<compile_context>
chip_gen: v6e
topology: v6e:2x2x1
jax: 0.10.0
libtpu: 0.0.40
codegen_flags: <defaults>
</compile_context>

<pallas_src>
import numpy as np

import jax
import jax.numpy as jnp
from jax import lax
from jax.experimental import pallas as pl
from jax.experimental.pallas import tpu as pltpu

EPS = 1e-5  # PyTorch InstanceNorm2d default

# (KH, KW, sh, sw, ph, pw) of the five convs in _netE.main
_CONV_CFG = (
    (5, 4, 2, 2, 0, 1),
    (5, 4, 2, 1, 1, 0),
    (5, 4, 4, 1, 1, 1),
    (4, 4, 3, 1, 1, 1),
    (3, 3, 1, 1, 0, 0),
)


def _out_dim(i, k, s, p):
    return (i + 2 * p - k) // s + 1


# ---------------------------------------------------------------------------
# Kernel body helpers (traced inside the Pallas kernel).
# ---------------------------------------------------------------------------

def _conv_taps(x, r_ref, m_ref):
    """Conv2d(bias=False) on an (H_in, W_in*C) tile -> (OH, OW*OC)."""
    acc = None
    for kh in range(m_ref.shape[0]):
        rows = jnp.dot(r_ref[kh], x, preferred_element_type=jnp.float32)
        y = jnp.dot(rows, m_ref[kh], preferred_element_type=jnp.float32)
        acc = y if acc is None else acc + y
    return acc


def _chan_index(shape, axis, oc):
    idx = lax.broadcasted_iota(jnp.int32, shape, axis)
    if (oc & (oc - 1)) == 0:            # OC is a power of two for every layer
        return jnp.bitwise_and(idx, oc - 1)
    return idx % oc


def _relu_instnorm(x, gb_ref):
    """ReLU + InstanceNorm2d (biased var, eps=1e-5, affine) on (OH, OW*OC)."""
    oc = gb_ref.shape[1]
    oh, owoc = x.shape
    ow = owoc // oc
    x = jnp.maximum(x, 0.0)

    # Channel gather / scatter one-hot maps built in-register (matmul-only path).
    ii = _chan_index((owoc, oc), 0, oc)
    jj = lax.broadcasted_iota(jnp.int32, (owoc, oc), 1)
    gather = (ii == jj).astype(jnp.float32)          # (OW*OC, OC)
    ii2 = lax.broadcasted_iota(jnp.int32, (oc, owoc), 0)
    jj2 = _chan_index((oc, owoc), 1, oc)
    scatter = (ii2 == jj2).astype(jnp.float32)       # (OC, OW*OC)

    inv_cnt = 1.0 / float(oh * ow)
    # One-pass statistics: mean and E[x^2] per channel of this instance.
    mean = jnp.dot(jnp.sum(x, axis=0, keepdims=True), gather,
                   preferred_element_type=jnp.float32) * inv_cnt       # (1, OC)
    ex2 = jnp.dot(jnp.sum(x * x, axis=0, keepdims=True), gather,
                  preferred_element_type=jnp.float32) * inv_cnt        # (1, OC)
    var = ex2 - mean * mean                                            # biased

    gamma = gb_ref[0:1, :]
    beta = gb_ref[1:2, :]
    scale = gamma * lax.rsqrt(var + EPS)                               # (1, OC)
    shift = beta - mean * scale

    scale_t = jnp.dot(scale, scatter, preferred_element_type=jnp.float32)
    shift_t = jnp.dot(shift, scatter, preferred_element_type=jnp.float32)
    return x * scale_t + shift_t                                       # (OH, OW*OC)


def _netE_kernel(x_ref,
                 r1_ref, r2_ref, r3_ref, r4_ref,
                 m1_ref, m2_ref, m3_ref, m4_ref, m5_ref,
                 gb1_ref, gb2_ref, gb3_ref, gb4_ref,
                 wl_ref, bl_ref,
                 o_ref):
    x = x_ref[0]                                                      # (H, W*nc)
    x = _relu_instnorm(_conv_taps(x, r1_ref, m1_ref), gb1_ref)        # (63, 8*8)
    x = _relu_instnorm(_conv_taps(x, r2_ref, m2_ref), gb2_ref)        # (31, 5*16)
    x = _relu_instnorm(_conv_taps(x, r3_ref, m3_ref), gb3_ref)        # (8, 4*32)
    x = _relu_instnorm(_conv_taps(x, r4_ref, m4_ref), gb4_ref)        # (3, 3*64)

    # Final 3x3 conv: spatial output is 1x1 so the height taps are row slices.
    z = None
    for kh in range(m5_ref.shape[0]):
        t = jnp.dot(x[kh:kh + 1, :], m5_ref[kh],
                    preferred_element_type=jnp.float32)
        z = t if z is None else z + t                                  # (1, nz)

    # flatten (already (1, nz)) + Linear(nz, nz)
    y = jnp.dot(z, wl_ref[...], preferred_element_type=jnp.float32) + bl_ref[...]
    o_ref[0] = y.astype(o_ref.dtype)


# ---------------------------------------------------------------------------
# Host-side one-time parameter reorganization (run once, outside the forward).
# ---------------------------------------------------------------------------

def precompute(params, H, W):
    """Turn PyTorch-layout _netE parameters into the fused kernel's operands."""
    weights = [params["w1"], params["w2"], params["w3"],
               params["w4"], params["w5"]]
    Rs, Ms = [], []
    h, w = H, W
    for (KH, KW, sh, sw, ph, pw), wt in zip(_CONV_CFG, weights):
        wt_np = np.asarray(wt)                       # (OC, C, KH, KW)
        oc, cin = wt_np.shape[0], wt_np.shape[1]
        oh = _out_dim(h, KH, sh, ph)
        ow = _out_dim(w, KW, sw, pw)

        # Height-tap row-selection matrices (zero rows encode the zero padding).
        R = np.zeros((KH, oh, h), np.float32)
        for k in range(KH):
            for o in range(oh):
                src = sh * o + k - ph
                if 0 <= src < h:
                    R[k, o, src] = 1.0
        Rs.append(jnp.asarray(R))

        # Width-unfolded weights: M[kh, win*C + c, ow*OC + oc] = W[oc, c, kh, kw].
        M = np.zeros((KH, w * cin, ow * oc), np.float32)
        for k in range(KH):
            for o in range(ow):
                for q in range(KW):
                    win = sw * o + q - pw
                    if 0 <= win < w:
                        M[k, win * cin:(win + 1) * cin,
                          o * oc:(o + 1) * oc] += wt_np[:, :, k, q].T
        Ms.append(jnp.asarray(M))
        h, w = oh, ow

    assert (h, w) == (1, 1), "spatial size must collapse to 1x1 before the head"

    gbs = [jnp.stack([params[f"g{i}"], params[f"b{i}"]]).astype(jnp.float32)
           for i in range(1, 5)]
    return {
        "R": Rs[:4],                 # layer-5 row selection is a plain slice
        "M": Ms,
        "gb": gbs,
        "w_lin_t": params["w_lin"].T,            # nn.Linear: y = x @ W.T + b
        "b_lin": params["b_lin"].reshape(1, -1),
    }


# ---------------------------------------------------------------------------
# Fused forward.
# ---------------------------------------------------------------------------

@jax.jit
def netE_forward(prep, x):
    """x: (N, nc, H, W) float32 -> (N, nz) float32."""
    N, nc, H, W = x.shape
    nz = prep["b_lin"].shape[1]

    # NCHW -> lane-dense (N, H, W*nc); for nc == 1 this is a pure reshape.
    x2 = jnp.transpose(x, (0, 2, 3, 1)).reshape(N, H, W * nc)

    operands = ([x2] + list(prep["R"]) + list(prep["M"]) + list(prep["gb"])
                + [prep["w_lin_t"], prep["b_lin"]])

    def _const_spec(a):
        nd = a.ndim
        return pl.BlockSpec(a.shape, lambda n: (0,) * nd)

    in_specs = ([pl.BlockSpec((1, H, W * nc), lambda n: (n, 0, 0))]
                + [_const_spec(a) for a in operands[1:]])

    out = pl.pallas_call(
        _netE_kernel,
        out_shape=jax.ShapeDtypeStruct((N, 1, nz), jnp.float32),
        grid=(N,),
        in_specs=in_specs,
        out_specs=pl.BlockSpec((1, 1, nz), lambda n: (n, 0, 0)),
        compiler_params=pltpu.CompilerParams(
            dimension_semantics=("parallel",)),
        cost_estimate=pl.CostEstimate(flops=int(1.5e7),
                                      transcendentals=256,
                                      bytes_accessed=int(1.2e6)),
    )(*operands)
    return out.reshape(N, nz)


# ---------------------------------------------------------------------------
# Parameters (PyTorch layout) and demo.
# ---------------------------------------------------------------------------

def init_params(key, nz, ngf, nc):
    ks = jax.random.split(key, 7)

    def conv_w(k, oc, ic, kh, kw):
        return jax.random.normal(k, (oc, ic, kh, kw), jnp.float32) * 0.02

    return {
        "w1": conv_w(ks[0], ngf, nc, 5, 4),
        "g1": jnp.ones((ngf,), jnp.float32), "b1": jnp.zeros((ngf,), jnp.float32),
        "w2": conv_w(ks[1], ngf * 2, ngf, 5, 4),
        "g2": jnp.ones((ngf * 2,), jnp.float32), "b2": jnp.zeros((ngf * 2,), jnp.float32),
        "w3": conv_w(ks[2], ngf * 4, ngf * 2, 5, 4),
        "g3": jnp.ones((ngf * 4,), jnp.float32), "b3": jnp.zeros((ngf * 4,), jnp.float32),
        "w4": conv_w(ks[3], ngf * 8, ngf * 4, 4, 4),
        "g4": jnp.ones((ngf * 8,), jnp.float32), "b4": jnp.zeros((ngf * 8,), jnp.float32),
        "w5": conv_w(ks[4], nz, ngf * 8, 3, 3),
        "w_lin": jax.random.normal(ks[5], (nz, nz), jnp.float32) * 0.05,
        "b_lin": jax.random.normal(ks[6], (nz,), jnp.float32) * 0.05,
    }


if __name__ == "__main__":
    # nz=32, ngf=8, nc=1; input (N, nc, 129, 16) is the "16 columns" size for
    # which the strided convs collapse to 1x1 before the final 3x3 conv:
    # 129x16 -> 63x8 -> 31x5 -> 8x4 -> 3x3 -> 1x1.
    nz, ngf, nc = 32, 8, 1
    N, H, W = 2, 129, 16
    key = jax.random.PRNGKey(0)
    kx, kp = jax.random.split(key)
    x = jax.random.normal(kx, (N, nc, H, W), jnp.float32)
    params = init_params(kp, nz, ngf, nc)
    prep = precompute(params, H, W)          # one-time weight reorganization
    out = jax.block_until_ready(netE_forward(prep, x))
    assert out.shape == (N, nz) and out.dtype == jnp.float32
    print("KERNEL_OK")
</pallas_src>

<mosaic_0001>
module attributes {stable_mosaic.version = 11 : i64} {
  func.func @_netE_kernel(%arg0: i32, %arg1: memref<1x129x16xf32, #tpu.memory_space<vmem>>, %arg2: memref<5x63x129xf32, #tpu.memory_space<vmem>>, %arg3: memref<5x31x63xf32, #tpu.memory_space<vmem>>, %arg4: memref<5x8x31xf32, #tpu.memory_space<vmem>>, %arg5: memref<4x3x8xf32, #tpu.memory_space<vmem>>, %arg6: memref<5x16x64xf32, #tpu.memory_space<vmem>>, %arg7: memref<5x64x80xf32, #tpu.memory_space<vmem>>, %arg8: memref<5x80x128xf32, #tpu.memory_space<vmem>>, %arg9: memref<4x128x192xf32, #tpu.memory_space<vmem>>, %arg10: memref<3x192x32xf32, #tpu.memory_space<vmem>>, %arg11: memref<2x8xf32, #tpu.memory_space<vmem>>, %arg12: memref<2x16xf32, #tpu.memory_space<vmem>>, %arg13: memref<2x32xf32, #tpu.memory_space<vmem>>, %arg14: memref<2x64xf32, #tpu.memory_space<vmem>>, %arg15: memref<32x32xf32, #tpu.memory_space<vmem>>, %arg16: memref<1x32xf32, #tpu.memory_space<vmem>>, %arg17: memref<1x1x32xf32, #tpu.memory_space<vmem>>) attributes {dimension_semantics = [#tpu.dimension_semantics<parallel>], iteration_bounds = array<i64: 2>, scalar_prefetch = 0 : i64, scratch_operands = 0 : i64, tpu.core_type = #tpu.core_type<tc>, window_params = [{transform_indices = @transform_0, window_bounds = array<i64: 1, 129, 16>}, {pipeline_mode = #tpu.pipeline_mode<synchronous>, transform_indices = @transform_1, window_bounds = array<i64: 5, 63, 129>}, {pipeline_mode = #tpu.pipeline_mode<synchronous>, transform_indices = @transform_2, window_bounds = array<i64: 5, 31, 63>}, {pipeline_mode = #tpu.pipeline_mode<synchronous>, transform_indices = @transform_3, window_bounds = array<i64: 5, 8, 31>}, {pipeline_mode = #tpu.pipeline_mode<synchronous>, transform_indices = @transform_4, window_bounds = array<i64: 4, 3, 8>}, {pipeline_mode = #tpu.pipeline_mode<synchronous>, transform_indices = @transform_5, window_bounds = array<i64: 5, 16, 64>}, {pipeline_mode = #tpu.pipeline_mode<synchronous>, transform_indices = @transform_6, window_bounds = array<i64: 5, 64, 80>}, {pipeline_mode = #tpu.pipeline_mode<synchronous>, transform_indices = @transform_7, window_bounds = array<i64: 5, 80, 128>}, {pipeline_mode = #tpu.pipeline_mode<synchronous>, transform_indices = @transform_8, window_bounds = array<i64: 4, 128, 192>}, {pipeline_mode = #tpu.pipeline_mode<synchronous>, transform_indices = @transform_9, window_bounds = array<i64: 3, 192, 32>}, {pipeline_mode = #tpu.pipeline_mode<synchronous>, transform_indices = @transform_10, window_bounds = array<i64: 2, 8>}, {pipeline_mode = #tpu.pipeline_mode<synchronous>, transform_indices = @transform_11, window_bounds = array<i64: 2, 16>}, {pipeline_mode = #tpu.pipeline_mode<synchronous>, transform_indices = @transform_12, window_bounds = array<i64: 2, 32>}, {pipeline_mode = #tpu.pipeline_mode<synchronous>, transform_indices = @transform_13, window_bounds = array<i64: 2, 64>}, {pipeline_mode = #tpu.pipeline_mode<synchronous>, transform_indices = @transform_14, window_bounds = array<i64: 32, 32>}, {pipeline_mode = #tpu.pipeline_mode<synchronous>, transform_indices = @transform_15, window_bounds = array<i64: 1, 32>}, {transform_indices = @transform_16, window_bounds = array<i64: 1, 1, 32>}]} {
    %c0 = arith.constant 0 : index
    %c0_0 = arith.constant 0 : index
    %c0_1 = arith.constant 0 : index
    %0 = vector.load %arg1[%c0, %c0_0, %c0_1] : memref<1x129x16xf32, #tpu.memory_space<vmem>>, vector<1x129x16xf32>
    %1 = vector.shape_cast %0 : vector<1x129x16xf32> to vector<129x16xf32>
    %c0_2 = arith.constant 0 : index
    %c0_3 = arith.constant 0 : index
    %c0_4 = arith.constant 0 : index
    %2 = vector.load %arg2[%c0_2, %c0_3, %c0_4] : memref<5x63x129xf32, #tpu.memory_space<vmem>>, vector<1x63x129xf32>
    %3 = vector.shape_cast %2 : vector<1x63x129xf32> to vector<63x129xf32>
    %cst = arith.constant dense<0.000000e+00> : vector<63x16xf32>
    %4 = tpu.matmul %3, %1, %cst {dimension_numbers = #tpu.dot_dimension_numbers<[1], [0], [0], [1], [0, 0, 1, 1], [], []>} : vector<63x129xf32>, vector<129x16xf32>, vector<63x16xf32> -> vector<63x16xf32>
    %c0_5 = arith.constant 0 : index
    %c0_6 = arith.constant 0 : index
    %c0_7 = arith.constant 0 : index
    %5 = vector.load %arg6[%c0_5, %c0_6, %c0_7] : memref<5x16x64xf32, #tpu.memory_space<vmem>>, vector<1x16x64xf32>
    %6 = vector.shape_cast %5 : vector<1x16x64xf32> to vector<16x64xf32>
    %cst_8 = arith.constant dense<0.000000e+00> : vector<63x64xf32>
    %7 = tpu.matmul %4, %6, %cst_8 {dimension_numbers = #tpu.dot_dimension_numbers<[1], [0], [0], [1], [0, 0, 1, 1], [], []>} : vector<63x16xf32>, vector<16x64xf32>, vector<63x64xf32> -> vector<63x64xf32>
    %c1 = arith.constant 1 : index
    %c0_9 = arith.constant 0 : index
    %c0_10 = arith.constant 0 : index
    %8 = vector.load %arg2[%c1, %c0_9, %c0_10] : memref<5x63x129xf32, #tpu.memory_space<vmem>>, vector<1x63x129xf32>
    %9 = vector.shape_cast %8 : vector<1x63x129xf32> to vector<63x129xf32>
    %cst_11 = arith.constant dense<0.000000e+00> : vector<63x16xf32>
    %10 = tpu.matmul %9, %1, %cst_11 {dimension_numbers = #tpu.dot_dimension_numbers<[1], [0], [0], [1], [0, 0, 1, 1], [], []>} : vector<63x129xf32>, vector<129x16xf32>, vector<63x16xf32> -> vector<63x16xf32>
    %c1_12 = arith.constant 1 : index
    %c0_13 = arith.constant 0 : index
    %c0_14 = arith.constant 0 : index
    %11 = vector.load %arg6[%c1_12, %c0_13, %c0_14] : memref<5x16x64xf32, #tpu.memory_space<vmem>>, vector<1x16x64xf32>
    %12 = vector.shape_cast %11 : vector<1x16x64xf32> to vector<16x64xf32>
    %cst_15 = arith.constant dense<0.000000e+00> : vector<63x64xf32>
    %13 = tpu.matmul %10, %12, %cst_15 {dimension_numbers = #tpu.dot_dimension_numbers<[1], [0], [0], [1], [0, 0, 1, 1], [], []>} : vector<63x16xf32>, vector<16x64xf32>, vector<63x64xf32> -> vector<63x64xf32>
    %14 = arith.addf %7, %13 : vector<63x64xf32>
    %c2 = arith.constant 2 : index
    %c0_16 = arith.constant 0 : index
    %c0_17 = arith.constant 0 : index
    %15 = vector.load %arg2[%c2, %c0_16, %c0_17] : memref<5x63x129xf32, #tpu.memory_space<vmem>>, vector<1x63x129xf32>
    %16 = vector.shape_cast %15 : vector<1x63x129xf32> to vector<63x129xf32>
    %cst_18 = arith.constant dense<0.000000e+00> : vector<63x16xf32>
    %17 = tpu.matmul %16, %1, %cst_18 {dimension_numbers = #tpu.dot_dimension_numbers<[1], [0], [0], [1], [0, 0, 1, 1], [], []>} : vector<63x129xf32>, vector<129x16xf32>, vector<63x16xf32> -> vector<63x16xf32>
    %c2_19 = arith.constant 2 : index
    %c0_20 = arith.constant 0 : index
    %c0_21 = arith.constant 0 : index
    %18 = vector.load %arg6[%c2_19, %c0_20, %c0_21] : memref<5x16x64xf32, #tpu.memory_space<vmem>>, vector<1x16x64xf32>
    %19 = vector.shape_cast %18 : vector<1x16x64xf32> to vector<16x64xf32>
    %cst_22 = arith.constant dense<0.000000e+00> : vector<63x64xf32>
    %20 = tpu.matmul %17, %19, %cst_22 {dimension_numbers = #tpu.dot_dimension_numbers<[1], [0], [0], [1], [0, 0, 1, 1], [], []>} : vector<63x16xf32>, vector<16x64xf32>, vector<63x64xf32> -> vector<63x64xf32>
    %21 = arith.addf %14, %20 : vector<63x64xf32>
    %c3 = arith.constant 3 : index
    %c0_23 = arith.constant 0 : index
    %c0_24 = arith.constant 0 : index
    %22 = vector.load %arg2[%c3, %c0_23, %c0_24] : memref<5x63x129xf32, #tpu.memory_space<vmem>>, vector<1x63x129xf32>
    %23 = vector.shape_cast %22 : vector<1x63x129xf32> to vector<63x129xf32>
    %cst_25 = arith.constant dense<0.000000e+00> : vector<63x16xf32>
    %24 = tpu.matmul %23, %1, %cst_25 {dimension_numbers = #tpu.dot_dimension_numbers<[1], [0], [0], [1], [0, 0, 1, 1], [], []>} : vector<63x129xf32>, vector<129x16xf32>, vector<63x16xf32> -> vector<63x16xf32>
    %c3_26 = arith.constant 3 : index
    %c0_27 = arith.constant 0 : index
    %c0_28 = arith.constant 0 : index
    %25 = vector.load %arg6[%c3_26, %c0_27, %c0_28] : memref<5x16x64xf32, #tpu.memory_space<vmem>>, vector<1x16x64xf32>
    %26 = vector.shape_cast %25 : vector<1x16x64xf32> to vector<16x64xf32>
    %cst_29 = arith.constant dense<0.000000e+00> : vector<63x64xf32>
    %27 = tpu.matmul %24, %26, %cst_29 {dimension_numbers = #tpu.dot_dimension_numbers<[1], [0], [0], [1], [0, 0, 1, 1], [], []>} : vector<63x16xf32>, vector<16x64xf32>, vector<63x64xf32> -> vector<63x64xf32>
    %28 = arith.addf %21, %27 : vector<63x64xf32>
    %c4 = arith.constant 4 : index
    %c0_30 = arith.constant 0 : index
    %c0_31 = arith.constant 0 : index
    %29 = vector.load %arg2[%c4, %c0_30, %c0_31] : memref<5x63x129xf32, #tpu.memory_space<vmem>>, vector<1x63x129xf32>
    %30 = vector.shape_cast %29 : vector<1x63x129xf32> to vector<63x129xf32>
    %cst_32 = arith.constant dense<0.000000e+00> : vector<63x16xf32>
    %31 = tpu.matmul %30, %1, %cst_32 {dimension_numbers = #tpu.dot_dimension_numbers<[1], [0], [0], [1], [0, 0, 1, 1], [], []>} : vector<63x129xf32>, vector<129x16xf32>, vector<63x16xf32> -> vector<63x16xf32>
    %c4_33 = arith.constant 4 : index
    %c0_34 = arith.constant 0 : index
    %c0_35 = arith.constant 0 : index
    %32 = vector.load %arg6[%c4_33, %c0_34, %c0_35] : memref<5x16x64xf32, #tpu.memory_space<vmem>>, vector<1x16x64xf32>
    %33 = vector.shape_cast %32 : vector<1x16x64xf32> to vector<16x64xf32>
    %cst_36 = arith.constant dense<0.000000e+00> : vector<63x64xf32>
    %34 = tpu.matmul %31, %33, %cst_36 {dimension_numbers = #tpu.dot_dimension_numbers<[1], [0], [0], [1], [0, 0, 1, 1], [], []>} : vector<63x16xf32>, vector<16x64xf32>, vector<63x64xf32> -> vector<63x64xf32>
    %35 = arith.addf %28, %34 : vector<63x64xf32>
    %cst_37 = arith.constant 0.000000e+00 : f32
    %36 = vector.broadcast %cst_37 : f32 to vector<63x64xf32>
    %37 = arith.maximumf %35, %36 : vector<63x64xf32>
    %38 = tpu.iota {dimensions = array<i32: 0>} : vector<64x8xi32>
    %c7_i32 = arith.constant 7 : i32
    %39 = vector.broadcast %c7_i32 : i32 to vector<64x8xi32>
    %40 = arith.andi %38, %39 : vector<64x8xi32>
    %41 = tpu.iota {dimensions = array<i32: 1>} : vector<64x8xi32>
    %42 = arith.cmpi eq, %40, %41 : vector<64x8xi32>
    %43 = arith.extui %42 : vector<64x8xi1> to vector<64x8xi32>
    %44 = arith.sitofp %43 : vector<64x8xi32> to vector<64x8xf32>
    %45 = tpu.iota {dimensions = array<i32: 0>} : vector<8x64xi32>
    %46 = tpu.iota {dimensions = array<i32: 1>} : vector<8x64xi32>
    %c7_i32_38 = arith.constant 7 : i32
    %47 = vector.broadcast %c7_i32_38 : i32 to vector<8x64xi32>
    %48 = arith.andi %46, %47 : vector<8x64xi32>
    %49 = arith.cmpi eq, %45, %48 : vector<8x64xi32>
    %50 = arith.extui %49 : vector<8x64xi1> to vector<8x64xi32>
    %51 = arith.sitofp %50 : vector<8x64xi32> to vector<8x64xf32>
    %cst_39 = arith.constant dense<0.000000e+00> : vector<64xf32>
    %52 = vector.multi_reduction <add>, %37, %cst_39 [0] : vector<63x64xf32> to vector<64xf32>
    %53 = vector.shape_cast %52 : vector<64xf32> to vector<1x64xf32>
    %cst_40 = arith.constant dense<0.000000e+00> : vector<1x8xf32>
    %54 = tpu.matmul %53, %44, %cst_40 {dimension_numbers = #tpu.dot_dimension_numbers<[1], [0], [0], [1], [0, 0, 1, 1], [], []>} : vector<1x64xf32>, vector<64x8xf32>, vector<1x8xf32> -> vector<1x8xf32>
    %cst_41 = arith.constant 0.0019841271 : f32
    %55 = vector.broadcast %cst_41 : f32 to vector<1x8xf32>
    %56 = arith.mulf %54, %55 : vector<1x8xf32>
    %57 = arith.mulf %37, %37 : vector<63x64xf32>
    %cst_42 = arith.constant dense<0.000000e+00> : vector<64xf32>
    %58 = vector.multi_reduction <add>, %57, %cst_42 [0] : vector<63x64xf32> to vector<64xf32>
    %59 = vector.shape_cast %58 : vector<64xf32> to vector<1x64xf32>
    %cst_43 = arith.constant dense<0.000000e+00> : vector<1x8xf32>
    %60 = tpu.matmul %59, %44, %cst_43 {dimension_numbers = #tpu.dot_dimension_numbers<[1], [0], [0], [1], [0, 0, 1, 1], [], []>} : vector<1x64xf32>, vector<64x8xf32>, vector<1x8xf32> -> vector<1x8xf32>
    %cst_44 = arith.constant 0.0019841271 : f32
    %61 = vector.broadcast %cst_44 : f32 to vector<1x8xf32>
    %62 = arith.mulf %60, %61 : vector<1x8xf32>
    %63 = arith.mulf %56, %56 : vector<1x8xf32>
    %64 = arith.subf %62, %63 : vector<1x8xf32>
    %c0_45 = arith.constant 0 : index
    %c0_46 = arith.constant 0 : index
    %65 = vector.load %arg11[%c0_45, %c0_46] : memref<2x8xf32, #tpu.memory_space<vmem>>, vector<1x8xf32>
    %c1_47 = arith.constant 1 : index
    %c0_48 = arith.constant 0 : index
    %66 = vector.load %arg11[%c1_47, %c0_48] : memref<2x8xf32, #tpu.memory_space<vmem>>, vector<1x8xf32>
    %cst_49 = arith.constant 9.99999974E-6 : f32
    %67 = vector.broadcast %cst_49 : f32 to vector<1x8xf32>
    %68 = arith.addf %64, %67 : vector<1x8xf32>
    %69 = math.rsqrt %68 : vector<1x8xf32>
    %70 = arith.mulf %65, %69 : vector<1x8xf32>
    %71 = arith.mulf %56, %70 : vector<1x8xf32>
    %72 = arith.subf %66, %71 : vector<1x8xf32>
    %cst_50 = arith.constant dense<0.000000e+00> : vector<1x64xf32>
    %73 = tpu.matmul %70, %51, %cst_50 {dimension_numbers = #tpu.dot_dimension_numbers<[1], [0], [0], [1], [0, 0, 1, 1], [], []>} : vector<1x8xf32>, vector<8x64xf32>, vector<1x64xf32> -> vector<1x64xf32>
    %cst_51 = arith.constant dense<0.000000e+00> : vector<1x64xf32>
    %74 = tpu.matmul %72, %51, %cst_51 {dimension_numbers = #tpu.dot_dimension_numbers<[1], [0], [0], [1], [0, 0, 1, 1], [], []>} : vector<1x8xf32>, vector<8x64xf32>, vector<1x64xf32> -> vector<1x64xf32>
    %75 = vector.broadcast %73 : vector<1x64xf32> to vector<63x64xf32>
    %76 = arith.mulf %37, %75 : vector<63x64xf32>
    %77 = vector.broadcast %74 : vector<1x64xf32> to vector<63x64xf32>
    %78 = arith.addf %76, %77 : vector<63x64xf32>
    %c0_52 = arith.constant 0 : index
    %c0_53 = arith.constant 0 : index
    %c0_54 = arith.constant 0 : index
    %79 = vector.load %arg3[%c0_52, %c0_53, %c0_54] : memref<5x31x63xf32, #tpu.memory_space<vmem>>, vector<1x31x63xf32>
    %80 = vector.shape_cast %79 : vector<1x31x63xf32> to vector<31x63xf32>
    %cst_55 = arith.constant dense<0.000000e+00> : vector<31x64xf32>
    %81 = tpu.matmul %80, %78, %cst_55 {dimension_numbers = #tpu.dot_dimension_numbers<[1], [0], [0], [1], [0, 0, 1, 1], [], []>} : vector<31x63xf32>, vector<63x64xf32>, vector<31x64xf32> -> vector<31x64xf32>
    %c0_56 = arith.constant 0 : index
    %c0_57 = arith.constant 0 : index
    %c0_58 = arith.constant 0 : index
    %82 = vector.load %arg7[%c0_56, %c0_57, %c0_58] : memref<5x64x80xf32, #tpu.memory_space<vmem>>, vector<1x64x80xf32>
    %83 = vector.shape_cast %82 : vector<1x64x80xf32> to vector<64x80xf32>
    %cst_59 = arith.constant dense<0.000000e+00> : vector<31x80xf32>
    %84 = tpu.matmul %81, %83, %cst_59 {dimension_numbers = #tpu.dot_dimension_numbers<[1], [0], [0], [1], [0, 0, 1, 1], [], []>} : vector<31x64xf32>, vector<64x80xf32>, vector<31x80xf32> -> vector<31x80xf32>
    %c1_60 = arith.constant 1 : index
    %c0_61 = arith.constant 0 : index
    %c0_62 = arith.constant 0 : index
    %85 = vector.load %arg3[%c1_60, %c0_61, %c0_62] : memref<5x31x63xf32, #tpu.memory_space<vmem>>, vector<1x31x63xf32>
    %86 = vector.shape_cast %85 : vector<1x31x63xf32> to vector<31x63xf32>
    %cst_63 = arith.constant dense<0.000000e+00> : vector<31x64xf32>
    %87 = tpu.matmul %86, %78, %cst_63 {dimension_numbers = #tpu.dot_dimension_numbers<[1], [0], [0], [1], [0, 0, 1, 1], [], []>} : vector<31x63xf32>, vector<63x64xf32>, vector<31x64xf32> -> vector<31x64xf32>
    %c1_64 = arith.constant 1 : index
    %c0_65 = arith.constant 0 : index
    %c0_66 = arith.constant 0 : index
    %88 = vector.load %arg7[%c1_64, %c0_65, %c0_66] : memref<5x64x80xf32, #tpu.memory_space<vmem>>, vector<1x64x80xf32>
    %89 = vector.shape_cast %88 : vector<1x64x80xf32> to vector<64x80xf32>
    %cst_67 = arith.constant dense<0.000000e+00> : vector<31x80xf32>
    %90 = tpu.matmul %87, %89, %cst_67 {dimension_numbers = #tpu.dot_dimension_numbers<[1], [0], [0], [1], [0, 0, 1, 1], [], []>} : vector<31x64xf32>, vector<64x80xf32>, vector<31x80xf32> -> vector<31x80xf32>
    %91 = arith.addf %84, %90 : vector<31x80xf32>
    %c2_68 = arith.constant 2 : index
    %c0_69 = arith.constant 0 : index
    %c0_70 = arith.constant 0 : index
    %92 = vector.load %arg3[%c2_68, %c0_69, %c0_70] : memref<5x31x63xf32, #tpu.memory_space<vmem>>, vector<1x31x63xf32>
    %93 = vector.shape_cast %92 : vector<1x31x63xf32> to vector<31x63xf32>
    %cst_71 = arith.constant dense<0.000000e+00> : vector<31x64xf32>
    %94 = tpu.matmul %93, %78, %cst_71 {dimension_numbers = #tpu.dot_dimension_numbers<[1], [0], [0], [1], [0, 0, 1, 1], [], []>} : vector<31x63xf32>, vector<63x64xf32>, vector<31x64xf32> -> vector<31x64xf32>
    %c2_72 = arith.constant 2 : index
    %c0_73 = arith.constant 0 : index
    %c0_74 = arith.constant 0 : index
    %95 = vector.load %arg7[%c2_72, %c0_73, %c0_74] : memref<5x64x80xf32, #tpu.memory_space<vmem>>, vector<1x64x80xf32>
    %96 = vector.shape_cast %95 : vector<1x64x80xf32> to vector<64x80xf32>
    %cst_75 = arith.constant dense<0.000000e+00> : vector<31x80xf32>
    %97 = tpu.matmul %94, %96, %cst_75 {dimension_numbers = #tpu.dot_dimension_numbers<[1], [0], [0], [1], [0, 0, 1, 1], [], []>} : vector<31x64xf32>, vector<64x80xf32>, vector<31x80xf32> -> vector<31x80xf32>
    %98 = arith.addf %91, %97 : vector<31x80xf32>
    %c3_76 = arith.constant 3 : index
    %c0_77 = arith.constant 0 : index
    %c0_78 = arith.constant 0 : index
    %99 = vector.load %arg3[%c3_76, %c0_77, %c0_78] : memref<5x31x63xf32, #tpu.memory_space<vmem>>, vector<1x31x63xf32>
    %100 = vector.shape_cast %99 : vector<1x31x63xf32> to vector<31x63xf32>
    %cst_79 = arith.constant dense<0.000000e+00> : vector<31x64xf32>
    %101 = tpu.matmul %100, %78, %cst_79 {dimension_numbers = #tpu.dot_dimension_numbers<[1], [0], [0], [1], [0, 0, 1, 1], [], []>} : vector<31x63xf32>, vector<63x64xf32>, vector<31x64xf32> -> vector<31x64xf32>
    %c3_80 = arith.constant 3 : index
    %c0_81 = arith.constant 0 : index
    %c0_82 = arith.constant 0 : index
    %102 = vector.load %arg7[%c3_80, %c0_81, %c0_82] : memref<5x64x80xf32, #tpu.memory_space<vmem>>, vector<1x64x80xf32>
    %103 = vector.shape_cast %102 : vector<1x64x80xf32> to vector<64x80xf32>
    %cst_83 = arith.constant dense<0.000000e+00> : vector<31x80xf32>
    %104 = tpu.matmul %101, %103, %cst_83 {dimension_numbers = #tpu.dot_dimension_numbers<[1], [0], [0], [1], [0, 0, 1, 1], [], []>} : vector<31x64xf32>, vector<64x80xf32>, vector<31x80xf32> -> vector<31x80xf32>
    %105 = arith.addf %98, %104 : vector<31x80xf32>
    %c4_84 = arith.constant 4 : index
    %c0_85 = arith.constant 0 : index
    %c0_86 = arith.constant 0 : index
    %106 = vector.load %arg3[%c4_84, %c0_85, %c0_86] : memref<5x31x63xf32, #tpu.memory_space<vmem>>, vector<1x31x63xf32>
    %107 = vector.shape_cast %106 : vector<1x31x63xf32> to vector<31x63xf32>
    %cst_87 = arith.constant dense<0.000000e+00> : vector<31x64xf32>
    %108 = tpu.matmul %107, %78, %cst_87 {dimension_numbers = #tpu.dot_dimension_numbers<[1], [0], [0], [1], [0, 0, 1, 1], [], []>} : vector<31x63xf32>, vector<63x64xf32>, vector<31x64xf32> -> vector<31x64xf32>
    %c4_88 = arith.constant 4 : index
    %c0_89 = arith.constant 0 : index
    %c0_90 = arith.constant 0 : index
    %109 = vector.load %arg7[%c4_88, %c0_89, %c0_90] : memref<5x64x80xf32, #tpu.memory_space<vmem>>, vector<1x64x80xf32>
    %110 = vector.shape_cast %109 : vector<1x64x80xf32> to vector<64x80xf32>
    %cst_91 = arith.constant dense<0.000000e+00> : vector<31x80xf32>
    %111 = tpu.matmul %108, %110, %cst_91 {dimension_numbers = #tpu.dot_dimension_numbers<[1], [0], [0], [1], [0, 0, 1, 1], [], []>} : vector<31x64xf32>, vector<64x80xf32>, vector<31x80xf32> -> vector<31x80xf32>
    %112 = arith.addf %105, %111 : vector<31x80xf32>
    %cst_92 = arith.constant 0.000000e+00 : f32
    %113 = vector.broadcast %cst_92 : f32 to vector<31x80xf32>
    %114 = arith.maximumf %112, %113 : vector<31x80xf32>
    %115 = tpu.iota {dimensions = array<i32: 0>} : vector<80x16xi32>
    %c15_i32 = arith.constant 15 : i32
    %116 = vector.broadcast %c15_i32 : i32 to vector<80x16xi32>
    %117 = arith.andi %115, %116 : vector<80x16xi32>
    %118 = tpu.iota {dimensions = array<i32: 1>} : vector<80x16xi32>
    %119 = arith.cmpi eq, %117, %118 : vector<80x16xi32>
    %120 = arith.extui %119 : vector<80x16xi1> to vector<80x16xi32>
    %121 = arith.sitofp %120 : vector<80x16xi32> to vector<80x16xf32>
    %122 = tpu.iota {dimensions = array<i32: 0>} : vector<16x80xi32>
    %123 = tpu.iota {dimensions = array<i32: 1>} : vector<16x80xi32>
    %c15_i32_93 = arith.constant 15 : i32
    %124 = vector.broadcast %c15_i32_93 : i32 to vector<16x80xi32>
    %125 = arith.andi %123, %124 : vector<16x80xi32>
    %126 = arith.cmpi eq, %122, %125 : vector<16x80xi32>
    %127 = arith.extui %126 : vector<16x80xi1> to vector<16x80xi32>
    %128 = arith.sitofp %127 : vector<16x80xi32> to vector<16x80xf32>
    %cst_94 = arith.constant dense<0.000000e+00> : vector<80xf32>
    %129 = vector.multi_reduction <add>, %114, %cst_94 [0] : vector<31x80xf32> to vector<80xf32>
    %130 = vector.shape_cast %129 : vector<80xf32> to vector<1x80xf32>
    %cst_95 = arith.constant dense<0.000000e+00> : vector<1x16xf32>
    %131 = tpu.matmul %130, %121, %cst_95 {dimension_numbers = #tpu.dot_dimension_numbers<[1], [0], [0], [1], [0, 0, 1, 1], [], []>} : vector<1x80xf32>, vector<80x16xf32>, vector<1x16xf32> -> vector<1x16xf32>
    %cst_96 = arith.constant 0.0064516128 : f32
    %132 = vector.broadcast %cst_96 : f32 to vector<1x16xf32>
    %133 = arith.mulf %131, %132 : vector<1x16xf32>
    %134 = arith.mulf %114, %114 : vector<31x80xf32>
    %cst_97 = arith.constant dense<0.000000e+00> : vector<80xf32>
    %135 = vector.multi_reduction <add>, %134, %cst_97 [0] : vector<31x80xf32> to vector<80xf32>
    %136 = vector.shape_cast %135 : vector<80xf32> to vector<1x80xf32>
    %cst_98 = arith.constant dense<0.000000e+00> : vector<1x16xf32>
    %137 = tpu.matmul %136, %121, %cst_98 {dimension_numbers = #tpu.dot_dimension_numbers<[1], [0], [0], [1], [0, 0, 1, 1], [], []>} : vector<1x80xf32>, vector<80x16xf32>, vector<1x16xf32> -> vector<1x16xf32>
    %cst_99 = arith.constant 0.0064516128 : f32
    %138 = vector.broadcast %cst_99 : f32 to vector<1x16xf32>
    %139 = arith.mulf %137, %138 : vector<1x16xf32>
    %140 = arith.mulf %133, %133 : vector<1x16xf32>
    %141 = arith.subf %139, %140 : vector<1x16xf32>
    %c0_100 = arith.constant 0 : index
    %c0_101 = arith.constant 0 : index
    %142 = vector.load %arg12[%c0_100, %c0_101] : memref<2x16xf32, #tpu.memory_space<vmem>>, vector<1x16xf32>
    %c1_102 = arith.constant 1 : index
    %c0_103 = arith.constant 0 : index
    %143 = vector.load %arg12[%c1_102, %c0_103] : memref<2x16xf32, #tpu.memory_space<vmem>>, vector<1x16xf32>
    %cst_104 = arith.constant 9.99999974E-6 : f32
    %144 = vector.broadcast %cst_104 : f32 to vector<1x16xf32>
    %145 = arith.addf %141, %144 : vector<1x16xf32>
    %146 = math.rsqrt %145 : vector<1x16xf32>
    %147 = arith.mulf %142, %146 : vector<1x16xf32>
    %148 = arith.mulf %133, %147 : vector<1x16xf32>
    %149 = arith.subf %143, %148 : vector<1x16xf32>
    %cst_105 = arith.constant dense<0.000000e+00> : vector<1x80xf32>
    %150 = tpu.matmul %147, %128, %cst_105 {dimension_numbers = #tpu.dot_dimension_numbers<[1], [0], [0], [1], [0, 0, 1, 1], [], []>} : vector<1x16xf32>, vector<16x80xf32>, vector<1x80xf32> -> vector<1x80xf32>
    %cst_106 = arith.constant dense<0.000000e+00> : vector<1x80xf32>
    %151 = tpu.matmul %149, %128, %cst_106 {dimension_numbers = #tpu.dot_dimension_numbers<[1], [0], [0], [1], [0, 0, 1, 1], [], []>} : vector<1x16xf32>, vector<16x80xf32>, vector<1x80xf32> -> vector<1x80xf32>
    %152 = vector.broadcast %150 : vector<1x80xf32> to vector<31x80xf32>
    %153 = arith.mulf %114, %152 : vector<31x80xf32>
    %154 = vector.broadcast %151 : vector<1x80xf32> to vector<31x80xf32>
    %155 = arith.addf %153, %154 : vector<31x80xf32>
    %c0_107 = arith.constant 0 : index
    %c0_108 = arith.constant 0 : index
    %c0_109 = arith.constant 0 : index
    %156 = vector.load %arg4[%c0_107, %c0_108, %c0_109] : memref<5x8x31xf32, #tpu.memory_space<vmem>>, vector<1x8x31xf32>
    %157 = vector.shape_cast %156 : vector<1x8x31xf32> to vector<8x31xf32>
    %cst_110 = arith.constant dense<0.000000e+00> : vector<8x80xf32>
    %158 = tpu.matmul %157, %155, %cst_110 {dimension_numbers = #tpu.dot_dimension_numbers<[1], [0], [0], [1], [0, 0, 1, 1], [], []>} : vector<8x31xf32>, vector<31x80xf32>, vector<8x80xf32> -> vector<8x80xf32>
    %c0_111 = arith.constant 0 : index
    %c0_112 = arith.constant 0 : index
    %c0_113 = arith.constant 0 : index
    %159 = vector.load %arg8[%c0_111, %c0_112, %c0_113] : memref<5x80x128xf32, #tpu.memory_space<vmem>>, vector<1x80x128xf32>
    %160 = vector.shape_cast %159 : vector<1x80x128xf32> to vector<80x128xf32>
    %cst_114 = arith.constant dense<0.000000e+00> : vector<8x128xf32>
    %161 = tpu.matmul %158, %160, %cst_114 {dimension_numbers = #tpu.dot_dimension_numbers<[1], [0], [0], [1], [0, 0, 1, 1], [], []>} : vector<8x80xf32>, vector<80x128xf32>, vector<8x128xf32> -> vector<8x128xf32>
    %c1_115 = arith.constant 1 : index
    %c0_116 = arith.constant 0 : index
    %c0_117 = arith.constant 0 : index
    %162 = vector.load %arg4[%c1_115, %c0_116, %c0_117] : memref<5x8x31xf32, #tpu.memory_space<vmem>>, vector<1x8x31xf32>
    %163 = vector.shape_cast %162 : vector<1x8x31xf32> to vector<8x31xf32>
    %cst_118 = arith.constant dense<0.000000e+00> : vector<8x80xf32>
    %164 = tpu.matmul %163, %155, %cst_118 {dimension_numbers = #tpu.dot_dimension_numbers<[1], [0], [0], [1], [0, 0, 1, 1], [], []>} : vector<8x31xf32>, vector<31x80xf32>, vector<8x80xf32> -> vector<8x80xf32>
    %c1_119 = arith.constant 1 : index
    %c0_120 = arith.constant 0 : index
    %c0_121 = arith.constant 0 : index
    %165 = vector.load %arg8[%c1_119, %c0_120, %c0_121] : memref<5x80x128xf32, #tpu.memory_space<vmem>>, vector<1x80x128xf32>
    %166 = vector.shape_cast %165 : vector<1x80x128xf32> to vector<80x128xf32>
    %cst_122 = arith.constant dense<0.000000e+00> : vector<8x128xf32>
    %167 = tpu.matmul %164, %166, %cst_122 {dimension_numbers = #tpu.dot_dimension_numbers<[1], [0], [0], [1], [0, 0, 1, 1], [], []>} : vector<8x80xf32>, vector<80x128xf32>, vector<8x128xf32> -> vector<8x128xf32>
    %168 = arith.addf %161, %167 : vector<8x128xf32>
    %c2_123 = arith.constant 2 : index
    %c0_124 = arith.constant 0 : index
    %c0_125 = arith.constant 0 : index
    %169 = vector.load %arg4[%c2_123, %c0_124, %c0_125] : memref<5x8x31xf32, #tpu.memory_space<vmem>>, vector<1x8x31xf32>
    %170 = vector.shape_cast %169 : vector<1x8x31xf32> to vector<8x31xf32>
    %cst_126 = arith.constant dense<0.000000e+00> : vector<8x80xf32>
    %171 = tpu.matmul %170, %155, %cst_126 {dimension_numbers = #tpu.dot_dimension_numbers<[1], [0], [0], [1], [0, 0, 1, 1], [], []>} : vector<8x31xf32>, vector<31x80xf32>, vector<8x80xf32> -> vector<8x80xf32>
    %c2_127 = arith.constant 2 : index
    %c0_128 = arith.constant 0 : index
    %c0_129 = arith.constant 0 : index
    %172 = vector.load %arg8[%c2_127, %c0_128, %c0_129] : memref<5x80x128xf32, #tpu.memory_space<vmem>>, vector<1x80x128xf32>
    %173 = vector.shape_cast %172 : vector<1x80x128xf32> to vector<80x128xf32>
    %cst_130 = arith.constant dense<0.000000e+00> : vector<8x128xf32>
    %174 = tpu.matmul %171, %173, %cst_130 {dimension_numbers = #tpu.dot_dimension_numbers<[1], [0], [0], [1], [0, 0, 1, 1], [], []>} : vector<8x80xf32>, vector<80x128xf32>, vector<8x128xf32> -> vector<8x128xf32>
    %175 = arith.addf %168, %174 : vector<8x128xf32>
    %c3_131 = arith.constant 3 : index
    %c0_132 = arith.constant 0 : index
    %c0_133 = arith.constant 0 : index
    %176 = vector.load %arg4[%c3_131, %c0_132, %c0_133] : memref<5x8x31xf32, #tpu.memory_space<vmem>>, vector<1x8x31xf32>
    %177 = vector.shape_cast %176 : vector<1x8x31xf32> to vector<8x31xf32>
    %cst_134 = arith.constant dense<0.000000e+00> : vector<8x80xf32>
    %178 = tpu.matmul %177, %155, %cst_134 {dimension_numbers = #tpu.dot_dimension_numbers<[1], [0], [0], [1], [0, 0, 1, 1], [], []>} : vector<8x31xf32>, vector<31x80xf32>, vector<8x80xf32> -> vector<8x80xf32>
    %c3_135 = arith.constant 3 : index
    %c0_136 = arith.constant 0 : index
    %c0_137 = arith.constant 0 : index
    %179 = vector.load %arg8[%c3_135, %c0_136, %c0_137] : memref<5x80x128xf32, #tpu.memory_space<vmem>>, vector<1x80x128xf32>
    %180 = vector.shape_cast %179 : vector<1x80x128xf32> to vector<80x128xf32>
    %cst_138 = arith.constant dense<0.000000e+00> : vector<8x128xf32>
    %181 = tpu.matmul %178, %180, %cst_138 {dimension_numbers = #tpu.dot_dimension_numbers<[1], [0], [0], [1], [0, 0, 1, 1], [], []>} : vector<8x80xf32>, vector<80x128xf32>, vector<8x128xf32> -> vector<8x128xf32>
    %182 = arith.addf %175, %181 : vector<8x128xf32>
    %c4_139 = arith.constant 4 : index
    %c0_140 = arith.constant 0 : index
    %c0_141 = arith.constant 0 : index
    %183 = vector.load %arg4[%c4_139, %c0_140, %c0_141] : memref<5x8x31xf32, #tpu.memory_space<vmem>>, vector<1x8x31xf32>
    %184 = vector.shape_cast %183 : vector<1x8x31xf32> to vector<8x31xf32>
    %cst_142 = arith.constant dense<0.000000e+00> : vector<8x80xf32>
    %185 = tpu.matmul %184, %155, %cst_142 {dimension_numbers = #tpu.dot_dimension_numbers<[1], [0], [0], [1], [0, 0, 1, 1], [], []>} : vector<8x31xf32>, vector<31x80xf32>, vector<8x80xf32> -> vector<8x80xf32>
    %c4_143 = arith.constant 4 : index
    %c0_144 = arith.constant 0 : index
    %c0_145 = arith.constant 0 : index
    %186 = vector.load %arg8[%c4_143, %c0_144, %c0_145] : memref<5x80x128xf32, #tpu.memory_space<vmem>>, vector<1x80x128xf32>
    %187 = vector.shape_cast %186 : vector<1x80x128xf32> to vector<80x128xf32>
    %cst_146 = arith.constant dense<0.000000e+00> : vector<8x128xf32>
    %188 = tpu.matmul %185, %187, %cst_146 {dimension_numbers = #tpu.dot_dimension_numbers<[1], [0], [0], [1], [0, 0, 1, 1], [], []>} : vector<8x80xf32>, vector<80x128xf32>, vector<8x128xf32> -> vector<8x128xf32>
    %189 = arith.addf %182, %188 : vector<8x128xf32>
    %cst_147 = arith.constant 0.000000e+00 : f32
    %190 = vector.broadcast %cst_147 : f32 to vector<8x128xf32>
    %191 = arith.maximumf %189, %190 : vector<8x128xf32>
    %192 = tpu.iota {dimensions = array<i32: 0>} : vector<128x32xi32>
    %c31_i32 = arith.constant 31 : i32
    %193 = vector.broadcast %c31_i32 : i32 to vector<128x32xi32>
    %194 = arith.andi %192, %193 : vector<128x32xi32>
    %195 = tpu.iota {dimensions = array<i32: 1>} : vector<128x32xi32>
    %196 = arith.cmpi eq, %194, %195 : vector<128x32xi32>
    %197 = arith.extui %196 : vector<128x32xi1> to vector<128x32xi32>
    %198 = arith.sitofp %197 : vector<128x32xi32> to vector<128x32xf32>
    %199 = tpu.iota {dimensions = array<i32: 0>} : vector<32x128xi32>
    %200 = tpu.iota {dimensions = array<i32: 1>} : vector<32x128xi32>
    %c31_i32_148 = arith.constant 31 : i32
    %201 = vector.broadcast %c31_i32_148 : i32 to vector<32x128xi32>
    %202 = arith.andi %200, %201 : vector<32x128xi32>
    %203 = arith.cmpi eq, %199, %202 : vector<32x128xi32>
    %204 = arith.extui %203 : vector<32x128xi1> to vector<32x128xi32>
    %205 = arith.sitofp %204 : vector<32x128xi32> to vector<32x128xf32>
    %cst_149 = arith.constant dense<0.000000e+00> : vector<128xf32>
    %206 = vector.multi_reduction <add>, %191, %cst_149 [0] : vector<8x128xf32> to vector<128xf32>
    %207 = vector.shape_cast %206 : vector<128xf32> to vector<1x128xf32>
    %cst_150 = arith.constant dense<0.000000e+00> : vector<1x32xf32>
    %208 = tpu.matmul %207, %198, %cst_150 {dimension_numbers = #tpu.dot_dimension_numbers<[1], [0], [0], [1], [0, 0, 1, 1], [], []>} : vector<1x128xf32>, vector<128x32xf32>, vector<1x32xf32> -> vector<1x32xf32>
    %cst_151 = arith.constant 3.125000e-02 : f32
    %209 = vector.broadcast %cst_151 : f32 to vector<1x32xf32>
    %210 = arith.mulf %208, %209 : vector<1x32xf32>
    %211 = arith.mulf %191, %191 : vector<8x128xf32>
    %cst_152 = arith.constant dense<0.000000e+00> : vector<128xf32>
    %212 = vector.multi_reduction <add>, %211, %cst_152 [0] : vector<8x128xf32> to vector<128xf32>
    %213 = vector.shape_cast %212 : vector<128xf32> to vector<1x128xf32>
    %cst_153 = arith.constant dense<0.000000e+00> : vector<1x32xf32>
    %214 = tpu.matmul %213, %198, %cst_153 {dimension_numbers = #tpu.dot_dimension_numbers<[1], [0], [0], [1], [0, 0, 1, 1], [], []>} : vector<1x128xf32>, vector<128x32xf32>, vector<1x32xf32> -> vector<1x32xf32>
    %cst_154 = arith.constant 3.125000e-02 : f32
    %215 = vector.broadcast %cst_154 : f32 to vector<1x32xf32>
    %216 = arith.mulf %214, %215 : vector<1x32xf32>
    %217 = arith.mulf %210, %210 : vector<1x32xf32>
    %218 = arith.subf %216, %217 : vector<1x32xf32>
    %c0_155 = arith.constant 0 : index
    %c0_156 = arith.constant 0 : index
    %219 = vector.load %arg13[%c0_155, %c0_156] : memref<2x32xf32, #tpu.memory_space<vmem>>, vector<1x32xf32>
    %c1_157 = arith.constant 1 : index
    %c0_158 = arith.constant 0 : index
    %220 = vector.load %arg13[%c1_157, %c0_158] : memref<2x32xf32, #tpu.memory_space<vmem>>, vector<1x32xf32>
    %cst_159 = arith.constant 9.99999974E-6 : f32
    %221 = vector.broadcast %cst_159 : f32 to vector<1x32xf32>
    %222 = arith.addf %218, %221 : vector<1x32xf32>
    %223 = math.rsqrt %222 : vector<1x32xf32>
    %224 = arith.mulf %219, %223 : vector<1x32xf32>
    %225 = arith.mulf %210, %224 : vector<1x32xf32>
    %226 = arith.subf %220, %225 : vector<1x32xf32>
    %cst_160 = arith.constant dense<0.000000e+00> : vector<1x128xf32>
    %227 = tpu.matmul %224, %205, %cst_160 {dimension_numbers = #tpu.dot_dimension_numbers<[1], [0], [0], [1], [0, 0, 1, 1], [], []>} : vector<1x32xf32>, vector<32x128xf32>, vector<1x128xf32> -> vector<1x128xf32>
    %cst_161 = arith.constant dense<0.000000e+00> : vector<1x128xf32>
    %228 = tpu.matmul %226, %205, %cst_161 {dimension_numbers = #tpu.dot_dimension_numbers<[1], [0], [0], [1], [0, 0, 1, 1], [], []>} : vector<1x32xf32>, vector<32x128xf32>, vector<1x128xf32> -> vector<1x128xf32>
    %229 = vector.broadcast %227 : vector<1x128xf32> to vector<8x128xf32>
    %230 = arith.mulf %191, %229 : vector<8x128xf32>
    %231 = vector.broadcast %228 : vector<1x128xf32> to vector<8x128xf32>
    %232 = arith.addf %230, %231 : vector<8x128xf32>
    %c0_162 = arith.constant 0 : index
    %c0_163 = arith.constant 0 : index
    %c0_164 = arith.constant 0 : index
    %233 = vector.load %arg5[%c0_162, %c0_163, %c0_164] : memref<4x3x8xf32, #tpu.memory_space<vmem>>, vector<1x3x8xf32>
    %234 = vector.shape_cast %233 : vector<1x3x8xf32> to vector<3x8xf32>
    %cst_165 = arith.constant dense<0.000000e+00> : vector<3x128xf32>
    %235 = tpu.matmul %234, %232, %cst_165 {dimension_numbers = #tpu.dot_dimension_numbers<[1], [0], [0], [1], [0, 0, 1, 1], [], []>} : vector<3x8xf32>, vector<8x128xf32>, vector<3x128xf32> -> vector<3x128xf32>
    %c0_166 = arith.constant 0 : index
    %c0_167 = arith.constant 0 : index
    %c0_168 = arith.constant 0 : index
    %236 = vector.load %arg9[%c0_166, %c0_167, %c0_168] : memref<4x128x192xf32, #tpu.memory_space<vmem>>, vector<1x128x192xf32>
    %237 = vector.shape_cast %236 : vector<1x128x192xf32> to vector<128x192xf32>
    %cst_169 = arith.constant dense<0.000000e+00> : vector<3x192xf32>
    %238 = tpu.matmul %235, %237, %cst_169 {dimension_numbers = #tpu.dot_dimension_numbers<[1], [0], [0], [1], [0, 0, 1, 1], [], []>} : vector<3x128xf32>, vector<128x192xf32>, vector<3x192xf32> -> vector<3x192xf32>
    %c1_170 = arith.constant 1 : index
    %c0_171 = arith.constant 0 : index
    %c0_172 = arith.constant 0 : index
    %239 = vector.load %arg5[%c1_170, %c0_171, %c0_172] : memref<4x3x8xf32, #tpu.memory_space<vmem>>, vector<1x3x8xf32>
    %240 = vector.shape_cast %239 : vector<1x3x8xf32> to vector<3x8xf32>
    %cst_173 = arith.constant dense<0.000000e+00> : vector<3x128xf32>
    %241 = tpu.matmul %240, %232, %cst_173 {dimension_numbers = #tpu.dot_dimension_numbers<[1], [0], [0], [1], [0, 0, 1, 1], [], []>} : vector<3x8xf32>, vector<8x128xf32>, vector<3x128xf32> -> vector<3x128xf32>
    %c1_174 = arith.constant 1 : index
    %c0_175 = arith.constant 0 : index
    %c0_176 = arith.constant 0 : index
    %242 = vector.load %arg9[%c1_174, %c0_175, %c0_176] : memref<4x128x192xf32, #tpu.memory_space<vmem>>, vector<1x128x192xf32>
    %243 = vector.shape_cast %242 : vector<1x128x192xf32> to vector<128x192xf32>
    %cst_177 = arith.constant dense<0.000000e+00> : vector<3x192xf32>
    %244 = tpu.matmul %241, %243, %cst_177 {dimension_numbers = #tpu.dot_dimension_numbers<[1], [0], [0], [1], [0, 0, 1, 1], [], []>} : vector<3x128xf32>, vector<128x192xf32>, vector<3x192xf32> -> vector<3x192xf32>
    %245 = arith.addf %238, %244 : vector<3x192xf32>
    %c2_178 = arith.constant 2 : index
    %c0_179 = arith.constant 0 : index
    %c0_180 = arith.constant 0 : index
    %246 = vector.load %arg5[%c2_178, %c0_179, %c0_180] : memref<4x3x8xf32, #tpu.memory_space<vmem>>, vector<1x3x8xf32>
    %247 = vector.shape_cast %246 : vector<1x3x8xf32> to vector<3x8xf32>
    %cst_181 = arith.constant dense<0.000000e+00> : vector<3x128xf32>
    %248 = tpu.matmul %247, %232, %cst_181 {dimension_numbers = #tpu.dot_dimension_numbers<[1], [0], [0], [1], [0, 0, 1, 1], [], []>} : vector<3x8xf32>, vector<8x128xf32>, vector<3x128xf32> -> vector<3x128xf32>
    %c2_182 = arith.constant 2 : index
    %c0_183 = arith.constant 0 : index
    %c0_184 = arith.constant 0 : index
    %249 = vector.load %arg9[%c2_182, %c0_183, %c0_184] : memref<4x128x192xf32, #tpu.memory_space<vmem>>, vector<1x128x192xf32>
    %250 = vector.shape_cast %249 : vector<1x128x192xf32> to vector<128x192xf32>
    %cst_185 = arith.constant dense<0.000000e+00> : vector<3x192xf32>
    %251 = tpu.matmul %248, %250, %cst_185 {dimension_numbers = #tpu.dot_dimension_numbers<[1], [0], [0], [1], [0, 0, 1, 1], [], []>} : vector<3x128xf32>, vector<128x192xf32>, vector<3x192xf32> -> vector<3x192xf32>
    %252 = arith.addf %245, %251 : vector<3x192xf32>
    %c3_186 = arith.constant 3 : index
    %c0_187 = arith.constant 0 : index
    %c0_188 = arith.constant 0 : index
    %253 = vector.load %arg5[%c3_186, %c0_187, %c0_188] : memref<4x3x8xf32, #tpu.memory_space<vmem>>, vector<1x3x8xf32>
    %254 = vector.shape_cast %253 : vector<1x3x8xf32> to vector<3x8xf32>
    %cst_189 = arith.constant dense<0.000000e+00> : vector<3x128xf32>
    %255 = tpu.matmul %254, %232, %cst_189 {dimension_numbers = #tpu.dot_dimension_numbers<[1], [0], [0], [1], [0, 0, 1, 1], [], []>} : vector<3x8xf32>, vector<8x128xf32>, vector<3x128xf32> -> vector<3x128xf32>
    %c3_190 = arith.constant 3 : index
    %c0_191 = arith.constant 0 : index
    %c0_192 = arith.constant 0 : index
    %256 = vector.load %arg9[%c3_190, %c0_191, %c0_192] : memref<4x128x192xf32, #tpu.memory_space<vmem>>, vector<1x128x192xf32>
    %257 = vector.shape_cast %256 : vector<1x128x192xf32> to vector<128x192xf32>
    %cst_193 = arith.constant dense<0.000000e+00> : vector<3x192xf32>
    %258 = tpu.matmul %255, %257, %cst_193 {dimension_numbers = #tpu.dot_dimension_numbers<[1], [0], [0], [1], [0, 0, 1, 1], [], []>} : vector<3x128xf32>, vector<128x192xf32>, vector<3x192xf32> -> vector<3x192xf32>
    %259 = arith.addf %252, %258 : vector<3x192xf32>
    %cst_194 = arith.constant 0.000000e+00 : f32
    %260 = vector.broadcast %cst_194 : f32 to vector<3x192xf32>
    %261 = arith.maximumf %259, %260 : vector<3x192xf32>
    %262 = tpu.iota {dimensions = array<i32: 0>} : vector<192x64xi32>
    %c63_i32 = arith.constant 63 : i32
    %263 = vector.broadcast %c63_i32 : i32 to vector<192x64xi32>
    %264 = arith.andi %262, %263 : vector<192x64xi32>
    %265 = tpu.iota {dimensions = array<i32: 1>} : vector<192x64xi32>
    %266 = arith.cmpi eq, %264, %265 : vector<192x64xi32>
    %267 = arith.extui %266 : vector<192x64xi1> to vector<192x64xi32>
    %268 = arith.sitofp %267 : vector<192x64xi32> to vector<192x64xf32>
    %269 = tpu.iota {dimensions = array<i32: 0>} : vector<64x192xi32>
    %270 = tpu.iota {dimensions = array<i32: 1>} : vector<64x192xi32>
    %c63_i32_195 = arith.constant 63 : i32
    %271 = vector.broadcast %c63_i32_195 : i32 to vector<64x192xi32>
    %272 = arith.andi %270, %271 : vector<64x192xi32>
    %273 = arith.cmpi eq, %269, %272 : vector<64x192xi32>
    %274 = arith.extui %273 : vector<64x192xi1> to vector<64x192xi32>
    %275 = arith.sitofp %274 : vector<64x192xi32> to vector<64x192xf32>
    %cst_196 = arith.constant dense<0.000000e+00> : vector<192xf32>
    %276 = vector.multi_reduction <add>, %261, %cst_196 [0] : vector<3x192xf32> to vector<192xf32>
    %277 = vector.shape_cast %276 : vector<192xf32> to vector<1x192xf32>
    %cst_197 = arith.constant dense<0.000000e+00> : vector<1x64xf32>
    %278 = tpu.matmul %277, %268, %cst_197 {dimension_numbers = #tpu.dot_dimension_numbers<[1], [0], [0], [1], [0, 0, 1, 1], [], []>} : vector<1x192xf32>, vector<192x64xf32>, vector<1x64xf32> -> vector<1x64xf32>
    %cst_198 = arith.constant 0.111111112 : f32
    %279 = vector.broadcast %cst_198 : f32 to vector<1x64xf32>
    %280 = arith.mulf %278, %279 : vector<1x64xf32>
    %281 = arith.mulf %261, %261 : vector<3x192xf32>
    %cst_199 = arith.constant dense<0.000000e+00> : vector<192xf32>
    %282 = vector.multi_reduction <add>, %281, %cst_199 [0] : vector<3x192xf32> to vector<192xf32>
    %283 = vector.shape_cast %282 : vector<192xf32> to vector<1x192xf32>
    %cst_200 = arith.constant dense<0.000000e+00> : vector<1x64xf32>
    %284 = tpu.matmul %283, %268, %cst_200 {dimension_numbers = #tpu.dot_dimension_numbers<[1], [0], [0], [1], [0, 0, 1, 1], [], []>} : vector<1x192xf32>, vector<192x64xf32>, vector<1x64xf32> -> vector<1x64xf32>
    %cst_201 = arith.constant 0.111111112 : f32
    %285 = vector.broadcast %cst_201 : f32 to vector<1x64xf32>
    %286 = arith.mulf %284, %285 : vector<1x64xf32>
    %287 = arith.mulf %280, %280 : vector<1x64xf32>
    %288 = arith.subf %286, %287 : vector<1x64xf32>
    %c0_202 = arith.constant 0 : index
    %c0_203 = arith.constant 0 : index
    %289 = vector.load %arg14[%c0_202, %c0_203] : memref<2x64xf32, #tpu.memory_space<vmem>>, vector<1x64xf32>
    %c1_204 = arith.constant 1 : index
    %c0_205 = arith.constant 0 : index
    %290 = vector.load %arg14[%c1_204, %c0_205] : memref<2x64xf32, #tpu.memory_space<vmem>>, vector<1x64xf32>
    %cst_206 = arith.constant 9.99999974E-6 : f32
    %291 = vector.broadcast %cst_206 : f32 to vector<1x64xf32>
    %292 = arith.addf %288, %291 : vector<1x64xf32>
    %293 = math.rsqrt %292 : vector<1x64xf32>
    %294 = arith.mulf %289, %293 : vector<1x64xf32>
    %295 = arith.mulf %280, %294 : vector<1x64xf32>
    %296 = arith.subf %290, %295 : vector<1x64xf32>
    %cst_207 = arith.constant dense<0.000000e+00> : vector<1x192xf32>
    %297 = tpu.matmul %294, %275, %cst_207 {dimension_numbers = #tpu.dot_dimension_numbers<[1], [0], [0], [1], [0, 0, 1, 1], [], []>} : vector<1x64xf32>, vector<64x192xf32>, vector<1x192xf32> -> vector<1x192xf32>
    %cst_208 = arith.constant dense<0.000000e+00> : vector<1x192xf32>
    %298 = tpu.matmul %296, %275, %cst_208 {dimension_numbers = #tpu.dot_dimension_numbers<[1], [0], [0], [1], [0, 0, 1, 1], [], []>} : vector<1x64xf32>, vector<64x192xf32>, vector<1x192xf32> -> vector<1x192xf32>
    %299 = vector.broadcast %297 : vector<1x192xf32> to vector<3x192xf32>
    %300 = arith.mulf %261, %299 : vector<3x192xf32>
    %301 = vector.broadcast %298 : vector<1x192xf32> to vector<3x192xf32>
    %302 = arith.addf %300, %301 : vector<3x192xf32>
    %303 = vector.extract_strided_slice %302 {offsets = [0, 0], sizes = [1, 192], strides = [1, 1]} : vector<3x192xf32> to vector<1x192xf32>
    %c0_209 = arith.constant 0 : index
    %c0_210 = arith.constant 0 : index
    %c0_211 = arith.constant 0 : index
    %304 = vector.load %arg10[%c0_209, %c0_210, %c0_211] : memref<3x192x32xf32, #tpu.memory_space<vmem>>, vector<1x192x32xf32>
    %305 = vector.shape_cast %304 : vector<1x192x32xf32> to vector<192x32xf32>
    %cst_212 = arith.constant dense<0.000000e+00> : vector<1x32xf32>
    %306 = tpu.matmul %303, %305, %cst_212 {dimension_numbers = #tpu.dot_dimension_numbers<[1], [0], [0], [1], [0, 0, 1, 1], [], []>} : vector<1x192xf32>, vector<192x32xf32>, vector<1x32xf32> -> vector<1x32xf32>
    %307 = vector.extract_strided_slice %302 {offsets = [1, 0], sizes = [1, 192], strides = [1, 1]} : vector<3x192xf32> to vector<1x192xf32>
    %c1_213 = arith.constant 1 : index
    %c0_214 = arith.constant 0 : index
    %c0_215 = arith.constant 0 : index
    %308 = vector.load %arg10[%c1_213, %c0_214, %c0_215] : memref<3x192x32xf32, #tpu.memory_space<vmem>>, vector<1x192x32xf32>
    %309 = vector.shape_cast %308 : vector<1x192x32xf32> to vector<192x32xf32>
    %cst_216 = arith.constant dense<0.000000e+00> : vector<1x32xf32>
    %310 = tpu.matmul %307, %309, %cst_216 {dimension_numbers = #tpu.dot_dimension_numbers<[1], [0], [0], [1], [0, 0, 1, 1], [], []>} : vector<1x192xf32>, vector<192x32xf32>, vector<1x32xf32> -> vector<1x32xf32>
    %311 = arith.addf %306, %310 : vector<1x32xf32>
    %312 = vector.extract_strided_slice %302 {offsets = [2, 0], sizes = [1, 192], strides = [1, 1]} : vector<3x192xf32> to vector<1x192xf32>
    %c2_217 = arith.constant 2 : index
    %c0_218 = arith.constant 0 : index
    %c0_219 = arith.constant 0 : index
    %313 = vector.load %arg10[%c2_217, %c0_218, %c0_219] : memref<3x192x32xf32, #tpu.memory_space<vmem>>, vector<1x192x32xf32>
    %314 = vector.shape_cast %313 : vector<1x192x32xf32> to vector<192x32xf32>
    %cst_220 = arith.constant dense<0.000000e+00> : vector<1x32xf32>
    %315 = tpu.matmul %312, %314, %cst_220 {dimension_numbers = #tpu.dot_dimension_numbers<[1], [0], [0], [1], [0, 0, 1, 1], [], []>} : vector<1x192xf32>, vector<192x32xf32>, vector<1x32xf32> -> vector<1x32xf32>
    %316 = arith.addf %311, %315 : vector<1x32xf32>
    %c0_221 = arith.constant 0 : index
    %c0_222 = arith.constant 0 : index
    %317 = vector.load %arg15[%c0_221, %c0_222] : memref<32x32xf32, #tpu.memory_space<vmem>>, vector<32x32xf32>
    %cst_223 = arith.constant dense<0.000000e+00> : vector<1x32xf32>
    %318 = tpu.matmul %316, %317, %cst_223 {dimension_numbers = #tpu.dot_dimension_numbers<[1], [0], [0], [1], [0, 0, 1, 1], [], []>} : vector<1x32xf32>, vector<32x32xf32>, vector<1x32xf32> -> vector<1x32xf32>
    %c0_224 = arith.constant 0 : index
    %c0_225 = arith.constant 0 : index
    %319 = vector.load %arg16[%c0_224, %c0_225] : memref<1x32xf32, #tpu.memory_space<vmem>>, vector<1x32xf32>
    %320 = arith.addf %318, %319 : vector<1x32xf32>
    %c0_226 = arith.constant 0 : index
    %c0_227 = arith.constant 0 : index
    %c0_228 = arith.constant 0 : index
    %321 = vector.load %arg17[%c0_226, %c0_227, %c0_228] : memref<1x1x32xf32, #tpu.memory_space<vmem>>, vector<1x1x32xf32>
    %322 = vector.shape_cast %321 : vector<1x1x32xf32> to vector<1x32xf32>
    %323 = vector.shape_cast %320 : vector<1x32xf32> to vector<1x1x32xf32>
    tpu.vector_store %arg17[%c0_226, %c0_227, %c0_228], %323 {strides = array<i32>} : memref<1x1x32xf32, #tpu.memory_space<vmem>>, vector<1x1x32xf32>,
    return
  }
  func.func @transform_0(%arg0: i32) -> (i32, i32, i32) {
    %c0_i32 = arith.constant 0 : i32
    %c0_i32_0 = arith.constant 0 : i32
    %c0_i32_1 = arith.constant 0 : i32
    return %arg0, %c0_i32, %c0_i32_0 : i32, i32, i32
  }
  func.func @transform_1(%arg0: i32) -> (i32, i32, i32) {
    %c0_i32 = arith.constant 0 : i32
    %c0_i32_0 = arith.constant 0 : i32
    %c0_i32_1 = arith.constant 0 : i32
    %c0_i32_2 = arith.constant 0 : i32
    return %c0_i32, %c0_i32_0, %c0_i32_1 : i32, i32, i32
  }
  func.func @transform_2(%arg0: i32) -> (i32, i32, i32) {
    %c0_i32 = arith.constant 0 : i32
    %c0_i32_0 = arith.constant 0 : i32
    %c0_i32_1 = arith.constant 0 : i32
    %c0_i32_2 = arith.constant 0 : i32
    return %c0_i32, %c0_i32_0, %c0_i32_1 : i32, i32, i32
  }
  func.func @transform_3(%arg0: i32) -> (i32, i32, i32) {
    %c0_i32 = arith.constant 0 : i32
    %c0_i32_0 = arith.constant 0 : i32
    %c0_i32_1 = arith.constant 0 : i32
    %c0_i32_2 = arith.constant 0 : i32
    return %c0_i32, %c0_i32_0, %c0_i32_1 : i32, i32, i32
  }
  func.func @transform_4(%arg0: i32) -> (i32, i32, i32) {
    %c0_i32 = arith.constant 0 : i32
    %c0_i32_0 = arith.constant 0 : i32
    %c0_i32_1 = arith.constant 0 : i32
    %c0_i32_2 = arith.constant 0 : i32
    return %c0_i32, %c0_i32_0, %c0_i32_1 : i32, i32, i32
  }
  func.func @transform_5(%arg0: i32) -> (i32, i32, i32) {
    %c0_i32 = arith.constant 0 : i32
    %c0_i32_0 = arith.constant 0 : i32
    %c0_i32_1 = arith.constant 0 : i32
    %c0_i32_2 = arith.constant 0 : i32
    return %c0_i32, %c0_i32_0, %c0_i32_1 : i32, i32, i32
  }
  func.func @transform_6(%arg0: i32) -> (i32, i32, i32) {
    %c0_i32 = arith.constant 0 : i32
    %c0_i32_0 = arith.constant 0 : i32
    %c0_i32_1 = arith.constant 0 : i32
    %c0_i32_2 = arith.constant 0 : i32
    return %c0_i32, %c0_i32_0, %c0_i32_1 : i32, i32, i32
  }
  func.func @transform_7(%arg0: i32) -> (i32, i32, i32) {
    %c0_i32 = arith.constant 0 : i32
    %c0_i32_0 = arith.constant 0 : i32
    %c0_i32_1 = arith.constant 0 : i32
    %c0_i32_2 = arith.constant 0 : i32
    return %c0_i32, %c0_i32_0, %c0_i32_1 : i32, i32, i32
  }
  func.func @transform_8(%arg0: i32) -> (i32, i32, i32) {
    %c0_i32 = arith.constant 0 : i32
    %c0_i32_0 = arith.constant 0 : i32
    %c0_i32_1 = arith.constant 0 : i32
    %c0_i32_2 = arith.constant 0 : i32
    return %c0_i32, %c0_i32_0, %c0_i32_1 : i32, i32, i32
  }
  func.func @transform_9(%arg0: i32) -> (i32, i32, i32) {
    %c0_i32 = arith.constant 0 : i32
    %c0_i32_0 = arith.constant 0 : i32
    %c0_i32_1 = arith.constant 0 : i32
    %c0_i32_2 = arith.constant 0 : i32
    return %c0_i32, %c0_i32_0, %c0_i32_1 : i32, i32, i32
  }
  func.func @transform_10(%arg0: i32) -> (i32, i32) {
    %c0_i32 = arith.constant 0 : i32
    %c0_i32_0 = arith.constant 0 : i32
    %c0_i32_1 = arith.constant 0 : i32
    return %c0_i32, %c0_i32_0 : i32, i32
  }
  func.func @transform_11(%arg0: i32) -> (i32, i32) {
    %c0_i32 = arith.constant 0 : i32
    %c0_i32_0 = arith.constant 0 : i32
    %c0_i32_1 = arith.constant 0 : i32
    return %c0_i32, %c0_i32_0 : i32, i32
  }
  func.func @transform_12(%arg0: i32) -> (i32, i32) {
    %c0_i32 = arith.constant 0 : i32
    %c0_i32_0 = arith.constant 0 : i32
    %c0_i32_1 = arith.constant 0 : i32
    return %c0_i32, %c0_i32_0 : i32, i32
  }
  func.func @transform_13(%arg0: i32) -> (i32, i32) {
    %c0_i32 = arith.constant 0 : i32
    %c0_i32_0 = arith.constant 0 : i32
    %c0_i32_1 = arith.constant 0 : i32
    return %c0_i32, %c0_i32_0 : i32, i32
  }
  func.func @transform_14(%arg0: i32) -> (i32, i32) {
    %c0_i32 = arith.constant 0 : i32
    %c0_i32_0 = arith.constant 0 : i32
    %c0_i32_1 = arith.constant 0 : i32
    return %c0_i32, %c0_i32_0 : i32, i32
  }
  func.func @transform_15(%arg0: i32) -> (i32, i32) {
    %c0_i32 = arith.constant 0 : i32
    %c0_i32_0 = arith.constant 0 : i32
    %c0_i32_1 = arith.constant 0 : i32
    return %c0_i32, %c0_i32_0 : i32, i32
  }
  func.func @transform_16(%arg0: i32) -> (i32, i32, i32) {
    %c0_i32 = arith.constant 0 : i32
    %c0_i32_0 = arith.constant 0 : i32
    %c0_i32_1 = arith.constant 0 : i32
    return %arg0, %c0_i32, %c0_i32_0 : i32, i32, i32
  }
}

</mosaic_0001>

<llo_original>
// kernel: netE_forward.1
$region0: #{netE_forward.1}
  #allocation0 [shape = 'u32[]', space=smem, size = 0x4, offset = 0x4, fixed_abs, tag = 'smem constant byte address 0x4 - core index']
  #allocation1 [shape = 'u32[144,128]{1,0:T(1,128)}', space=vmem, size = 0x12000, scoped, tag = 'internal scratch']
  %s0 = inlined_call_operand.vmem [shape: f32[2,129,16], index: 0, kind: input, shape index: {}]
  %s1 = inlined_call_operand.vmem [shape: f32[5,63,129], index: 1, kind: input, shape index: {}]
  %s2 = inlined_call_operand.vmem [shape: f32[5,31,63], index: 2, kind: input, shape index: {}]
  %s3 = inlined_call_operand.vmem [shape: f32[5,8,31], index: 3, kind: input, shape index: {}]
  %s4 = inlined_call_operand.vmem [shape: f32[4,3,8], index: 4, kind: input, shape index: {}]
  %s5 = inlined_call_operand.vmem [shape: f32[5,16,64], index: 5, kind: input, shape index: {}]
  %s6 = inlined_call_operand.vmem [shape: f32[5,64,80], index: 6, kind: input, shape index: {}]
  %s7 = inlined_call_operand.vmem [shape: f32[5,80,128], index: 7, kind: input, shape index: {}]
  %s8 = inlined_call_operand.vmem [shape: f32[4,128,192], index: 8, kind: input, shape index: {}]
  %s9 = inlined_call_operand.vmem [shape: f32[3,192,32], index: 9, kind: input, shape index: {}]
  %s10 = inlined_call_operand.vmem [shape: f32[2,8], index: 10, kind: input, shape index: {}]
  %s11 = inlined_call_operand.vmem [shape: f32[2,16], index: 11, kind: input, shape index: {}]
  %s12 = inlined_call_operand.vmem [shape: f32[2,32], index: 12, kind: input, shape index: {}]
  %s13 = inlined_call_operand.vmem [shape: f32[2,64], index: 13, kind: input, shape index: {}]
  %s14 = inlined_call_operand.vmem [shape: f32[32,32], index: 14, kind: input, shape index: {}]
  %s15 = inlined_call_operand.vmem [shape: f32[1,32], index: 15, kind: input, shape index: {}]
  %s16 = inlined_call_operand.hbm [shape: f32[2,1,32], index: 16, kind: output, shape index: {}]
  %s17 = sld [smem:[#allocation0]]
  $region97: #{netE_forward.1} parent=0
    _
  %s19 = ssub.s32 1, %s17
  %s20 = scalar_select 0, %s19, %s17
  $region1: #{netE_forward.1} parent=0
    #allocation2 [shape = 'u8[1024]{0}', space=vmem, size = 0x400, scoped, tag = 'output window, operand 0']
    #allocation3 [shape = 's32[2]{0}', space=sflag, size = 0x8, scoped, tag = 'scoped memory for netE_forward.1']
    %21 = vsyncpa [#allocation3], 0
    %s22 = scalar_lea.sflag [#allocation3], 1
    %23 = vsyncpa %s22, 0
    loop: start=0, step=1, limit=4
    $region2: #{netE_forward.1} parent=1 // loop_pre_header
      _
    $region3: #{netE_forward.1} parent=1 // loop_header
      %s25 = sphi 0, %s29
      %p26 = scmp.ge.s32.totalorder %s25, 4
      %s35 = sphi 0, %s37
      %s38 = sphi 0, %s35
      %s39 = sphi 0, %s38
      %s55 = sphi 0, %s39
      %s59 = sphi 0, %s59
      %s61 = sphi 0, %s59
      %s62 = sphi 0, %s61
      %s76 = sphi 0, %s62
      %s80 = sphi 0, %s80
      %s82 = sphi 0, %s80
      %s83 = sphi 0, %s82
      %s97 = sphi 0, %s83
      %s101 = sphi 0, %s101
      %s103 = sphi 0, %s101
      %s104 = sphi 0, %s103
      %s118 = sphi 0, %s104
      %s122 = sphi 0, %s122
      %s124 = sphi 0, %s122
      %s125 = sphi 0, %s124
      %s139 = sphi 0, %s125
      %s143 = sphi 0, %s143
      %s145 = sphi 0, %s143
      %s146 = sphi 0, %s145
      %s160 = sphi 0, %s146
      %s164 = sphi 0, %s164
      %s166 = sphi 0, %s164
      %s167 = sphi 0, %s166
      %s181 = sphi 0, %s167
      %s185 = sphi 0, %s185
      %s187 = sphi 0, %s185
      %s188 = sphi 0, %s187
      %s202 = sphi 0, %s188
      %s206 = sphi 0, %s206
      %s208 = sphi 0, %s206
      %s209 = sphi 0, %s208
      %s223 = sphi 0, %s209
      %s227 = sphi 0, %s227
      %s229 = sphi 0, %s227
      %s230 = sphi 0, %s229
      %s244 = sphi 0, %s230
      %s248 = sphi 0, %s248
      %s250 = sphi 0, %s248
      %s251 = sphi 0, %s250
      %s265 = sphi 0, %s251
      %s269 = sphi 0, %s269
      %s271 = sphi 0, %s269
      %s272 = sphi 0, %s271
      %s286 = sphi 0, %s272
      %s290 = sphi 0, %s290
      %s292 = sphi 0, %s290
      %s293 = sphi 0, %s292
      %s307 = sphi 0, %s293
      %s311 = sphi 0, %s311
      %s313 = sphi 0, %s311
      %s314 = sphi 0, %s313
      %s328 = sphi 0, %s314
      %s332 = sphi 0, %s332
      %s334 = sphi 0, %s332
      %s335 = sphi 0, %s334
      %s349 = sphi 0, %s335
      %s353 = sphi 0, %s353
      %s355 = sphi 0, %s353
      %s356 = sphi 0, %s355
      %s370 = sphi 0, %s356
      %s376 = sphi 0, %s378
      %s379 = sphi 0, %s376
      %s380 = sphi 0, %s379
      %s396 = sphi 0, %s380
    $region4: #{netE_forward.1} parent=1 // loop_header_branch
      %28 = sbr.rel (%p26) target = $region8
    $region5: #{netE_forward.1} parent=1 // loop_body
      %s30 = ssub.s32 %s25, 1
      %s31 = ssub.s32 %s25, 2
      %s32 = sadd.s32 %s25, 1
      %s33 = ssub.s32 %s25, %s32
      %p34 = scmp.eq.s32.totalorder %s33, 0
      %s36 = sadd.s32 %s35, 1
      %s37 = scalar_select %p34, %s35, %s36
      %p40 = pneg %p34
      %p41 = scmp.eq.s32.totalorder %s25, 1
      %p42 = por %p40, %p41
      %p43 = scmp.ne.s32.totalorder %s35, %s38
      %p44 = scmp.eq.s32.totalorder %s25, 0
      %p45 = por %p43, %p44
      %p46 = scmp.ne.s32.totalorder %s35, %s38
      %p47 = scmp.eq.s32.totalorder %s30, 1
      %p48 = por %p46, %p47
      %p49 = scmp.ne.s32.totalorder %s38, %s39
      %p50 = scmp.eq.s32.totalorder %s30, 0
      %p51 = por %p49, %p50
      %p52 = scmp.ne.s32.totalorder %s38, %s39
      %p53 = scmp.eq.s32.totalorder %s31, 1
      %p54 = por %p52, %p53
      %p56 = scmp.ne.s32.totalorder %s39, %s55
      %p57 = scmp.eq.s32.totalorder %s31, 0
      %p58 = por %p56, %p57
      %s60 = sadd.s32 %s59, 1
      %p63 = scmp.eq.s32.totalorder %s25, 1
      %p64 = scmp.ne.s32.totalorder %s59, %s61
      %p65 = scmp.eq.s32.totalorder %s25, 0
      %p66 = por %p64, %p65
      %p67 = scmp.ne.s32.totalorder %s59, %s61
      %p68 = scmp.eq.s32.totalorder %s30, 1
      %p69 = por %p67, %p68
      %p70 = scmp.ne.s32.totalorder %s61, %s62
      %p71 = scmp.eq.s32.totalorder %s30, 0
      %p72 = por %p70, %p71
      %p73 = scmp.ne.s32.totalorder %s61, %s62
      %p74 = scmp.eq.s32.totalorder %s31, 1
      %p75 = por %p73, %p74
      %p77 = scmp.ne.s32.totalorder %s62, %s76
      %p78 = scmp.eq.s32.totalorder %s31, 0
      %p79 = por %p77, %p78
      %s81 = sadd.s32 %s80, 1
      %p84 = scmp.eq.s32.totalorder %s25, 1
      %p85 = scmp.ne.s32.totalorder %s80, %s82
      %p86 = scmp.eq.s32.totalorder %s25, 0
      %p87 = por %p85, %p86
      %p88 = scmp.ne.s32.totalorder %s80, %s82
      %p89 = scmp.eq.s32.totalorder %s30, 1
      %p90 = por %p88, %p89
      %p91 = scmp.ne.s32.totalorder %s82, %s83
      %p92 = scmp.eq.s32.totalorder %s30, 0
      %p93 = por %p91, %p92
      %p94 = scmp.ne.s32.totalorder %s82, %s83
      %p95 = scmp.eq.s32.totalorder %s31, 1
      %p96 = por %p94, %p95
      %p98 = scmp.ne.s32.totalorder %s83, %s97
      %p99 = scmp.eq.s32.totalorder %s31, 0
      %p100 = por %p98, %p99
      %s102 = sadd.s32 %s101, 1
      %p105 = scmp.eq.s32.totalorder %s25, 1
      %p106 = scmp.ne.s32.totalorder %s101, %s103
      %p107 = scmp.eq.s32.totalorder %s25, 0
      %p108 = por %p106, %p107
      %p109 = scmp.ne.s32.totalorder %s101, %s103
      %p110 = scmp.eq.s32.totalorder %s30, 1
      %p111 = por %p109, %p110
      %p112 = scmp.ne.s32.totalorder %s103, %s104
      %p113 = scmp.eq.s32.totalorder %s30, 0
      %p114 = por %p112, %p113
      %p115 = scmp.ne.s32.totalorder %s103, %s104
      %p116 = scmp.eq.s32.totalorder %s31, 1
      %p117 = por %p115, %p116
      %p119 = scmp.ne.s32.totalorder %s104, %s118
      %p120 = scmp.eq.s32.totalorder %s31, 0
      %p121 = por %p119, %p120
      %s123 = sadd.s32 %s122, 1
      %p126 = scmp.eq.s32.totalorder %s25, 1
      %p127 = scmp.ne.s32.totalorder %s122, %s124
      %p128 = scmp.eq.s32.totalorder %s25, 0
      %p129 = por %p127, %p128
      %p130 = scmp.ne.s32.totalorder %s122, %s124
      %p131 = scmp.eq.s32.totalorder %s30, 1
      %p132 = por %p130, %p131
      %p133 = scmp.ne.s32.totalorder %s124, %s125
      %p134 = scmp.eq.s32.totalorder %s30, 0
      %p135 = por %p133, %p134
      %p136 = scmp.ne.s32.totalorder %s124, %s125
      %p137 = scmp.eq.s32.totalorder %s31, 1
      %p138 = por %p136, %p137
      %p140 = scmp.ne.s32.totalorder %s125, %s139
      %p141 = scmp.eq.s32.totalorder %s31, 0
      %p142 = por %p140, %p141
      %s144 = sadd.s32 %s143, 1
      %p147 = scmp.eq.s32.totalorder %s25, 1
      %p148 = scmp.ne.s32.totalorder %s143, %s145
      %p149 = scmp.eq.s32.totalorder %s25, 0
      %p150 = por %p148, %p149
      %p151 = scmp.ne.s32.totalorder %s143, %s145
      %p152 = scmp.eq.s32.totalorder %s30, 1
      %p153 = por %p151, %p152
      %p154 = scmp.ne.s32.totalorder %s145, %s146
      %p155 = scmp.eq.s32.totalorder %s30, 0
      %p156 = por %p154, %p155
      %p157 = scmp.ne.s32.totalorder %s145, %s146
      %p158 = scmp.eq.s32.totalorder %s31, 1
      %p159 = por %p157, %p158
      %p161 = scmp.ne.s32.totalorder %s146, %s160
      %p162 = scmp.eq.s32.totalorder %s31, 0
      %p163 = por %p161, %p162
      %s165 = sadd.s32 %s164, 1
      %p168 = scmp.eq.s32.totalorder %s25, 1
      %p169 = scmp.ne.s32.totalorder %s164, %s166
      %p170 = scmp.eq.s32.totalorder %s25, 0
      %p171 = por %p169, %p170
      %p172 = scmp.ne.s32.totalorder %s164, %s166
      %p173 = scmp.eq.s32.totalorder %s30, 1
      %p174 = por %p172, %p173
      %p175 = scmp.ne.s32.totalorder %s166, %s167
      %p176 = scmp.eq.s32.totalorder %s30, 0
      %p177 = por %p175, %p176
      %p178 = scmp.ne.s32.totalorder %s166, %s167
      %p179 = scmp.eq.s32.totalorder %s31, 1
      %p180 = por %p178, %p179
      %p182 = scmp.ne.s32.totalorder %s167, %s181
      %p183 = scmp.eq.s32.totalorder %s31, 0
      %p184 = por %p182, %p183
      %s186 = sadd.s32 %s185, 1
      %p189 = scmp.eq.s32.totalorder %s25, 1
      %p190 = scmp.ne.s32.totalorder %s185, %s187
      %p191 = scmp.eq.s32.totalorder %s25, 0
      %p192 = por %p190, %p191
      %p193 = scmp.ne.s32.totalorder %s185, %s187
      %p194 = scmp.eq.s32.totalorder %s30, 1
      %p195 = por %p193, %p194
      %p196 = scmp.ne.s32.totalorder %s187, %s188
      %p197 = scmp.eq.s32.totalorder %s30, 0
      %p198 = por %p196, %p197
      %p199 = scmp.ne.s32.totalorder %s187, %s188
      %p200 = scmp.eq.s32.totalorder %s31, 1
      %p201 = por %p199, %p200
      %p203 = scmp.ne.s32.totalorder %s188, %s202
      %p204 = scmp.eq.s32.totalorder %s31, 0
      %p205 = por %p203, %p204
      %s207 = sadd.s32 %s206, 1
      %p210 = scmp.eq.s32.totalorder %s25, 1
      %p211 = scmp.ne.s32.totalorder %s206, %s208
      %p212 = scmp.eq.s32.totalorder %s25, 0
      %p213 = por %p211, %p212
      %p214 = scmp.ne.s32.totalorder %s206, %s208
      %p215 = scmp.eq.s32.totalorder %s30, 1
      %p216 = por %p214, %p215
      %p217 = scmp.ne.s32.totalorder %s208, %s209
      %p218 = scmp.eq.s32.totalorder %s30, 0
      %p219 = por %p217, %p218
      %p220 = scmp.ne.s32.totalorder %s208, %s209
      %p221 = scmp.eq.s32.totalorder %s31, 1
      %p222 = por %p220, %p221
      %p224 = scmp.ne.s32.totalorder %s209, %s223
      %p225 = scmp.eq.s32.totalorder %s31, 0
      %p226 = por %p224, %p225
      %s228 = sadd.s32 %s227, 1
      %p231 = scmp.eq.s32.totalorder %s25, 1
      %p232 = scmp.ne.s32.totalorder %s227, %s229
      %p233 = scmp.eq.s32.totalorder %s25, 0
      %p234 = por %p232, %p233
      %p235 = scmp.ne.s32.totalorder %s227, %s229
      %p236 = scmp.eq.s32.totalorder %s30, 1
      %p237 = por %p235, %p236
      %p238 = scmp.ne.s32.totalorder %s229, %s230
      %p239 = scmp.eq.s32.totalorder %s30, 0
      %p240 = por %p238, %p239
      %p241 = scmp.ne.s32.totalorder %s229, %s230
      %p242 = scmp.eq.s32.totalorder %s31, 1
      %p243 = por %p241, %p242
      %p245 = scmp.ne.s32.totalorder %s230, %s244
      %p246 = scmp.eq.s32.totalorder %s31, 0
      %p247 = por %p245, %p246
      %s249 = sadd.s32 %s248, 1
      %p252 = scmp.eq.s32.totalorder %s25, 1
      %p253 = scmp.ne.s32.totalorder %s248, %s250
      %p254 = scmp.eq.s32.totalorder %s25, 0
      %p255 = por %p253, %p254
      %p256 = scmp.ne.s32.totalorder %s248, %s250
      %p257 = scmp.eq.s32.totalorder %s30, 1
      %p258 = por %p256, %p257
      %p259 = scmp.ne.s32.totalorder %s250, %s251
      %p260 = scmp.eq.s32.totalorder %s30, 0
      %p261 = por %p259, %p260
      %p262 = scmp.ne.s32.totalorder %s250, %s251
      %p263 = scmp.eq.s32.totalorder %s31, 1
      %p264 = por %p262, %p263
      %p266 = scmp.ne.s32.totalorder %s251, %s265
      %p267 = scmp.eq.s32.totalorder %s31, 0
      %p268 = por %p266, %p267
      %s270 = sadd.s32 %s269, 1
      %p273 = scmp.eq.s32.totalorder %s25, 1
      %p274 = scmp.ne.s32.totalorder %s269, %s271
      %p275 = scmp.eq.s32.totalorder %s25, 0
      %p276 = por %p274, %p275
      %p277 = scmp.ne.s32.totalorder %s269, %s271
      %p278 = scmp.eq.s32.totalorder %s30, 1
      %p279 = por %p277, %p278
      %p280 = scmp.ne.s32.totalorder %s271, %s272
      %p281 = scmp.eq.s32.totalorder %s30, 0
      %p282 = por %p280, %p281
      %p283 = scmp.ne.s32.totalorder %s271, %s272
      %p284 = scmp.eq.s32.totalorder %s31, 1
      %p285 = por %p283, %p284
      %p287 = scmp.ne.s32.totalorder %s272, %s286
      %p288 = scmp.eq.s32.totalorder %s31, 0
      %p289 = por %p287, %p288
      %s291 = sadd.s32 %s290, 1
      %p294 = scmp.eq.s32.totalorder %s25, 1
      %p295 = scmp.ne.s32.totalorder %s290, %s292
      %p296 = scmp.eq.s32.totalorder %s25, 0
      %p297 = por %p295, %p296
      %p298 = scmp.ne.s32.totalorder %s290, %s292
      %p299 = scmp.eq.s32.totalorder %s30, 1
      %p300 = por %p298, %p299
      %p301 = scmp.ne.s32.totalorder %s292, %s293
      %p302 = scmp.eq.s32.totalorder %s30, 0
      %p303 = por %p301, %p302
      %p304 = scmp.ne.s32.totalorder %s292, %s293
      %p305 = scmp.eq.s32.totalorder %s31, 1
      %p306 = por %p304, %p305
      %p308 = scmp.ne.s32.totalorder %s293, %s307
      %p309 = scmp.eq.s32.totalorder %s31, 0
      %p310 = por %p308, %p309
      %s312 = sadd.s32 %s311, 1
      %p315 = scmp.eq.s32.totalorder %s25, 1
      %p316 = scmp.ne.s32.totalorder %s311, %s313
      %p317 = scmp.eq.s32.totalorder %s25, 0
      %p318 = por %p316, %p317
      %p319 = scmp.ne.s32.totalorder %s311, %s313
      %p320 = scmp.eq.s32.totalorder %s30, 1
      %p321 = por %p319, %p320
      %p322 = scmp.ne.s32.totalorder %s313, %s314
      %p323 = scmp.eq.s32.totalorder %s30, 0
      %p324 = por %p322, %p323
      %p325 = scmp.ne.s32.totalorder %s313, %s314
      %p326 = scmp.eq.s32.totalorder %s31, 1
      %p327 = por %p325, %p326
      %p329 = scmp.ne.s32.totalorder %s314, %s328
      %p330 = scmp.eq.s32.totalorder %s31, 0
      %p331 = por %p329, %p330
      %s333 = sadd.s32 %s332, 1
      %p336 = scmp.eq.s32.totalorder %s25, 1
      %p337 = scmp.ne.s32.totalorder %s332, %s334
      %p338 = scmp.eq.s32.totalorder %s25, 0
      %p339 = por %p337, %p338
      %p340 = scmp.ne.s32.totalorder %s332, %s334
      %p341 = scmp.eq.s32.totalorder %s30, 1
      %p342 = por %p340, %p341
      %p343 = scmp.ne.s32.totalorder %s334, %s335
      %p344 = scmp.eq.s32.totalorder %s30, 0
      %p345 = por %p343, %p344
      %p346 = scmp.ne.s32.totalorder %s334, %s335
      %p347 = scmp.eq.s32.totalorder %s31, 1
      %p348 = por %p346, %p347
      %p350 = scmp.ne.s32.totalorder %s335, %s349
      %p351 = scmp.eq.s32.totalorder %s31, 0
      %p352 = por %p350, %p351
      %s354 = sadd.s32 %s353, 1
      %p357 = scmp.eq.s32.totalorder %s25, 1
      %p358 = scmp.ne.s32.totalorder %s353, %s355
      %p359 = scmp.eq.s32.totalorder %s25, 0
      %p360 = por %p358, %p359
      %p361 = scmp.ne.s32.totalorder %s353, %s355
      %p362 = scmp.eq.s32.totalorder %s30, 1
      %p363 = por %p361, %p362
      %p364 = scmp.ne.s32.totalorder %s355, %s356
      %p365 = scmp.eq.s32.totalorder %s30, 0
      %p366 = por %p364, %p365
      %p367 = scmp.ne.s32.totalorder %s355, %s356
      %p368 = scmp.eq.s32.totalorder %s31, 1
      %p369 = por %p367, %p368
      %p371 = scmp.ne.s32.totalorder %s356, %s370
      %p372 = scmp.eq.s32.totalorder %s31, 0
      %p373 = por %p371, %p372
      %s374 = ssub.s32 %s25, %s32
      %p375 = scmp.eq.s32.totalorder %s374, 0
      %s377 = sadd.s32 %s376, 1
      %s378 = scalar_select %p375, %s376, %s377
      %p381 = pneg %p375
      %p382 = scmp.eq.s32.totalorder %s25, 1
      %p383 = por %p381, %p382
      %p384 = scmp.ne.s32.totalorder %s376, %s379
      %p385 = scmp.eq.s32.totalorder %s25, 0
      %p386 = por %p384, %p385
      %p387 = scmp.ne.s32.totalorder %s376, %s379
      %p388 = scmp.eq.s32.totalorder %s30, 1
      %p389 = por %p387, %p388
      %p390 = scmp.ne.s32.totalorder %s379, %s380
      %p391 = scmp.eq.s32.totalorder %s30, 0
      %p392 = por %p390, %p391
      %p393 = scmp.ne.s32.totalorder %s379, %s380
      %p394 = scmp.eq.s32.totalorder %s31, 1
      %p395 = por %p393, %p394
      %p397 = scmp.ne.s32.totalorder %s380, %s396
      %p398 = scmp.eq.s32.totalorder %s31, 0
      %p399 = por %p397, %p398
      %p400 = scmp.le.s32.totalorder 1, %s25
      %p401 = scmp.lt.s32.totalorder %s25, 3
      %p402 = pnand %p400, %p401
      %p403 = pneg %p402
      // Predicated region
      $region9: #{netE_forward.1} parent=5 // pred_check
        _
      $region10: #{netE_forward.1} parent=5 // pred_check_branch
        %405 = sbr.rel (%p402) target = $region12
      $region11: #{netE_forward.1} parent=5 // pred_region
        %s406 = ssub.s32 %s25, 1
        // Predicated region
        $region13: #{netE_forward.1} parent=11 // pred_check
          %p407 = pneg %p72
        $region14: #{netE_forward.1} parent=11 // pred_check_branch
          %409 = sbr.rel (%p407) target = $region16
        $region15: #{netE_forward.1} parent=11 // pred_region
          _
        $region16: #{netE_forward.1} parent=11 // pred_fallthru
          _
        // Predicated region
        $region17: #{netE_forward.1} parent=11 // pred_check
          %p410 = pneg %p93
        $region18: #{netE_forward.1} parent=11 // pred_check_branch
          %412 = sbr.rel (%p410) target = $region20
        $region19: #{netE_forward.1} parent=11 // pred_region
          _
        $region20: #{netE_forward.1} parent=11 // pred_fallthru
          _
        // Predicated region
        $region21: #{netE_forward.1} parent=11 // pred_check
          %p413 = pneg %p114
        $region22: #{netE_forward.1} parent=11 // pred_check_branch
          %415 = sbr.rel (%p413) target = $region24
        $region23: #{netE_forward.1} parent=11 // pred_region
          _
        $region24: #{netE_forward.1} parent=11 // pred_fallthru
          _
        // Predicated region
        $region25: #{netE_forward.1} parent=11 // pred_check
          %p416 = pneg %p135
        $region26: #{netE_forward.1} parent=11 // pred_check_branch
          %418 = sbr.rel (%p416) target = $region28
        $region27: #{netE_forward.1} parent=11 // pred_region
          _
        $region28: #{netE_forward.1} parent=11 // pred_fallthru
          _
        // Predicated region
        $region29: #{netE_forward.1} parent=11 // pred_check
          %p419 = pneg %p156
        $region30: #{netE_forward.1} parent=11 // pred_check_branch
          %421 = sbr.rel (%p419) target = $region32
        $region31: #{netE_forward.1} parent=11 // pred_region
          _
        $region32: #{netE_forward.1} parent=11 // pred_fallthru
          _
        // Predicated region
        $region33: #{netE_forward.1} parent=11 // pred_check
          %p422 = pneg %p177
        $region34: #{netE_forward.1} parent=11 // pred_check_branch
          %424 = sbr.rel (%p422) target = $region36
        $region35: #{netE_forward.1} parent=11 // pred_region
          _
        $region36: #{netE_forward.1} parent=11 // pred_fallthru
          _
        // Predicated region
        $region37: #{netE_forward.1} parent=11 // pred_check
          %p425 = pneg %p198
        $region38: #{netE_forward.1} parent=11 // pred_check_branch
          %427 = sbr.rel (%p425) target = $region40
        $region39: #{netE_forward.1} parent=11 // pred_region
          _
        $region40: #{netE_forward.1} parent=11 // pred_fallthru
          _
        // Predicated region
        $region41: #{netE_forward.1} parent=11 // pred_check
          %p428 = pneg %p219
        $region42: #{netE_forward.1} parent=11 // pred_check_branch
          %430 = sbr.rel (%p428) target = $region44
        $region43: #{netE_forward.1} parent=11 // pred_region
          _
        $region44: #{netE_forward.1} parent=11 // pred_fallthru
          _
        // Predicated region
        $region45: #{netE_forward.1} parent=11 // pred_check
          %p431 = pneg %p240
        $region46: #{netE_forward.1} parent=11 // pred_check_branch
          %433 = sbr.rel (%p431) target = $region48
        $region47: #{netE_forward.1} parent=11 // pred_region
          _
        $region48: #{netE_forward.1} parent=11 // pred_fallthru
          _
        // Predicated region
        $region49: #{netE_forward.1} parent=11 // pred_check
          %p434 = pneg %p261
        $region50: #{netE_forward.1} parent=11 // pred_check_branch
          %436 = sbr.rel (%p434) target = $region52
        $region51: #{netE_forward.1} parent=11 // pred_region
          _
        $region52: #{netE_forward.1} parent=11 // pred_fallthru
          _
        // Predicated region
        $region53: #{netE_forward.1} parent=11 // pred_check
          %p437 = pneg %p282
        $region54: #{netE_forward.1} parent=11 // pred_check_branch
          %439 = sbr.rel (%p437) target = $region56
        $region55: #{netE_forward.1} parent=11 // pred_region
          _
        $region56: #{netE_forward.1} parent=11 // pred_fallthru
          _
        // Predicated region
        $region57: #{netE_forward.1} parent=11 // pred_check
          %p440 = pneg %p303
        $region58: #{netE_forward.1} parent=11 // pred_check_branch
          %442 = sbr.rel (%p440) target = $region60
        $region59: #{netE_forward.1} parent=11 // pred_region
          _
        $region60: #{netE_forward.1} parent=11 // pred_fallthru
          _
        // Predicated region
        $region61: #{netE_forward.1} parent=11 // pred_check
          %p443 = pneg %p324
        $region62: #{netE_forward.1} parent=11 // pred_check_branch
          %445 = sbr.rel (%p443) target = $region64
        $region63: #{netE_forward.1} parent=11 // pred_region
          _
        $region64: #{netE_forward.1} parent=11 // pred_fallthru
          _
        // Predicated region
        $region65: #{netE_forward.1} parent=11 // pred_check
          %p446 = pneg %p345
        $region66: #{netE_forward.1} parent=11 // pred_check_branch
          %448 = sbr.rel (%p446) target = $region68
        $region67: #{netE_forward.1} parent=11 // pred_region
          _
        $region68: #{netE_forward.1} parent=11 // pred_fallthru
          _
        // Predicated region
        $region69: #{netE_forward.1} parent=11 // pred_check
          %p449 = pneg %p366
        $region70: #{netE_forward.1} parent=11 // pred_check_branch
          %451 = sbr.rel (%p449) target = $region72
        $region71: #{netE_forward.1} parent=11 // pred_region
          _
        $region72: #{netE_forward.1} parent=11 // pred_fallthru
          _
      $region12: #{netE_forward.1} parent=5 // pred_fallthru
        _
      %p452 = scmp.lt.s32.totalorder %s25, 2
      // Predicated region
      $region73: #{netE_forward.1} parent=5 // pred_check
        %p453 = pneg %p452
      $region74: #{netE_forward.1} parent=5 // pred_check_branch
        %455 = sbr.rel (%p453) target = $region76
      $region75: #{netE_forward.1} parent=5 // pred_region
        // Predicated region
        $region77: #{netE_forward.1} parent=75 // pred_check
          %p456 = pneg %p45
        $region78: #{netE_forward.1} parent=75 // pred_check_branch
          %458 = sbr.rel (%p456) target = $region80
        $region79: #{netE_forward.1} parent=75 // pred_region
          %p459 = scmp.lt.s32.totalorder %s25, 1
          %s460 = scalar_select %p459, %s25, 1
          %s461 = smul.addr %s460, 17
          %s462 = smul.addr %s461, 8
          %s463 = scalar_lea.vmem %s0, %s462
        $region80: #{netE_forward.1} parent=75 // pred_fallthru
          _
      $region76: #{netE_forward.1} parent=5 // pred_fallthru
        _
      %p464 = scmp.le.s32.totalorder 1, %s25
      %p465 = scmp.lt.s32.totalorder %s25, 3
      %p466 = pnand %p464, %p465
      %p467 = pneg %p466
      // Predicated region
      $region81: #{netE_forward.1} parent=5 // pred_check
        _
      $region82: #{netE_forward.1} parent=5 // pred_check_branch
        %469 = sbr.rel (%p466) target = $region84
      $region83: #{netE_forward.1} parent=5 // pred_region
        %s470 = ssub.s32 %s25, 1
        %p471 = scmp.lt.s32.totalorder %s30, 1
        %s472 = scalar_select %p471, %s30, 1
        %s473 = smul.addr %s472, 17
        %s474 = smul.addr %s473, 8
        %s475 = scalar_lea.vmem %s0, %s474
        %p476 = pneg %p51
        %p477 = pneg %p48
        %p478 = pneg %p72
        %p479 = pneg %p69
        %p480 = pneg %p93
        %p481 = pneg %p90
        %p482 = pneg %p114
        %p483 = pneg %p111
        %p484 = pneg %p135
        %p485 = pneg %p132
        %p486 = pneg %p156
        %p487 = pneg %p153
        %p488 = pneg %p177
        %p489 = pneg %p174
        %p490 = pneg %p198
        %p491 = pneg %p195
        %p492 = pneg %p219
        %p493 = pneg %p216
        %p494 = pneg %p240
        %p495 = pneg %p237
        %p496 = pneg %p261
        %p497 = pneg %p258
        %p498 = pneg %p282
        %p499 = pneg %p279
        %p500 = pneg %p303
        %p501 = pneg %p300
        %p502 = pneg %p324
        %p503 = pneg %p321
        %p504 = pneg %p345
        %p505 = pneg %p342
        %p506 = pneg %p366
        %p507 = pneg %p363
        %p508 = pneg %p392
        %p509 = pneg %p389
        %s510 = sand.u32 %s379, 1
        %s511 = scalar_lea.sflag [#allocation3], %s510
        %s512 = sand.u32 %s379, 1
        %s513 = scalar_lea.vmem [#allocation2], %s512
        %p514 = scmp.lt.s32.totalorder %s30, 1
        %s515 = scalar_select %p514, %s30, 1
        %s516 = smul.addr %s515, 17
        %s517 = smul.addr %s516, 8
        %s518 = scalar_lea.vmem %s0, %s517
        %v519 = vld [vmem:[%s518] sm:$0xff]
        %v520 = vld [vmem:[%s518 + $0x8] sm:$0xff]
        %v521 = vld [vmem:[%s518 + $0x10] sm:$0xff]
        %v522 = vld [vmem:[%s518 + $0x18] sm:$0xff]
        %v523 = vld [vmem:[%s518 + $0x20] sm:$0xff]
        %v524 = vld [vmem:[%s518 + $0x28] sm:$0xff]
        %v525 = vld [vmem:[%s518 + $0x30] sm:$0xff]
        %v526 = vld [vmem:[%s518 + $0x38] sm:$0xff]
        %v527 = vld [vmem:[%s518 + $0x40] sm:$0xff]
        %v528 = vld [vmem:[%s518 + $0x48] sm:$0xff]
        %v529 = vld [vmem:[%s518 + $0x50] sm:$0xff]
        %v530 = vld [vmem:[%s518 + $0x58] sm:$0xff]
        %v531 = vld [vmem:[%s518 + $0x60] sm:$0xff]
        %v532 = vld [vmem:[%s518 + $0x68] sm:$0xff]
        %v533 = vld [vmem:[%s518 + $0x70] sm:$0xff]
        %v534 = vld [vmem:[%s518 + $0x78] sm:$0xff]
        %v535 = vld [vmem:[%s518 + $0x80] sm:$0x1]
        %v536 = vld [vmem:[%s1] sm:$0xff]
        %v537 = vld [vmem:[%s1 + $0x8] sm:$0xff]
        %v538 = vld [vmem:[%s1 + $0x10] sm:$0xff]
        %v539 = vld [vmem:[%s1 + $0x18] sm:$0xff]
        %v540 = vld [vmem:[%s1 + $0x20] sm:$0xff]
        %v541 = vld [vmem:[%s1 + $0x28] sm:$0xff]
        %v542 = vld [vmem:[%s1 + $0x30] sm:$0xff]
        %v543 = vld [vmem:[%s1 + $0x38] sm:$0xff]
        %v544 = vld [vmem:[%s1 + $0x40] sm:$0xff]
        %v545 = vld [vmem:[%s1 + $0x48] sm:$0xff]
        %v546 = vld [vmem:[%s1 + $0x50] sm:$0xff]
        %v547 = vld [vmem:[%s1 + $0x58] sm:$0xff]
        %v548 = vld [vmem:[%s1 + $0x60] sm:$0xff]
        %v549 = vld [vmem:[%s1 + $0x68] sm:$0xff]
        %v550 = vld [vmem:[%s1 + $0x70] sm:$0x7f]
        %v551 = vld [vmem:[%s1 + $0x78] sm:$0x7f]
        %vm552 = vcmask 7168
        %v554 = vsel %vm552, %v537, 0
        %v557 = vsel %vm552, %v539, 0
        %v560 = vsel %vm552, %v541, 0
        %v563 = vsel %vm552, %v543, 0
        %v566 = vsel %vm552, %v545, 0
        %v569 = vsel %vm552, %v547, 0
        %v572 = vsel %vm552, %v549, 0
        %v575 = vsel %vm552, %v551, 0
        %vm577 = vcmask 1040384
        %v579 = vsel %vm577, %v535, 0
        %581 = vmatprep.subr.mxu0 0.0
        %582 = vmatpush1.msra.mxu0 %v534
        %583 = vmatprep.subr.mxu0 0.0
        %584 = vmatpush1.msra.mxu0 %v533
        %585 = vmatprep.subr.mxu0 0.0
        %586 = vmatpush1.msra.mxu0 %v532
        %587 = vmatprep.subr.mxu0 0.0
        %588 = vmatpush1.msra.mxu0 %v531
        %589 = vmatprep.subr.mxu0 0.0
        %590 = vmatpush1.msra.mxu0 %v530
        %591 = vmatprep.subr.mxu0 0.0
        %592 = vmatpush1.msra.mxu0 %v529
        %593 = vmatprep.subr.mxu0 0.0
        %594 = vmatpush1.msra.mxu0 %v528
        %595 = vmatprep.subr.mxu0 0.0
        %596 = vmatpush1.msra.mxu0 %v527
        %597 = vmatprep.subr.mxu0 0.0
        %598 = vmatpush1.msra.mxu0 %v526
        %599 = vmatprep.subr.mxu0 0.0
        %600 = vmatpush1.msra.mxu0 %v525
        %601 = vmatprep.subr.mxu0 0.0
        %602 = vmatpush1.msra.mxu0 %v524
        %603 = vmatprep.subr.mxu0 0.0
        %604 = vmatpush1.msra.mxu0 %v523
        %605 = vmatprep.subr.mxu0 0.0
        %606 = vmatpush1.msra.mxu0 %v522
        %607 = vmatprep.subr.mxu0 0.0
        %608 = vmatpush1.msra.mxu0 %v521
        %609 = vmatprep.subr.mxu0 0.0
        %610 = vmatpush1.msra.mxu0 %v520
        %611 = vmatprep.subr.mxu0 0.0
        %612 = vmatpush1.msra.mxu0 %v519
        %613 = vmatprep.subr.mxu0 0.0
        %614 = vmatpush2.msra.mxu0 0.0
        %615 = vmatprep.subr.mxu0 0.0
        %616 = vmatpush2.msra.mxu0 0.0
        %617 = vmatprep.subr.mxu0 0.0
        %618 = vmatpush2.msra.mxu0 0.0
        %619 = vmatprep.subr.mxu0 0.0
        %620 = vmatpush2.msra.mxu0 0.0
        %621 = vmatprep.subr.mxu0 0.0
        %622 = vmatpush2.msra.mxu0 0.0
        %623 = vmatprep.subr.mxu0 0.0
        %624 = vmatpush2.msra.mxu0 0.0
        %625 = vmatprep.subr.mxu0 0.0
        %626 = vmatpush2.msra.mxu0 0.0
        %627 = vmatprep.subr.mxu0 0.0
        %628 = vmatpush2.msra.mxu0 0.0
        %629 = vmatprep.subr.mxu0 0.0
        %630 = vmatpush2.msra.mxu0 0.0
        %631 = vmatprep.subr.mxu0 0.0
        %632 = vmatpush2.msra.mxu0 0.0
        %633 = vmatprep.subr.mxu0 0.0
        %634 = vmatpush2.msra.mxu0 0.0
        %635 = vmatprep.subr.mxu0 0.0
        %636 = vmatpush2.msra.mxu0 0.0
        %637 = vmatprep.subr.mxu0 0.0
        %638 = vmatpush2.msra.mxu0 0.0
        %639 = vmatprep.subr.mxu0 0.0
        %640 = vmatpush2.msra.mxu0 0.0
        %641 = vmatprep.subr.mxu0 0.0
        %642 = vmatpush2.msra.mxu0 0.0
        %643 = vmatprep.subr.mxu0 0.0
        %644 = vmatpush2.msra.mxu0 %v579
        %645 = vmatprep.mubr.f32.mxu0 %v554
        %646 = vmatmul.mubr.f32.gmra.mxu0 %v536
        %v647 = vpop.f32.mrf.mxu0
        %v648 = vadd.f32 0.0, %v647
        %v649 = vpop.f32.mrf.mxu0
        %650 = vmatprep.mubr.f32.mxu0 %v557
        %651 = vmatmul.mubr.f32.gmra.mxu0 %v538
        %v652 = vpop.f32.mrf.mxu0
        %v653 = vadd.f32 0.0, %v652
        %v654 = vpop.f32.mrf.mxu0
        %655 = vmatprep.mubr.f32.mxu0 %v560
        %656 = vmatmul.mubr.f32.gmra.mxu0 %v540
        %v657 = vpop.f32.mrf.mxu0
        %v658 = vadd.f32 0.0, %v657
        %v659 = vpop.f32.mrf.mxu0
        %660 = vmatprep.mubr.f32.mxu0 %v563
        %661 = vmatmul.mubr.f32.gmra.mxu0 %v542
        %v662 = vpop.f32.mrf.mxu0
        %v663 = vadd.f32 0.0, %v662
        %v664 = vpop.f32.mrf.mxu0
        %665 = vmatprep.mubr.f32.mxu0 %v566
        %666 = vmatmul.mubr.f32.gmra.mxu0 %v544
        %v667 = vpop.f32.mrf.mxu0
        %v668 = vadd.f32 0.0, %v667
        %v669 = vpop.f32.mrf.mxu0
        %670 = vmatprep.mubr.f32.mxu0 %v569
        %671 = vmatmul.mubr.f32.gmra.mxu0 %v546
        %v672 = vpop.f32.mrf.mxu0
        %v673 = vadd.f32 0.0, %v672
        %v674 = vpop.f32.mrf.mxu0
        %675 = vmatprep.mubr.f32.mxu0 %v572
        %676 = vmatmul.mubr.f32.gmra.mxu0 %v548
        %v677 = vpop.f32.mrf.mxu0
        %v678 = vadd.f32 0.0, %v677
        %v679 = vpop.f32.mrf.mxu0
        %680 = vmatprep.mubr.f32.mxu0 %v575
        %681 = vmatmul.mubr.f32.gmra.mxu0 %v550
        %v682 = vpop.f32.mrf.mxu0
        %v683 = vadd.f32 0.0, %v682
        %v684 = vpop.f32.mrf.mxu0
        %685 = vdwg.mxu0
        %v686 = vld [vmem:[%s5] sm:$0xff]
        %v687 = vld [vmem:[%s5 + $0x8] sm:$0xff]
        %s688 = scalar_lea.vmem %s1, 128
        %v689 = vld [vmem:[%s688] sm:$0xff]
        %v690 = vld [vmem:[%s688 + $0x8] sm:$0xff]
        %v691 = vld [vmem:[%s688 + $0x10] sm:$0xff]
        %v692 = vld [vmem:[%s688 + $0x18] sm:$0xff]
        %v693 = vld [vmem:[%s688 + $0x20] sm:$0xff]
        %v694 = vld [vmem:[%s688 + $0x28] sm:$0xff]
        %v695 = vld [vmem:[%s688 + $0x30] sm:$0xff]
        %v696 = vld [vmem:[%s688 + $0x38] sm:$0xff]
        %v697 = vld [vmem:[%s688 + $0x40] sm:$0xff]
        %v698 = vld [vmem:[%s688 + $0x48] sm:$0xff]
        %v699 = vld [vmem:[%s688 + $0x50] sm:$0xff]
        %v700 = vld [vmem:[%s688 + $0x58] sm:$0xff]
        %v701 = vld [vmem:[%s688 + $0x60] sm:$0xff]
        %v702 = vld [vmem:[%s688 + $0x68] sm:$0xff]
        %v703 = vld [vmem:[%s688 + $0x70] sm:$0x7f]
        %v704 = vld [vmem:[%s688 + $0x78] sm:$0x7f]
        %v706 = vsel %vm552, %v690, 0
        %v709 = vsel %vm552, %v692, 0
        %v712 = vsel %vm552, %v694, 0
        %v715 = vsel %vm552, %v696, 0
        %v718 = vsel %vm552, %v698, 0
        %v721 = vsel %vm552, %v700, 0
        %v724 = vsel %vm552, %v702, 0
        %v727 = vsel %vm552, %v704, 0
        %729 = vmatprep.subr.mxu0 0.0
        %730 = vmatpush1.msra.mxu0 %v534
        %731 = vmatprep.subr.mxu0 0.0
        %732 = vmatpush1.msra.mxu0 %v533
        %733 = vmatprep.subr.mxu0 0.0
        %734 = vmatpush1.msra.mxu0 %v532
        %735 = vmatprep.subr.mxu0 0.0
        %736 = vmatpush1.msra.mxu0 %v531
        %737 = vmatprep.subr.mxu0 0.0
        %738 = vmatpush1.msra.mxu0 %v530
        %739 = vmatprep.subr.mxu0 0.0
        %740 = vmatpush1.msra.mxu0 %v529
        %741 = vmatprep.subr.mxu0 0.0
        %742 = vmatpush1.msra.mxu0 %v528
        %743 = vmatprep.subr.mxu0 0.0
        %744 = vmatpush1.msra.mxu0 %v527
        %745 = vmatprep.subr.mxu0 0.0
        %746 = vmatpush1.msra.mxu0 %v526
        %747 = vmatprep.subr.mxu0 0.0
        %748 = vmatpush1.msra.mxu0 %v525
        %749 = vmatprep.subr.mxu0 0.0
        %750 = vmatpush1.msra.mxu0 %v524
        %751 = vmatprep.subr.mxu0 0.0
        %752 = vmatpush1.msra.mxu0 %v523
        %753 = vmatprep.subr.mxu0 0.0
        %754 = vmatpush1.msra.mxu0 %v522
        %755 = vmatprep.subr.mxu0 0.0
        %756 = vmatpush1.msra.mxu0 %v521
        %757 = vmatprep.subr.mxu0 0.0
        %758 = vmatpush1.msra.mxu0 %v520
        %759 = vmatprep.subr.mxu0 0.0
        %760 = vmatpush1.msra.mxu0 %v519
        %761 = vmatprep.subr.mxu0 0.0
        %762 = vmatpush2.msra.mxu0 0.0
        %763 = vmatprep.subr.mxu0 0.0
        %764 = vmatpush2.msra.mxu0 0.0
        %765 = vmatprep.subr.mxu0 0.0
        %766 = vmatpush2.msra.mxu0 0.0
        %767 = vmatprep.subr.mxu0 0.0
        %768 = vmatpush2.msra.mxu0 0.0
        %769 = vmatprep.subr.mxu0 0.0
        %770 = vmatpush2.msra.mxu0 0.0
        %771 = vmatprep.subr.mxu0 0.0
        %772 = vmatpush2.msra.mxu0 0.0
        %773 = vmatprep.subr.mxu0 0.0
        %774 = vmatpush2.msra.mxu0 0.0
        %775 = vmatprep.subr.mxu0 0.0
        %776 = vmatpush2.msra.mxu0 0.0
        %777 = vmatprep.subr.mxu0 0.0
        %778 = vmatpush2.msra.mxu0 0.0
        %779 = vmatprep.subr.mxu0 0.0
        %780 = vmatpush2.msra.mxu0 0.0
        %781 = vmatprep.subr.mxu0 0.0
        %782 = vmatpush2.msra.mxu0 0.0
        %783 = vmatprep.subr.mxu0 0.0
        %784 = vmatpush2.msra.mxu0 0.0
        %785 = vmatprep.subr.mxu0 0.0
        %786 = vmatpush2.msra.mxu0 0.0
        %787 = vmatprep.subr.mxu0 0.0
        %788 = vmatpush2.msra.mxu0 0.0
        %789 = vmatprep.subr.mxu0 0.0
        %790 = vmatpush2.msra.mxu0 0.0
        %791 = vmatprep.subr.mxu0 0.0
        %792 = vmatpush2.msra.mxu0 %v579
        %793 = vmatprep.mubr.f32.mxu0 %v706
        %794 = vmatmul.mubr.f32.gmra.mxu0 %v689
        %v795 = vpop.f32.mrf.mxu0
        %v796 = vadd.f32 0.0, %v795
        %v797 = vpop.f32.mrf.mxu0
        %798 = vmatprep.mubr.f32.mxu0 %v709
        %799 = vmatmul.mubr.f32.gmra.mxu0 %v691
        %v800 = vpop.f32.mrf.mxu0
        %v801 = vadd.f32 0.0, %v800
        %v802 = vpop.f32.mrf.mxu0
        %803 = vmatprep.mubr.f32.mxu0 %v712
        %804 = vmatmul.mubr.f32.gmra.mxu0 %v693
        %v805 = vpop.f32.mrf.mxu0
        %v806 = vadd.f32 0.0, %v805
        %v807 = vpop.f32.mrf.mxu0
        %808 = vmatprep.mubr.f32.mxu0 %v715
        %809 = vmatmul.mubr.f32.gmra.mxu0 %v695
        %v810 = vpop.f32.mrf.mxu0
        %v811 = vadd.f32 0.0, %v810
        %v812 = vpop.f32.mrf.mxu0
        %813 = vmatprep.mubr.f32.mxu0 %v718
        %814 = vmatmul.mubr.f32.gmra.mxu0 %v697
        %v815 = vpop.f32.mrf.mxu0
        %v816 = vadd.f32 0.0, %v815
        %v817 = vpop.f32.mrf.mxu0
        %818 = vmatprep.mubr.f32.mxu0 %v721
        %819 = vmatmul.mubr.f32.gmra.mxu0 %v699
        %v820 = vpop.f32.mrf.mxu0
        %v821 = vadd.f32 0.0, %v820
        %v822 = vpop.f32.mrf.mxu0
        %823 = vmatprep.mubr.f32.mxu0 %v724
        %824 = vmatmul.mubr.f32.gmra.mxu0 %v701
        %v825 = vpop.f32.mrf.mxu0
        %v826 = vadd.f32 0.0, %v825
        %v827 = vpop.f32.mrf.mxu0
        %828 = vmatprep.mubr.f32.mxu0 %v727
        %829 = vmatmul.mubr.f32.gmra.mxu0 %v703
        %v830 = vpop.f32.mrf.mxu0
        %v831 = vadd.f32 0.0, %v830
        %v832 = vpop.f32.mrf.mxu0
        %833 = vdwg.mxu0
        %s834 = scalar_lea.vmem %s5, 16
        %v835 = vld [vmem:[%s834] sm:$0xff]
        %v836 = vld [vmem:[%s834 + $0x8] sm:$0xff]
        %vm837 = vcmask 130048
        %v839 = vsel %vm837, %v796, 0
        %v842 = vsel %vm837, %v801, 0
        %v845 = vsel %vm837, %v806, 0
        %v848 = vsel %vm837, %v811, 0
        %v851 = vsel %vm837, %v816, 0
        %v854 = vsel %vm837, %v821, 0
        %v857 = vsel %vm837, %v826, 0
        %v860 = vsel %vm837, %v831, 0
        %862 = vmatprep.subr.mxu0 0.0
        %863 = vmatpush1.msra.mxu0 0.0
        %864 = vmatprep.subr.mxu0 0.0
        %865 = vmatpush1.msra.mxu0 0.0
        %866 = vmatprep.subr.mxu0 0.0
        %867 = vmatpush1.msra.mxu0 0.0
        %868 = vmatprep.subr.mxu0 0.0
        %869 = vmatpush1.msra.mxu0 0.0
        %870 = vmatprep.subr.mxu0 0.0
        %871 = vmatpush1.msra.mxu0 0.0
        %872 = vmatprep.subr.mxu0 0.0
        %873 = vmatpush1.msra.mxu0 0.0
        %874 = vmatprep.subr.mxu0 0.0
        %875 = vmatpush1.msra.mxu0 0.0
        %876 = vmatprep.subr.mxu0 0.0
        %877 = vmatpush1.msra.mxu0 0.0
        %878 = vmatprep.subr.mxu0 0.0
        %879 = vmatpush1.msra.mxu0 0.0
        %880 = vmatprep.subr.mxu0 0.0
        %881 = vmatpush1.msra.mxu0 0.0
        %882 = vmatprep.subr.mxu0 0.0
        %883 = vmatpush1.msra.mxu0 0.0
        %884 = vmatprep.subr.mxu0 0.0
        %885 = vmatpush1.msra.mxu0 0.0
        %886 = vmatprep.subr.mxu0 0.0
        %887 = vmatpush1.msra.mxu0 0.0
        %888 = vmatprep.subr.mxu0 0.0
        %889 = vmatpush1.msra.mxu0 0.0
        %890 = vmatprep.subr.mxu0 0.0
        %891 = vmatpush1.msra.mxu0 %v836
        %892 = vmatprep.subr.mxu0 0.0
        %893 = vmatpush1.msra.mxu0 %v835
        %894 = vmatprep.subr.mxu0 0.0
        %895 = vmatpush2.msra.mxu0 0.0
        %896 = vmatprep.subr.mxu0 0.0
        %897 = vmatpush2.msra.mxu0 0.0
        %898 = vmatprep.subr.mxu0 0.0
        %899 = vmatpush2.msra.mxu0 0.0
        %900 = vmatprep.subr.mxu0 0.0
        %901 = vmatpush2.msra.mxu0 0.0
        %902 = vmatprep.subr.mxu0 0.0
        %903 = vmatpush2.msra.mxu0 0.0
        %904 = vmatprep.subr.mxu0 0.0
        %905 = vmatpush2.msra.mxu0 0.0
        %906 = vmatprep.subr.mxu0 0.0
        %907 = vmatpush2.msra.mxu0 0.0
        %908 = vmatprep.subr.mxu0 0.0
        %909 = vmatpush2.msra.mxu0 0.0
        %910 = vmatprep.subr.mxu0 0.0
        %911 = vmatpush2.msra.mxu0 0.0
        %912 = vmatprep.subr.mxu0 0.0
        %913 = vmatpush2.msra.mxu0 0.0
        %914 = vmatprep.subr.mxu0 0.0
        %915 = vmatpush2.msra.mxu0 0.0
        %916 = vmatprep.subr.mxu0 0.0
        %917 = vmatpush2.msra.mxu0 0.0
        %918 = vmatprep.subr.mxu0 0.0
        %919 = vmatpush2.msra.mxu0 0.0
        %920 = vmatprep.subr.mxu0 0.0
        %921 = vmatpush2.msra.mxu0 0.0
        %922 = vmatprep.subr.mxu0 0.0
        %923 = vmatpush2.msra.mxu0 0.0
        %924 = vmatprep.subr.mxu0 0.0
        %925 = vmatpush2.msra.mxu0 0.0
        %926 = vmatprep.mubr.f32.mxu0 0.0
        %927 = vmatmul.mubr.f32.gmra.mxu0 %v839
        %v928 = vpop.f32.mrf.mxu0
        %v929 = vadd.f32 0.0, %v928
        %v930 = vpop.f32.mrf.mxu0
        %931 = vmatprep.mubr.f32.mxu0 0.0
        %932 = vmatmul.mubr.f32.gmra.mxu0 %v842
        %v933 = vpop.f32.mrf.mxu0
        %v934 = vadd.f32 0.0, %v933
        %v935 = vpop.f32.mrf.mxu0
        %936 = vmatprep.mubr.f32.mxu0 0.0
        %937 = vmatmul.mubr.f32.gmra.mxu0 %v845
        %v938 = vpop.f32.mrf.mxu0
        %v939 = vadd.f32 0.0, %v938
        %v940 = vpop.f32.mrf.mxu0
        %941 = vmatprep.mubr.f32.mxu0 0.0
        %942 = vmatmul.mubr.f32.gmra.mxu0 %v848
        %v943 = vpop.f32.mrf.mxu0
        %v944 = vadd.f32 0.0, %v943
        %v945 = vpop.f32.mrf.mxu0
        %946 = vmatprep.mubr.f32.mxu0 0.0
        %947 = vmatmul.mubr.f32.gmra.mxu0 %v851
        %v948 = vpop.f32.mrf.mxu0
        %v949 = vadd.f32 0.0, %v948
        %v950 = vpop.f32.mrf.mxu0
        %951 = vmatprep.mubr.f32.mxu0 0.0
        %952 = vmatmul.mubr.f32.gmra.mxu0 %v854
        %v953 = vpop.f32.mrf.mxu0
        %v954 = vadd.f32 0.0, %v953
        %v955 = vpop.f32.mrf.mxu0
        %956 = vmatprep.mubr.f32.mxu0 0.0
        %957 = vmatmul.mubr.f32.gmra.mxu0 %v857
        %v958 = vpop.f32.mrf.mxu0
        %v959 = vadd.f32 0.0, %v958
        %v960 = vpop.f32.mrf.mxu0
        %961 = vmatprep.mubr.f32.mxu0 0.0
        %962 = vmatmul.mubr.f32.gmra.mxu0 %v860
        %v963 = vpop.f32.mrf.mxu0
        %v964 = vadd.f32 0.0, %v963
        %v965 = vpop.f32.mrf.mxu0
        %966 = vdwg.mxu0
        %v968 = vsel %vm837, %v648, 0
        %v971 = vsel %vm837, %v653, 0
        %v974 = vsel %vm837, %v658, 0
        %v977 = vsel %vm837, %v663, 0
        %v980 = vsel %vm837, %v668, 0
        %v983 = vsel %vm837, %v673, 0
        %v986 = vsel %vm837, %v678, 0
        %v989 = vsel %vm837, %v683, 0
        %991 = vmatprep.subr.mxu0 0.0
        %992 = vmatpush1.msra.mxu0 0.0
        %993 = vmatprep.subr.mxu0 0.0
        %994 = vmatpush1.msra.mxu0 0.0
        %995 = vmatprep.subr.mxu0 0.0
        %996 = vmatpush1.msra.mxu0 0.0
        %997 = vmatprep.subr.mxu0 0.0
        %998 = vmatpush1.msra.mxu0 0.0
        %999 = vmatprep.subr.mxu0 0.0
        %1000 = vmatpush1.msra.mxu0 0.0
        %1001 = vmatprep.subr.mxu0 0.0
        %1002 = vmatpush1.msra.mxu0 0.0
        %1003 = vmatprep.subr.mxu0 0.0
        %1004 = vmatpush1.msra.mxu0 0.0
        %1005 = vmatprep.subr.mxu0 0.0
        %1006 = vmatpush1.msra.mxu0 0.0
        %1007 = vmatprep.subr.mxu0 0.0
        %1008 = vmatpush1.msra.mxu0 0.0
        %1009 = vmatprep.subr.mxu0 0.0
        %1010 = vmatpush1.msra.mxu0 0.0
        %1011 = vmatprep.subr.mxu0 0.0
        %1012 = vmatpush1.msra.mxu0 0.0
        %1013 = vmatprep.subr.mxu0 0.0
        %1014 = vmatpush1.msra.mxu0 0.0
        %1015 = vmatprep.subr.mxu0 0.0
        %1016 = vmatpush1.msra.mxu0 0.0
        %1017 = vmatprep.subr.mxu0 0.0
        %1018 = vmatpush1.msra.mxu0 0.0
        %1019 = vmatprep.subr.mxu0 0.0
        %1020 = vmatpush1.msra.mxu0 %v687
        %1021 = vmatprep.subr.mxu0 0.0
        %1022 = vmatpush1.msra.mxu0 %v686
        %1023 = vmatprep.subr.mxu0 0.0
        %1024 = vmatpush2.msra.mxu0 0.0
        %1025 = vmatprep.subr.mxu0 0.0
        %1026 = vmatpush2.msra.mxu0 0.0
        %1027 = vmatprep.subr.mxu0 0.0
        %1028 = vmatpush2.msra.mxu0 0.0
        %1029 = vmatprep.subr.mxu0 0.0
        %1030 = vmatpush2.msra.mxu0 0.0
        %1031 = vmatprep.subr.mxu0 0.0
        %1032 = vmatpush2.msra.mxu0 0.0
        %1033 = vmatprep.subr.mxu0 0.0
        %1034 = vmatpush2.msra.mxu0 0.0
        %1035 = vmatprep.subr.mxu0 0.0
        %1036 = vmatpush2.msra.mxu0 0.0
        %1037 = vmatprep.subr.mxu0 0.0
        %1038 = vmatpush2.msra.mxu0 0.0
        %1039 = vmatprep.subr.mxu0 0.0
        %1040 = vmatpush2.msra.mxu0 0.0
        %1041 = vmatprep.subr.mxu0 0.0
        %1042 = vmatpush2.msra.mxu0 0.0
        %1043 = vmatprep.subr.mxu0 0.0
        %1044 = vmatpush2.msra.mxu0 0.0
        %1045 = vmatprep.subr.mxu0 0.0
        %1046 = vmatpush2.msra.mxu0 0.0
        %1047 = vmatprep.subr.mxu0 0.0
        %1048 = vmatpush2.msra.mxu0 0.0
        %1049 = vmatprep.subr.mxu0 0.0
        %1050 = vmatpush2.msra.mxu0 0.0
        %1051 = vmatprep.subr.mxu0 0.0
        %1052 = vmatpush2.msra.mxu0 0.0
        %1053 = vmatprep.subr.mxu0 0.0
        %1054 = vmatpush2.msra.mxu0 0.0
        %1055 = vmatprep.mubr.f32.mxu0 0.0
        %1056 = vmatmul.mubr.f32.gmra.mxu0 %v968
        %v1057 = vpop.f32.mrf.mxu0
        %v1058 = vadd.f32 %v929, %v1057
        %v1059 = vpop.f32.mrf.mxu0
        %1060 = vmatprep.mubr.f32.mxu0 0.0
        %1061 = vmatmul.mubr.f32.gmra.mxu0 %v971
        %v1062 = vpop.f32.mrf.mxu0
        %v1063 = vadd.f32 %v934, %v1062
        %v1064 = vpop.f32.mrf.mxu0
        %1065 = vmatprep.mubr.f32.mxu0 0.0
        %1066 = vmatmul.mubr.f32.gmra.mxu0 %v974
        %v1067 = vpop.f32.mrf.mxu0
        %v1068 = vadd.f32 %v939, %v1067
        %v1069 = vpop.f32.mrf.mxu0
        %1070 = vmatprep.mubr.f32.mxu0 0.0
        %1071 = vmatmul.mubr.f32.gmra.mxu0 %v977
        %v1072 = vpop.f32.mrf.mxu0
        %v1073 = vadd.f32 %v944, %v1072
        %v1074 = vpop.f32.mrf.mxu0
        %1075 = vmatprep.mubr.f32.mxu0 0.0
        %1076 = vmatmul.mubr.f32.gmra.mxu0 %v980
        %v1077 = vpop.f32.mrf.mxu0
        %v1078 = vadd.f32 %v949, %v1077
        %v1079 = vpop.f32.mrf.mxu0
        %1080 = vmatprep.mubr.f32.mxu0 0.0
        %1081 = vmatmul.mubr.f32.gmra.mxu0 %v983
        %v1082 = vpop.f32.mrf.mxu0
        %v1083 = vadd.f32 %v954, %v1082
        %v1084 = vpop.f32.mrf.mxu0
        %1085 = vmatprep.mubr.f32.mxu0 0.0
        %1086 = vmatmul.mubr.f32.gmra.mxu0 %v986
        %v1087 = vpop.f32.mrf.mxu0
        %v1088 = vadd.f32 %v959, %v1087
        %v1089 = vpop.f32.mrf.mxu0
        %1090 = vmatprep.mubr.f32.mxu0 0.0
        %1091 = vmatmul.mubr.f32.gmra.mxu0 %v989
        %v1092 = vpop.f32.mrf.mxu0
        %v1093 = vadd.f32 %v964, %v1092
        %v1094 = vpop.f32.mrf.mxu0
        %1095 = vdwg.mxu0
        %s1096 = scalar_lea.vmem %s1, 256
        %v1097 = vld [vmem:[%s1096] sm:$0xff]
        %v1098 = vld [vmem:[%s1096 + $0x8] sm:$0xff]
        %v1099 = vld [vmem:[%s1096 + $0x10] sm:$0xff]
        %v1100 = vld [vmem:[%s1096 + $0x18] sm:$0xff]
        %v1101 = vld [vmem:[%s1096 + $0x20] sm:$0xff]
        %v1102 = vld [vmem:[%s1096 + $0x28] sm:$0xff]
        %v1103 = vld [vmem:[%s1096 + $0x30] sm:$0xff]
        %v1104 = vld [vmem:[%s1096 + $0x38] sm:$0xff]
        %v1105 = vld [vmem:[%s1096 + $0x40] sm:$0xff]
        %v1106 = vld [vmem:[%s1096 + $0x48] sm:$0xff]
        %v1107 = vld [vmem:[%s1096 + $0x50] sm:$0xff]
        %v1108 = vld [vmem:[%s1096 + $0x58] sm:$0xff]
        %v1109 = vld [vmem:[%s1096 + $0x60] sm:$0xff]
        %v1110 = vld [vmem:[%s1096 + $0x68] sm:$0xff]
        %v1111 = vld [vmem:[%s1096 + $0x70] sm:$0x7f]
        %v1112 = vld [vmem:[%s1096 + $0x78] sm:$0x7f]
        %v1114 = vsel %vm552, %v1098, 0
        %v1117 = vsel %vm552, %v1100, 0
        %v1120 = vsel %vm552, %v1102, 0
        %v1123 = vsel %vm552, %v1104, 0
        %v1126 = vsel %vm552, %v1106, 0
        %v1129 = vsel %vm552, %v1108, 0
        %v1132 = vsel %vm552, %v1110, 0
        %v1135 = vsel %vm552, %v1112, 0
        %1137 = vmatprep.subr.mxu0 0.0
        %1138 = vmatpush1.msra.mxu0 %v534
        %1139 = vmatprep.subr.mxu0 0.0
        %1140 = vmatpush1.msra.mxu0 %v533
        %1141 = vmatprep.subr.mxu0 0.0
        %1142 = vmatpush1.msra.mxu0 %v532
        %1143 = vmatprep.subr.mxu0 0.0
        %1144 = vmatpush1.msra.mxu0 %v531
        %1145 = vmatprep.subr.mxu0 0.0
        %1146 = vmatpush1.msra.mxu0 %v530
        %1147 = vmatprep.subr.mxu0 0.0
        %1148 = vmatpush1.msra.mxu0 %v529
        %1149 = vmatprep.subr.mxu0 0.0
        %1150 = vmatpush1.msra.mxu0 %v528
        %1151 = vmatprep.subr.mxu0 0.0
        %1152 = vmatpush1.msra.mxu0 %v527
        %1153 = vmatprep.subr.mxu0 0.0
        %1154 = vmatpush1.msra.mxu0 %v526
        %1155 = vmatprep.subr.mxu0 0.0
        %1156 = vmatpush1.msra.mxu0 %v525
        %1157 = vmatprep.subr.mxu0 0.0
        %1158 = vmatpush1.msra.mxu0 %v524
        %1159 = vmatprep.subr.mxu0 0.0
        %1160 = vmatpush1.msra.mxu0 %v523
        %1161 = vmatprep.subr.mxu0 0.0
        %1162 = vmatpush1.msra.mxu0 %v522
        %1163 = vmatprep.subr.mxu0 0.0
        %1164 = vmatpush1.msra.mxu0 %v521
        %1165 = vmatprep.subr.mxu0 0.0
        %1166 = vmatpush1.msra.mxu0 %v520
        %1167 = vmatprep.subr.mxu0 0.0
        %1168 = vmatpush1.msra.mxu0 %v519
        %1169 = vmatprep.subr.mxu0 0.0
        %1170 = vmatpush2.msra.mxu0 0.0
        %1171 = vmatprep.subr.mxu0 0.0
        %1172 = vmatpush2.msra.mxu0 0.0
        %1173 = vmatprep.subr.mxu0 0.0
        %1174 = vmatpush2.msra.mxu0 0.0
        %1175 = vmatprep.subr.mxu0 0.0
        %1176 = vmatpush2.msra.mxu0 0.0
        %1177 = vmatprep.subr.mxu0 0.0
        %1178 = vmatpush2.msra.mxu0 0.0
        %1179 = vmatprep.subr.mxu0 0.0
        %1180 = vmatpush2.msra.mxu0 0.0
        %1181 = vmatprep.subr.mxu0 0.0
        %1182 = vmatpush2.msra.mxu0 0.0
        %1183 = vmatprep.subr.mxu0 0.0
        %1184 = vmatpush2.msra.mxu0 0.0
        %1185 = vmatprep.subr.mxu0 0.0
        %1186 = vmatpush2.msra.mxu0 0.0
        %1187 = vmatprep.subr.mxu0 0.0
        %1188 = vmatpush2.msra.mxu0 0.0
        %1189 = vmatprep.subr.mxu0 0.0
        %1190 = vmatpush2.msra.mxu0 0.0
        %1191 = vmatprep.subr.mxu0 0.0
        %1192 = vmatpush2.msra.mxu0 0.0
        %1193 = vmatprep.subr.mxu0 0.0
        %1194 = vmatpush2.msra.mxu0 0.0
        %1195 = vmatprep.subr.mxu0 0.0
        %1196 = vmatpush2.msra.mxu0 0.0
        %1197 = vmatprep.subr.mxu0 0.0
        %1198 = vmatpush2.msra.mxu0 0.0
        %1199 = vmatprep.subr.mxu0 0.0
        %1200 = vmatpush2.msra.mxu0 %v579
        %1201 = vmatprep.mubr.f32.mxu0 %v1114
        %1202 = vmatmul.mubr.f32.gmra.mxu0 %v1097
        %v1203 = vpop.f32.mrf.mxu0
        %v1204 = vadd.f32 0.0, %v1203
        %v1205 = vpop.f32.mrf.mxu0
        %1206 = vmatprep.mubr.f32.mxu0 %v1117
        %1207 = vmatmul.mubr.f32.gmra.mxu0 %v1099
        %v1208 = vpop.f32.mrf.mxu0
        %v1209 = vadd.f32 0.0, %v1208
        %v1210 = vpop.f32.mrf.mxu0
        %1211 = vmatprep.mubr.f32.mxu0 %v1120
        %1212 = vmatmul.mubr.f32.gmra.mxu0 %v1101
        %v1213 = vpop.f32.mrf.mxu0
        %v1214 = vadd.f32 0.0, %v1213
        %v1215 = vpop.f32.mrf.mxu0
        %1216 = vmatprep.mubr.f32.mxu0 %v1123
        %1217 = vmatmul.mubr.f32.gmra.mxu0 %v1103
        %v1218 = vpop.f32.mrf.mxu0
        %v1219 = vadd.f32 0.0, %v1218
        %v1220 = vpop.f32.mrf.mxu0
        %1221 = vmatprep.mubr.f32.mxu0 %v1126
        %1222 = vmatmul.mubr.f32.gmra.mxu0 %v1105
        %v1223 = vpop.f32.mrf.mxu0
        %v1224 = vadd.f32 0.0, %v1223
        %v1225 = vpop.f32.mrf.mxu0
        %1226 = vmatprep.mubr.f32.mxu0 %v1129
        %1227 = vmatmul.mubr.f32.gmra.mxu0 %v1107
        %v1228 = vpop.f32.mrf.mxu0
        %v1229 = vadd.f32 0.0, %v1228
        %v1230 = vpop.f32.mrf.mxu0
        %1231 = vmatprep.mubr.f32.mxu0 %v1132
        %1232 = vmatmul.mubr.f32.gmra.mxu0 %v1109
        %v1233 = vpop.f32.mrf.mxu0
        %v1234 = vadd.f32 0.0, %v1233
        %v1235 = vpop.f32.mrf.mxu0
        %1236 = vmatprep.mubr.f32.mxu0 %v1135
        %1237 = vmatmul.mubr.f32.gmra.mxu0 %v1111
        %v1238 = vpop.f32.mrf.mxu0
        %v1239 = vadd.f32 0.0, %v1238
        %v1240 = vpop.f32.mrf.mxu0
        %1241 = vdwg.mxu0
        %s1242 = scalar_lea.vmem %s5, 32
        %v1243 = vld [vmem:[%s1242] sm:$0xff]
        %v1244 = vld [vmem:[%s1242 + $0x8] sm:$0xff]
        %v1246 = vsel %vm837, %v1204, 0
        %v1249 = vsel %vm837, %v1209, 0
        %v1252 = vsel %vm837, %v1214, 0
        %v1255 = vsel %vm837, %v1219, 0
        %v1258 = vsel %vm837, %v1224, 0
        %v1261 = vsel %vm837, %v1229, 0
        %v1264 = vsel %vm837, %v1234, 0
        %v1267 = vsel %vm837, %v1239, 0
        %1269 = vmatprep.subr.mxu0 0.0
        %1270 = vmatpush1.msra.mxu0 0.0
        %1271 = vmatprep.subr.mxu0 0.0
        %1272 = vmatpush1.msra.mxu0 0.0
        %1273 = vmatprep.subr.mxu0 0.0
        %1274 = vmatpush1.msra.mxu0 0.0
        %1275 = vmatprep.subr.mxu0 0.0
        %1276 = vmatpush1.msra.mxu0 0.0
        %1277 = vmatprep.subr.mxu0 0.0
        %1278 = vmatpush1.msra.mxu0 0.0
        %1279 = vmatprep.subr.mxu0 0.0
        %1280 = vmatpush1.msra.mxu0 0.0
        %1281 = vmatprep.subr.mxu0 0.0
        %1282 = vmatpush1.msra.mxu0 0.0
        %1283 = vmatprep.subr.mxu0 0.0
        %1284 = vmatpush1.msra.mxu0 0.0
        %1285 = vmatprep.subr.mxu0 0.0
        %1286 = vmatpush1.msra.mxu0 0.0
        %1287 = vmatprep.subr.mxu0 0.0
        %1288 = vmatpush1.msra.mxu0 0.0
        %1289 = vmatprep.subr.mxu0 0.0
        %1290 = vmatpush1.msra.mxu0 0.0
        %1291 = vmatprep.subr.mxu0 0.0
        %1292 = vmatpush1.msra.mxu0 0.0
        %1293 = vmatprep.subr.mxu0 0.0
        %1294 = vmatpush1.msra.mxu0 0.0
        %1295 = vmatprep.subr.mxu0 0.0
        %1296 = vmatpush1.msra.mxu0 0.0
        %1297 = vmatprep.subr.mxu0 0.0
        %1298 = vmatpush1.msra.mxu0 %v1244
        %1299 = vmatprep.subr.mxu0 0.0
        %1300 = vmatpush1.msra.mxu0 %v1243
        %1301 = vmatprep.subr.mxu0 0.0
        %1302 = vmatpush2.msra.mxu0 0.0
        %1303 = vmatprep.subr.mxu0 0.0
        %1304 = vmatpush2.msra.mxu0 0.0
        %1305 = vmatprep.subr.mxu0 0.0
        %1306 = vmatpush2.msra.mxu0 0.0
        %1307 = vmatprep.subr.mxu0 0.0
        %1308 = vmatpush2.msra.mxu0 0.0
        %1309 = vmatprep.subr.mxu0 0.0
        %1310 = vmatpush2.msra.mxu0 0.0
        %1311 = vmatprep.subr.mxu0 0.0
        %1312 = vmatpush2.msra.mxu0 0.0
        %1313 = vmatprep.subr.mxu0 0.0
        %1314 = vmatpush2.msra.mxu0 0.0
        %1315 = vmatprep.subr.mxu0 0.0
        %1316 = vmatpush2.msra.mxu0 0.0
        %1317 = vmatprep.subr.mxu0 0.0
        %1318 = vmatpush2.msra.mxu0 0.0
        %1319 = vmatprep.subr.mxu0 0.0
        %1320 = vmatpush2.msra.mxu0 0.0
        %1321 = vmatprep.subr.mxu0 0.0
        %1322 = vmatpush2.msra.mxu0 0.0
        %1323 = vmatprep.subr.mxu0 0.0
        %1324 = vmatpush2.msra.mxu0 0.0
        %1325 = vmatprep.subr.mxu0 0.0
        %1326 = vmatpush2.msra.mxu0 0.0
        %1327 = vmatprep.subr.mxu0 0.0
        %1328 = vmatpush2.msra.mxu0 0.0
        %1329 = vmatprep.subr.mxu0 0.0
        %1330 = vmatpush2.msra.mxu0 0.0
        %1331 = vmatprep.subr.mxu0 0.0
        %1332 = vmatpush2.msra.mxu0 0.0
        %1333 = vmatprep.mubr.f32.mxu0 0.0
        %1334 = vmatmul.mubr.f32.gmra.mxu0 %v1246
        %v1335 = vpop.f32.mrf.mxu0
        %v1336 = vadd.f32 0.0, %v1335
        %v1337 = vpop.f32.mrf.mxu0
        %1338 = vmatprep.mubr.f32.mxu0 0.0
        %1339 = vmatmul.mubr.f32.gmra.mxu0 %v1249
        %v1340 = vpop.f32.mrf.mxu0
        %v1341 = vadd.f32 0.0, %v1340
        %v1342 = vpop.f32.mrf.mxu0
        %1343 = vmatprep.mubr.f32.mxu0 0.0
        %1344 = vmatmul.mubr.f32.gmra.mxu0 %v1252
        %v1345 = vpop.f32.mrf.mxu0
        %v1346 = vadd.f32 0.0, %v1345
        %v1347 = vpop.f32.mrf.mxu0
        %1348 = vmatprep.mubr.f32.mxu0 0.0
        %1349 = vmatmul.mubr.f32.gmra.mxu0 %v1255
        %v1350 = vpop.f32.mrf.mxu0
        %v1351 = vadd.f32 0.0, %v1350
        %v1352 = vpop.f32.mrf.mxu0
        %1353 = vmatprep.mubr.f32.mxu0 0.0
        %1354 = vmatmul.mubr.f32.gmra.mxu0 %v1258
        %v1355 = vpop.f32.mrf.mxu0
        %v1356 = vadd.f32 0.0, %v1355
        %v1357 = vpop.f32.mrf.mxu0
        %1358 = vmatprep.mubr.f32.mxu0 0.0
        %1359 = vmatmul.mubr.f32.gmra.mxu0 %v1261
        %v1360 = vpop.f32.mrf.mxu0
        %v1361 = vadd.f32 0.0, %v1360
        %v1362 = vpop.f32.mrf.mxu0
        %1363 = vmatprep.mubr.f32.mxu0 0.0
        %1364 = vmatmul.mubr.f32.gmra.mxu0 %v1264
        %v1365 = vpop.f32.mrf.mxu0
        %v1366 = vadd.f32 0.0, %v1365
        %v1367 = vpop.f32.mrf.mxu0
        %1368 = vmatprep.mubr.f32.mxu0 0.0
        %1369 = vmatmul.mubr.f32.gmra.mxu0 %v1267
        %v1370 = vpop.f32.mrf.mxu0
        %v1371 = vadd.f32 0.0, %v1370
        %v1372 = vpop.f32.mrf.mxu0
        %1373 = vdwg.mxu0
        %v1374 = vadd.f32 %v1058, %v1336
        %v1375 = vadd.f32 %v1063, %v1341
        %v1376 = vadd.f32 %v1068, %v1346
        %v1377 = vadd.f32 %v1073, %v1351
        %v1378 = vadd.f32 %v1078, %v1356
        %v1379 = vadd.f32 %v1083, %v1361
        %v1380 = vadd.f32 %v1088, %v1366
        %v1381 = vadd.f32 %v1093, %v1371
        %s1382 = scalar_lea.vmem %s1, 384
        %v1383 = vld [vmem:[%s1382] sm:$0xff]
        %v1384 = vld [vmem:[%s1382 + $0x8] sm:$0xff]
        %v1385 = vld [vmem:[%s1382 + $0x10] sm:$0xff]
        %v1386 = vld [vmem:[%s1382 + $0x18] sm:$0xff]
        %v1387 = vld [vmem:[%s1382 + $0x20] sm:$0xff]
        %v1388 = vld [vmem:[%s1382 + $0x28] sm:$0xff]
        %v1389 = vld [vmem:[%s1382 + $0x30] sm:$0xff]
        %v1390 = vld [vmem:[%s1382 + $0x38] sm:$0xff]
        %v1391 = vld [vmem:[%s1382 + $0x40] sm:$0xff]
        %v1392 = vld [vmem:[%s1382 + $0x48] sm:$0xff]
        %v1393 = vld [vmem:[%s1382 + $0x50] sm:$0xff]
        %v1394 = vld [vmem:[%s1382 + $0x58] sm:$0xff]
        %v1395 = vld [vmem:[%s1382 + $0x60] sm:$0xff]
        %v1396 = vld [vmem:[%s1382 + $0x68] sm:$0xff]
        %v1397 = vld [vmem:[%s1382 + $0x70] sm:$0x7f]
        %v1398 = vld [vmem:[%s1382 + $0x78] sm:$0x7f]
        %v1400 = vsel %vm552, %v1384, 0
        %v1403 = vsel %vm552, %v1386, 0
        %v1406 = vsel %vm552, %v1388, 0
        %v1409 = vsel %vm552, %v1390, 0
        %v1412 = vsel %vm552, %v1392, 0
        %v1415 = vsel %vm552, %v1394, 0
        %v1418 = vsel %vm552, %v1396, 0
        %v1421 = vsel %vm552, %v1398, 0
        %1423 = vmatprep.subr.mxu0 0.0
        %1424 = vmatpush1.msra.mxu0 %v534
        %1425 = vmatprep.subr.mxu0 0.0
        %1426 = vmatpush1.msra.mxu0 %v533
        %1427 = vmatprep.subr.mxu0 0.0
        %1428 = vmatpush1.msra.mxu0 %v532
        %1429 = vmatprep.subr.mxu0 0.0
        %1430 = vmatpush1.msra.mxu0 %v531
        %1431 = vmatprep.subr.mxu0 0.0
        %1432 = vmatpush1.msra.mxu0 %v530
        %1433 = vmatprep.subr.mxu0 0.0
        %1434 = vmatpush1.msra.mxu0 %v529
        %1435 = vmatprep.subr.mxu0 0.0
        %1436 = vmatpush1.msra.mxu0 %v528
        %1437 = vmatprep.subr.mxu0 0.0
        %1438 = vmatpush1.msra.mxu0 %v527
        %1439 = vmatprep.subr.mxu0 0.0
        %1440 = vmatpush1.msra.mxu0 %v526
        %1441 = vmatprep.subr.mxu0 0.0
        %1442 = vmatpush1.msra.mxu0 %v525
        %1443 = vmatprep.subr.mxu0 0.0
        %1444 = vmatpush1.msra.mxu0 %v524
        %1445 = vmatprep.subr.mxu0 0.0
        %1446 = vmatpush1.msra.mxu0 %v523
        %1447 = vmatprep.subr.mxu0 0.0
        %1448 = vmatpush1.msra.mxu0 %v522
        %1449 = vmatprep.subr.mxu0 0.0
        %1450 = vmatpush1.msra.mxu0 %v521
        %1451 = vmatprep.subr.mxu0 0.0
        %1452 = vmatpush1.msra.mxu0 %v520
        %1453 = vmatprep.subr.mxu0 0.0
        %1454 = vmatpush1.msra.mxu0 %v519
        %1455 = vmatprep.subr.mxu0 0.0
        %1456 = vmatpush2.msra.mxu0 0.0
        %1457 = vmatprep.subr.mxu0 0.0
        %1458 = vmatpush2.msra.mxu0 0.0
        %1459 = vmatprep.subr.mxu0 0.0
        %1460 = vmatpush2.msra.mxu0 0.0
        %1461 = vmatprep.subr.mxu0 0.0
        %1462 = vmatpush2.msra.mxu0 0.0
        %1463 = vmatprep.subr.mxu0 0.0
        %1464 = vmatpush2.msra.mxu0 0.0
        %1465 = vmatprep.subr.mxu0 0.0
        %1466 = vmatpush2.msra.mxu0 0.0
        %1467 = vmatprep.subr.mxu0 0.0
        %1468 = vmatpush2.msra.mxu0 0.0
        %1469 = vmatprep.subr.mxu0 0.0
        %1470 = vmatpush2.msra.mxu0 0.0
        %1471 = vmatprep.subr.mxu0 0.0
        %1472 = vmatpush2.msra.mxu0 0.0
        %1473 = vmatprep.subr.mxu0 0.0
        %1474 = vmatpush2.msra.mxu0 0.0
        %1475 = vmatprep.subr.mxu0 0.0
        %1476 = vmatpush2.msra.mxu0 0.0
        %1477 = vmatprep.subr.mxu0 0.0
        %1478 = vmatpush2.msra.mxu0 0.0
        %1479 = vmatprep.subr.mxu0 0.0
        %1480 = vmatpush2.msra.mxu0 0.0
        %1481 = vmatprep.subr.mxu0 0.0
        %1482 = vmatpush2.msra.mxu0 0.0
        %1483 = vmatprep.subr.mxu0 0.0
        %1484 = vmatpush2.msra.mxu0 0.0
        %1485 = vmatprep.subr.mxu0 0.0
        %1486 = vmatpush2.msra.mxu0 %v579
        %1487 = vmatprep.mubr.f32.mxu0 %v1400
        %1488 = vmatmul.mubr.f32.gmra.mxu0 %v1383
        %v1489 = vpop.f32.mrf.mxu0
        %v1490 = vadd.f32 0.0, %v1489
        %v1491 = vpop.f32.mrf.mxu0
        %1492 = vmatprep.mubr.f32.mxu0 %v1403
        %1493 = vmatmul.mubr.f32.gmra.mxu0 %v1385
        %v1494 = vpop.f32.mrf.mxu0
        %v1495 = vadd.f32 0.0, %v1494
        %v1496 = vpop.f32.mrf.mxu0
        %1497 = vmatprep.mubr.f32.mxu0 %v1406
        %1498 = vmatmul.mubr.f32.gmra.mxu0 %v1387
        %v1499 = vpop.f32.mrf.mxu0
        %v1500 = vadd.f32 0.0, %v1499
        %v1501 = vpop.f32.mrf.mxu0
        %1502 = vmatprep.mubr.f32.mxu0 %v1409
        %1503 = vmatmul.mubr.f32.gmra.mxu0 %v1389
        %v1504 = vpop.f32.mrf.mxu0
        %v1505 = vadd.f32 0.0, %v1504
        %v1506 = vpop.f32.mrf.mxu0
        %1507 = vmatprep.mubr.f32.mxu0 %v1412
        %1508 = vmatmul.mubr.f32.gmra.mxu0 %v1391
        %v1509 = vpop.f32.mrf.mxu0
        %v1510 = vadd.f32 0.0, %v1509
        %v1511 = vpop.f32.mrf.mxu0
        %1512 = vmatprep.mubr.f32.mxu0 %v1415
        %1513 = vmatmul.mubr.f32.gmra.mxu0 %v1393
        %v1514 = vpop.f32.mrf.mxu0
        %v1515 = vadd.f32 0.0, %v1514
        %v1516 = vpop.f32.mrf.mxu0
        %1517 = vmatprep.mubr.f32.mxu0 %v1418
        %1518 = vmatmul.mubr.f32.gmra.mxu0 %v1395
        %v1519 = vpop.f32.mrf.mxu0
        %v1520 = vadd.f32 0.0, %v1519
        %v1521 = vpop.f32.mrf.mxu0
        %1522 = vmatprep.mubr.f32.mxu0 %v1421
        %1523 = vmatmul.mubr.f32.gmra.mxu0 %v1397
        %v1524 = vpop.f32.mrf.mxu0
        %v1525 = vadd.f32 0.0, %v1524
        %v1526 = vpop.f32.mrf.mxu0
        %1527 = vdwg.mxu0
        %s1528 = scalar_lea.vmem %s5, 48
        %v1529 = vld [vmem:[%s1528] sm:$0xff]
        %v1530 = vld [vmem:[%s1528 + $0x8] sm:$0xff]
        %v1532 = vsel %vm837, %v1490, 0
        %v1535 = vsel %vm837, %v1495, 0
        %v1538 = vsel %vm837, %v1500, 0
        %v1541 = vsel %vm837, %v1505, 0
        %v1544 = vsel %vm837, %v1510, 0
        %v1547 = vsel %vm837, %v1515, 0
        %v1550 = vsel %vm837, %v1520, 0
        %v1553 = vsel %vm837, %v1525, 0
        %1555 = vmatprep.subr.mxu0 0.0
        %1556 = vmatpush1.msra.mxu0 0.0
        %1557 = vmatprep.subr.mxu0 0.0
        %1558 = vmatpush1.msra.mxu0 0.0
        %1559 = vmatprep.subr.mxu0 0.0
        %1560 = vmatpush1.msra.mxu0 0.0
        %1561 = vmatprep.subr.mxu0 0.0
        %1562 = vmatpush1.msra.mxu0 0.0
        %1563 = vmatprep.subr.mxu0 0.0
        %1564 = vmatpush1.msra.mxu0 0.0
        %1565 = vmatprep.subr.mxu0 0.0
        %1566 = vmatpush1.msra.mxu0 0.0
        %1567 = vmatprep.subr.mxu0 0.0
        %1568 = vmatpush1.msra.mxu0 0.0
        %1569 = vmatprep.subr.mxu0 0.0
        %1570 = vmatpush1.msra.mxu0 0.0
        %1571 = vmatprep.subr.mxu0 0.0
        %1572 = vmatpush1.msra.mxu0 0.0
        %1573 = vmatprep.subr.mxu0 0.0
        %1574 = vmatpush1.msra.mxu0 0.0
        %1575 = vmatprep.subr.mxu0 0.0
        %1576 = vmatpush1.msra.mxu0 0.0
        %1577 = vmatprep.subr.mxu0 0.0
        %1578 = vmatpush1.msra.mxu0 0.0
        %1579 = vmatprep.subr.mxu0 0.0
        %1580 = vmatpush1.msra.mxu0 0.0
        %1581 = vmatprep.subr.mxu0 0.0
        %1582 = vmatpush1.msra.mxu0 0.0
        %1583 = vmatprep.subr.mxu0 0.0
        %1584 = vmatpush1.msra.mxu0 %v1530
        %1585 = vmatprep.subr.mxu0 0.0
        %1586 = vmatpush1.msra.mxu0 %v1529
        %1587 = vmatprep.subr.mxu0 0.0
        %1588 = vmatpush2.msra.mxu0 0.0
        %1589 = vmatprep.subr.mxu0 0.0
        %1590 = vmatpush2.msra.mxu0 0.0
        %1591 = vmatprep.subr.mxu0 0.0
        %1592 = vmatpush2.msra.mxu0 0.0
        %1593 = vmatprep.subr.mxu0 0.0
        %1594 = vmatpush2.msra.mxu0 0.0
        %1595 = vmatprep.subr.mxu0 0.0
        %1596 = vmatpush2.msra.mxu0 0.0
        %1597 = vmatprep.subr.mxu0 0.0
        %1598 = vmatpush2.msra.mxu0 0.0
        %1599 = vmatprep.subr.mxu0 0.0
        %1600 = vmatpush2.msra.mxu0 0.0
        %1601 = vmatprep.subr.mxu0 0.0
        %1602 = vmatpush2.msra.mxu0 0.0
        %1603 = vmatprep.subr.mxu0 0.0
        %1604 = vmatpush2.msra.mxu0 0.0
        %1605 = vmatprep.subr.mxu0 0.0
        %1606 = vmatpush2.msra.mxu0 0.0
        %1607 = vmatprep.subr.mxu0 0.0
        %1608 = vmatpush2.msra.mxu0 0.0
        %1609 = vmatprep.subr.mxu0 0.0
        %1610 = vmatpush2.msra.mxu0 0.0
        %1611 = vmatprep.subr.mxu0 0.0
        %1612 = vmatpush2.msra.mxu0 0.0
        %1613 = vmatprep.subr.mxu0 0.0
        %1614 = vmatpush2.msra.mxu0 0.0
        %1615 = vmatprep.subr.mxu0 0.0
        %1616 = vmatpush2.msra.mxu0 0.0
        %1617 = vmatprep.subr.mxu0 0.0
        %1618 = vmatpush2.msra.mxu0 0.0
        %1619 = vmatprep.mubr.f32.mxu0 0.0
        %1620 = vmatmul.mubr.f32.gmra.mxu0 %v1532
        %v1621 = vpop.f32.mrf.mxu0
        %v1622 = vadd.f32 0.0, %v1621
        %v1623 = vpop.f32.mrf.mxu0
        %1624 = vmatprep.mubr.f32.mxu0 0.0
        %1625 = vmatmul.mubr.f32.gmra.mxu0 %v1535
        %v1626 = vpop.f32.mrf.mxu0
        %v1627 = vadd.f32 0.0, %v1626
        %v1628 = vpop.f32.mrf.mxu0
        %1629 = vmatprep.mubr.f32.mxu0 0.0
        %1630 = vmatmul.mubr.f32.gmra.mxu0 %v1538
        %v1631 = vpop.f32.mrf.mxu0
        %v1632 = vadd.f32 0.0, %v1631
        %v1633 = vpop.f32.mrf.mxu0
        %1634 = vmatprep.mubr.f32.mxu0 0.0
        %1635 = vmatmul.mubr.f32.gmra.mxu0 %v1541
        %v1636 = vpop.f32.mrf.mxu0
        %v1637 = vadd.f32 0.0, %v1636
        %v1638 = vpop.f32.mrf.mxu0
        %1639 = vmatprep.mubr.f32.mxu0 0.0
        %1640 = vmatmul.mubr.f32.gmra.mxu0 %v1544
        %v1641 = vpop.f32.mrf.mxu0
        %v1642 = vadd.f32 0.0, %v1641
        %v1643 = vpop.f32.mrf.mxu0
        %1644 = vmatprep.mubr.f32.mxu0 0.0
        %1645 = vmatmul.mubr.f32.gmra.mxu0 %v1547
        %v1646 = vpop.f32.mrf.mxu0
        %v1647 = vadd.f32 0.0, %v1646
        %v1648 = vpop.f32.mrf.mxu0
        %1649 = vmatprep.mubr.f32.mxu0 0.0
        %1650 = vmatmul.mubr.f32.gmra.mxu0 %v1550
        %v1651 = vpop.f32.mrf.mxu0
        %v1652 = vadd.f32 0.0, %v1651
        %v1653 = vpop.f32.mrf.mxu0
        %1654 = vmatprep.mubr.f32.mxu0 0.0
        %1655 = vmatmul.mubr.f32.gmra.mxu0 %v1553
        %v1656 = vpop.f32.mrf.mxu0
        %v1657 = vadd.f32 0.0, %v1656
        %v1658 = vpop.f32.mrf.mxu0
        %1659 = vdwg.mxu0
        %v1660 = vadd.f32 %v1374, %v1622
        %v1661 = vadd.f32 %v1375, %v1627
        %v1662 = vadd.f32 %v1376, %v1632
        %v1663 = vadd.f32 %v1377, %v1637
        %v1664 = vadd.f32 %v1378, %v1642
        %v1665 = vadd.f32 %v1379, %v1647
        %v1666 = vadd.f32 %v1380, %v1652
        %v1667 = vadd.f32 %v1381, %v1657
        %s1668 = scalar_lea.vmem %s1, 512
        %v1669 = vld [vmem:[%s1668] sm:$0xff]
        %v1670 = vld [vmem:[%s1668 + $0x8] sm:$0xff]
        %v1671 = vld [vmem:[%s1668 + $0x10] sm:$0xff]
        %v1672 = vld [vmem:[%s1668 + $0x18] sm:$0xff]
        %v1673 = vld [vmem:[%s1668 + $0x20] sm:$0xff]
        %v1674 = vld [vmem:[%s1668 + $0x28] sm:$0xff]
        %v1675 = vld [vmem:[%s1668 + $0x30] sm:$0xff]
        %v1676 = vld [vmem:[%s1668 + $0x38] sm:$0xff]
        %v1677 = vld [vmem:[%s1668 + $0x40] sm:$0xff]
        %v1678 = vld [vmem:[%s1668 + $0x48] sm:$0xff]
        %v1679 = vld [vmem:[%s1668 + $0x50] sm:$0xff]
        %v1680 = vld [vmem:[%s1668 + $0x58] sm:$0xff]
        %v1681 = vld [vmem:[%s1668 + $0x60] sm:$0xff]
        %v1682 = vld [vmem:[%s1668 + $0x68] sm:$0xff]
        %v1683 = vld [vmem:[%s1668 + $0x70] sm:$0x7f]
        %v1684 = vld [vmem:[%s1668 + $0x78] sm:$0x7f]
        %v1686 = vsel %vm552, %v1670, 0
        %v1689 = vsel %vm552, %v1672, 0
        %v1692 = vsel %vm552, %v1674, 0
        %v1695 = vsel %vm552, %v1676, 0
        %v1698 = vsel %vm552, %v1678, 0
        %v1701 = vsel %vm552, %v1680, 0
        %v1704 = vsel %vm552, %v1682, 0
        %v1707 = vsel %vm552, %v1684, 0
        %1709 = vmatprep.subr.mxu0 0.0
        %1710 = vmatpush1.msra.mxu0 %v534
        %1711 = vmatprep.subr.mxu0 0.0
        %1712 = vmatpush1.msra.mxu0 %v533
        %1713 = vmatprep.subr.mxu0 0.0
        %1714 = vmatpush1.msra.mxu0 %v532
        %1715 = vmatprep.subr.mxu0 0.0
        %1716 = vmatpush1.msra.mxu0 %v531
        %1717 = vmatprep.subr.mxu0 0.0
        %1718 = vmatpush1.msra.mxu0 %v530
        %1719 = vmatprep.subr.mxu0 0.0
        %1720 = vmatpush1.msra.mxu0 %v529
        %1721 = vmatprep.subr.mxu0 0.0
        %1722 = vmatpush1.msra.mxu0 %v528
        %1723 = vmatprep.subr.mxu0 0.0
        %1724 = vmatpush1.msra.mxu0 %v527
        %1725 = vmatprep.subr.mxu0 0.0
        %1726 = vmatpush1.msra.mxu0 %v526
        %1727 = vmatprep.subr.mxu0 0.0
        %1728 = vmatpush1.msra.mxu0 %v525
        %1729 = vmatprep.subr.mxu0 0.0
        %1730 = vmatpush1.msra.mxu0 %v524
        %1731 = vmatprep.subr.mxu0 0.0
        %1732 = vmatpush1.msra.mxu0 %v523
        %1733 = vmatprep.subr.mxu0 0.0
        %1734 = vmatpush1.msra.mxu0 %v522
        %1735 = vmatprep.subr.mxu0 0.0
        %1736 = vmatpush1.msra.mxu0 %v521
        %1737 = vmatprep.subr.mxu0 0.0
        %1738 = vmatpush1.msra.mxu0 %v520
        %1739 = vmatprep.subr.mxu0 0.0
        %1740 = vmatpush1.msra.mxu0 %v519
        %1741 = vmatprep.subr.mxu0 0.0
        %1742 = vmatpush2.msra.mxu0 0.0
        %1743 = vmatprep.subr.mxu0 0.0
        %1744 = vmatpush2.msra.mxu0 0.0
        %1745 = vmatprep.subr.mxu0 0.0
        %1746 = vmatpush2.msra.mxu0 0.0
        %1747 = vmatprep.subr.mxu0 0.0
        %1748 = vmatpush2.msra.mxu0 0.0
        %1749 = vmatprep.subr.mxu0 0.0
        %1750 = vmatpush2.msra.mxu0 0.0
        %1751 = vmatprep.subr.mxu0 0.0
        %1752 = vmatpush2.msra.mxu0 0.0
        %1753 = vmatprep.subr.mxu0 0.0
        %1754 = vmatpush2.msra.mxu0 0.0
        %1755 = vmatprep.subr.mxu0 0.0
        %1756 = vmatpush2.msra.mxu0 0.0
        %1757 = vmatprep.subr.mxu0 0.0
        %1758 = vmatpush2.msra.mxu0 0.0
        %1759 = vmatprep.subr.mxu0 0.0
        %1760 = vmatpush2.msra.mxu0 0.0
        %1761 = vmatprep.subr.mxu0 0.0
        %1762 = vmatpush2.msra.mxu0 0.0
        %1763 = vmatprep.subr.mxu0 0.0
        %1764 = vmatpush2.msra.mxu0 0.0
        %1765 = vmatprep.subr.mxu0 0.0
        %1766 = vmatpush2.msra.mxu0 0.0
        %1767 = vmatprep.subr.mxu0 0.0
        %1768 = vmatpush2.msra.mxu0 0.0
        %1769 = vmatprep.subr.mxu0 0.0
        %1770 = vmatpush2.msra.mxu0 0.0
        %1771 = vmatprep.subr.mxu0 0.0
        %1772 = vmatpush2.msra.mxu0 %v579
        %1773 = vmatprep.mubr.f32.mxu0 %v1686
        %1774 = vmatmul.mubr.f32.gmra.mxu0 %v1669
        %v1775 = vpop.f32.mrf.mxu0
        %v1776 = vadd.f32 0.0, %v1775
        %v1777 = vpop.f32.mrf.mxu0
        %1778 = vmatprep.mubr.f32.mxu0 %v1689
        %1779 = vmatmul.mubr.f32.gmra.mxu0 %v1671
        %v1780 = vpop.f32.mrf.mxu0
        %v1781 = vadd.f32 0.0, %v1780
        %v1782 = vpop.f32.mrf.mxu0
        %1783 = vmatprep.mubr.f32.mxu0 %v1692
        %1784 = vmatmul.mubr.f32.gmra.mxu0 %v1673
        %v1785 = vpop.f32.mrf.mxu0
        %v1786 = vadd.f32 0.0, %v1785
        %v1787 = vpop.f32.mrf.mxu0
        %1788 = vmatprep.mubr.f32.mxu0 %v1695
        %1789 = vmatmul.mubr.f32.gmra.mxu0 %v1675
        %v1790 = vpop.f32.mrf.mxu0
        %v1791 = vadd.f32 0.0, %v1790
        %v1792 = vpop.f32.mrf.mxu0
        %1793 = vmatprep.mubr.f32.mxu0 %v1698
        %1794 = vmatmul.mubr.f32.gmra.mxu0 %v1677
        %v1795 = vpop.f32.mrf.mxu0
        %v1796 = vadd.f32 0.0, %v1795
        %v1797 = vpop.f32.mrf.mxu0
        %1798 = vmatprep.mubr.f32.mxu0 %v1701
        %1799 = vmatmul.mubr.f32.gmra.mxu0 %v1679
        %v1800 = vpop.f32.mrf.mxu0
        %v1801 = vadd.f32 0.0, %v1800
        %v1802 = vpop.f32.mrf.mxu0
        %1803 = vmatprep.mubr.f32.mxu0 %v1704
        %1804 = vmatmul.mubr.f32.gmra.mxu0 %v1681
        %v1805 = vpop.f32.mrf.mxu0
        %v1806 = vadd.f32 0.0, %v1805
        %v1807 = vpop.f32.mrf.mxu0
        %1808 = vmatprep.mubr.f32.mxu0 %v1707
        %1809 = vmatmul.mubr.f32.gmra.mxu0 %v1683
        %v1810 = vpop.f32.mrf.mxu0
        %v1811 = vadd.f32 0.0, %v1810
        %v1812 = vpop.f32.mrf.mxu0
        %1813 = vdwg.mxu0
        %s1814 = scalar_lea.vmem %s5, 64
        %v1815 = vld [vmem:[%s1814] sm:$0xff]
        %v1816 = vld [vmem:[%s1814 + $0x8] sm:$0xff]
        %v1818 = vsel %vm837, %v1776, 0
        %v1821 = vsel %vm837, %v1781, 0
        %v1824 = vsel %vm837, %v1786, 0
        %v1827 = vsel %vm837, %v1791, 0
        %v1830 = vsel %vm837, %v1796, 0
        %v1833 = vsel %vm837, %v1801, 0
        %v1836 = vsel %vm837, %v1806, 0
        %v1839 = vsel %vm837, %v1811, 0
        %1841 = vmatprep.subr.mxu0 0.0
        %1842 = vmatpush1.msra.mxu0 0.0
        %1843 = vmatprep.subr.mxu0 0.0
        %1844 = vmatpush1.msra.mxu0 0.0
        %1845 = vmatprep.subr.mxu0 0.0
        %1846 = vmatpush1.msra.mxu0 0.0
        %1847 = vmatprep.subr.mxu0 0.0
        %1848 = vmatpush1.msra.mxu0 0.0
        %1849 = vmatprep.subr.mxu0 0.0
        %1850 = vmatpush1.msra.mxu0 0.0
        %1851 = vmatprep.subr.mxu0 0.0
        %1852 = vmatpush1.msra.mxu0 0.0
        %1853 = vmatprep.subr.mxu0 0.0
        %1854 = vmatpush1.msra.mxu0 0.0
        %1855 = vmatprep.subr.mxu0 0.0
        %1856 = vmatpush1.msra.mxu0 0.0
        %1857 = vmatprep.subr.mxu0 0.0
        %1858 = vmatpush1.msra.mxu0 0.0
        %1859 = vmatprep.subr.mxu0 0.0
        %1860 = vmatpush1.msra.mxu0 0.0
        %1861 = vmatprep.subr.mxu0 0.0
        %1862 = vmatpush1.msra.mxu0 0.0
        %1863 = vmatprep.subr.mxu0 0.0
        %1864 = vmatpush1.msra.mxu0 0.0
        %1865 = vmatprep.subr.mxu0 0.0
        %1866 = vmatpush1.msra.mxu0 0.0
        %1867 = vmatprep.subr.mxu0 0.0
        %1868 = vmatpush1.msra.mxu0 0.0
        %1869 = vmatprep.subr.mxu0 0.0
        %1870 = vmatpush1.msra.mxu0 %v1816
        %1871 = vmatprep.subr.mxu0 0.0
        %1872 = vmatpush1.msra.mxu0 %v1815
        %1873 = vmatprep.subr.mxu0 0.0
        %1874 = vmatpush2.msra.mxu0 0.0
        %1875 = vmatprep.subr.mxu0 0.0
        %1876 = vmatpush2.msra.mxu0 0.0
        %1877 = vmatprep.subr.mxu0 0.0
        %1878 = vmatpush2.msra.mxu0 0.0
        %1879 = vmatprep.subr.mxu0 0.0
        %1880 = vmatpush2.msra.mxu0 0.0
        %1881 = vmatprep.subr.mxu0 0.0
        %1882 = vmatpush2.msra.mxu0 0.0
        %1883 = vmatprep.subr.mxu0 0.0
        %1884 = vmatpush2.msra.mxu0 0.0
        %1885 = vmatprep.subr.mxu0 0.0
        %1886 = vmatpush2.msra.mxu0 0.0
        %1887 = vmatprep.subr.mxu0 0.0
        %1888 = vmatpush2.msra.mxu0 0.0
        %1889 = vmatprep.subr.mxu0 0.0
        %1890 = vmatpush2.msra.mxu0 0.0
        %1891 = vmatprep.subr.mxu0 0.0
        %1892 = vmatpush2.msra.mxu0 0.0
        %1893 = vmatprep.subr.mxu0 0.0
        %1894 = vmatpush2.msra.mxu0 0.0
        %1895 = vmatprep.subr.mxu0 0.0
        %1896 = vmatpush2.msra.mxu0 0.0
        %1897 = vmatprep.subr.mxu0 0.0
        %1898 = vmatpush2.msra.mxu0 0.0
        %1899 = vmatprep.subr.mxu0 0.0
        %1900 = vmatpush2.msra.mxu0 0.0
        %1901 = vmatprep.subr.mxu0 0.0
        %1902 = vmatpush2.msra.mxu0 0.0
        %1903 = vmatprep.subr.mxu0 0.0
        %1904 = vmatpush2.msra.mxu0 0.0
        %1905 = vmatprep.mubr.f32.mxu0 0.0
        %1906 = vmatmul.mubr.f32.gmra.mxu0 %v1818
        %v1907 = vpop.f32.mrf.mxu0
        %v1908 = vadd.f32 0.0, %v1907
        %v1909 = vpop.f32.mrf.mxu0
        %1910 = vmatprep.mubr.f32.mxu0 0.0
        %1911 = vmatmul.mubr.f32.gmra.mxu0 %v1821
        %v1912 = vpop.f32.mrf.mxu0
        %v1913 = vadd.f32 0.0, %v1912
        %v1914 = vpop.f32.mrf.mxu0
        %1915 = vmatprep.mubr.f32.mxu0 0.0
        %1916 = vmatmul.mubr.f32.gmra.mxu0 %v1824
        %v1917 = vpop.f32.mrf.mxu0
        %v1918 = vadd.f32 0.0, %v1917
        %v1919 = vpop.f32.mrf.mxu0
        %1920 = vmatprep.mubr.f32.mxu0 0.0
        %1921 = vmatmul.mubr.f32.gmra.mxu0 %v1827
        %v1922 = vpop.f32.mrf.mxu0
        %v1923 = vadd.f32 0.0, %v1922
        %v1924 = vpop.f32.mrf.mxu0
        %1925 = vmatprep.mubr.f32.mxu0 0.0
        %1926 = vmatmul.mubr.f32.gmra.mxu0 %v1830
        %v1927 = vpop.f32.mrf.mxu0
        %v1928 = vadd.f32 0.0, %v1927
        %v1929 = vpop.f32.mrf.mxu0
        %1930 = vmatprep.mubr.f32.mxu0 0.0
        %1931 = vmatmul.mubr.f32.gmra.mxu0 %v1833
        %v1932 = vpop.f32.mrf.mxu0
        %v1933 = vadd.f32 0.0, %v1932
        %v1934 = vpop.f32.mrf.mxu0
        %1935 = vmatprep.mubr.f32.mxu0 0.0
        %1936 = vmatmul.mubr.f32.gmra.mxu0 %v1836
        %v1937 = vpop.f32.mrf.mxu0
        %v1938 = vadd.f32 0.0, %v1937
        %v1939 = vpop.f32.mrf.mxu0
        %1940 = vmatprep.mubr.f32.mxu0 0.0
        %1941 = vmatmul.mubr.f32.gmra.mxu0 %v1839
        %v1942 = vpop.f32.mrf.mxu0
        %v1943 = vadd.f32 0.0, %v1942
        %v1944 = vpop.f32.mrf.mxu0
        %1945 = vdwg.mxu0
        %v1946 = vadd.f32 %v1660, %v1908
        %v1947 = vadd.f32 %v1661, %v1913
        %v1948 = vadd.f32 %v1662, %v1918
        %v1949 = vadd.f32 %v1663, %v1923
        %v1950 = vadd.f32 %v1664, %v1928
        %v1951 = vadd.f32 %v1665, %v1933
        %v1952 = vadd.f32 %v1666, %v1938
        %v1953 = vadd.f32 %v1667, %v1943
        %v1954 = vmax.f32 %v1946, 0.0
        %v1955 = vmax.f32 %v1947, 0.0
        %v1956 = vmax.f32 %v1948, 0.0
        %v1957 = vmax.f32 %v1949, 0.0
        %v1958 = vmax.f32 %v1950, 0.0
        %v1959 = vmax.f32 %v1951, 0.0
        %v1960 = vmax.f32 %v1952, 0.0
        %v1961 = vmax.f32 %v1953, 0.0
        %v1962 = vlaneseq
        %v1963 = vshrl.u32 %v1962, 7
        %v1964 = vadd.s32 %v1963, 8
        %v1965 = vadd.s32 %v1963, 16
        %v1966 = vadd.s32 %v1963, 24
        %v1967 = vadd.s32 %v1963, 32
        %v1968 = vadd.s32 %v1963, 40
        %v1969 = vadd.s32 %v1963, 48
        %v1970 = vadd.s32 %v1963, 56
        %v1971 = vand.u32 %v1963, 7
        %v1972 = vand.u32 %v1964, 7
        %v1973 = vand.u32 %v1965, 7
        %v1974 = vand.u32 %v1966, 7
        %v1975 = vand.u32 %v1967, 7
        %v1976 = vand.u32 %v1968, 7
        %v1977 = vand.u32 %v1969, 7
        %v1978 = vand.u32 %v1970, 7
        %v1979 = vlaneseq
        %v1980 = vand.u32 %v1979, 127
        %vm1981 = vcmp.eq.s32.totalorder %v1971, %v1980
        %vm1982 = vcmp.eq.s32.totalorder %v1972, %v1980
        %vm1983 = vcmp.eq.s32.totalorder %v1973, %v1980
        %vm1984 = vcmp.eq.s32.totalorder %v1974, %v1980
        %vm1985 = vcmp.eq.s32.totalorder %v1975, %v1980
        %vm1986 = vcmp.eq.s32.totalorder %v1976, %v1980
        %vm1987 = vcmp.eq.s32.totalorder %v1977, %v1980
        %vm1988 = vcmp.eq.s32.totalorder %v1978, %v1980
        %v1989 = vsel %vm1981, 1, 0
        %v1990 = vsel %vm1982, 1, 0
        %v1991 = vsel %vm1983, 1, 0
        %v1992 = vsel %vm1984, 1, 0
        %v1993 = vsel %vm1985, 1, 0
        %v1994 = vsel %vm1986, 1, 0
        %v1995 = vsel %vm1987, 1, 0
        %v1996 = vsel %vm1988, 1, 0
        %v1997 = vcvt.s32.f32 %v1989
        %v1998 = vcvt.s32.f32 %v1990
        %v1999 = vcvt.s32.f32 %v1991
        %v2000 = vcvt.s32.f32 %v1992
        %v2001 = vcvt.s32.f32 %v1993
        %v2002 = vcvt.s32.f32 %v1994
        %v2003 = vcvt.s32.f32 %v1995
        %v2004 = vcvt.s32.f32 %v1996
        %v2005 = vand.u32 %v1980, 7
        %vm2006 = vcmp.eq.s32.totalorder %v1963, %v2005
        %v2007 = vsel %vm2006, 1, 0
        %v2008 = vcvt.s32.f32 %v2007
        %vm2009 = vcmask 523264
        %v2010 = vsel %vm2009, %v1954, 0.0
        %v2011 = vsel %vm2009, %v1955, 0.0
        %v2012 = vadd.f32 %v2010, %v2011
        %v2013 = vsel %vm2009, %v1956, 0.0
        %v2014 = vadd.f32 %v2012, %v2013
        %v2015 = vsel %vm2009, %v1957, 0.0
        %v2016 = vadd.f32 %v2014, %v2015
        %v2017 = vsel %vm2009, %v1958, 0.0
        %v2018 = vadd.f32 %v2016, %v2017
        %v2019 = vsel %vm2009, %v1959, 0.0
        %v2020 = vadd.f32 %v2018, %v2019
        %v2021 = vsel %vm2009, %v1960, 0.0
        %v2022 = vadd.f32 %v2020, %v2021
        %vm2023 = vcmask 522240
        %v2024 = vsel %vm2023, %v1961, 0.0
        %v2025 = vadd.f32 %v2022, %v2024
        %v2026 = vrot.slane %v2025, 4
        %v2027 = vadd.f32 %v2025, %v2026
        %v2028 = vrot.slane %v2027, 2
        %v2029 = vadd.f32 %v2027, %v2028
        %v2030 = vrot.slane %v2029, 1
        %v2031 = vadd.f32 %v2029, %v2030
        %v2033 = vsel %vm2009, %v2031, 0
        %2035 = vmatprep.subr.mxu0 0.0
        %2036 = vmatpush1.msra.mxu0 0.0
        %2037 = vmatprep.subr.mxu0 0.0
        %2038 = vmatpush1.msra.mxu0 0.0
        %2039 = vmatprep.subr.mxu0 0.0
        %2040 = vmatpush1.msra.mxu0 0.0
        %2041 = vmatprep.subr.mxu0 0.0
        %2042 = vmatpush1.msra.mxu0 0.0
        %2043 = vmatprep.subr.mxu0 0.0
        %2044 = vmatpush1.msra.mxu0 0.0
        %2045 = vmatprep.subr.mxu0 0.0
        %2046 = vmatpush1.msra.mxu0 0.0
        %2047 = vmatprep.subr.mxu0 0.0
        %2048 = vmatpush1.msra.mxu0 0.0
        %2049 = vmatprep.subr.mxu0 0.0
        %2050 = vmatpush1.msra.mxu0 0.0
        %2051 = vmatprep.subr.mxu0 0.0
        %2052 = vmatpush1.msra.mxu0 %v2004
        %2053 = vmatprep.subr.mxu0 0.0
        %2054 = vmatpush1.msra.mxu0 %v2003
        %2055 = vmatprep.subr.mxu0 0.0
        %2056 = vmatpush1.msra.mxu0 %v2002
        %2057 = vmatprep.subr.mxu0 0.0
        %2058 = vmatpush1.msra.mxu0 %v2001
        %2059 = vmatprep.subr.mxu0 0.0
        %2060 = vmatpush1.msra.mxu0 %v2000
        %2061 = vmatprep.subr.mxu0 0.0
        %2062 = vmatpush1.msra.mxu0 %v1999
        %2063 = vmatprep.subr.mxu0 0.0
        %2064 = vmatpush1.msra.mxu0 %v1998
        %2065 = vmatprep.subr.mxu0 0.0
        %2066 = vmatpush1.msra.mxu0 %v1997
        %2067 = vmatprep.subr.mxu0 0.0
        %2068 = vmatpush2.msra.mxu0 0.0
        %2069 = vmatprep.subr.mxu0 0.0
        %2070 = vmatpush2.msra.mxu0 0.0
        %2071 = vmatprep.subr.mxu0 0.0
        %2072 = vmatpush2.msra.mxu0 0.0
        %2073 = vmatprep.subr.mxu0 0.0
        %2074 = vmatpush2.msra.mxu0 0.0
        %2075 = vmatprep.subr.mxu0 0.0
        %2076 = vmatpush2.msra.mxu0 0.0
        %2077 = vmatprep.subr.mxu0 0.0
        %2078 = vmatpush2.msra.mxu0 0.0
        %2079 = vmatprep.subr.mxu0 0.0
        %2080 = vmatpush2.msra.mxu0 0.0
        %2081 = vmatprep.subr.mxu0 0.0
        %2082 = vmatpush2.msra.mxu0 0.0
        %2083 = vmatprep.subr.mxu0 0.0
        %2084 = vmatpush2.msra.mxu0 0.0
        %2085 = vmatprep.subr.mxu0 0.0
        %2086 = vmatpush2.msra.mxu0 0.0
        %2087 = vmatprep.subr.mxu0 0.0
        %2088 = vmatpush2.msra.mxu0 0.0
        %2089 = vmatprep.subr.mxu0 0.0
        %2090 = vmatpush2.msra.mxu0 0.0
        %2091 = vmatprep.subr.mxu0 0.0
        %2092 = vmatpush2.msra.mxu0 0.0
        %2093 = vmatprep.subr.mxu0 0.0
        %2094 = vmatpush2.msra.mxu0 0.0
        %2095 = vmatprep.subr.mxu0 0.0
        %2096 = vmatpush2.msra.mxu0 0.0
        %2097 = vmatprep.subr.mxu0 0.0
        %2098 = vmatpush2.msra.mxu0 0.0
        %2099 = vmatprep.mubr.f32.mxu0 0.0
        %2100 = vmatmul.mubr.f32.gmra.mxu0 %v2033
        %v2101 = vpop.f32.mrf.mxu0
        %v2102 = vadd.f32 0.0, %v2101
        %v2103 = vpop.f32.mrf.mxu0
        %2104 = vdwg.mxu0
        %v2105 = vmul.f32 %v2102, 0.001984127
        %v2106 = vmul.f32 %v1954, %v1954
        %v2107 = vmul.f32 %v1955, %v1955
        %v2108 = vmul.f32 %v1956, %v1956
        %v2109 = vmul.f32 %v1957, %v1957
        %v2110 = vmul.f32 %v1958, %v1958
        %v2111 = vmul.f32 %v1959, %v1959
        %v2112 = vmul.f32 %v1960, %v1960
        %v2113 = vmul.f32 %v1961, %v1961
        %v2114 = vsel %vm2009, %v2106, 0.0
        %v2115 = vsel %vm2009, %v2107, 0.0
        %v2116 = vadd.f32 %v2114, %v2115
        %v2117 = vsel %vm2009, %v2108, 0.0
        %v2118 = vadd.f32 %v2116, %v2117
        %v2119 = vsel %vm2009, %v2109, 0.0
        %v2120 = vadd.f32 %v2118, %v2119
        %v2121 = vsel %vm2009, %v2110, 0.0
        %v2122 = vadd.f32 %v2120, %v2121
        %v2123 = vsel %vm2009, %v2111, 0.0
        %v2124 = vadd.f32 %v2122, %v2123
        %v2125 = vsel %vm2009, %v2112, 0.0
        %v2126 = vadd.f32 %v2124, %v2125
        %v2127 = vsel %vm2023, %v2113, 0.0
        %v2128 = vadd.f32 %v2126, %v2127
        %v2129 = vrot.slane %v2128, 4
        %v2130 = vadd.f32 %v2128, %v2129
        %v2131 = vrot.slane %v2130, 2
        %v2132 = vadd.f32 %v2130, %v2131
        %v2133 = vrot.slane %v2132, 1
        %v2134 = vadd.f32 %v2132, %v2133
        %v2136 = vsel %vm2009, %v2134, 0
        %2138 = vmatprep.subr.mxu0 0.0
        %2139 = vmatpush1.msra.mxu0 0.0
        %2140 = vmatprep.subr.mxu0 0.0
        %2141 = vmatpush1.msra.mxu0 0.0
        %2142 = vmatprep.subr.mxu0 0.0
        %2143 = vmatpush1.msra.mxu0 0.0
        %2144 = vmatprep.subr.mxu0 0.0
        %2145 = vmatpush1.msra.mxu0 0.0
        %2146 = vmatprep.subr.mxu0 0.0
        %2147 = vmatpush1.msra.mxu0 0.0
        %2148 = vmatprep.subr.mxu0 0.0
        %2149 = vmatpush1.msra.mxu0 0.0
        %2150 = vmatprep.subr.mxu0 0.0
        %2151 = vmatpush1.msra.mxu0 0.0
        %2152 = vmatprep.subr.mxu0 0.0
        %2153 = vmatpush1.msra.mxu0 0.0
        %2154 = vmatprep.subr.mxu0 0.0
        %2155 = vmatpush1.msra.mxu0 %v2004
        %2156 = vmatprep.subr.mxu0 0.0
        %2157 = vmatpush1.msra.mxu0 %v2003
        %2158 = vmatprep.subr.mxu0 0.0
        %2159 = vmatpush1.msra.mxu0 %v2002
        %2160 = vmatprep.subr.mxu0 0.0
        %2161 = vmatpush1.msra.mxu0 %v2001
        %2162 = vmatprep.subr.mxu0 0.0
        %2163 = vmatpush1.msra.mxu0 %v2000
        %2164 = vmatprep.subr.mxu0 0.0
        %2165 = vmatpush1.msra.mxu0 %v1999
        %2166 = vmatprep.subr.mxu0 0.0
        %2167 = vmatpush1.msra.mxu0 %v1998
        %2168 = vmatprep.subr.mxu0 0.0
        %2169 = vmatpush1.msra.mxu0 %v1997
        %2170 = vmatprep.subr.mxu0 0.0
        %2171 = vmatpush2.msra.mxu0 0.0
        %2172 = vmatprep.subr.mxu0 0.0
        %2173 = vmatpush2.msra.mxu0 0.0
        %2174 = vmatprep.subr.mxu0 0.0
        %2175 = vmatpush2.msra.mxu0 0.0
        %2176 = vmatprep.subr.mxu0 0.0
        %2177 = vmatpush2.msra.mxu0 0.0
        %2178 = vmatprep.subr.mxu0 0.0
        %2179 = vmatpush2.msra.mxu0 0.0
        %2180 = vmatprep.subr.mxu0 0.0
        %2181 = vmatpush2.msra.mxu0 0.0
        %2182 = vmatprep.subr.mxu0 0.0
        %2183 = vmatpush2.msra.mxu0 0.0
        %2184 = vmatprep.subr.mxu0 0.0
        %2185 = vmatpush2.msra.mxu0 0.0
        %2186 = vmatprep.subr.mxu0 0.0
        %2187 = vmatpush2.msra.mxu0 0.0
        %2188 = vmatprep.subr.mxu0 0.0
        %2189 = vmatpush2.msra.mxu0 0.0
        %2190 = vmatprep.subr.mxu0 0.0
        %2191 = vmatpush2.msra.mxu0 0.0
        %2192 = vmatprep.subr.mxu0 0.0
        %2193 = vmatpush2.msra.mxu0 0.0
        %2194 = vmatprep.subr.mxu0 0.0
        %2195 = vmatpush2.msra.mxu0 0.0
        %2196 = vmatprep.subr.mxu0 0.0
        %2197 = vmatpush2.msra.mxu0 0.0
        %2198 = vmatprep.subr.mxu0 0.0
        %2199 = vmatpush2.msra.mxu0 0.0
        %2200 = vmatprep.subr.mxu0 0.0
        %2201 = vmatpush2.msra.mxu0 0.0
        %2202 = vmatprep.mubr.f32.mxu0 0.0
        %2203 = vmatmul.mubr.f32.gmra.mxu0 %v2136
        %v2204 = vpop.f32.mrf.mxu0
        %v2205 = vadd.f32 0.0, %v2204
        %v2206 = vpop.f32.mrf.mxu0
        %2207 = vdwg.mxu0
        %v2208 = vmul.f32 %v2205, 0.001984127
        %v2209 = vmul.f32 %v2105, %v2105
        %v2210 = vsub.f32 %v2208, %v2209
        %v2211 = vld [vmem:[%s10] sm:$0x1]
        %v2212 = vld [vmem:[%s10 + $0x1] sm:$0x1]
        %v2213 = vadd.f32 %v2210, 1e-05
        %v2214 = vrsqrt.pop %v2213
        %v2215 = vmul.f32 %v2211, %v2214
        %v2216 = vmul.f32 %v2105, %v2215
        %v2217 = vsub.f32 %v2212, %v2216
        %vm2218 = vcmask 64512
        %v2220 = vsel %vm2218, %v2215, 0
        %2222 = vmatprep.subr.mxu0 0.0
        %2223 = vmatpush1.msra.mxu0 0.0
        %2224 = vmatprep.subr.mxu0 0.0
        %2225 = vmatpush1.msra.mxu0 0.0
        %2226 = vmatprep.subr.mxu0 0.0
        %2227 = vmatpush1.msra.mxu0 0.0
        %2228 = vmatprep.subr.mxu0 0.0
        %2229 = vmatpush1.msra.mxu0 0.0
        %2230 = vmatprep.subr.mxu0 0.0
        %2231 = vmatpush1.msra.mxu0 0.0
        %2232 = vmatprep.subr.mxu0 0.0
        %2233 = vmatpush1.msra.mxu0 0.0
        %2234 = vmatprep.subr.mxu0 0.0
        %2235 = vmatpush1.msra.mxu0 0.0
        %2236 = vmatprep.subr.mxu0 0.0
        %2237 = vmatpush1.msra.mxu0 0.0
        %2238 = vmatprep.subr.mxu0 0.0
        %2239 = vmatpush1.msra.mxu0 0.0
        %2240 = vmatprep.subr.mxu0 0.0
        %2241 = vmatpush1.msra.mxu0 0.0
        %2242 = vmatprep.subr.mxu0 0.0
        %2243 = vmatpush1.msra.mxu0 0.0
        %2244 = vmatprep.subr.mxu0 0.0
        %2245 = vmatpush1.msra.mxu0 0.0
        %2246 = vmatprep.subr.mxu0 0.0
        %2247 = vmatpush1.msra.mxu0 0.0
        %2248 = vmatprep.subr.mxu0 0.0
        %2249 = vmatpush1.msra.mxu0 0.0
        %2250 = vmatprep.subr.mxu0 0.0
        %2251 = vmatpush1.msra.mxu0 0.0
        %2252 = vmatprep.subr.mxu0 0.0
        %2253 = vmatpush1.msra.mxu0 %v2008
        %2254 = vmatprep.subr.mxu0 0.0
        %2255 = vmatpush2.msra.mxu0 0.0
        %2256 = vmatprep.subr.mxu0 0.0
        %2257 = vmatpush2.msra.mxu0 0.0
        %2258 = vmatprep.subr.mxu0 0.0
        %2259 = vmatpush2.msra.mxu0 0.0
        %2260 = vmatprep.subr.mxu0 0.0
        %2261 = vmatpush2.msra.mxu0 0.0
        %2262 = vmatprep.subr.mxu0 0.0
        %2263 = vmatpush2.msra.mxu0 0.0
        %2264 = vmatprep.subr.mxu0 0.0
        %2265 = vmatpush2.msra.mxu0 0.0
        %2266 = vmatprep.subr.mxu0 0.0
        %2267 = vmatpush2.msra.mxu0 0.0
        %2268 = vmatprep.subr.mxu0 0.0
        %2269 = vmatpush2.msra.mxu0 0.0
        %2270 = vmatprep.subr.mxu0 0.0
        %2271 = vmatpush2.msra.mxu0 0.0
        %2272 = vmatprep.subr.mxu0 0.0
        %2273 = vmatpush2.msra.mxu0 0.0
        %2274 = vmatprep.subr.mxu0 0.0
        %2275 = vmatpush2.msra.mxu0 0.0
        %2276 = vmatprep.subr.mxu0 0.0
        %2277 = vmatpush2.msra.mxu0 0.0
        %2278 = vmatprep.subr.mxu0 0.0
        %2279 = vmatpush2.msra.mxu0 0.0
        %2280 = vmatprep.subr.mxu0 0.0
        %2281 = vmatpush2.msra.mxu0 0.0
        %2282 = vmatprep.subr.mxu0 0.0
        %2283 = vmatpush2.msra.mxu0 0.0
        %2284 = vmatprep.subr.mxu0 0.0
        %2285 = vmatpush2.msra.mxu0 0.0
        %2286 = vmatprep.mubr.f32.mxu0 0.0
        %2287 = vmatmul.mubr.f32.gmra.mxu0 %v2220
        %v2288 = vpop.f32.mrf.mxu0
        %v2289 = vadd.f32 0.0, %v2288
        %v2290 = vpop.f32.mrf.mxu0
        %2291 = vdwg.mxu0
        %v2293 = vsel %vm2218, %v2217, 0
        %2295 = vmatprep.subr.mxu0 0.0
        %2296 = vmatpush1.msra.mxu0 0.0
        %2297 = vmatprep.subr.mxu0 0.0
        %2298 = vmatpush1.msra.mxu0 0.0
        %2299 = vmatprep.subr.mxu0 0.0
        %2300 = vmatpush1.msra.mxu0 0.0
        %2301 = vmatprep.subr.mxu0 0.0
        %2302 = vmatpush1.msra.mxu0 0.0
        %2303 = vmatprep.subr.mxu0 0.0
        %2304 = vmatpush1.msra.mxu0 0.0
        %2305 = vmatprep.subr.mxu0 0.0
        %2306 = vmatpush1.msra.mxu0 0.0
        %2307 = vmatprep.subr.mxu0 0.0
        %2308 = vmatpush1.msra.mxu0 0.0
        %2309 = vmatprep.subr.mxu0 0.0
        %2310 = vmatpush1.msra.mxu0 0.0
        %2311 = vmatprep.subr.mxu0 0.0
        %2312 = vmatpush1.msra.mxu0 0.0
        %2313 = vmatprep.subr.mxu0 0.0
        %2314 = vmatpush1.msra.mxu0 0.0
        %2315 = vmatprep.subr.mxu0 0.0
        %2316 = vmatpush1.msra.mxu0 0.0
        %2317 = vmatprep.subr.mxu0 0.0
        %2318 = vmatpush1.msra.mxu0 0.0
        %2319 = vmatprep.subr.mxu0 0.0
        %2320 = vmatpush1.msra.mxu0 0.0
        %2321 = vmatprep.subr.mxu0 0.0
        %2322 = vmatpush1.msra.mxu0 0.0
        %2323 = vmatprep.subr.mxu0 0.0
        %2324 = vmatpush1.msra.mxu0 0.0
        %2325 = vmatprep.subr.mxu0 0.0
        %2326 = vmatpush1.msra.mxu0 %v2008
        %2327 = vmatprep.subr.mxu0 0.0
        %2328 = vmatpush2.msra.mxu0 0.0
        %2329 = vmatprep.subr.mxu0 0.0
        %2330 = vmatpush2.msra.mxu0 0.0
        %2331 = vmatprep.subr.mxu0 0.0
        %2332 = vmatpush2.msra.mxu0 0.0
        %2333 = vmatprep.subr.mxu0 0.0
        %2334 = vmatpush2.msra.mxu0 0.0
        %2335 = vmatprep.subr.mxu0 0.0
        %2336 = vmatpush2.msra.mxu0 0.0
        %2337 = vmatprep.subr.mxu0 0.0
        %2338 = vmatpush2.msra.mxu0 0.0
        %2339 = vmatprep.subr.mxu0 0.0
        %2340 = vmatpush2.msra.mxu0 0.0
        %2341 = vmatprep.subr.mxu0 0.0
        %2342 = vmatpush2.msra.mxu0 0.0
        %2343 = vmatprep.subr.mxu0 0.0
        %2344 = vmatpush2.msra.mxu0 0.0
        %2345 = vmatprep.subr.mxu0 0.0
        %2346 = vmatpush2.msra.mxu0 0.0
        %2347 = vmatprep.subr.mxu0 0.0
        %2348 = vmatpush2.msra.mxu0 0.0
        %2349 = vmatprep.subr.mxu0 0.0
        %2350 = vmatpush2.msra.mxu0 0.0
        %2351 = vmatprep.subr.mxu0 0.0
        %2352 = vmatpush2.msra.mxu0 0.0
        %2353 = vmatprep.subr.mxu0 0.0
        %2354 = vmatpush2.msra.mxu0 0.0
        %2355 = vmatprep.subr.mxu0 0.0
        %2356 = vmatpush2.msra.mxu0 0.0
        %2357 = vmatprep.subr.mxu0 0.0
        %2358 = vmatpush2.msra.mxu0 0.0
        %2359 = vmatprep.mubr.f32.mxu0 0.0
        %2360 = vmatmul.mubr.f32.gmra.mxu0 %v2293
        %v2361 = vpop.f32.mrf.mxu0
        %v2362 = vadd.f32 0.0, %v2361
        %v2363 = vpop.f32.mrf.mxu0
        %2364 = vdwg.mxu0
        %v2365 = vlaneseq
        %v2366 = vshrl.u32 %v2365, 7
        %v2367 = vsub.s32 0, %v2366
        %v2368 = vrot.slane %v2289, %v2367
        %v2369 = vmul.f32 %v1954, %v2368
        %v2370 = vmul.f32 %v1955, %v2368
        %v2371 = vmul.f32 %v1956, %v2368
        %v2372 = vmul.f32 %v1957, %v2368
        %v2373 = vmul.f32 %v1958, %v2368
        %v2374 = vmul.f32 %v1959, %v2368
        %v2375 = vmul.f32 %v1960, %v2368
        %v2376 = vmul.f32 %v1961, %v2368
        %v2377 = vlaneseq
        %v2378 = vshrl.u32 %v2377, 7
        %v2379 = vsub.s32 0, %v2378
        %v2380 = vrot.slane %v2362, %v2379
        %v2381 = vadd.f32 %v2369, %v2380
        %v2382 = vadd.f32 %v2370, %v2380
        %v2383 = vadd.f32 %v2371, %v2380
        %v2384 = vadd.f32 %v2372, %v2380
        %v2385 = vadd.f32 %v2373, %v2380
        %v2386 = vadd.f32 %v2374, %v2380
        %v2387 = vadd.f32 %v2375, %v2380
        %v2388 = vadd.f32 %v2376, %v2380
        %v2389 = vld [vmem:[%s2] sm:$0xff]
        %v2390 = vld [vmem:[%s2 + $0x8] sm:$0xff]
        %v2391 = vld [vmem:[%s2 + $0x10] sm:$0xff]
        %v2392 = vld [vmem:[%s2 + $0x18] sm:$0x7f]
        %vm2393 = vcmask 515072
        %v2395 = vsel %vm2393, %v2389, 0
        %v2398 = vsel %vm2393, %v2390, 0
        %v2401 = vsel %vm2393, %v2391, 0
        %v2404 = vsel %vm2393, %v2392, 0
        %vm2406 = vcmask 1046528
        %v2408 = vsel %vm2406, %v2388, 0
        %2410 = vmatprep.subr.mxu0 0.0
        %2411 = vmatpush1.msra.mxu0 0.0
        %2412 = vmatprep.subr.mxu0 0.0
        %2413 = vmatpush1.msra.mxu0 0.0
        %2414 = vmatprep.subr.mxu0 0.0
        %2415 = vmatpush1.msra.mxu0 0.0
        %2416 = vmatprep.subr.mxu0 0.0
        %2417 = vmatpush1.msra.mxu0 0.0
        %2418 = vmatprep.subr.mxu0 0.0
        %2419 = vmatpush1.msra.mxu0 0.0
        %2420 = vmatprep.subr.mxu0 0.0
        %2421 = vmatpush1.msra.mxu0 0.0
        %2422 = vmatprep.subr.mxu0 0.0
        %2423 = vmatpush1.msra.mxu0 0.0
        %2424 = vmatprep.subr.mxu0 0.0
        %2425 = vmatpush1.msra.mxu0 0.0
        %2426 = vmatprep.subr.mxu0 0.0
        %2427 = vmatpush1.msra.mxu0 %v2408
        %2428 = vmatprep.subr.mxu0 0.0
        %2429 = vmatpush1.msra.mxu0 %v2387
        %2430 = vmatprep.subr.mxu0 0.0
        %2431 = vmatpush1.msra.mxu0 %v2386
        %2432 = vmatprep.subr.mxu0 0.0
        %2433 = vmatpush1.msra.mxu0 %v2385
        %2434 = vmatprep.subr.mxu0 0.0
        %2435 = vmatpush1.msra.mxu0 %v2384
        %2436 = vmatprep.subr.mxu0 0.0
        %2437 = vmatpush1.msra.mxu0 %v2383
        %2438 = vmatprep.subr.mxu0 0.0
        %2439 = vmatpush1.msra.mxu0 %v2382
        %2440 = vmatprep.subr.mxu0 0.0
        %2441 = vmatpush1.msra.mxu0 %v2381
        %2442 = vmatprep.subr.mxu0 0.0
        %2443 = vmatpush2.msra.mxu0 0.0
        %2444 = vmatprep.subr.mxu0 0.0
        %2445 = vmatpush2.msra.mxu0 0.0
        %2446 = vmatprep.subr.mxu0 0.0
        %2447 = vmatpush2.msra.mxu0 0.0
        %2448 = vmatprep.subr.mxu0 0.0
        %2449 = vmatpush2.msra.mxu0 0.0
        %2450 = vmatprep.subr.mxu0 0.0
        %2451 = vmatpush2.msra.mxu0 0.0
        %2452 = vmatprep.subr.mxu0 0.0
        %2453 = vmatpush2.msra.mxu0 0.0
        %2454 = vmatprep.subr.mxu0 0.0
        %2455 = vmatpush2.msra.mxu0 0.0
        %2456 = vmatprep.subr.mxu0 0.0
        %2457 = vmatpush2.msra.mxu0 0.0
        %2458 = vmatprep.subr.mxu0 0.0
        %2459 = vmatpush2.msra.mxu0 0.0
        %2460 = vmatprep.subr.mxu0 0.0
        %2461 = vmatpush2.msra.mxu0 0.0
        %2462 = vmatprep.subr.mxu0 0.0
        %2463 = vmatpush2.msra.mxu0 0.0
        %2464 = vmatprep.subr.mxu0 0.0
        %2465 = vmatpush2.msra.mxu0 0.0
        %2466 = vmatprep.subr.mxu0 0.0
        %2467 = vmatpush2.msra.mxu0 0.0
        %2468 = vmatprep.subr.mxu0 0.0
        %2469 = vmatpush2.msra.mxu0 0.0
        %2470 = vmatprep.subr.mxu0 0.0
        %2471 = vmatpush2.msra.mxu0 0.0
        %2472 = vmatprep.subr.mxu0 0.0
        %2473 = vmatpush2.msra.mxu0 0.0
        %2474 = vmatprep.mubr.f32.mxu0 0.0
        %2475 = vmatmul.mubr.f32.gmra.mxu0 %v2395
        %v2476 = vpop.f32.mrf.mxu0
        %v2477 = vadd.f32 0.0, %v2476
        %v2478 = vpop.f32.mrf.mxu0
        %2479 = vmatprep.mubr.f32.mxu0 0.0
        %2480 = vmatmul.mubr.f32.gmra.mxu0 %v2398
        %v2481 = vpop.f32.mrf.mxu0
        %v2482 = vadd.f32 0.0, %v2481
        %v2483 = vpop.f32.mrf.mxu0
        %2484 = vmatprep.mubr.f32.mxu0 0.0
        %2485 = vmatmul.mubr.f32.gmra.mxu0 %v2401
        %v2486 = vpop.f32.mrf.mxu0
        %v2487 = vadd.f32 0.0, %v2486
        %v2488 = vpop.f32.mrf.mxu0
        %2489 = vmatprep.mubr.f32.mxu0 0.0
        %2490 = vmatmul.mubr.f32.gmra.mxu0 %v2404
        %v2491 = vpop.f32.mrf.mxu0
        %v2492 = vadd.f32 0.0, %v2491
        %v2493 = vpop.f32.mrf.mxu0
        %2494 = vdwg.mxu0
        %v2495 = vld [vmem:[%s6] sm:$0xff]
        %v2496 = vld [vmem:[%s6 + $0x8] sm:$0xff]
        %v2497 = vld [vmem:[%s6 + $0x10] sm:$0xff]
        %v2498 = vld [vmem:[%s6 + $0x18] sm:$0xff]
        %v2499 = vld [vmem:[%s6 + $0x20] sm:$0xff]
        %v2500 = vld [vmem:[%s6 + $0x28] sm:$0xff]
        %v2501 = vld [vmem:[%s6 + $0x30] sm:$0xff]
        %v2502 = vld [vmem:[%s6 + $0x38] sm:$0xff]
        %s2503 = scalar_lea.vmem %s2, 32
        %v2504 = vld [vmem:[%s2503] sm:$0xff]
        %v2505 = vld [vmem:[%s2503 + $0x8] sm:$0xff]
        %v2506 = vld [vmem:[%s2503 + $0x10] sm:$0xff]
        %v2507 = vld [vmem:[%s2503 + $0x18] sm:$0x7f]
        %v2509 = vsel %vm2393, %v2504, 0
        %v2512 = vsel %vm2393, %v2505, 0
        %v2515 = vsel %vm2393, %v2506, 0
        %v2518 = vsel %vm2393, %v2507, 0
        %2520 = vmatprep.subr.mxu0 0.0
        %2521 = vmatpush1.msra.mxu0 0.0
        %2522 = vmatprep.subr.mxu0 0.0
        %2523 = vmatpush1.msra.mxu0 0.0
        %2524 = vmatprep.subr.mxu0 0.0
        %2525 = vmatpush1.msra.mxu0 0.0
        %2526 = vmatprep.subr.mxu0 0.0
        %2527 = vmatpush1.msra.mxu0 0.0
        %2528 = vmatprep.subr.mxu0 0.0
        %2529 = vmatpush1.msra.mxu0 0.0
        %2530 = vmatprep.subr.mxu0 0.0
        %2531 = vmatpush1.msra.mxu0 0.0
        %2532 = vmatprep.subr.mxu0 0.0
        %2533 = vmatpush1.msra.mxu0 0.0
        %2534 = vmatprep.subr.mxu0 0.0
        %2535 = vmatpush1.msra.mxu0 0.0
        %2536 = vmatprep.subr.mxu0 0.0
        %2537 = vmatpush1.msra.mxu0 %v2408
        %2538 = vmatprep.subr.mxu0 0.0
        %2539 = vmatpush1.msra.mxu0 %v2387
        %2540 = vmatprep.subr.mxu0 0.0
        %2541 = vmatpush1.msra.mxu0 %v2386
        %2542 = vmatprep.subr.mxu0 0.0
        %2543 = vmatpush1.msra.mxu0 %v2385
        %2544 = vmatprep.subr.mxu0 0.0
        %2545 = vmatpush1.msra.mxu0 %v2384
        %2546 = vmatprep.subr.mxu0 0.0
        %2547 = vmatpush1.msra.mxu0 %v2383
        %2548 = vmatprep.subr.mxu0 0.0
        %2549 = vmatpush1.msra.mxu0 %v2382
        %2550 = vmatprep.subr.mxu0 0.0
        %2551 = vmatpush1.msra.mxu0 %v2381
        %2552 = vmatprep.subr.mxu0 0.0
        %2553 = vmatpush2.msra.mxu0 0.0
        %2554 = vmatprep.subr.mxu0 0.0
        %2555 = vmatpush2.msra.mxu0 0.0
        %2556 = vmatprep.subr.mxu0 0.0
        %2557 = vmatpush2.msra.mxu0 0.0
        %2558 = vmatprep.subr.mxu0 0.0
        %2559 = vmatpush2.msra.mxu0 0.0
        %2560 = vmatprep.subr.mxu0 0.0
        %2561 = vmatpush2.msra.mxu0 0.0
        %2562 = vmatprep.subr.mxu0 0.0
        %2563 = vmatpush2.msra.mxu0 0.0
        %2564 = vmatprep.subr.mxu0 0.0
        %2565 = vmatpush2.msra.mxu0 0.0
        %2566 = vmatprep.subr.mxu0 0.0
        %2567 = vmatpush2.msra.mxu0 0.0
        %2568 = vmatprep.subr.mxu0 0.0
        %2569 = vmatpush2.msra.mxu0 0.0
        %2570 = vmatprep.subr.mxu0 0.0
        %2571 = vmatpush2.msra.mxu0 0.0
        %2572 = vmatprep.subr.mxu0 0.0
        %2573 = vmatpush2.msra.mxu0 0.0
        %2574 = vmatprep.subr.mxu0 0.0
        %2575 = vmatpush2.msra.mxu0 0.0
        %2576 = vmatprep.subr.mxu0 0.0
        %2577 = vmatpush2.msra.mxu0 0.0
        %2578 = vmatprep.subr.mxu0 0.0
        %2579 = vmatpush2.msra.mxu0 0.0
        %2580 = vmatprep.subr.mxu0 0.0
        %2581 = vmatpush2.msra.mxu0 0.0
        %2582 = vmatprep.subr.mxu0 0.0
        %2583 = vmatpush2.msra.mxu0 0.0
        %2584 = vmatprep.mubr.f32.mxu0 0.0
        %2585 = vmatmul.mubr.f32.gmra.mxu0 %v2509
        %v2586 = vpop.f32.mrf.mxu0
        %v2587 = vadd.f32 0.0, %v2586
        %v2588 = vpop.f32.mrf.mxu0
        %2589 = vmatprep.mubr.f32.mxu0 0.0
        %2590 = vmatmul.mubr.f32.gmra.mxu0 %v2512
        %v2591 = vpop.f32.mrf.mxu0
        %v2592 = vadd.f32 0.0, %v2591
        %v2593 = vpop.f32.mrf.mxu0
        %2594 = vmatprep.mubr.f32.mxu0 0.0
        %2595 = vmatmul.mubr.f32.gmra.mxu0 %v2515
        %v2596 = vpop.f32.mrf.mxu0
        %v2597 = vadd.f32 0.0, %v2596
        %v2598 = vpop.f32.mrf.mxu0
        %2599 = vmatprep.mubr.f32.mxu0 0.0
        %2600 = vmatmul.mubr.f32.gmra.mxu0 %v2518
        %v2601 = vpop.f32.mrf.mxu0
        %v2602 = vadd.f32 0.0, %v2601
        %v2603 = vpop.f32.mrf.mxu0
        %2604 = vdwg.mxu0
        %s2605 = scalar_lea.vmem %s6, 64
        %v2606 = vld [vmem:[%s2605] sm:$0xff]
        %v2607 = vld [vmem:[%s2605 + $0x8] sm:$0xff]
        %v2608 = vld [vmem:[%s2605 + $0x10] sm:$0xff]
        %v2609 = vld [vmem:[%s2605 + $0x18] sm:$0xff]
        %v2610 = vld [vmem:[%s2605 + $0x20] sm:$0xff]
        %v2611 = vld [vmem:[%s2605 + $0x28] sm:$0xff]
        %v2612 = vld [vmem:[%s2605 + $0x30] sm:$0xff]
        %v2613 = vld [vmem:[%s2605 + $0x38] sm:$0xff]
        %v2615 = vsel %vm2009, %v2587, 0
        %v2618 = vsel %vm2009, %v2592, 0
        %v2621 = vsel %vm2009, %v2597, 0
        %v2624 = vsel %vm2009, %v2602, 0
        %2626 = vmatprep.subr.mxu0 0.0
        %2627 = vmatpush1.msra.mxu0 0.0
        %2628 = vmatprep.subr.mxu0 0.0
        %2629 = vmatpush1.msra.mxu0 0.0
        %2630 = vmatprep.subr.mxu0 0.0
        %2631 = vmatpush1.msra.mxu0 0.0
        %2632 = vmatprep.subr.mxu0 0.0
        %2633 = vmatpush1.msra.mxu0 0.0
        %2634 = vmatprep.subr.mxu0 0.0
        %2635 = vmatpush1.msra.mxu0 0.0
        %2636 = vmatprep.subr.mxu0 0.0
        %2637 = vmatpush1.msra.mxu0 0.0
        %2638 = vmatprep.subr.mxu0 0.0
        %2639 = vmatpush1.msra.mxu0 0.0
        %2640 = vmatprep.subr.mxu0 0.0
        %2641 = vmatpush1.msra.mxu0 0.0
        %2642 = vmatprep.subr.mxu0 0.0
        %2643 = vmatpush1.msra.mxu0 %v2613
        %2644 = vmatprep.subr.mxu0 0.0
        %2645 = vmatpush1.msra.mxu0 %v2612
        %2646 = vmatprep.subr.mxu0 0.0
        %2647 = vmatpush1.msra.mxu0 %v2611
        %2648 = vmatprep.subr.mxu0 0.0
        %2649 = vmatpush1.msra.mxu0 %v2610
        %2650 = vmatprep.subr.mxu0 0.0
        %2651 = vmatpush1.msra.mxu0 %v2609
        %2652 = vmatprep.subr.mxu0 0.0
        %2653 = vmatpush1.msra.mxu0 %v2608
        %2654 = vmatprep.subr.mxu0 0.0
        %2655 = vmatpush1.msra.mxu0 %v2607
        %2656 = vmatprep.subr.mxu0 0.0
        %2657 = vmatpush1.msra.mxu0 %v2606
        %2658 = vmatprep.subr.mxu0 0.0
        %2659 = vmatpush2.msra.mxu0 0.0
        %2660 = vmatprep.subr.mxu0 0.0
        %2661 = vmatpush2.msra.mxu0 0.0
        %2662 = vmatprep.subr.mxu0 0.0
        %2663 = vmatpush2.msra.mxu0 0.0
        %2664 = vmatprep.subr.mxu0 0.0
        %2665 = vmatpush2.msra.mxu0 0.0
        %2666 = vmatprep.subr.mxu0 0.0
        %2667 = vmatpush2.msra.mxu0 0.0
        %2668 = vmatprep.subr.mxu0 0.0
        %2669 = vmatpush2.msra.mxu0 0.0
        %2670 = vmatprep.subr.mxu0 0.0
        %2671 = vmatpush2.msra.mxu0 0.0
        %2672 = vmatprep.subr.mxu0 0.0
        %2673 = vmatpush2.msra.mxu0 0.0
        %2674 = vmatprep.subr.mxu0 0.0
        %2675 = vmatpush2.msra.mxu0 0.0
        %2676 = vmatprep.subr.mxu0 0.0
        %2677 = vmatpush2.msra.mxu0 0.0
        %2678 = vmatprep.subr.mxu0 0.0
        %2679 = vmatpush2.msra.mxu0 0.0
        %2680 = vmatprep.subr.mxu0 0.0
        %2681 = vmatpush2.msra.mxu0 0.0
        %2682 = vmatprep.subr.mxu0 0.0
        %2683 = vmatpush2.msra.mxu0 0.0
        %2684 = vmatprep.subr.mxu0 0.0
        %2685 = vmatpush2.msra.mxu0 0.0
        %2686 = vmatprep.subr.mxu0 0.0
        %2687 = vmatpush2.msra.mxu0 0.0
        %2688 = vmatprep.subr.mxu0 0.0
        %2689 = vmatpush2.msra.mxu0 0.0
        %2690 = vmatprep.mubr.f32.mxu0 0.0
        %2691 = vmatmul.mubr.f32.gmra.mxu0 %v2615
        %v2692 = vpop.f32.mrf.mxu0
        %v2693 = vadd.f32 0.0, %v2692
        %v2694 = vpop.f32.mrf.mxu0
        %2695 = vmatprep.mubr.f32.mxu0 0.0
        %2696 = vmatmul.mubr.f32.gmra.mxu0 %v2618
        %v2697 = vpop.f32.mrf.mxu0
        %v2698 = vadd.f32 0.0, %v2697
        %v2699 = vpop.f32.mrf.mxu0
        %2700 = vmatprep.mubr.f32.mxu0 0.0
        %2701 = vmatmul.mubr.f32.gmra.mxu0 %v2621
        %v2702 = vpop.f32.mrf.mxu0
        %v2703 = vadd.f32 0.0, %v2702
        %v2704 = vpop.f32.mrf.mxu0
        %2705 = vmatprep.mubr.f32.mxu0 0.0
        %2706 = vmatmul.mubr.f32.gmra.mxu0 %v2624
        %v2707 = vpop.f32.mrf.mxu0
        %v2708 = vadd.f32 0.0, %v2707
        %v2709 = vpop.f32.mrf.mxu0
        %2710 = vdwg.mxu0
        %v2712 = vsel %vm2009, %v2477, 0
        %v2715 = vsel %vm2009, %v2482, 0
        %v2718 = vsel %vm2009, %v2487, 0
        %v2721 = vsel %vm2009, %v2492, 0
        %2723 = vmatprep.subr.mxu0 0.0
        %2724 = vmatpush1.msra.mxu0 0.0
        %2725 = vmatprep.subr.mxu0 0.0
        %2726 = vmatpush1.msra.mxu0 0.0
        %2727 = vmatprep.subr.mxu0 0.0
        %2728 = vmatpush1.msra.mxu0 0.0
        %2729 = vmatprep.subr.mxu0 0.0
        %2730 = vmatpush1.msra.mxu0 0.0
        %2731 = vmatprep.subr.mxu0 0.0
        %2732 = vmatpush1.msra.mxu0 0.0
        %2733 = vmatprep.subr.mxu0 0.0
        %2734 = vmatpush1.msra.mxu0 0.0
        %2735 = vmatprep.subr.mxu0 0.0
        %2736 = vmatpush1.msra.mxu0 0.0
        %2737 = vmatprep.subr.mxu0 0.0
        %2738 = vmatpush1.msra.mxu0 0.0
        %2739 = vmatprep.subr.mxu0 0.0
        %2740 = vmatpush1.msra.mxu0 %v2502
        %2741 = vmatprep.subr.mxu0 0.0
        %2742 = vmatpush1.msra.mxu0 %v2501
        %2743 = vmatprep.subr.mxu0 0.0
        %2744 = vmatpush1.msra.mxu0 %v2500
        %2745 = vmatprep.subr.mxu0 0.0
        %2746 = vmatpush1.msra.mxu0 %v2499
        %2747 = vmatprep.subr.mxu0 0.0
        %2748 = vmatpush1.msra.mxu0 %v2498
        %2749 = vmatprep.subr.mxu0 0.0
        %2750 = vmatpush1.msra.mxu0 %v2497
        %2751 = vmatprep.subr.mxu0 0.0
        %2752 = vmatpush1.msra.mxu0 %v2496
        %2753 = vmatprep.subr.mxu0 0.0
        %2754 = vmatpush1.msra.mxu0 %v2495
        %2755 = vmatprep.subr.mxu0 0.0
        %2756 = vmatpush2.msra.mxu0 0.0
        %2757 = vmatprep.subr.mxu0 0.0
        %2758 = vmatpush2.msra.mxu0 0.0
        %2759 = vmatprep.subr.mxu0 0.0
        %2760 = vmatpush2.msra.mxu0 0.0
        %2761 = vmatprep.subr.mxu0 0.0
        %2762 = vmatpush2.msra.mxu0 0.0
        %2763 = vmatprep.subr.mxu0 0.0
        %2764 = vmatpush2.msra.mxu0 0.0
        %2765 = vmatprep.subr.mxu0 0.0
        %2766 = vmatpush2.msra.mxu0 0.0
        %2767 = vmatprep.subr.mxu0 0.0
        %2768 = vmatpush2.msra.mxu0 0.0
        %2769 = vmatprep.subr.mxu0 0.0
        %2770 = vmatpush2.msra.mxu0 0.0
        %2771 = vmatprep.subr.mxu0 0.0
        %2772 = vmatpush2.msra.mxu0 0.0
        %2773 = vmatprep.subr.mxu0 0.0
        %2774 = vmatpush2.msra.mxu0 0.0
        %2775 = vmatprep.subr.mxu0 0.0
        %2776 = vmatpush2.msra.mxu0 0.0
        %2777 = vmatprep.subr.mxu0 0.0
        %2778 = vmatpush2.msra.mxu0 0.0
        %2779 = vmatprep.subr.mxu0 0.0
        %2780 = vmatpush2.msra.mxu0 0.0
        %2781 = vmatprep.subr.mxu0 0.0
        %2782 = vmatpush2.msra.mxu0 0.0
        %2783 = vmatprep.subr.mxu0 0.0
        %2784 = vmatpush2.msra.mxu0 0.0
        %2785 = vmatprep.subr.mxu0 0.0
        %2786 = vmatpush2.msra.mxu0 0.0
        %2787 = vmatprep.mubr.f32.mxu0 0.0
        %2788 = vmatmul.mubr.f32.gmra.mxu0 %v2712
        %v2789 = vpop.f32.mrf.mxu0
        %v2790 = vadd.f32 %v2693, %v2789
        %v2791 = vpop.f32.mrf.mxu0
        %2792 = vmatprep.mubr.f32.mxu0 0.0
        %2793 = vmatmul.mubr.f32.gmra.mxu0 %v2715
        %v2794 = vpop.f32.mrf.mxu0
        %v2795 = vadd.f32 %v2698, %v2794
        %v2796 = vpop.f32.mrf.mxu0
        %2797 = vmatprep.mubr.f32.mxu0 0.0
        %2798 = vmatmul.mubr.f32.gmra.mxu0 %v2718
        %v2799 = vpop.f32.mrf.mxu0
        %v2800 = vadd.f32 %v2703, %v2799
        %v2801 = vpop.f32.mrf.mxu0
        %2802 = vmatprep.mubr.f32.mxu0 0.0
        %2803 = vmatmul.mubr.f32.gmra.mxu0 %v2721
        %v2804 = vpop.f32.mrf.mxu0
        %v2805 = vadd.f32 %v2708, %v2804
        %v2806 = vpop.f32.mrf.mxu0
        %2807 = vdwg.mxu0
        %s2808 = scalar_lea.vmem %s2, 64
        %v2809 = vld [vmem:[%s2808] sm:$0xff]
        %v2810 = vld [vmem:[%s2808 + $0x8] sm:$0xff]
        %v2811 = vld [vmem:[%s2808 + $0x10] sm:$0xff]
        %v2812 = vld [vmem:[%s2808 + $0x18] sm:$0x7f]
        %v2814 = vsel %vm2393, %v2809, 0
        %v2817 = vsel %vm2393, %v2810, 0
        %v2820 = vsel %vm2393, %v2811, 0
        %v2823 = vsel %vm2393, %v2812, 0
        %2825 = vmatprep.subr.mxu0 0.0
        %2826 = vmatpush1.msra.mxu0 0.0
        %2827 = vmatprep.subr.mxu0 0.0
        %2828 = vmatpush1.msra.mxu0 0.0
        %2829 = vmatprep.subr.mxu0 0.0
        %2830 = vmatpush1.msra.mxu0 0.0
        %2831 = vmatprep.subr.mxu0 0.0
        %2832 = vmatpush1.msra.mxu0 0.0
        %2833 = vmatprep.subr.mxu0 0.0
        %2834 = vmatpush1.msra.mxu0 0.0
        %2835 = vmatprep.subr.mxu0 0.0
        %2836 = vmatpush1.msra.mxu0 0.0
        %2837 = vmatprep.subr.mxu0 0.0
        %2838 = vmatpush1.msra.mxu0 0.0
        %2839 = vmatprep.subr.mxu0 0.0
        %2840 = vmatpush1.msra.mxu0 0.0
        %2841 = vmatprep.subr.mxu0 0.0
        %2842 = vmatpush1.msra.mxu0 %v2408
        %2843 = vmatprep.subr.mxu0 0.0
        %2844 = vmatpush1.msra.mxu0 %v2387
        %2845 = vmatprep.subr.mxu0 0.0
        %2846 = vmatpush1.msra.mxu0 %v2386
        %2847 = vmatprep.subr.mxu0 0.0
        %2848 = vmatpush1.msra.mxu0 %v2385
        %2849 = vmatprep.subr.mxu0 0.0
        %2850 = vmatpush1.msra.mxu0 %v2384
        %2851 = vmatprep.subr.mxu0 0.0
        %2852 = vmatpush1.msra.mxu0 %v2383
        %2853 = vmatprep.subr.mxu0 0.0
        %2854 = vmatpush1.msra.mxu0 %v2382
        %2855 = vmatprep.subr.mxu0 0.0
        %2856 = vmatpush1.msra.mxu0 %v2381
        %2857 = vmatprep.subr.mxu0 0.0
        %2858 = vmatpush2.msra.mxu0 0.0
        %2859 = vmatprep.subr.mxu0 0.0
        %2860 = vmatpush2.msra.mxu0 0.0
        %2861 = vmatprep.subr.mxu0 0.0
        %2862 = vmatpush2.msra.mxu0 0.0
        %2863 = vmatprep.subr.mxu0 0.0
        %2864 = vmatpush2.msra.mxu0 0.0
        %2865 = vmatprep.subr.mxu0 0.0
        %2866 = vmatpush2.msra.mxu0 0.0
        %2867 = vmatprep.subr.mxu0 0.0
        %2868 = vmatpush2.msra.mxu0 0.0
        %2869 = vmatprep.subr.mxu0 0.0
        %2870 = vmatpush2.msra.mxu0 0.0
        %2871 = vmatprep.subr.mxu0 0.0
        %2872 = vmatpush2.msra.mxu0 0.0
        %2873 = vmatprep.subr.mxu0 0.0
        %2874 = vmatpush2.msra.mxu0 0.0
        %2875 = vmatprep.subr.mxu0 0.0
        %2876 = vmatpush2.msra.mxu0 0.0
        %2877 = vmatprep.subr.mxu0 0.0
        %2878 = vmatpush2.msra.mxu0 0.0
        %2879 = vmatprep.subr.mxu0 0.0
        %2880 = vmatpush2.msra.mxu0 0.0
        %2881 = vmatprep.subr.mxu0 0.0
        %2882 = vmatpush2.msra.mxu0 0.0
        %2883 = vmatprep.subr.mxu0 0.0
        %2884 = vmatpush2.msra.mxu0 0.0
        %2885 = vmatprep.subr.mxu0 0.0
        %2886 = vmatpush2.msra.mxu0 0.0
        %2887 = vmatprep.subr.mxu0 0.0
        %2888 = vmatpush2.msra.mxu0 0.0
        %2889 = vmatprep.mubr.f32.mxu0 0.0
        %2890 = vmatmul.mubr.f32.gmra.mxu0 %v2814
        %v2891 = vpop.f32.mrf.mxu0
        %v2892 = vadd.f32 0.0, %v2891
        %v2893 = vpop.f32.mrf.mxu0
        %2894 = vmatprep.mubr.f32.mxu0 0.0
        %2895 = vmatmul.mubr.f32.gmra.mxu0 %v2817
        %v2896 = vpop.f32.mrf.mxu0
        %v2897 = vadd.f32 0.0, %v2896
        %v2898 = vpop.f32.mrf.mxu0
        %2899 = vmatprep.mubr.f32.mxu0 0.0
        %2900 = vmatmul.mubr.f32.gmra.mxu0 %v2820
        %v2901 = vpop.f32.mrf.mxu0
        %v2902 = vadd.f32 0.0, %v2901
        %v2903 = vpop.f32.mrf.mxu0
        %2904 = vmatprep.mubr.f32.mxu0 0.0
        %2905 = vmatmul.mubr.f32.gmra.mxu0 %v2823
        %v2906 = vpop.f32.mrf.mxu0
        %v2907 = vadd.f32 0.0, %v2906
        %v2908 = vpop.f32.mrf.mxu0
        %2909 = vdwg.mxu0
        %s2910 = scalar_lea.vmem %s6, 128
        %v2911 = vld [vmem:[%s2910] sm:$0xff]
        %v2912 = vld [vmem:[%s2910 + $0x8] sm:$0xff]
        %v2913 = vld [vmem:[%s2910 + $0x10] sm:$0xff]
        %v2914 = vld [vmem:[%s2910 + $0x18] sm:$0xff]
        %v2915 = vld [vmem:[%s2910 + $0x20] sm:$0xff]
        %v2916 = vld [vmem:[%s2910 + $0x28] sm:$0xff]
        %v2917 = vld [vmem:[%s2910 + $0x30] sm:$0xff]
        %v2918 = vld [vmem:[%s2910 + $0x38] sm:$0xff]
        %v2920 = vsel %vm2009, %v2892, 0
        %v2923 = vsel %vm2009, %v2897, 0
        %v2926 = vsel %vm2009, %v2902, 0
        %v2929 = vsel %vm2009, %v2907, 0
        %2931 = vmatprep.subr.mxu0 0.0
        %2932 = vmatpush1.msra.mxu0 0.0
        %2933 = vmatprep.subr.mxu0 0.0
        %2934 = vmatpush1.msra.mxu0 0.0
        %2935 = vmatprep.subr.mxu0 0.0
        %2936 = vmatpush1.msra.mxu0 0.0
        %2937 = vmatprep.subr.mxu0 0.0
        %2938 = vmatpush1.msra.mxu0 0.0
        %2939 = vmatprep.subr.mxu0 0.0
        %2940 = vmatpush1.msra.mxu0 0.0
        %2941 = vmatprep.subr.mxu0 0.0
        %2942 = vmatpush1.msra.mxu0 0.0
        %2943 = vmatprep.subr.mxu0 0.0
        %2944 = vmatpush1.msra.mxu0 0.0
        %2945 = vmatprep.subr.mxu0 0.0
        %2946 = vmatpush1.msra.mxu0 0.0
        %2947 = vmatprep.subr.mxu0 0.0
        %2948 = vmatpush1.msra.mxu0 %v2918
        %2949 = vmatprep.subr.mxu0 0.0
        %2950 = vmatpush1.msra.mxu0 %v2917
        %2951 = vmatprep.subr.mxu0 0.0
        %2952 = vmatpush1.msra.mxu0 %v2916
        %2953 = vmatprep.subr.mxu0 0.0
        %2954 = vmatpush1.msra.mxu0 %v2915
        %2955 = vmatprep.subr.mxu0 0.0
        %2956 = vmatpush1.msra.mxu0 %v2914
        %2957 = vmatprep.subr.mxu0 0.0
        %2958 = vmatpush1.msra.mxu0 %v2913
        %2959 = vmatprep.subr.mxu0 0.0
        %2960 = vmatpush1.msra.mxu0 %v2912
        %2961 = vmatprep.subr.mxu0 0.0
        %2962 = vmatpush1.msra.mxu0 %v2911
        %2963 = vmatprep.subr.mxu0 0.0
        %2964 = vmatpush2.msra.mxu0 0.0
        %2965 = vmatprep.subr.mxu0 0.0
        %2966 = vmatpush2.msra.mxu0 0.0
        %2967 = vmatprep.subr.mxu0 0.0
        %2968 = vmatpush2.msra.mxu0 0.0
        %2969 = vmatprep.subr.mxu0 0.0
        %2970 = vmatpush2.msra.mxu0 0.0
        %2971 = vmatprep.subr.mxu0 0.0
        %2972 = vmatpush2.msra.mxu0 0.0
        %2973 = vmatprep.subr.mxu0 0.0
        %2974 = vmatpush2.msra.mxu0 0.0
        %2975 = vmatprep.subr.mxu0 0.0
        %2976 = vmatpush2.msra.mxu0 0.0
        %2977 = vmatprep.subr.mxu0 0.0
        %2978 = vmatpush2.msra.mxu0 0.0
        %2979 = vmatprep.subr.mxu0 0.0
        %2980 = vmatpush2.msra.mxu0 0.0
        %2981 = vmatprep.subr.mxu0 0.0
        %2982 = vmatpush2.msra.mxu0 0.0
        %2983 = vmatprep.subr.mxu0 0.0
        %2984 = vmatpush2.msra.mxu0 0.0
        %2985 = vmatprep.subr.mxu0 0.0
        %2986 = vmatpush2.msra.mxu0 0.0
        %2987 = vmatprep.subr.mxu0 0.0
        %2988 = vmatpush2.msra.mxu0 0.0
        %2989 = vmatprep.subr.mxu0 0.0
        %2990 = vmatpush2.msra.mxu0 0.0
        %2991 = vmatprep.subr.mxu0 0.0
        %2992 = vmatpush2.msra.mxu0 0.0
        %2993 = vmatprep.subr.mxu0 0.0
        %2994 = vmatpush2.msra.mxu0 0.0
        %2995 = vmatprep.mubr.f32.mxu0 0.0
        %2996 = vmatmul.mubr.f32.gmra.mxu0 %v2920
        %v2997 = vpop.f32.mrf.mxu0
        %v2998 = vadd.f32 0.0, %v2997
        %v2999 = vpop.f32.mrf.mxu0
        %3000 = vmatprep.mubr.f32.mxu0 0.0
        %3001 = vmatmul.mubr.f32.gmra.mxu0 %v2923
        %v3002 = vpop.f32.mrf.mxu0
        %v3003 = vadd.f32 0.0, %v3002
        %v3004 = vpop.f32.mrf.mxu0
        %3005 = vmatprep.mubr.f32.mxu0 0.0
        %3006 = vmatmul.mubr.f32.gmra.mxu0 %v2926
        %v3007 = vpop.f32.mrf.mxu0
        %v3008 = vadd.f32 0.0, %v3007
        %v3009 = vpop.f32.mrf.mxu0
        %3010 = vmatprep.mubr.f32.mxu0 0.0
        %3011 = vmatmul.mubr.f32.gmra.mxu0 %v2929
        %v3012 = vpop.f32.mrf.mxu0
        %v3013 = vadd.f32 0.0, %v3012
        %v3014 = vpop.f32.mrf.mxu0
        %3015 = vdwg.mxu0
        %v3016 = vadd.f32 %v2790, %v2998
        %v3017 = vadd.f32 %v2795, %v3003
        %v3018 = vadd.f32 %v2800, %v3008
        %v3019 = vadd.f32 %v2805, %v3013
        %s3020 = scalar_lea.vmem %s2, 96
        %v3021 = vld [vmem:[%s3020] sm:$0xff]
        %v3022 = vld [vmem:[%s3020 + $0x8] sm:$0xff]
        %v3023 = vld [vmem:[%s3020 + $0x10] sm:$0xff]
        %v3024 = vld [vmem:[%s3020 + $0x18] sm:$0x7f]
        %v3026 = vsel %vm2393, %v3021, 0
        %v3029 = vsel %vm2393, %v3022, 0
        %v3032 = vsel %vm2393, %v3023, 0
        %v3035 = vsel %vm2393, %v3024, 0
        %3037 = vmatprep.subr.mxu0 0.0
        %3038 = vmatpush1.msra.mxu0 0.0
        %3039 = vmatprep.subr.mxu0 0.0
        %3040 = vmatpush1.msra.mxu0 0.0
        %3041 = vmatprep.subr.mxu0 0.0
        %3042 = vmatpush1.msra.mxu0 0.0
        %3043 = vmatprep.subr.mxu0 0.0
        %3044 = vmatpush1.msra.mxu0 0.0
        %3045 = vmatprep.subr.mxu0 0.0
        %3046 = vmatpush1.msra.mxu0 0.0
        %3047 = vmatprep.subr.mxu0 0.0
        %3048 = vmatpush1.msra.mxu0 0.0
        %3049 = vmatprep.subr.mxu0 0.0
        %3050 = vmatpush1.msra.mxu0 0.0
        %3051 = vmatprep.subr.mxu0 0.0
        %3052 = vmatpush1.msra.mxu0 0.0
        %3053 = vmatprep.subr.mxu0 0.0
        %3054 = vmatpush1.msra.mxu0 %v2408
        %3055 = vmatprep.subr.mxu0 0.0
        %3056 = vmatpush1.msra.mxu0 %v2387
        %3057 = vmatprep.subr.mxu0 0.0
        %3058 = vmatpush1.msra.mxu0 %v2386
        %3059 = vmatprep.subr.mxu0 0.0
        %3060 = vmatpush1.msra.mxu0 %v2385
        %3061 = vmatprep.subr.mxu0 0.0
        %3062 = vmatpush1.msra.mxu0 %v2384
        %3063 = vmatprep.subr.mxu0 0.0
        %3064 = vmatpush1.msra.mxu0 %v2383
        %3065 = vmatprep.subr.mxu0 0.0
        %3066 = vmatpush1.msra.mxu0 %v2382
        %3067 = vmatprep.subr.mxu0 0.0
        %3068 = vmatpush1.msra.mxu0 %v2381
        %3069 = vmatprep.subr.mxu0 0.0
        %3070 = vmatpush2.msra.mxu0 0.0
        %3071 = vmatprep.subr.mxu0 0.0
        %3072 = vmatpush2.msra.mxu0 0.0
        %3073 = vmatprep.subr.mxu0 0.0
        %3074 = vmatpush2.msra.mxu0 0.0
        %3075 = vmatprep.subr.mxu0 0.0
        %3076 = vmatpush2.msra.mxu0 0.0
        %3077 = vmatprep.subr.mxu0 0.0
        %3078 = vmatpush2.msra.mxu0 0.0
        %3079 = vmatprep.subr.mxu0 0.0
        %3080 = vmatpush2.msra.mxu0 0.0
        %3081 = vmatprep.subr.mxu0 0.0
        %3082 = vmatpush2.msra.mxu0 0.0
        %3083 = vmatprep.subr.mxu0 0.0
        %3084 = vmatpush2.msra.mxu0 0.0
        %3085 = vmatprep.subr.mxu0 0.0
        %3086 = vmatpush2.msra.mxu0 0.0
        %3087 = vmatprep.subr.mxu0 0.0
        %3088 = vmatpush2.msra.mxu0 0.0
        %3089 = vmatprep.subr.mxu0 0.0
        %3090 = vmatpush2.msra.mxu0 0.0
        %3091 = vmatprep.subr.mxu0 0.0
        %3092 = vmatpush2.msra.mxu0 0.0
        %3093 = vmatprep.subr.mxu0 0.0
        %3094 = vmatpush2.msra.mxu0 0.0
        %3095 = vmatprep.subr.mxu0 0.0
        %3096 = vmatpush2.msra.mxu0 0.0
        %3097 = vmatprep.subr.mxu0 0.0
        %3098 = vmatpush2.msra.mxu0 0.0
        %3099 = vmatprep.subr.mxu0 0.0
        %3100 = vmatpush2.msra.mxu0 0.0
        %3101 = vmatprep.mubr.f32.mxu0 0.0
        %3102 = vmatmul.mubr.f32.gmra.mxu0 %v3026
        %v3103 = vpop.f32.mrf.mxu0
        %v3104 = vadd.f32 0.0, %v3103
        %v3105 = vpop.f32.mrf.mxu0
        %3106 = vmatprep.mubr.f32.mxu0 0.0
        %3107 = vmatmul.mubr.f32.gmra.mxu0 %v3029
        %v3108 = vpop.f32.mrf.mxu0
        %v3109 = vadd.f32 0.0, %v3108
        %v3110 = vpop.f32.mrf.mxu0
        %3111 = vmatprep.mubr.f32.mxu0 0.0
        %3112 = vmatmul.mubr.f32.gmra.mxu0 %v3032
        %v3113 = vpop.f32.mrf.mxu0
        %v3114 = vadd.f32 0.0, %v3113
        %v3115 = vpop.f32.mrf.mxu0
        %3116 = vmatprep.mubr.f32.mxu0 0.0
        %3117 = vmatmul.mubr.f32.gmra.mxu0 %v3035
        %v3118 = vpop.f32.mrf.mxu0
        %v3119 = vadd.f32 0.0, %v3118
        %v3120 = vpop.f32.mrf.mxu0
        %3121 = vdwg.mxu0
        %s3122 = scalar_lea.vmem %s6, 192
        %v3123 = vld [vmem:[%s3122] sm:$0xff]
        %v3124 = vld [vmem:[%s3122 + $0x8] sm:$0xff]
        %v3125 = vld [vmem:[%s3122 + $0x10] sm:$0xff]
        %v3126 = vld [vmem:[%s3122 + $0x18] sm:$0xff]
        %v3127 = vld [vmem:[%s3122 + $0x20] sm:$0xff]
        %v3128 = vld [vmem:[%s3122 + $0x28] sm:$0xff]
        %v3129 = vld [vmem:[%s3122 + $0x30] sm:$0xff]
        %v3130 = vld [vmem:[%s3122 + $0x38] sm:$0xff]
        %v3132 = vsel %vm2009, %v3104, 0
        %v3135 = vsel %vm2009, %v3109, 0
        %v3138 = vsel %vm2009, %v3114, 0
        %v3141 = vsel %vm2009, %v3119, 0
        %3143 = vmatprep.subr.mxu0 0.0
        %3144 = vmatpush1.msra.mxu0 0.0
        %3145 = vmatprep.subr.mxu0 0.0
        %3146 = vmatpush1.msra.mxu0 0.0
        %3147 = vmatprep.subr.mxu0 0.0
        %3148 = vmatpush1.msra.mxu0 0.0
        %3149 = vmatprep.subr.mxu0 0.0
        %3150 = vmatpush1.msra.mxu0 0.0
        %3151 = vmatprep.subr.mxu0 0.0
        %3152 = vmatpush1.msra.mxu0 0.0
        %3153 = vmatprep.subr.mxu0 0.0
        %3154 = vmatpush1.msra.mxu0 0.0
        %3155 = vmatprep.subr.mxu0 0.0
        %3156 = vmatpush1.msra.mxu0 0.0
        %3157 = vmatprep.subr.mxu0 0.0
        %3158 = vmatpush1.msra.mxu0 0.0
        %3159 = vmatprep.subr.mxu0 0.0
        %3160 = vmatpush1.msra.mxu0 %v3130
        %3161 = vmatprep.subr.mxu0 0.0
        %3162 = vmatpush1.msra.mxu0 %v3129
        %3163 = vmatprep.subr.mxu0 0.0
        %3164 = vmatpush1.msra.mxu0 %v3128
        %3165 = vmatprep.subr.mxu0 0.0
        %3166 = vmatpush1.msra.mxu0 %v3127
        %3167 = vmatprep.subr.mxu0 0.0
        %3168 = vmatpush1.msra.mxu0 %v3126
        %3169 = vmatprep.subr.mxu0 0.0
        %3170 = vmatpush1.msra.mxu0 %v3125
        %3171 = vmatprep.subr.mxu0 0.0
        %3172 = vmatpush1.msra.mxu0 %v3124
        %3173 = vmatprep.subr.mxu0 0.0
        %3174 = vmatpush1.msra.mxu0 %v3123
        %3175 = vmatprep.subr.mxu0 0.0
        %3176 = vmatpush2.msra.mxu0 0.0
        %3177 = vmatprep.subr.mxu0 0.0
        %3178 = vmatpush2.msra.mxu0 0.0
        %3179 = vmatprep.subr.mxu0 0.0
        %3180 = vmatpush2.msra.mxu0 0.0
        %3181 = vmatprep.subr.mxu0 0.0
        %3182 = vmatpush2.msra.mxu0 0.0
        %3183 = vmatprep.subr.mxu0 0.0
        %3184 = vmatpush2.msra.mxu0 0.0
        %3185 = vmatprep.subr.mxu0 0.0
        %3186 = vmatpush2.msra.mxu0 0.0
        %3187 = vmatprep.subr.mxu0 0.0
        %3188 = vmatpush2.msra.mxu0 0.0
        %3189 = vmatprep.subr.mxu0 0.0
        %3190 = vmatpush2.msra.mxu0 0.0
        %3191 = vmatprep.subr.mxu0 0.0
        %3192 = vmatpush2.msra.mxu0 0.0
        %3193 = vmatprep.subr.mxu0 0.0
        %3194 = vmatpush2.msra.mxu0 0.0
        %3195 = vmatprep.subr.mxu0 0.0
        %3196 = vmatpush2.msra.mxu0 0.0
        %3197 = vmatprep.subr.mxu0 0.0
        %3198 = vmatpush2.msra.mxu0 0.0
        %3199 = vmatprep.subr.mxu0 0.0
        %3200 = vmatpush2.msra.mxu0 0.0
        %3201 = vmatprep.subr.mxu0 0.0
        %3202 = vmatpush2.msra.mxu0 0.0
        %3203 = vmatprep.subr.mxu0 0.0
        %3204 = vmatpush2.msra.mxu0 0.0
        %3205 = vmatprep.subr.mxu0 0.0
        %3206 = vmatpush2.msra.mxu0 0.0
        %3207 = vmatprep.mubr.f32.mxu0 0.0
        %3208 = vmatmul.mubr.f32.gmra.mxu0 %v3132
        %v3209 = vpop.f32.mrf.mxu0
        %v3210 = vadd.f32 0.0, %v3209
        %v3211 = vpop.f32.mrf.mxu0
        %3212 = vmatprep.mubr.f32.mxu0 0.0
        %3213 = vmatmul.mubr.f32.gmra.mxu0 %v3135
        %v3214 = vpop.f32.mrf.mxu0
        %v3215 = vadd.f32 0.0, %v3214
        %v3216 = vpop.f32.mrf.mxu0
        %3217 = vmatprep.mubr.f32.mxu0 0.0
        %3218 = vmatmul.mubr.f32.gmra.mxu0 %v3138
        %v3219 = vpop.f32.mrf.mxu0
        %v3220 = vadd.f32 0.0, %v3219
        %v3221 = vpop.f32.mrf.mxu0
        %3222 = vmatprep.mubr.f32.mxu0 0.0
        %3223 = vmatmul.mubr.f32.gmra.mxu0 %v3141
        %v3224 = vpop.f32.mrf.mxu0
        %v3225 = vadd.f32 0.0, %v3224
        %v3226 = vpop.f32.mrf.mxu0
        %3227 = vdwg.mxu0
        %v3228 = vadd.f32 %v3016, %v3210
        %v3229 = vadd.f32 %v3017, %v3215
        %v3230 = vadd.f32 %v3018, %v3220
        %v3231 = vadd.f32 %v3019, %v3225
        %s3232 = scalar_lea.vmem %s2, 128
        %v3233 = vld [vmem:[%s3232] sm:$0xff]
        %v3234 = vld [vmem:[%s3232 + $0x8] sm:$0xff]
        %v3235 = vld [vmem:[%s3232 + $0x10] sm:$0xff]
        %v3236 = vld [vmem:[%s3232 + $0x18] sm:$0x7f]
        %v3238 = vsel %vm2393, %v3233, 0
        %v3241 = vsel %vm2393, %v3234, 0
        %v3244 = vsel %vm2393, %v3235, 0
        %v3247 = vsel %vm2393, %v3236, 0
        %3249 = vmatprep.subr.mxu0 0.0
        %3250 = vmatpush1.msra.mxu0 0.0
        %3251 = vmatprep.subr.mxu0 0.0
        %3252 = vmatpush1.msra.mxu0 0.0
        %3253 = vmatprep.subr.mxu0 0.0
        %3254 = vmatpush1.msra.mxu0 0.0
        %3255 = vmatprep.subr.mxu0 0.0
        %3256 = vmatpush1.msra.mxu0 0.0
        %3257 = vmatprep.subr.mxu0 0.0
        %3258 = vmatpush1.msra.mxu0 0.0
        %3259 = vmatprep.subr.mxu0 0.0
        %3260 = vmatpush1.msra.mxu0 0.0
        %3261 = vmatprep.subr.mxu0 0.0
        %3262 = vmatpush1.msra.mxu0 0.0
        %3263 = vmatprep.subr.mxu0 0.0
        %3264 = vmatpush1.msra.mxu0 0.0
        %3265 = vmatprep.subr.mxu0 0.0
        %3266 = vmatpush1.msra.mxu0 %v2408
        %3267 = vmatprep.subr.mxu0 0.0
        %3268 = vmatpush1.msra.mxu0 %v2387
        %3269 = vmatprep.subr.mxu0 0.0
        %3270 = vmatpush1.msra.mxu0 %v2386
        %3271 = vmatprep.subr.mxu0 0.0
        %3272 = vmatpush1.msra.mxu0 %v2385
        %3273 = vmatprep.subr.mxu0 0.0
        %3274 = vmatpush1.msra.mxu0 %v2384
        %3275 = vmatprep.subr.mxu0 0.0
        %3276 = vmatpush1.msra.mxu0 %v2383
        %3277 = vmatprep.subr.mxu0 0.0
        %3278 = vmatpush1.msra.mxu0 %v2382
        %3279 = vmatprep.subr.mxu0 0.0
        %3280 = vmatpush1.msra.mxu0 %v2381
        %3281 = vmatprep.subr.mxu0 0.0
        %3282 = vmatpush2.msra.mxu0 0.0
        %3283 = vmatprep.subr.mxu0 0.0
        %3284 = vmatpush2.msra.mxu0 0.0
        %3285 = vmatprep.subr.mxu0 0.0
        %3286 = vmatpush2.msra.mxu0 0.0
        %3287 = vmatprep.subr.mxu0 0.0
        %3288 = vmatpush2.msra.mxu0 0.0
        %3289 = vmatprep.subr.mxu0 0.0
        %3290 = vmatpush2.msra.mxu0 0.0
        %3291 = vmatprep.subr.mxu0 0.0
        %3292 = vmatpush2.msra.mxu0 0.0
        %3293 = vmatprep.subr.mxu0 0.0
        %3294 = vmatpush2.msra.mxu0 0.0
        %3295 = vmatprep.subr.mxu0 0.0
        %3296 = vmatpush2.msra.mxu0 0.0
        %3297 = vmatprep.subr.mxu0 0.0
        %3298 = vmatpush2.msra.mxu0 0.0
        %3299 = vmatprep.subr.mxu0 0.0
        %3300 = vmatpush2.msra.mxu0 0.0
        %3301 = vmatprep.subr.mxu0 0.0
        %3302 = vmatpush2.msra.mxu0 0.0
        %3303 = vmatprep.subr.mxu0 0.0
        %3304 = vmatpush2.msra.mxu0 0.0
        %3305 = vmatprep.subr.mxu0 0.0
        %3306 = vmatpush2.msra.mxu0 0.0
        %3307 = vmatprep.subr.mxu0 0.0
        %3308 = vmatpush2.msra.mxu0 0.0
        %3309 = vmatprep.subr.mxu0 0.0
        %3310 = vmatpush2.msra.mxu0 0.0
        %3311 = vmatprep.subr.mxu0 0.0
        %3312 = vmatpush2.msra.mxu0 0.0
        %3313 = vmatprep.mubr.f32.mxu0 0.0
        %3314 = vmatmul.mubr.f32.gmra.mxu0 %v3238
        %v3315 = vpop.f32.mrf.mxu0
        %v3316 = vadd.f32 0.0, %v3315
        %v3317 = vpop.f32.mrf.mxu0
        %3318 = vmatprep.mubr.f32.mxu0 0.0
        %3319 = vmatmul.mubr.f32.gmra.mxu0 %v3241
        %v3320 = vpop.f32.mrf.mxu0
        %v3321 = vadd.f32 0.0, %v3320
        %v3322 = vpop.f32.mrf.mxu0
        %3323 = vmatprep.mubr.f32.mxu0 0.0
        %3324 = vmatmul.mubr.f32.gmra.mxu0 %v3244
        %v3325 = vpop.f32.mrf.mxu0
        %v3326 = vadd.f32 0.0, %v3325
        %v3327 = vpop.f32.mrf.mxu0
        %3328 = vmatprep.mubr.f32.mxu0 0.0
        %3329 = vmatmul.mubr.f32.gmra.mxu0 %v3247
        %v3330 = vpop.f32.mrf.mxu0
        %v3331 = vadd.f32 0.0, %v3330
        %v3332 = vpop.f32.mrf.mxu0
        %3333 = vdwg.mxu0
        %s3334 = scalar_lea.vmem %s6, 256
        %v3335 = vld [vmem:[%s3334] sm:$0xff]
        %v3336 = vld [vmem:[%s3334 + $0x8] sm:$0xff]
        %v3337 = vld [vmem:[%s3334 + $0x10] sm:$0xff]
        %v3338 = vld [vmem:[%s3334 + $0x18] sm:$0xff]
        %v3339 = vld [vmem:[%s3334 + $0x20] sm:$0xff]
        %v3340 = vld [vmem:[%s3334 + $0x28] sm:$0xff]
        %v3341 = vld [vmem:[%s3334 + $0x30] sm:$0xff]
        %v3342 = vld [vmem:[%s3334 + $0x38] sm:$0xff]
        %v3344 = vsel %vm2009, %v3316, 0
        %v3347 = vsel %vm2009, %v3321, 0
        %v3350 = vsel %vm2009, %v3326, 0
        %v3353 = vsel %vm2009, %v3331, 0
        %3355 = vmatprep.subr.mxu0 0.0
        %3356 = vmatpush1.msra.mxu0 0.0
        %3357 = vmatprep.subr.mxu0 0.0
        %3358 = vmatpush1.msra.mxu0 0.0
        %3359 = vmatprep.subr.mxu0 0.0
        %3360 = vmatpush1.msra.mxu0 0.0
        %3361 = vmatprep.subr.mxu0 0.0
        %3362 = vmatpush1.msra.mxu0 0.0
        %3363 = vmatprep.subr.mxu0 0.0
        %3364 = vmatpush1.msra.mxu0 0.0
        %3365 = vmatprep.subr.mxu0 0.0
        %3366 = vmatpush1.msra.mxu0 0.0
        %3367 = vmatprep.subr.mxu0 0.0
        %3368 = vmatpush1.msra.mxu0 0.0
        %3369 = vmatprep.subr.mxu0 0.0
        %3370 = vmatpush1.msra.mxu0 0.0
        %3371 = vmatprep.subr.mxu0 0.0
        %3372 = vmatpush1.msra.mxu0 %v3342
        %3373 = vmatprep.subr.mxu0 0.0
        %3374 = vmatpush1.msra.mxu0 %v3341
        %3375 = vmatprep.subr.mxu0 0.0
        %3376 = vmatpush1.msra.mxu0 %v3340
        %3377 = vmatprep.subr.mxu0 0.0
        %3378 = vmatpush1.msra.mxu0 %v3339
        %3379 = vmatprep.subr.mxu0 0.0
        %3380 = vmatpush1.msra.mxu0 %v3338
        %3381 = vmatprep.subr.mxu0 0.0
        %3382 = vmatpush1.msra.mxu0 %v3337
        %3383 = vmatprep.subr.mxu0 0.0
        %3384 = vmatpush1.msra.mxu0 %v3336
        %3385 = vmatprep.subr.mxu0 0.0
        %3386 = vmatpush1.msra.mxu0 %v3335
        %3387 = vmatprep.subr.mxu0 0.0
        %3388 = vmatpush2.msra.mxu0 0.0
        %3389 = vmatprep.subr.mxu0 0.0
        %3390 = vmatpush2.msra.mxu0 0.0
        %3391 = vmatprep.subr.mxu0 0.0
        %3392 = vmatpush2.msra.mxu0 0.0
        %3393 = vmatprep.subr.mxu0 0.0
        %3394 = vmatpush2.msra.mxu0 0.0
        %3395 = vmatprep.subr.mxu0 0.0
        %3396 = vmatpush2.msra.mxu0 0.0
        %3397 = vmatprep.subr.mxu0 0.0
        %3398 = vmatpush2.msra.mxu0 0.0
        %3399 = vmatprep.subr.mxu0 0.0
        %3400 = vmatpush2.msra.mxu0 0.0
        %3401 = vmatprep.subr.mxu0 0.0
        %3402 = vmatpush2.msra.mxu0 0.0
        %3403 = vmatprep.subr.mxu0 0.0
        %3404 = vmatpush2.msra.mxu0 0.0
        %3405 = vmatprep.subr.mxu0 0.0
        %3406 = vmatpush2.msra.mxu0 0.0
        %3407 = vmatprep.subr.mxu0 0.0
        %3408 = vmatpush2.msra.mxu0 0.0
        %3409 = vmatprep.subr.mxu0 0.0
        %3410 = vmatpush2.msra.mxu0 0.0
        %3411 = vmatprep.subr.mxu0 0.0
        %3412 = vmatpush2.msra.mxu0 0.0
        %3413 = vmatprep.subr.mxu0 0.0
        %3414 = vmatpush2.msra.mxu0 0.0
        %3415 = vmatprep.subr.mxu0 0.0
        %3416 = vmatpush2.msra.mxu0 0.0
        %3417 = vmatprep.subr.mxu0 0.0
        %3418 = vmatpush2.msra.mxu0 0.0
        %3419 = vmatprep.mubr.f32.mxu0 0.0
        %3420 = vmatmul.mubr.f32.gmra.mxu0 %v3344
        %v3421 = vpop.f32.mrf.mxu0
        %v3422 = vadd.f32 0.0, %v3421
        %v3423 = vpop.f32.mrf.mxu0
        %3424 = vmatprep.mubr.f32.mxu0 0.0
        %3425 = vmatmul.mubr.f32.gmra.mxu0 %v3347
        %v3426 = vpop.f32.mrf.mxu0
        %v3427 = vadd.f32 0.0, %v3426
        %v3428 = vpop.f32.mrf.mxu0
        %3429 = vmatprep.mubr.f32.mxu0 0.0
        %3430 = vmatmul.mubr.f32.gmra.mxu0 %v3350
        %v3431 = vpop.f32.mrf.mxu0
        %v3432 = vadd.f32 0.0, %v3431
        %v3433 = vpop.f32.mrf.mxu0
        %3434 = vmatprep.mubr.f32.mxu0 0.0
        %3435 = vmatmul.mubr.f32.gmra.mxu0 %v3353
        %v3436 = vpop.f32.mrf.mxu0
        %v3437 = vadd.f32 0.0, %v3436
        %v3438 = vpop.f32.mrf.mxu0
        %3439 = vdwg.mxu0
        %v3440 = vadd.f32 %v3228, %v3422
        %v3441 = vadd.f32 %v3229, %v3427
        %v3442 = vadd.f32 %v3230, %v3432
        %v3443 = vadd.f32 %v3231, %v3437
        %v3444 = vmax.f32 %v3440, 0.0
        %v3445 = vmax.f32 %v3441, 0.0
        %v3446 = vmax.f32 %v3442, 0.0
        %v3447 = vmax.f32 %v3443, 0.0
        %v3448 = vadd.s32 %v1963, 64
        %v3449 = vadd.s32 %v1963, 72
        %v3450 = vand.u32 %v1963, 15
        %v3451 = vand.u32 %v1964, 15
        %v3452 = vand.u32 %v1965, 15
        %v3453 = vand.u32 %v1966, 15
        %v3454 = vand.u32 %v1967, 15
        %v3455 = vand.u32 %v1968, 15
        %v3456 = vand.u32 %v1969, 15
        %v3457 = vand.u32 %v1970, 15
        %v3458 = vand.u32 %v3448, 15
        %v3459 = vand.u32 %v3449, 15
        %vm3460 = vcmp.eq.s32.totalorder %v3450, %v1980
        %vm3461 = vcmp.eq.s32.totalorder %v3451, %v1980
        %vm3462 = vcmp.eq.s32.totalorder %v3452, %v1980
        %vm3463 = vcmp.eq.s32.totalorder %v3453, %v1980
        %vm3464 = vcmp.eq.s32.totalorder %v3454, %v1980
        %vm3465 = vcmp.eq.s32.totalorder %v3455, %v1980
        %vm3466 = vcmp.eq.s32.totalorder %v3456, %v1980
        %vm3467 = vcmp.eq.s32.totalorder %v3457, %v1980
        %vm3468 = vcmp.eq.s32.totalorder %v3458, %v1980
        %vm3469 = vcmp.eq.s32.totalorder %v3459, %v1980
        %v3470 = vsel %vm3460, 1, 0
        %v3471 = vsel %vm3461, 1, 0
        %v3472 = vsel %vm3462, 1, 0
        %v3473 = vsel %vm3463, 1, 0
        %v3474 = vsel %vm3464, 1, 0
        %v3475 = vsel %vm3465, 1, 0
        %v3476 = vsel %vm3466, 1, 0
        %v3477 = vsel %vm3467, 1, 0
        %v3478 = vsel %vm3468, 1, 0
        %v3479 = vsel %vm3469, 1, 0
        %v3480 = vcvt.s32.f32 %v3470
        %v3481 = vcvt.s32.f32 %v3471
        %v3482 = vcvt.s32.f32 %v3472
        %v3483 = vcvt.s32.f32 %v3473
        %v3484 = vcvt.s32.f32 %v3474
        %v3485 = vcvt.s32.f32 %v3475
        %v3486 = vcvt.s32.f32 %v3476
        %v3487 = vcvt.s32.f32 %v3477
        %v3488 = vcvt.s32.f32 %v3478
        %v3489 = vcvt.s32.f32 %v3479
        %v3490 = vand.u32 %v1980, 15
        %vm3491 = vcmp.eq.s32.totalorder %v1963, %v3490
        %vm3492 = vcmp.eq.s32.totalorder %v1964, %v3490
        %v3493 = vsel %vm3491, 1, 0
        %v3494 = vsel %vm3492, 1, 0
        %v3495 = vcvt.s32.f32 %v3493
        %v3496 = vcvt.s32.f32 %v3494
        %vm3497 = vcmask 654336
        %v3498 = vsel %vm3497, %v3444, 0.0
        %v3499 = vsel %vm3497, %v3445, 0.0
        %v3500 = vadd.f32 %v3498, %v3499
        %v3501 = vsel %vm3497, %v3446, 0.0
        %v3502 = vadd.f32 %v3500, %v3501
        %vm3503 = vcmask 653312
        %v3504 = vsel %vm3503, %v3447, 0.0
        %v3505 = vadd.f32 %v3502, %v3504
        %v3506 = vrot.slane %v3505, 4
        %v3507 = vadd.f32 %v3505, %v3506
        %v3508 = vrot.slane %v3507, 2
        %v3509 = vadd.f32 %v3507, %v3508
        %v3510 = vrot.slane %v3509, 1
        %v3511 = vadd.f32 %v3509, %v3510
        %v3513 = vsel %vm3497, %v3511, 0
        %3515 = vmatprep.subr.mxu0 0.0
        %3516 = vmatpush1.msra.mxu0 0.0
        %3517 = vmatprep.subr.mxu0 0.0
        %3518 = vmatpush1.msra.mxu0 0.0
        %3519 = vmatprep.subr.mxu0 0.0
        %3520 = vmatpush1.msra.mxu0 0.0
        %3521 = vmatprep.subr.mxu0 0.0
        %3522 = vmatpush1.msra.mxu0 0.0
        %3523 = vmatprep.subr.mxu0 0.0
        %3524 = vmatpush1.msra.mxu0 0.0
        %3525 = vmatprep.subr.mxu0 0.0
        %3526 = vmatpush1.msra.mxu0 0.0
        %3527 = vmatprep.subr.mxu0 0.0
        %3528 = vmatpush1.msra.mxu0 %v3489
        %3529 = vmatprep.subr.mxu0 0.0
        %3530 = vmatpush1.msra.mxu0 %v3488
        %3531 = vmatprep.subr.mxu0 0.0
        %3532 = vmatpush1.msra.mxu0 %v3487
        %3533 = vmatprep.subr.mxu0 0.0
        %3534 = vmatpush1.msra.mxu0 %v3486
        %3535 = vmatprep.subr.mxu0 0.0
        %3536 = vmatpush1.msra.mxu0 %v3485
        %3537 = vmatprep.subr.mxu0 0.0
        %3538 = vmatpush1.msra.mxu0 %v3484
        %3539 = vmatprep.subr.mxu0 0.0
        %3540 = vmatpush1.msra.mxu0 %v3483
        %3541 = vmatprep.subr.mxu0 0.0
        %3542 = vmatpush1.msra.mxu0 %v3482
        %3543 = vmatprep.subr.mxu0 0.0
        %3544 = vmatpush1.msra.mxu0 %v3481
        %3545 = vmatprep.subr.mxu0 0.0
        %3546 = vmatpush1.msra.mxu0 %v3480
        %3547 = vmatprep.subr.mxu0 0.0
        %3548 = vmatpush2.msra.mxu0 0.0
        %3549 = vmatprep.subr.mxu0 0.0
        %3550 = vmatpush2.msra.mxu0 0.0
        %3551 = vmatprep.subr.mxu0 0.0
        %3552 = vmatpush2.msra.mxu0 0.0
        %3553 = vmatprep.subr.mxu0 0.0
        %3554 = vmatpush2.msra.mxu0 0.0
        %3555 = vmatprep.subr.mxu0 0.0
        %3556 = vmatpush2.msra.mxu0 0.0
        %3557 = vmatprep.subr.mxu0 0.0
        %3558 = vmatpush2.msra.mxu0 0.0
        %3559 = vmatprep.subr.mxu0 0.0
        %3560 = vmatpush2.msra.mxu0 0.0
        %3561 = vmatprep.subr.mxu0 0.0
        %3562 = vmatpush2.msra.mxu0 0.0
        %3563 = vmatprep.subr.mxu0 0.0
        %3564 = vmatpush2.msra.mxu0 0.0
        %3565 = vmatprep.subr.mxu0 0.0
        %3566 = vmatpush2.msra.mxu0 0.0
        %3567 = vmatprep.subr.mxu0 0.0
        %3568 = vmatpush2.msra.mxu0 0.0
        %3569 = vmatprep.subr.mxu0 0.0
        %3570 = vmatpush2.msra.mxu0 0.0
        %3571 = vmatprep.subr.mxu0 0.0
        %3572 = vmatpush2.msra.mxu0 0.0
        %3573 = vmatprep.subr.mxu0 0.0
        %3574 = vmatpush2.msra.mxu0 0.0
        %3575 = vmatprep.subr.mxu0 0.0
        %3576 = vmatpush2.msra.mxu0 0.0
        %3577 = vmatprep.subr.mxu0 0.0
        %3578 = vmatpush2.msra.mxu0 0.0
        %3579 = vmatprep.mubr.f32.mxu0 0.0
        %3580 = vmatmul.mubr.f32.gmra.mxu0 %v3513
        %v3581 = vpop.f32.mrf.mxu0
        %v3582 = vadd.f32 0.0, %v3581
        %v3583 = vpop.f32.mrf.mxu0
        %3584 = vdwg.mxu0
        %v3585 = vmul.f32 %v3582, 0.006451613
        %v3586 = vmul.f32 %v3444, %v3444
        %v3587 = vmul.f32 %v3445, %v3445
        %v3588 = vmul.f32 %v3446, %v3446
        %v3589 = vmul.f32 %v3447, %v3447
        %v3590 = vsel %vm3497, %v3586, 0.0
        %v3591 = vsel %vm3497, %v3587, 0.0
        %v3592 = vadd.f32 %v3590, %v3591
        %v3593 = vsel %vm3497, %v3588, 0.0
        %v3594 = vadd.f32 %v3592, %v3593
        %v3595 = vsel %vm3503, %v3589, 0.0
        %v3596 = vadd.f32 %v3594, %v3595
        %v3597 = vrot.slane %v3596, 4
        %v3598 = vadd.f32 %v3596, %v3597
        %v3599 = vrot.slane %v3598, 2
        %v3600 = vadd.f32 %v3598, %v3599
        %v3601 = vrot.slane %v3600, 1
        %v3602 = vadd.f32 %v3600, %v3601
        %v3604 = vsel %vm3497, %v3602, 0
        %3606 = vmatprep.subr.mxu0 0.0
        %3607 = vmatpush1.msra.mxu0 0.0
        %3608 = vmatprep.subr.mxu0 0.0
        %3609 = vmatpush1.msra.mxu0 0.0
        %3610 = vmatprep.subr.mxu0 0.0
        %3611 = vmatpush1.msra.mxu0 0.0
        %3612 = vmatprep.subr.mxu0 0.0
        %3613 = vmatpush1.msra.mxu0 0.0
        %3614 = vmatprep.subr.mxu0 0.0
        %3615 = vmatpush1.msra.mxu0 0.0
        %3616 = vmatprep.subr.mxu0 0.0
        %3617 = vmatpush1.msra.mxu0 0.0
        %3618 = vmatprep.subr.mxu0 0.0
        %3619 = vmatpush1.msra.mxu0 %v3489
        %3620 = vmatprep.subr.mxu0 0.0
        %3621 = vmatpush1.msra.mxu0 %v3488
        %3622 = vmatprep.subr.mxu0 0.0
        %3623 = vmatpush1.msra.mxu0 %v3487
        %3624 = vmatprep.subr.mxu0 0.0
        %3625 = vmatpush1.msra.mxu0 %v3486
        %3626 = vmatprep.subr.mxu0 0.0
        %3627 = vmatpush1.msra.mxu0 %v3485
        %3628 = vmatprep.subr.mxu0 0.0
        %3629 = vmatpush1.msra.mxu0 %v3484
        %3630 = vmatprep.subr.mxu0 0.0
        %3631 = vmatpush1.msra.mxu0 %v3483
        %3632 = vmatprep.subr.mxu0 0.0
        %3633 = vmatpush1.msra.mxu0 %v3482
        %3634 = vmatprep.subr.mxu0 0.0
        %3635 = vmatpush1.msra.mxu0 %v3481
        %3636 = vmatprep.subr.mxu0 0.0
        %3637 = vmatpush1.msra.mxu0 %v3480
        %3638 = vmatprep.subr.mxu0 0.0
        %3639 = vmatpush2.msra.mxu0 0.0
        %3640 = vmatprep.subr.mxu0 0.0
        %3641 = vmatpush2.msra.mxu0 0.0
        %3642 = vmatprep.subr.mxu0 0.0
        %3643 = vmatpush2.msra.mxu0 0.0
        %3644 = vmatprep.subr.mxu0 0.0
        %3645 = vmatpush2.msra.mxu0 0.0
        %3646 = vmatprep.subr.mxu0 0.0
        %3647 = vmatpush2.msra.mxu0 0.0
        %3648 = vmatprep.subr.mxu0 0.0
        %3649 = vmatpush2.msra.mxu0 0.0
        %3650 = vmatprep.subr.mxu0 0.0
        %3651 = vmatpush2.msra.mxu0 0.0
        %3652 = vmatprep.subr.mxu0 0.0
        %3653 = vmatpush2.msra.mxu0 0.0
        %3654 = vmatprep.subr.mxu0 0.0
        %3655 = vmatpush2.msra.mxu0 0.0
        %3656 = vmatprep.subr.mxu0 0.0
        %3657 = vmatpush2.msra.mxu0 0.0
        %3658 = vmatprep.subr.mxu0 0.0
        %3659 = vmatpush2.msra.mxu0 0.0
        %3660 = vmatprep.subr.mxu0 0.0
        %3661 = vmatpush2.msra.mxu0 0.0
        %3662 = vmatprep.subr.mxu0 0.0
        %3663 = vmatpush2.msra.mxu0 0.0
        %3664 = vmatprep.subr.mxu0 0.0
        %3665 = vmatpush2.msra.mxu0 0.0
        %3666 = vmatprep.subr.mxu0 0.0
        %3667 = vmatpush2.msra.mxu0 0.0
        %3668 = vmatprep.subr.mxu0 0.0
        %3669 = vmatpush2.msra.mxu0 0.0
        %3670 = vmatprep.mubr.f32.mxu0 0.0
        %3671 = vmatmul.mubr.f32.gmra.mxu0 %v3604
        %v3672 = vpop.f32.mrf.mxu0
        %v3673 = vadd.f32 0.0, %v3672
        %v3674 = vpop.f32.mrf.mxu0
        %3675 = vdwg.mxu0
        %v3676 = vmul.f32 %v3673, 0.006451613
        %v3677 = vmul.f32 %v3585, %v3585
        %v3678 = vsub.f32 %v3676, %v3677
        %v3679 = vld [vmem:[%s11] sm:$0x1]
        %v3680 = vld [vmem:[%s11 + $0x1] sm:$0x1]
        %v3681 = vadd.f32 %v3678, 1e-05
        %v3682 = vrsqrt.pop %v3681
        %v3683 = vmul.f32 %v3679, %v3682
        %v3684 = vmul.f32 %v3585, %v3683
        %v3685 = vsub.f32 %v3680, %v3684
        %v3687 = vsel %vm837, %v3683, 0
        %3689 = vmatprep.subr.mxu0 0.0
        %3690 = vmatpush1.msra.mxu0 0.0
        %3691 = vmatprep.subr.mxu0 0.0
        %3692 = vmatpush1.msra.mxu0 0.0
        %3693 = vmatprep.subr.mxu0 0.0
        %3694 = vmatpush1.msra.mxu0 0.0
        %3695 = vmatprep.subr.mxu0 0.0
        %3696 = vmatpush1.msra.mxu0 0.0
        %3697 = vmatprep.subr.mxu0 0.0
        %3698 = vmatpush1.msra.mxu0 0.0
        %3699 = vmatprep.subr.mxu0 0.0
        %3700 = vmatpush1.msra.mxu0 0.0
        %3701 = vmatprep.subr.mxu0 0.0
        %3702 = vmatpush1.msra.mxu0 0.0
        %3703 = vmatprep.subr.mxu0 0.0
        %3704 = vmatpush1.msra.mxu0 0.0
        %3705 = vmatprep.subr.mxu0 0.0
        %3706 = vmatpush1.msra.mxu0 0.0
        %3707 = vmatprep.subr.mxu0 0.0
        %3708 = vmatpush1.msra.mxu0 0.0
        %3709 = vmatprep.subr.mxu0 0.0
        %3710 = vmatpush1.msra.mxu0 0.0
        %3711 = vmatprep.subr.mxu0 0.0
        %3712 = vmatpush1.msra.mxu0 0.0
        %3713 = vmatprep.subr.mxu0 0.0
        %3714 = vmatpush1.msra.mxu0 0.0
        %3715 = vmatprep.subr.mxu0 0.0
        %3716 = vmatpush1.msra.mxu0 0.0
        %3717 = vmatprep.subr.mxu0 0.0
        %3718 = vmatpush1.msra.mxu0 %v3496
        %3719 = vmatprep.subr.mxu0 0.0
        %3720 = vmatpush1.msra.mxu0 %v3495
        %3721 = vmatprep.subr.mxu0 0.0
        %3722 = vmatpush2.msra.mxu0 0.0
        %3723 = vmatprep.subr.mxu0 0.0
        %3724 = vmatpush2.msra.mxu0 0.0
        %3725 = vmatprep.subr.mxu0 0.0
        %3726 = vmatpush2.msra.mxu0 0.0
        %3727 = vmatprep.subr.mxu0 0.0
        %3728 = vmatpush2.msra.mxu0 0.0
        %3729 = vmatprep.subr.mxu0 0.0
        %3730 = vmatpush2.msra.mxu0 0.0
        %3731 = vmatprep.subr.mxu0 0.0
        %3732 = vmatpush2.msra.mxu0 0.0
        %3733 = vmatprep.subr.mxu0 0.0
        %3734 = vmatpush2.msra.mxu0 0.0
        %3735 = vmatprep.subr.mxu0 0.0
        %3736 = vmatpush2.msra.mxu0 0.0
        %3737 = vmatprep.subr.mxu0 0.0
        %3738 = vmatpush2.msra.mxu0 0.0
        %3739 = vmatprep.subr.mxu0 0.0
        %3740 = vmatpush2.msra.mxu0 0.0
        %3741 = vmatprep.subr.mxu0 0.0
        %3742 = vmatpush2.msra.mxu0 0.0
        %3743 = vmatprep.subr.mxu0 0.0
        %3744 = vmatpush2.msra.mxu0 0.0
        %3745 = vmatprep.subr.mxu0 0.0
        %3746 = vmatpush2.msra.mxu0 0.0
        %3747 = vmatprep.subr.mxu0 0.0
        %3748 = vmatpush2.msra.mxu0 0.0
        %3749 = vmatprep.subr.mxu0 0.0
        %3750 = vmatpush2.msra.mxu0 0.0
        %3751 = vmatprep.subr.mxu0 0.0
        %3752 = vmatpush2.msra.mxu0 0.0
        %3753 = vmatprep.mubr.f32.mxu0 0.0
        %3754 = vmatmul.mubr.f32.gmra.mxu0 %v3687
        %v3755 = vpop.f32.mrf.mxu0
        %v3756 = vadd.f32 0.0, %v3755
        %v3757 = vpop.f32.mrf.mxu0
        %3758 = vdwg.mxu0
        %v3760 = vsel %vm837, %v3685, 0
        %3762 = vmatprep.subr.mxu0 0.0
        %3763 = vmatpush1.msra.mxu0 0.0
        %3764 = vmatprep.subr.mxu0 0.0
        %3765 = vmatpush1.msra.mxu0 0.0
        %3766 = vmatprep.subr.mxu0 0.0
        %3767 = vmatpush1.msra.mxu0 0.0
        %3768 = vmatprep.subr.mxu0 0.0
        %3769 = vmatpush1.msra.mxu0 0.0
        %3770 = vmatprep.subr.mxu0 0.0
        %3771 = vmatpush1.msra.mxu0 0.0
        %3772 = vmatprep.subr.mxu0 0.0
        %3773 = vmatpush1.msra.mxu0 0.0
        %3774 = vmatprep.subr.mxu0 0.0
        %3775 = vmatpush1.msra.mxu0 0.0
        %3776 = vmatprep.subr.mxu0 0.0
        %3777 = vmatpush1.msra.mxu0 0.0
        %3778 = vmatprep.subr.mxu0 0.0
        %3779 = vmatpush1.msra.mxu0 0.0
        %3780 = vmatprep.subr.mxu0 0.0
        %3781 = vmatpush1.msra.mxu0 0.0
        %3782 = vmatprep.subr.mxu0 0.0
        %3783 = vmatpush1.msra.mxu0 0.0
        %3784 = vmatprep.subr.mxu0 0.0
        %3785 = vmatpush1.msra.mxu0 0.0
        %3786 = vmatprep.subr.mxu0 0.0
        %3787 = vmatpush1.msra.mxu0 0.0
        %3788 = vmatprep.subr.mxu0 0.0
        %3789 = vmatpush1.msra.mxu0 0.0
        %3790 = vmatprep.subr.mxu0 0.0
        %3791 = vmatpush1.msra.mxu0 %v3496
        %3792 = vmatprep.subr.mxu0 0.0
        %3793 = vmatpush1.msra.mxu0 %v3495
        %3794 = vmatprep.subr.mxu0 0.0
        %3795 = vmatpush2.msra.mxu0 0.0
        %3796 = vmatprep.subr.mxu0 0.0
        %3797 = vmatpush2.msra.mxu0 0.0
        %3798 = vmatprep.subr.mxu0 0.0
        %3799 = vmatpush2.msra.mxu0 0.0
        %3800 = vmatprep.subr.mxu0 0.0
        %3801 = vmatpush2.msra.mxu0 0.0
        %3802 = vmatprep.subr.mxu0 0.0
        %3803 = vmatpush2.msra.mxu0 0.0
        %3804 = vmatprep.subr.mxu0 0.0
        %3805 = vmatpush2.msra.mxu0 0.0
        %3806 = vmatprep.subr.mxu0 0.0
        %3807 = vmatpush2.msra.mxu0 0.0
        %3808 = vmatprep.subr.mxu0 0.0
        %3809 = vmatpush2.msra.mxu0 0.0
        %3810 = vmatprep.subr.mxu0 0.0
        %3811 = vmatpush2.msra.mxu0 0.0
        %3812 = vmatprep.subr.mxu0 0.0
        %3813 = vmatpush2.msra.mxu0 0.0
        %3814 = vmatprep.subr.mxu0 0.0
        %3815 = vmatpush2.msra.mxu0 0.0
        %3816 = vmatprep.subr.mxu0 0.0
        %3817 = vmatpush2.msra.mxu0 0.0
        %3818 = vmatprep.subr.mxu0 0.0
        %3819 = vmatpush2.msra.mxu0 0.0
        %3820 = vmatprep.subr.mxu0 0.0
        %3821 = vmatpush2.msra.mxu0 0.0
        %3822 = vmatprep.subr.mxu0 0.0
        %3823 = vmatpush2.msra.mxu0 0.0
        %3824 = vmatprep.subr.mxu0 0.0
        %3825 = vmatpush2.msra.mxu0 0.0
        %3826 = vmatprep.mubr.f32.mxu0 0.0
        %3827 = vmatmul.mubr.f32.gmra.mxu0 %v3760
        %v3828 = vpop.f32.mrf.mxu0
        %v3829 = vadd.f32 0.0, %v3828
        %v3830 = vpop.f32.mrf.mxu0
        %3831 = vdwg.mxu0
        %v3832 = vlaneseq
        %v3833 = vshrl.u32 %v3832, 7
        %v3834 = vsub.s32 0, %v3833
        %v3835 = vrot.slane %v3756, %v3834
        %v3836 = vmul.f32 %v3444, %v3835
        %v3837 = vmul.f32 %v3445, %v3835
        %v3838 = vmul.f32 %v3446, %v3835
        %v3839 = vmul.f32 %v3447, %v3835
        %v3840 = vlaneseq
        %v3841 = vshrl.u32 %v3840, 7
        %v3842 = vsub.s32 0, %v3841
        %v3843 = vrot.slane %v3829, %v3842
        %v3844 = vadd.f32 %v3836, %v3843
        %v3845 = vadd.f32 %v3837, %v3843
        %v3846 = vadd.f32 %v3838, %v3843
        %v3847 = vadd.f32 %v3839, %v3843
        %v3848 = vld [vmem:[%s3] sm:$0xff]
        %vm3849 = vcmask 252928
        %v3851 = vsel %vm3849, %v3848, 0
        %v3854 = vsel %vm2406, %v3847, 0
        %3856 = vmatprep.subr.mxu0 0.0
        %3857 = vmatpush1.msra.mxu0 0.0
        %3858 = vmatprep.subr.mxu0 0.0
        %3859 = vmatpush1.msra.mxu0 0.0
        %3860 = vmatprep.subr.mxu0 0.0
        %3861 = vmatpush1.msra.mxu0 0.0
        %3862 = vmatprep.subr.mxu0 0.0
        %3863 = vmatpush1.msra.mxu0 0.0
        %3864 = vmatprep.subr.mxu0 0.0
        %3865 = vmatpush1.msra.mxu0 0.0
        %3866 = vmatprep.subr.mxu0 0.0
        %3867 = vmatpush1.msra.mxu0 0.0
        %3868 = vmatprep.subr.mxu0 0.0
        %3869 = vmatpush1.msra.mxu0 0.0
        %3870 = vmatprep.subr.mxu0 0.0
        %3871 = vmatpush1.msra.mxu0 0.0
        %3872 = vmatprep.subr.mxu0 0.0
        %3873 = vmatpush1.msra.mxu0 0.0
        %3874 = vmatprep.subr.mxu0 0.0
        %3875 = vmatpush1.msra.mxu0 0.0
        %3876 = vmatprep.subr.mxu0 0.0
        %3877 = vmatpush1.msra.mxu0 0.0
        %3878 = vmatprep.subr.mxu0 0.0
        %3879 = vmatpush1.msra.mxu0 0.0
        %3880 = vmatprep.subr.mxu0 0.0
        %3881 = vmatpush1.msra.mxu0 %v3854
        %3882 = vmatprep.subr.mxu0 0.0
        %3883 = vmatpush1.msra.mxu0 %v3846
        %3884 = vmatprep.subr.mxu0 0.0
        %3885 = vmatpush1.msra.mxu0 %v3845
        %3886 = vmatprep.subr.mxu0 0.0
        %3887 = vmatpush1.msra.mxu0 %v3844
        %3888 = vmatprep.subr.mxu0 0.0
        %3889 = vmatpush2.msra.mxu0 0.0
        %3890 = vmatprep.subr.mxu0 0.0
        %3891 = vmatpush2.msra.mxu0 0.0
        %3892 = vmatprep.subr.mxu0 0.0
        %3893 = vmatpush2.msra.mxu0 0.0
        %3894 = vmatprep.subr.mxu0 0.0
        %3895 = vmatpush2.msra.mxu0 0.0
        %3896 = vmatprep.subr.mxu0 0.0
        %3897 = vmatpush2.msra.mxu0 0.0
        %3898 = vmatprep.subr.mxu0 0.0
        %3899 = vmatpush2.msra.mxu0 0.0
        %3900 = vmatprep.subr.mxu0 0.0
        %3901 = vmatpush2.msra.mxu0 0.0
        %3902 = vmatprep.subr.mxu0 0.0
        %3903 = vmatpush2.msra.mxu0 0.0
        %3904 = vmatprep.subr.mxu0 0.0
        %3905 = vmatpush2.msra.mxu0 0.0
        %3906 = vmatprep.subr.mxu0 0.0
        %3907 = vmatpush2.msra.mxu0 0.0
        %3908 = vmatprep.subr.mxu0 0.0
        %3909 = vmatpush2.msra.mxu0 0.0
        %3910 = vmatprep.subr.mxu0 0.0
        %3911 = vmatpush2.msra.mxu0 0.0
        %3912 = vmatprep.subr.mxu0 0.0
        %3913 = vmatpush2.msra.mxu0 0.0
        %3914 = vmatprep.subr.mxu0 0.0
        %3915 = vmatpush2.msra.mxu0 0.0
        %3916 = vmatprep.subr.mxu0 0.0
        %3917 = vmatpush2.msra.mxu0 0.0
        %3918 = vmatprep.subr.mxu0 0.0
        %3919 = vmatpush2.msra.mxu0 0.0
        %3920 = vmatprep.mubr.f32.mxu0 0.0
        %3921 = vmatmul.mubr.f32.gmra.mxu0 %v3851
        %v3922 = vpop.f32.mrf.mxu0
        %v3923 = vadd.f32 0.0, %v3922
        %v3924 = vpop.f32.mrf.mxu0
        %3925 = vdwg.mxu0
        %v3926 = vld [vmem:[%s7] sm:$0xff]
        %v3927 = vld [vmem:[%s7 + $0x8] sm:$0xff]
        %v3928 = vld [vmem:[%s7 + $0x10] sm:$0xff]
        %v3929 = vld [vmem:[%s7 + $0x18] sm:$0xff]
        %v3930 = vld [vmem:[%s7 + $0x20] sm:$0xff]
        %v3931 = vld [vmem:[%s7 + $0x28] sm:$0xff]
        %v3932 = vld [vmem:[%s7 + $0x30] sm:$0xff]
        %v3933 = vld [vmem:[%s7 + $0x38] sm:$0xff]
        %v3934 = vld [vmem:[%s7 + $0x40] sm:$0xff]
        %v3935 = vld [vmem:[%s7 + $0x48] sm:$0xff]
        %s3936 = scalar_lea.vmem %s3, 8
        %v3937 = vld [vmem:[%s3936] sm:$0xff]
        %v3939 = vsel %vm3849, %v3937, 0
        %3941 = vmatprep.subr.mxu0 0.0
        %3942 = vmatpush1.msra.mxu0 0.0
        %3943 = vmatprep.subr.mxu0 0.0
        %3944 = vmatpush1.msra.mxu0 0.0
        %3945 = vmatprep.subr.mxu0 0.0
        %3946 = vmatpush1.msra.mxu0 0.0
        %3947 = vmatprep.subr.mxu0 0.0
        %3948 = vmatpush1.msra.mxu0 0.0
        %3949 = vmatprep.subr.mxu0 0.0
        %3950 = vmatpush1.msra.mxu0 0.0
        %3951 = vmatprep.subr.mxu0 0.0
        %3952 = vmatpush1.msra.mxu0 0.0
        %3953 = vmatprep.subr.mxu0 0.0
        %3954 = vmatpush1.msra.mxu0 0.0
        %3955 = vmatprep.subr.mxu0 0.0
        %3956 = vmatpush1.msra.mxu0 0.0
        %3957 = vmatprep.subr.mxu0 0.0
        %3958 = vmatpush1.msra.mxu0 0.0
        %3959 = vmatprep.subr.mxu0 0.0
        %3960 = vmatpush1.msra.mxu0 0.0
        %3961 = vmatprep.subr.mxu0 0.0
        %3962 = vmatpush1.msra.mxu0 0.0
        %3963 = vmatprep.subr.mxu0 0.0
        %3964 = vmatpush1.msra.mxu0 0.0
        %3965 = vmatprep.subr.mxu0 0.0
        %3966 = vmatpush1.msra.mxu0 %v3854
        %3967 = vmatprep.subr.mxu0 0.0
        %3968 = vmatpush1.msra.mxu0 %v3846
        %3969 = vmatprep.subr.mxu0 0.0
        %3970 = vmatpush1.msra.mxu0 %v3845
        %3971 = vmatprep.subr.mxu0 0.0
        %3972 = vmatpush1.msra.mxu0 %v3844
        %3973 = vmatprep.subr.mxu0 0.0
        %3974 = vmatpush2.msra.mxu0 0.0
        %3975 = vmatprep.subr.mxu0 0.0
        %3976 = vmatpush2.msra.mxu0 0.0
        %3977 = vmatprep.subr.mxu0 0.0
        %3978 = vmatpush2.msra.mxu0 0.0
        %3979 = vmatprep.subr.mxu0 0.0
        %3980 = vmatpush2.msra.mxu0 0.0
        %3981 = vmatprep.subr.mxu0 0.0
        %3982 = vmatpush2.msra.mxu0 0.0
        %3983 = vmatprep.subr.mxu0 0.0
        %3984 = vmatpush2.msra.mxu0 0.0
        %3985 = vmatprep.subr.mxu0 0.0
        %3986 = vmatpush2.msra.mxu0 0.0
        %3987 = vmatprep.subr.mxu0 0.0
        %3988 = vmatpush2.msra.mxu0 0.0
        %3989 = vmatprep.subr.mxu0 0.0
        %3990 = vmatpush2.msra.mxu0 0.0
        %3991 = vmatprep.subr.mxu0 0.0
        %3992 = vmatpush2.msra.mxu0 0.0
        %3993 = vmatprep.subr.mxu0 0.0
        %3994 = vmatpush2.msra.mxu0 0.0
        %3995 = vmatprep.subr.mxu0 0.0
        %3996 = vmatpush2.msra.mxu0 0.0
        %3997 = vmatprep.subr.mxu0 0.0
        %3998 = vmatpush2.msra.mxu0 0.0
        %3999 = vmatprep.subr.mxu0 0.0
        %4000 = vmatpush2.msra.mxu0 0.0
        %4001 = vmatprep.subr.mxu0 0.0
        %4002 = vmatpush2.msra.mxu0 0.0
        %4003 = vmatprep.subr.mxu0 0.0
        %4004 = vmatpush2.msra.mxu0 0.0
        %4005 = vmatprep.mubr.f32.mxu0 0.0
        %4006 = vmatmul.mubr.f32.gmra.mxu0 %v3939
        %v4007 = vpop.f32.mrf.mxu0
        %v4008 = vadd.f32 0.0, %v4007
        %v4009 = vpop.f32.mrf.mxu0
        %4010 = vdwg.mxu0
        %s4011 = scalar_lea.vmem %s7, 80
        %v4012 = vld [vmem:[%s4011] sm:$0xff]
        %v4013 = vld [vmem:[%s4011 + $0x8] sm:$0xff]
        %v4014 = vld [vmem:[%s4011 + $0x10] sm:$0xff]
        %v4015 = vld [vmem:[%s4011 + $0x18] sm:$0xff]
        %v4016 = vld [vmem:[%s4011 + $0x20] sm:$0xff]
        %v4017 = vld [vmem:[%s4011 + $0x28] sm:$0xff]
        %v4018 = vld [vmem:[%s4011 + $0x30] sm:$0xff]
        %v4019 = vld [vmem:[%s4011 + $0x38] sm:$0xff]
        %v4020 = vld [vmem:[%s4011 + $0x40] sm:$0xff]
        %v4021 = vld [vmem:[%s4011 + $0x48] sm:$0xff]
        %v4023 = vsel %vm3497, %v4008, 0
        %4025 = vmatprep.subr.mxu0 0.0
        %4026 = vmatpush1.msra.mxu0 0.0
        %4027 = vmatprep.subr.mxu0 0.0
        %4028 = vmatpush1.msra.mxu0 0.0
        %4029 = vmatprep.subr.mxu0 0.0
        %4030 = vmatpush1.msra.mxu0 0.0
        %4031 = vmatprep.subr.mxu0 0.0
        %4032 = vmatpush1.msra.mxu0 0.0
        %4033 = vmatprep.subr.mxu0 0.0
        %4034 = vmatpush1.msra.mxu0 0.0
        %4035 = vmatprep.subr.mxu0 0.0
        %4036 = vmatpush1.msra.mxu0 0.0
        %4037 = vmatprep.subr.mxu0 0.0
        %4038 = vmatpush1.msra.mxu0 %v4021
        %4039 = vmatprep.subr.mxu0 0.0
        %4040 = vmatpush1.msra.mxu0 %v4020
        %4041 = vmatprep.subr.mxu0 0.0
        %4042 = vmatpush1.msra.mxu0 %v4019
        %4043 = vmatprep.subr.mxu0 0.0
        %4044 = vmatpush1.msra.mxu0 %v4018
        %4045 = vmatprep.subr.mxu0 0.0
        %4046 = vmatpush1.msra.mxu0 %v4017
        %4047 = vmatprep.subr.mxu0 0.0
        %4048 = vmatpush1.msra.mxu0 %v4016
        %4049 = vmatprep.subr.mxu0 0.0
        %4050 = vmatpush1.msra.mxu0 %v4015
        %4051 = vmatprep.subr.mxu0 0.0
        %4052 = vmatpush1.msra.mxu0 %v4014
        %4053 = vmatprep.subr.mxu0 0.0
        %4054 = vmatpush1.msra.mxu0 %v4013
        %4055 = vmatprep.subr.mxu0 0.0
        %4056 = vmatpush1.msra.mxu0 %v4012
        %4057 = vmatprep.subr.mxu0 0.0
        %4058 = vmatpush2.msra.mxu0 0.0
        %4059 = vmatprep.subr.mxu0 0.0
        %4060 = vmatpush2.msra.mxu0 0.0
        %4061 = vmatprep.subr.mxu0 0.0
        %4062 = vmatpush2.msra.mxu0 0.0
        %4063 = vmatprep.subr.mxu0 0.0
        %4064 = vmatpush2.msra.mxu0 0.0
        %4065 = vmatprep.subr.mxu0 0.0
        %4066 = vmatpush2.msra.mxu0 0.0
        %4067 = vmatprep.subr.mxu0 0.0
        %4068 = vmatpush2.msra.mxu0 0.0
        %4069 = vmatprep.subr.mxu0 0.0
        %4070 = vmatpush2.msra.mxu0 0.0
        %4071 = vmatprep.subr.mxu0 0.0
        %4072 = vmatpush2.msra.mxu0 0.0
        %4073 = vmatprep.subr.mxu0 0.0
        %4074 = vmatpush2.msra.mxu0 0.0
        %4075 = vmatprep.subr.mxu0 0.0
        %4076 = vmatpush2.msra.mxu0 0.0
        %4077 = vmatprep.subr.mxu0 0.0
        %4078 = vmatpush2.msra.mxu0 0.0
        %4079 = vmatprep.subr.mxu0 0.0
        %4080 = vmatpush2.msra.mxu0 0.0
        %4081 = vmatprep.subr.mxu0 0.0
        %4082 = vmatpush2.msra.mxu0 0.0
        %4083 = vmatprep.subr.mxu0 0.0
        %4084 = vmatpush2.msra.mxu0 0.0
        %4085 = vmatprep.subr.mxu0 0.0
        %4086 = vmatpush2.msra.mxu0 0.0
        %4087 = vmatprep.subr.mxu0 0.0
        %4088 = vmatpush2.msra.mxu0 0.0
        %4089 = vmatprep.mubr.f32.mxu0 0.0
        %4090 = vmatmul.mubr.f32.gmra.mxu0 %v4023
        %v4091 = vpop.f32.mrf.mxu0
        %v4092 = vadd.f32 0.0, %v4091
        %v4093 = vpop.f32.mrf.mxu0
        %4094 = vdwg.mxu0
        %v4096 = vsel %vm3497, %v3923, 0
        %4098 = vmatprep.subr.mxu0 0.0
        %4099 = vmatpush1.msra.mxu0 0.0
        %4100 = vmatprep.subr.mxu0 0.0
        %4101 = vmatpush1.msra.mxu0 0.0
        %4102 = vmatprep.subr.mxu0 0.0
        %4103 = vmatpush1.msra.mxu0 0.0
        %4104 = vmatprep.subr.mxu0 0.0
        %4105 = vmatpush1.msra.mxu0 0.0
        %4106 = vmatprep.subr.mxu0 0.0
        %4107 = vmatpush1.msra.mxu0 0.0
        %4108 = vmatprep.subr.mxu0 0.0
        %4109 = vmatpush1.msra.mxu0 0.0
        %4110 = vmatprep.subr.mxu0 0.0
        %4111 = vmatpush1.msra.mxu0 %v3935
        %4112 = vmatprep.subr.mxu0 0.0
        %4113 = vmatpush1.msra.mxu0 %v3934
        %4114 = vmatprep.subr.mxu0 0.0
        %4115 = vmatpush1.msra.mxu0 %v3933
        %4116 = vmatprep.subr.mxu0 0.0
        %4117 = vmatpush1.msra.mxu0 %v3932
        %4118 = vmatprep.subr.mxu0 0.0
        %4119 = vmatpush1.msra.mxu0 %v3931
        %4120 = vmatprep.subr.mxu0 0.0
        %4121 = vmatpush1.msra.mxu0 %v3930
        %4122 = vmatprep.subr.mxu0 0.0
        %4123 = vmatpush1.msra.mxu0 %v3929
        %4124 = vmatprep.subr.mxu0 0.0
        %4125 = vmatpush1.msra.mxu0 %v3928
        %4126 = vmatprep.subr.mxu0 0.0
        %4127 = vmatpush1.msra.mxu0 %v3927
        %4128 = vmatprep.subr.mxu0 0.0
        %4129 = vmatpush1.msra.mxu0 %v3926
        %4130 = vmatprep.subr.mxu0 0.0
        %4131 = vmatpush2.msra.mxu0 0.0
        %4132 = vmatprep.subr.mxu0 0.0
        %4133 = vmatpush2.msra.mxu0 0.0
        %4134 = vmatprep.subr.mxu0 0.0
        %4135 = vmatpush2.msra.mxu0 0.0
        %4136 = vmatprep.subr.mxu0 0.0
        %4137 = vmatpush2.msra.mxu0 0.0
        %4138 = vmatprep.subr.mxu0 0.0
        %4139 = vmatpush2.msra.mxu0 0.0
        %4140 = vmatprep.subr.mxu0 0.0
        %4141 = vmatpush2.msra.mxu0 0.0
        %4142 = vmatprep.subr.mxu0 0.0
        %4143 = vmatpush2.msra.mxu0 0.0
        %4144 = vmatprep.subr.mxu0 0.0
        %4145 = vmatpush2.msra.mxu0 0.0
        %4146 = vmatprep.subr.mxu0 0.0
        %4147 = vmatpush2.msra.mxu0 0.0
        %4148 = vmatprep.subr.mxu0 0.0
        %4149 = vmatpush2.msra.mxu0 0.0
        %4150 = vmatprep.subr.mxu0 0.0
        %4151 = vmatpush2.msra.mxu0 0.0
        %4152 = vmatprep.subr.mxu0 0.0
        %4153 = vmatpush2.msra.mxu0 0.0
        %4154 = vmatprep.subr.mxu0 0.0
        %4155 = vmatpush2.msra.mxu0 0.0
        %4156 = vmatprep.subr.mxu0 0.0
        %4157 = vmatpush2.msra.mxu0 0.0
        %4158 = vmatprep.subr.mxu0 0.0
        %4159 = vmatpush2.msra.mxu0 0.0
        %4160 = vmatprep.subr.mxu0 0.0
        %4161 = vmatpush2.msra.mxu0 0.0
        %4162 = vmatprep.mubr.f32.mxu0 0.0
        %4163 = vmatmul.mubr.f32.gmra.mxu0 %v4096
        %v4164 = vpop.f32.mrf.mxu0
        %v4165 = vadd.f32 %v4092, %v4164
        %v4166 = vpop.f32.mrf.mxu0
        %4167 = vdwg.mxu0
        %s4168 = scalar_lea.vmem %s3, 16
        %v4169 = vld [vmem:[%s4168] sm:$0xff]
        %v4171 = vsel %vm3849, %v4169, 0
        %4173 = vmatprep.subr.mxu0 0.0
        %4174 = vmatpush1.msra.mxu0 0.0
        %4175 = vmatprep.subr.mxu0 0.0
        %4176 = vmatpush1.msra.mxu0 0.0
        %4177 = vmatprep.subr.mxu0 0.0
        %4178 = vmatpush1.msra.mxu0 0.0
        %4179 = vmatprep.subr.mxu0 0.0
        %4180 = vmatpush1.msra.mxu0 0.0
        %4181 = vmatprep.subr.mxu0 0.0
        %4182 = vmatpush1.msra.mxu0 0.0
        %4183 = vmatprep.subr.mxu0 0.0
        %4184 = vmatpush1.msra.mxu0 0.0
        %4185 = vmatprep.subr.mxu0 0.0
        %4186 = vmatpush1.msra.mxu0 0.0
        %4187 = vmatprep.subr.mxu0 0.0
        %4188 = vmatpush1.msra.mxu0 0.0
        %4189 = vmatprep.subr.mxu0 0.0
        %4190 = vmatpush1.msra.mxu0 0.0
        %4191 = vmatprep.subr.mxu0 0.0
        %4192 = vmatpush1.msra.mxu0 0.0
        %4193 = vmatprep.subr.mxu0 0.0
        %4194 = vmatpush1.msra.mxu0 0.0
        %4195 = vmatprep.subr.mxu0 0.0
        %4196 = vmatpush1.msra.mxu0 0.0
        %4197 = vmatprep.subr.mxu0 0.0
        %4198 = vmatpush1.msra.mxu0 %v3854
        %4199 = vmatprep.subr.mxu0 0.0
        %4200 = vmatpush1.msra.mxu0 %v3846
        %4201 = vmatprep.subr.mxu0 0.0
        %4202 = vmatpush1.msra.mxu0 %v3845
        %4203 = vmatprep.subr.mxu0 0.0
        %4204 = vmatpush1.msra.mxu0 %v3844
        %4205 = vmatprep.subr.mxu0 0.0
        %4206 = vmatpush2.msra.mxu0 0.0
        %4207 = vmatprep.subr.mxu0 0.0
        %4208 = vmatpush2.msra.mxu0 0.0
        %4209 = vmatprep.subr.mxu0 0.0
        %4210 = vmatpush2.msra.mxu0 0.0
        %4211 = vmatprep.subr.mxu0 0.0
        %4212 = vmatpush2.msra.mxu0 0.0
        %4213 = vmatprep.subr.mxu0 0.0
        %4214 = vmatpush2.msra.mxu0 0.0
        %4215 = vmatprep.subr.mxu0 0.0
        %4216 = vmatpush2.msra.mxu0 0.0
        %4217 = vmatprep.subr.mxu0 0.0
        %4218 = vmatpush2.msra.mxu0 0.0
        %4219 = vmatprep.subr.mxu0 0.0
        %4220 = vmatpush2.msra.mxu0 0.0
        %4221 = vmatprep.subr.mxu0 0.0
        %4222 = vmatpush2.msra.mxu0 0.0
        %4223 = vmatprep.subr.mxu0 0.0
        %4224 = vmatpush2.msra.mxu0 0.0
        %4225 = vmatprep.subr.mxu0 0.0
        %4226 = vmatpush2.msra.mxu0 0.0
        %4227 = vmatprep.subr.mxu0 0.0
        %4228 = vmatpush2.msra.mxu0 0.0
        %4229 = vmatprep.subr.mxu0 0.0
        %4230 = vmatpush2.msra.mxu0 0.0
        %4231 = vmatprep.subr.mxu0 0.0
        %4232 = vmatpush2.msra.mxu0 0.0
        %4233 = vmatprep.subr.mxu0 0.0
        %4234 = vmatpush2.msra.mxu0 0.0
        %4235 = vmatprep.subr.mxu0 0.0
        %4236 = vmatpush2.msra.mxu0 0.0
        %4237 = vmatprep.mubr.f32.mxu0 0.0
        %4238 = vmatmul.mubr.f32.gmra.mxu0 %v4171
        %v4239 = vpop.f32.mrf.mxu0
        %v4240 = vadd.f32 0.0, %v4239
        %v4241 = vpop.f32.mrf.mxu0
        %4242 = vdwg.mxu0
        %s4243 = scalar_lea.vmem %s7, 160
        %v4244 = vld [vmem:[%s4243] sm:$0xff]
        %v4245 = vld [vmem:[%s4243 + $0x8] sm:$0xff]
        %v4246 = vld [vmem:[%s4243 + $0x10] sm:$0xff]
        %v4247 = vld [vmem:[%s4243 + $0x18] sm:$0xff]
        %v4248 = vld [vmem:[%s4243 + $0x20] sm:$0xff]
        %v4249 = vld [vmem:[%s4243 + $0x28] sm:$0xff]
        %v4250 = vld [vmem:[%s4243 + $0x30] sm:$0xff]
        %v4251 = vld [vmem:[%s4243 + $0x38] sm:$0xff]
        %v4252 = vld [vmem:[%s4243 + $0x40] sm:$0xff]
        %v4253 = vld [vmem:[%s4243 + $0x48] sm:$0xff]
        %v4255 = vsel %vm3497, %v4240, 0
        %4257 = vmatprep.subr.mxu0 0.0
        %4258 = vmatpush1.msra.mxu0 0.0
        %4259 = vmatprep.subr.mxu0 0.0
        %4260 = vmatpush1.msra.mxu0 0.0
        %4261 = vmatprep.subr.mxu0 0.0
        %4262 = vmatpush1.msra.mxu0 0.0
        %4263 = vmatprep.subr.mxu0 0.0
        %4264 = vmatpush1.msra.mxu0 0.0
        %4265 = vmatprep.subr.mxu0 0.0
        %4266 = vmatpush1.msra.mxu0 0.0
        %4267 = vmatprep.subr.mxu0 0.0
        %4268 = vmatpush1.msra.mxu0 0.0
        %4269 = vmatprep.subr.mxu0 0.0
        %4270 = vmatpush1.msra.mxu0 %v4253
        %4271 = vmatprep.subr.mxu0 0.0
        %4272 = vmatpush1.msra.mxu0 %v4252
        %4273 = vmatprep.subr.mxu0 0.0
        %4274 = vmatpush1.msra.mxu0 %v4251
        %4275 = vmatprep.subr.mxu0 0.0
        %4276 = vmatpush1.msra.mxu0 %v4250
        %4277 = vmatprep.subr.mxu0 0.0
        %4278 = vmatpush1.msra.mxu0 %v4249
        %4279 = vmatprep.subr.mxu0 0.0
        %4280 = vmatpush1.msra.mxu0 %v4248
        %4281 = vmatprep.subr.mxu0 0.0
        %4282 = vmatpush1.msra.mxu0 %v4247
        %4283 = vmatprep.subr.mxu0 0.0
        %4284 = vmatpush1.msra.mxu0 %v4246
        %4285 = vmatprep.subr.mxu0 0.0
        %4286 = vmatpush1.msra.mxu0 %v4245
        %4287 = vmatprep.subr.mxu0 0.0
        %4288 = vmatpush1.msra.mxu0 %v4244
        %4289 = vmatprep.subr.mxu0 0.0
        %4290 = vmatpush2.msra.mxu0 0.0
        %4291 = vmatprep.subr.mxu0 0.0
        %4292 = vmatpush2.msra.mxu0 0.0
        %4293 = vmatprep.subr.mxu0 0.0
        %4294 = vmatpush2.msra.mxu0 0.0
        %4295 = vmatprep.subr.mxu0 0.0
        %4296 = vmatpush2.msra.mxu0 0.0
        %4297 = vmatprep.subr.mxu0 0.0
        %4298 = vmatpush2.msra.mxu0 0.0
        %4299 = vmatprep.subr.mxu0 0.0
        %4300 = vmatpush2.msra.mxu0 0.0
        %4301 = vmatprep.subr.mxu0 0.0
        %4302 = vmatpush2.msra.mxu0 0.0
        %4303 = vmatprep.subr.mxu0 0.0
        %4304 = vmatpush2.msra.mxu0 0.0
        %4305 = vmatprep.subr.mxu0 0.0
        %4306 = vmatpush2.msra.mxu0 0.0
        %4307 = vmatprep.subr.mxu0 0.0
        %4308 = vmatpush2.msra.mxu0 0.0
        %4309 = vmatprep.subr.mxu0 0.0
        %4310 = vmatpush2.msra.mxu0 0.0
        %4311 = vmatprep.subr.mxu0 0.0
        %4312 = vmatpush2.msra.mxu0 0.0
        %4313 = vmatprep.subr.mxu0 0.0
        %4314 = vmatpush2.msra.mxu0 0.0
        %4315 = vmatprep.subr.mxu0 0.0
        %4316 = vmatpush2.msra.mxu0 0.0
        %4317 = vmatprep.subr.mxu0 0.0
        %4318 = vmatpush2.msra.mxu0 0.0
        %4319 = vmatprep.subr.mxu0 0.0
        %4320 = vmatpush2.msra.mxu0 0.0
        %4321 = vmatprep.mubr.f32.mxu0 0.0
        %4322 = vmatmul.mubr.f32.gmra.mxu0 %v4255
        %v4323 = vpop.f32.mrf.mxu0
        %v4324 = vadd.f32 0.0, %v4323
        %v4325 = vpop.f32.mrf.mxu0
        %4326 = vdwg.mxu0
        %v4327 = vadd.f32 %v4165, %v4324
        %s4328 = scalar_lea.vmem %s3, 24
        %v4329 = vld [vmem:[%s4328] sm:$0xff]
        %v4331 = vsel %vm3849, %v4329, 0
        %4333 = vmatprep.subr.mxu0 0.0
        %4334 = vmatpush1.msra.mxu0 0.0
        %4335 = vmatprep.subr.mxu0 0.0
        %4336 = vmatpush1.msra.mxu0 0.0
        %4337 = vmatprep.subr.mxu0 0.0
        %4338 = vmatpush1.msra.mxu0 0.0
        %4339 = vmatprep.subr.mxu0 0.0
        %4340 = vmatpush1.msra.mxu0 0.0
        %4341 = vmatprep.subr.mxu0 0.0
        %4342 = vmatpush1.msra.mxu0 0.0
        %4343 = vmatprep.subr.mxu0 0.0
        %4344 = vmatpush1.msra.mxu0 0.0
        %4345 = vmatprep.subr.mxu0 0.0
        %4346 = vmatpush1.msra.mxu0 0.0
        %4347 = vmatprep.subr.mxu0 0.0
        %4348 = vmatpush1.msra.mxu0 0.0
        %4349 = vmatprep.subr.mxu0 0.0
        %4350 = vmatpush1.msra.mxu0 0.0
        %4351 = vmatprep.subr.mxu0 0.0
        %4352 = vmatpush1.msra.mxu0 0.0
        %4353 = vmatprep.subr.mxu0 0.0
        %4354 = vmatpush1.msra.mxu0 0.0
        %4355 = vmatprep.subr.mxu0 0.0
        %4356 = vmatpush1.msra.mxu0 0.0
        %4357 = vmatprep.subr.mxu0 0.0
        %4358 = vmatpush1.msra.mxu0 %v3854
        %4359 = vmatprep.subr.mxu0 0.0
        %4360 = vmatpush1.msra.mxu0 %v3846
        %4361 = vmatprep.subr.mxu0 0.0
        %4362 = vmatpush1.msra.mxu0 %v3845
        %4363 = vmatprep.subr.mxu0 0.0
        %4364 = vmatpush1.msra.mxu0 %v3844
        %4365 = vmatprep.subr.mxu0 0.0
        %4366 = vmatpush2.msra.mxu0 0.0
        %4367 = vmatprep.subr.mxu0 0.0
        %4368 = vmatpush2.msra.mxu0 0.0
        %4369 = vmatprep.subr.mxu0 0.0
        %4370 = vmatpush2.msra.mxu0 0.0
        %4371 = vmatprep.subr.mxu0 0.0
        %4372 = vmatpush2.msra.mxu0 0.0
        %4373 = vmatprep.subr.mxu0 0.0
        %4374 = vmatpush2.msra.mxu0 0.0
        %4375 = vmatprep.subr.mxu0 0.0
        %4376 = vmatpush2.msra.mxu0 0.0
        %4377 = vmatprep.subr.mxu0 0.0
        %4378 = vmatpush2.msra.mxu0 0.0
        %4379 = vmatprep.subr.mxu0 0.0
        %4380 = vmatpush2.msra.mxu0 0.0
        %4381 = vmatprep.subr.mxu0 0.0
        %4382 = vmatpush2.msra.mxu0 0.0
        %4383 = vmatprep.subr.mxu0 0.0
        %4384 = vmatpush2.msra.mxu0 0.0
        %4385 = vmatprep.subr.mxu0 0.0
        %4386 = vmatpush2.msra.mxu0 0.0
        %4387 = vmatprep.subr.mxu0 0.0
        %4388 = vmatpush2.msra.mxu0 0.0
        %4389 = vmatprep.subr.mxu0 0.0
        %4390 = vmatpush2.msra.mxu0 0.0
        %4391 = vmatprep.subr.mxu0 0.0
        %4392 = vmatpush2.msra.mxu0 0.0
        %4393 = vmatprep.subr.mxu0 0.0
        %4394 = vmatpush2.msra.mxu0 0.0
        %4395 = vmatprep.subr.mxu0 0.0
        %4396 = vmatpush2.msra.mxu0 0.0
        %4397 = vmatprep.mubr.f32.mxu0 0.0
        %4398 = vmatmul.mubr.f32.gmra.mxu0 %v4331
        %v4399 = vpop.f32.mrf.mxu0
        %v4400 = vadd.f32 0.0, %v4399
        %v4401 = vpop.f32.mrf.mxu0
        %4402 = vdwg.mxu0
        %s4403 = scalar_lea.vmem %s7, 240
        %v4404 = vld [vmem:[%s4403] sm:$0xff]
        %v4405 = vld [vmem:[%s4403 + $0x8] sm:$0xff]
        %v4406 = vld [vmem:[%s4403 + $0x10] sm:$0xff]
        %v4407 = vld [vmem:[%s4403 + $0x18] sm:$0xff]
        %v4408 = vld [vmem:[%s4403 + $0x20] sm:$0xff]
        %v4409 = vld [vmem:[%s4403 + $0x28] sm:$0xff]
        %v4410 = vld [vmem:[%s4403 + $0x30] sm:$0xff]
        %v4411 = vld [vmem:[%s4403 + $0x38] sm:$0xff]
        %v4412 = vld [vmem:[%s4403 + $0x40] sm:$0xff]
        %v4413 = vld [vmem:[%s4403 + $0x48] sm:$0xff]
        %v4415 = vsel %vm3497, %v4400, 0
        %4417 = vmatprep.subr.mxu0 0.0
        %4418 = vmatpush1.msra.mxu0 0.0
        %4419 = vmatprep.subr.mxu0 0.0
        %4420 = vmatpush1.msra.mxu0 0.0
        %4421 = vmatprep.subr.mxu0 0.0
        %4422 = vmatpush1.msra.mxu0 0.0
        %4423 = vmatprep.subr.mxu0 0.0
        %4424 = vmatpush1.msra.mxu0 0.0
        %4425 = vmatprep.subr.mxu0 0.0
        %4426 = vmatpush1.msra.mxu0 0.0
        %4427 = vmatprep.subr.mxu0 0.0
        %4428 = vmatpush1.msra.mxu0 0.0
        %4429 = vmatprep.subr.mxu0 0.0
        %4430 = vmatpush1.msra.mxu0 %v4413
        %4431 = vmatprep.subr.mxu0 0.0
        %4432 = vmatpush1.msra.mxu0 %v4412
        %4433 = vmatprep.subr.mxu0 0.0
        %4434 = vmatpush1.msra.mxu0 %v4411
        %4435 = vmatprep.subr.mxu0 0.0
        %4436 = vmatpush1.msra.mxu0 %v4410
        %4437 = vmatprep.subr.mxu0 0.0
        %4438 = vmatpush1.msra.mxu0 %v4409
        %4439 = vmatprep.subr.mxu0 0.0
        %4440 = vmatpush1.msra.mxu0 %v4408
        %4441 = vmatprep.subr.mxu0 0.0
        %4442 = vmatpush1.msra.mxu0 %v4407
        %4443 = vmatprep.subr.mxu0 0.0
        %4444 = vmatpush1.msra.mxu0 %v4406
        %4445 = vmatprep.subr.mxu0 0.0
        %4446 = vmatpush1.msra.mxu0 %v4405
        %4447 = vmatprep.subr.mxu0 0.0
        %4448 = vmatpush1.msra.mxu0 %v4404
        %4449 = vmatprep.subr.mxu0 0.0
        %4450 = vmatpush2.msra.mxu0 0.0
        %4451 = vmatprep.subr.mxu0 0.0
        %4452 = vmatpush2.msra.mxu0 0.0
        %4453 = vmatprep.subr.mxu0 0.0
        %4454 = vmatpush2.msra.mxu0 0.0
        %4455 = vmatprep.subr.mxu0 0.0
        %4456 = vmatpush2.msra.mxu0 0.0
        %4457 = vmatprep.subr.mxu0 0.0
        %4458 = vmatpush2.msra.mxu0 0.0
        %4459 = vmatprep.subr.mxu0 0.0
        %4460 = vmatpush2.msra.mxu0 0.0
        %4461 = vmatprep.subr.mxu0 0.0
        %4462 = vmatpush2.msra.mxu0 0.0
        %4463 = vmatprep.subr.mxu0 0.0
        %4464 = vmatpush2.msra.mxu0 0.0
        %4465 = vmatprep.subr.mxu0 0.0
        %4466 = vmatpush2.msra.mxu0 0.0
        %4467 = vmatprep.subr.mxu0 0.0
        %4468 = vmatpush2.msra.mxu0 0.0
        %4469 = vmatprep.subr.mxu0 0.0
        %4470 = vmatpush2.msra.mxu0 0.0
        %4471 = vmatprep.subr.mxu0 0.0
        %4472 = vmatpush2.msra.mxu0 0.0
        %4473 = vmatprep.subr.mxu0 0.0
        %4474 = vmatpush2.msra.mxu0 0.0
        %4475 = vmatprep.subr.mxu0 0.0
        %4476 = vmatpush2.msra.mxu0 0.0
        %4477 = vmatprep.subr.mxu0 0.0
        %4478 = vmatpush2.msra.mxu0 0.0
        %4479 = vmatprep.subr.mxu0 0.0
        %4480 = vmatpush2.msra.mxu0 0.0
        %4481 = vmatprep.mubr.f32.mxu0 0.0
        %4482 = vmatmul.mubr.f32.gmra.mxu0 %v4415
        %v4483 = vpop.f32.mrf.mxu0
        %v4484 = vadd.f32 0.0, %v4483
        %v4485 = vpop.f32.mrf.mxu0
        %4486 = vdwg.mxu0
        %v4487 = vadd.f32 %v4327, %v4484
        %s4488 = scalar_lea.vmem %s3, 32
        %v4489 = vld [vmem:[%s4488] sm:$0xff]
        %v4491 = vsel %vm3849, %v4489, 0
        %4493 = vmatprep.subr.mxu0 0.0
        %4494 = vmatpush1.msra.mxu0 0.0
        %4495 = vmatprep.subr.mxu0 0.0
        %4496 = vmatpush1.msra.mxu0 0.0
        %4497 = vmatprep.subr.mxu0 0.0
        %4498 = vmatpush1.msra.mxu0 0.0
        %4499 = vmatprep.subr.mxu0 0.0
        %4500 = vmatpush1.msra.mxu0 0.0
        %4501 = vmatprep.subr.mxu0 0.0
        %4502 = vmatpush1.msra.mxu0 0.0
        %4503 = vmatprep.subr.mxu0 0.0
        %4504 = vmatpush1.msra.mxu0 0.0
        %4505 = vmatprep.subr.mxu0 0.0
        %4506 = vmatpush1.msra.mxu0 0.0
        %4507 = vmatprep.subr.mxu0 0.0
        %4508 = vmatpush1.msra.mxu0 0.0
        %4509 = vmatprep.subr.mxu0 0.0
        %4510 = vmatpush1.msra.mxu0 0.0
        %4511 = vmatprep.subr.mxu0 0.0
        %4512 = vmatpush1.msra.mxu0 0.0
        %4513 = vmatprep.subr.mxu0 0.0
        %4514 = vmatpush1.msra.mxu0 0.0
        %4515 = vmatprep.subr.mxu0 0.0
        %4516 = vmatpush1.msra.mxu0 0.0
        %4517 = vmatprep.subr.mxu0 0.0
        %4518 = vmatpush1.msra.mxu0 %v3854
        %4519 = vmatprep.subr.mxu0 0.0
        %4520 = vmatpush1.msra.mxu0 %v3846
        %4521 = vmatprep.subr.mxu0 0.0
        %4522 = vmatpush1.msra.mxu0 %v3845
        %4523 = vmatprep.subr.mxu0 0.0
        %4524 = vmatpush1.msra.mxu0 %v3844
        %4525 = vmatprep.subr.mxu0 0.0
        %4526 = vmatpush2.msra.mxu0 0.0
        %4527 = vmatprep.subr.mxu0 0.0
        %4528 = vmatpush2.msra.mxu0 0.0
        %4529 = vmatprep.subr.mxu0 0.0
        %4530 = vmatpush2.msra.mxu0 0.0
        %4531 = vmatprep.subr.mxu0 0.0
        %4532 = vmatpush2.msra.mxu0 0.0
        %4533 = vmatprep.subr.mxu0 0.0
        %4534 = vmatpush2.msra.mxu0 0.0
        %4535 = vmatprep.subr.mxu0 0.0
        %4536 = vmatpush2.msra.mxu0 0.0
        %4537 = vmatprep.subr.mxu0 0.0
        %4538 = vmatpush2.msra.mxu0 0.0
        %4539 = vmatprep.subr.mxu0 0.0
        %4540 = vmatpush2.msra.mxu0 0.0
        %4541 = vmatprep.subr.mxu0 0.0
        %4542 = vmatpush2.msra.mxu0 0.0
        %4543 = vmatprep.subr.mxu0 0.0
        %4544 = vmatpush2.msra.mxu0 0.0
        %4545 = vmatprep.subr.mxu0 0.0
        %4546 = vmatpush2.msra.mxu0 0.0
        %4547 = vmatprep.subr.mxu0 0.0
        %4548 = vmatpush2.msra.mxu0 0.0
        %4549 = vmatprep.subr.mxu0 0.0
        %4550 = vmatpush2.msra.mxu0 0.0
        %4551 = vmatprep.subr.mxu0 0.0
        %4552 = vmatpush2.msra.mxu0 0.0
        %4553 = vmatprep.subr.mxu0 0.0
        %4554 = vmatpush2.msra.mxu0 0.0
        %4555 = vmatprep.subr.mxu0 0.0
        %4556 = vmatpush2.msra.mxu0 0.0
        %4557 = vmatprep.mubr.f32.mxu0 0.0
        %4558 = vmatmul.mubr.f32.gmra.mxu0 %v4491
        %v4559 = vpop.f32.mrf.mxu0
        %v4560 = vadd.f32 0.0, %v4559
        %v4561 = vpop.f32.mrf.mxu0
        %4562 = vdwg.mxu0
        %s4563 = scalar_lea.vmem %s7, 320
        %v4564 = vld [vmem:[%s4563] sm:$0xff]
        %v4565 = vld [vmem:[%s4563 + $0x8] sm:$0xff]
        %v4566 = vld [vmem:[%s4563 + $0x10] sm:$0xff]
        %v4567 = vld [vmem:[%s4563 + $0x18] sm:$0xff]
        %v4568 = vld [vmem:[%s4563 + $0x20] sm:$0xff]
        %v4569 = vld [vmem:[%s4563 + $0x28] sm:$0xff]
        %v4570 = vld [vmem:[%s4563 + $0x30] sm:$0xff]
        %v4571 = vld [vmem:[%s4563 + $0x38] sm:$0xff]
        %v4572 = vld [vmem:[%s4563 + $0x40] sm:$0xff]
        %v4573 = vld [vmem:[%s4563 + $0x48] sm:$0xff]
        %v4575 = vsel %vm3497, %v4560, 0
        %4577 = vmatprep.subr.mxu0 0.0
        %4578 = vmatpush1.msra.mxu0 0.0
        %4579 = vmatprep.subr.mxu0 0.0
        %4580 = vmatpush1.msra.mxu0 0.0
        %4581 = vmatprep.subr.mxu0 0.0
        %4582 = vmatpush1.msra.mxu0 0.0
        %4583 = vmatprep.subr.mxu0 0.0
        %4584 = vmatpush1.msra.mxu0 0.0
        %4585 = vmatprep.subr.mxu0 0.0
        %4586 = vmatpush1.msra.mxu0 0.0
        %4587 = vmatprep.subr.mxu0 0.0
        %4588 = vmatpush1.msra.mxu0 0.0
        %4589 = vmatprep.subr.mxu0 0.0
        %4590 = vmatpush1.msra.mxu0 %v4573
        %4591 = vmatprep.subr.mxu0 0.0
        %4592 = vmatpush1.msra.mxu0 %v4572
        %4593 = vmatprep.subr.mxu0 0.0
        %4594 = vmatpush1.msra.mxu0 %v4571
        %4595 = vmatprep.subr.mxu0 0.0
        %4596 = vmatpush1.msra.mxu0 %v4570
        %4597 = vmatprep.subr.mxu0 0.0
        %4598 = vmatpush1.msra.mxu0 %v4569
        %4599 = vmatprep.subr.mxu0 0.0
        %4600 = vmatpush1.msra.mxu0 %v4568
        %4601 = vmatprep.subr.mxu0 0.0
        %4602 = vmatpush1.msra.mxu0 %v4567
        %4603 = vmatprep.subr.mxu0 0.0
        %4604 = vmatpush1.msra.mxu0 %v4566
        %4605 = vmatprep.subr.mxu0 0.0
        %4606 = vmatpush1.msra.mxu0 %v4565
        %4607 = vmatprep.subr.mxu0 0.0
        %4608 = vmatpush1.msra.mxu0 %v4564
        %4609 = vmatprep.subr.mxu0 0.0
        %4610 = vmatpush2.msra.mxu0 0.0
        %4611 = vmatprep.subr.mxu0 0.0
        %4612 = vmatpush2.msra.mxu0 0.0
        %4613 = vmatprep.subr.mxu0 0.0
        %4614 = vmatpush2.msra.mxu0 0.0
        %4615 = vmatprep.subr.mxu0 0.0
        %4616 = vmatpush2.msra.mxu0 0.0
        %4617 = vmatprep.subr.mxu0 0.0
        %4618 = vmatpush2.msra.mxu0 0.0
        %4619 = vmatprep.subr.mxu0 0.0
        %4620 = vmatpush2.msra.mxu0 0.0
        %4621 = vmatprep.subr.mxu0 0.0
        %4622 = vmatpush2.msra.mxu0 0.0
        %4623 = vmatprep.subr.mxu0 0.0
        %4624 = vmatpush2.msra.mxu0 0.0
        %4625 = vmatprep.subr.mxu0 0.0
        %4626 = vmatpush2.msra.mxu0 0.0
        %4627 = vmatprep.subr.mxu0 0.0
        %4628 = vmatpush2.msra.mxu0 0.0
        %4629 = vmatprep.subr.mxu0 0.0
        %4630 = vmatpush2.msra.mxu0 0.0
        %4631 = vmatprep.subr.mxu0 0.0
        %4632 = vmatpush2.msra.mxu0 0.0
        %4633 = vmatprep.subr.mxu0 0.0
        %4634 = vmatpush2.msra.mxu0 0.0
        %4635 = vmatprep.subr.mxu0 0.0
        %4636 = vmatpush2.msra.mxu0 0.0
        %4637 = vmatprep.subr.mxu0 0.0
        %4638 = vmatpush2.msra.mxu0 0.0
        %4639 = vmatprep.subr.mxu0 0.0
        %4640 = vmatpush2.msra.mxu0 0.0
        %4641 = vmatprep.mubr.f32.mxu0 0.0
        %4642 = vmatmul.mubr.f32.gmra.mxu0 %v4575
        %v4643 = vpop.f32.mrf.mxu0
        %v4644 = vadd.f32 0.0, %v4643
        %v4645 = vpop.f32.mrf.mxu0
        %4646 = vdwg.mxu0
        %v4647 = vadd.f32 %v4487, %v4644
        %v4648 = vmax.f32 %v4647, 0.0
        %v4649 = vadd.s32 %v1963, 80
        %v4650 = vadd.s32 %v1963, 88
        %v4651 = vadd.s32 %v1963, 96
        %v4652 = vadd.s32 %v1963, 104
        %v4653 = vadd.s32 %v1963, 112
        %v4654 = vadd.s32 %v1963, 120
        %v4655 = vand.u32 %v1963, 31
        %v4656 = vand.u32 %v1964, 31
        %v4657 = vand.u32 %v1965, 31
        %v4658 = vand.u32 %v1966, 31
        %v4659 = vand.u32 %v1967, 31
        %v4660 = vand.u32 %v1968, 31
        %v4661 = vand.u32 %v1969, 31
        %v4662 = vand.u32 %v1970, 31
        %v4663 = vand.u32 %v3448, 31
        %v4664 = vand.u32 %v3449, 31
        %v4665 = vand.u32 %v4649, 31
        %v4666 = vand.u32 %v4650, 31
        %v4667 = vand.u32 %v4651, 31
        %v4668 = vand.u32 %v4652, 31
        %v4669 = vand.u32 %v4653, 31
        %v4670 = vand.u32 %v4654, 31
        %vm4671 = vcmp.eq.s32.totalorder %v4655, %v1980
        %vm4672 = vcmp.eq.s32.totalorder %v4656, %v1980
        %vm4673 = vcmp.eq.s32.totalorder %v4657, %v1980
        %vm4674 = vcmp.eq.s32.totalorder %v4658, %v1980
        %vm4675 = vcmp.eq.s32.totalorder %v4659, %v1980
        %vm4676 = vcmp.eq.s32.totalorder %v4660, %v1980
        %vm4677 = vcmp.eq.s32.totalorder %v4661, %v1980
        %vm4678 = vcmp.eq.s32.totalorder %v4662, %v1980
        %vm4679 = vcmp.eq.s32.totalorder %v4663, %v1980
        %vm4680 = vcmp.eq.s32.totalorder %v4664, %v1980
        %vm4681 = vcmp.eq.s32.totalorder %v4665, %v1980
        %vm4682 = vcmp.eq.s32.totalorder %v4666, %v1980
        %vm4683 = vcmp.eq.s32.totalorder %v4667, %v1980
        %vm4684 = vcmp.eq.s32.totalorder %v4668, %v1980
        %vm4685 = vcmp.eq.s32.totalorder %v4669, %v1980
        %vm4686 = vcmp.eq.s32.totalorder %v4670, %v1980
        %v4687 = vsel %vm4671, 1, 0
        %v4688 = vsel %vm4672, 1, 0
        %v4689 = vsel %vm4673, 1, 0
        %v4690 = vsel %vm4674, 1, 0
        %v4691 = vsel %vm4675, 1, 0
        %v4692 = vsel %vm4676, 1, 0
        %v4693 = vsel %vm4677, 1, 0
        %v4694 = vsel %vm4678, 1, 0
        %v4695 = vsel %vm4679, 1, 0
        %v4696 = vsel %vm4680, 1, 0
        %v4697 = vsel %vm4681, 1, 0
        %v4698 = vsel %vm4682, 1, 0
        %v4699 = vsel %vm4683, 1, 0
        %v4700 = vsel %vm4684, 1, 0
        %v4701 = vsel %vm4685, 1, 0
        %v4702 = vsel %vm4686, 1, 0
        %v4703 = vcvt.s32.f32 %v4687
        %v4704 = vcvt.s32.f32 %v4688
        %v4705 = vcvt.s32.f32 %v4689
        %v4706 = vcvt.s32.f32 %v4690
        %v4707 = vcvt.s32.f32 %v4691
        %v4708 = vcvt.s32.f32 %v4692
        %v4709 = vcvt.s32.f32 %v4693
        %v4710 = vcvt.s32.f32 %v4694
        %v4711 = vcvt.s32.f32 %v4695
        %v4712 = vcvt.s32.f32 %v4696
        %v4713 = vcvt.s32.f32 %v4697
        %v4714 = vcvt.s32.f32 %v4698
        %v4715 = vcvt.s32.f32 %v4699
        %v4716 = vcvt.s32.f32 %v4700
        %v4717 = vcvt.s32.f32 %v4701
        %v4718 = vcvt.s32.f32 %v4702
        %v4719 = vand.u32 %v1980, 31
        %vm4720 = vcmp.eq.s32.totalorder %v1963, %v4719
        %vm4721 = vcmp.eq.s32.totalorder %v1964, %v4719
        %vm4722 = vcmp.eq.s32.totalorder %v1965, %v4719
        %vm4723 = vcmp.eq.s32.totalorder %v1966, %v4719
        %v4724 = vsel %vm4720, 1, 0
        %v4725 = vsel %vm4721, 1, 0
        %v4726 = vsel %vm4722, 1, 0
        %v4727 = vsel %vm4723, 1, 0
        %v4728 = vcvt.s32.f32 %v4724
        %v4729 = vcvt.s32.f32 %v4725
        %v4730 = vcvt.s32.f32 %v4726
        %v4731 = vcvt.s32.f32 %v4727
        %v4732 = vrot.slane %v4648, 4
        %v4733 = vadd.f32 %v4648, %v4732
        %v4734 = vrot.slane %v4733, 2
        %v4735 = vadd.f32 %v4733, %v4734
        %v4736 = vrot.slane %v4735, 1
        %v4737 = vadd.f32 %v4735, %v4736
        %4738 = vmatprep.subr.mxu0 0.0
        %4739 = vmatpush1.msra.mxu0 %v4718
        %4740 = vmatprep.subr.mxu0 0.0
        %4741 = vmatpush1.msra.mxu0 %v4717
        %4742 = vmatprep.subr.mxu0 0.0
        %4743 = vmatpush1.msra.mxu0 %v4716
        %4744 = vmatprep.subr.mxu0 0.0
        %4745 = vmatpush1.msra.mxu0 %v4715
        %4746 = vmatprep.subr.mxu0 0.0
        %4747 = vmatpush1.msra.mxu0 %v4714
        %4748 = vmatprep.subr.mxu0 0.0
        %4749 = vmatpush1.msra.mxu0 %v4713
        %4750 = vmatprep.subr.mxu0 0.0
        %4751 = vmatpush1.msra.mxu0 %v4712
        %4752 = vmatprep.subr.mxu0 0.0
        %4753 = vmatpush1.msra.mxu0 %v4711
        %4754 = vmatprep.subr.mxu0 0.0
        %4755 = vmatpush1.msra.mxu0 %v4710
        %4756 = vmatprep.subr.mxu0 0.0
        %4757 = vmatpush1.msra.mxu0 %v4709
        %4758 = vmatprep.subr.mxu0 0.0
        %4759 = vmatpush1.msra.mxu0 %v4708
        %4760 = vmatprep.subr.mxu0 0.0
        %4761 = vmatpush1.msra.mxu0 %v4707
        %4762 = vmatprep.subr.mxu0 0.0
        %4763 = vmatpush1.msra.mxu0 %v4706
        %4764 = vmatprep.subr.mxu0 0.0
        %4765 = vmatpush1.msra.mxu0 %v4705
        %4766 = vmatprep.subr.mxu0 0.0
        %4767 = vmatpush1.msra.mxu0 %v4704
        %4768 = vmatprep.subr.mxu0 0.0
        %4769 = vmatpush1.msra.mxu0 %v4703
        %4770 = vmatprep.subr.mxu0 0.0
        %4771 = vmatpush2.msra.mxu0 0.0
        %4772 = vmatprep.subr.mxu0 0.0
        %4773 = vmatpush2.msra.mxu0 0.0
        %4774 = vmatprep.subr.mxu0 0.0
        %4775 = vmatpush2.msra.mxu0 0.0
        %4776 = vmatprep.subr.mxu0 0.0
        %4777 = vmatpush2.msra.mxu0 0.0
        %4778 = vmatprep.subr.mxu0 0.0
        %4779 = vmatpush2.msra.mxu0 0.0
        %4780 = vmatprep.subr.mxu0 0.0
        %4781 = vmatpush2.msra.mxu0 0.0
        %4782 = vmatprep.subr.mxu0 0.0
        %4783 = vmatpush2.msra.mxu0 0.0
        %4784 = vmatprep.subr.mxu0 0.0
        %4785 = vmatpush2.msra.mxu0 0.0
        %4786 = vmatprep.subr.mxu0 0.0
        %4787 = vmatpush2.msra.mxu0 0.0
        %4788 = vmatprep.subr.mxu0 0.0
        %4789 = vmatpush2.msra.mxu0 0.0
        %4790 = vmatprep.subr.mxu0 0.0
        %4791 = vmatpush2.msra.mxu0 0.0
        %4792 = vmatprep.subr.mxu0 0.0
        %4793 = vmatpush2.msra.mxu0 0.0
        %4794 = vmatprep.subr.mxu0 0.0
        %4795 = vmatpush2.msra.mxu0 0.0
        %4796 = vmatprep.subr.mxu0 0.0
        %4797 = vmatpush2.msra.mxu0 0.0
        %4798 = vmatprep.subr.mxu0 0.0
        %4799 = vmatpush2.msra.mxu0 0.0
        %4800 = vmatprep.subr.mxu0 0.0
        %4801 = vmatpush2.msra.mxu0 0.0
        %4802 = vmatprep.mubr.f32.mxu0 0.0
        %4803 = vmatmul.mubr.f32.gmra.mxu0 %v4737
        %v4804 = vpop.f32.mrf.mxu0
        %v4805 = vadd.f32 0.0, %v4804
        %v4806 = vpop.f32.mrf.mxu0
        %4807 = vdwg.mxu0
        %v4808 = vmul.f32 %v4805, 0.03125
        %v4809 = vmul.f32 %v4648, %v4648
        %v4810 = vrot.slane %v4809, 4
        %v4811 = vadd.f32 %v4809, %v4810
        %v4812 = vrot.slane %v4811, 2
        %v4813 = vadd.f32 %v4811, %v4812
        %v4814 = vrot.slane %v4813, 1
        %v4815 = vadd.f32 %v4813, %v4814
        %4816 = vmatprep.subr.mxu0 0.0
        %4817 = vmatpush1.msra.mxu0 %v4718
        %4818 = vmatprep.subr.mxu0 0.0
        %4819 = vmatpush1.msra.mxu0 %v4717
        %4820 = vmatprep.subr.mxu0 0.0
        %4821 = vmatpush1.msra.mxu0 %v4716
        %4822 = vmatprep.subr.mxu0 0.0
        %4823 = vmatpush1.msra.mxu0 %v4715
        %4824 = vmatprep.subr.mxu0 0.0
        %4825 = vmatpush1.msra.mxu0 %v4714
        %4826 = vmatprep.subr.mxu0 0.0
        %4827 = vmatpush1.msra.mxu0 %v4713
        %4828 = vmatprep.subr.mxu0 0.0
        %4829 = vmatpush1.msra.mxu0 %v4712
        %4830 = vmatprep.subr.mxu0 0.0
        %4831 = vmatpush1.msra.mxu0 %v4711
        %4832 = vmatprep.subr.mxu0 0.0
        %4833 = vmatpush1.msra.mxu0 %v4710
        %4834 = vmatprep.subr.mxu0 0.0
        %4835 = vmatpush1.msra.mxu0 %v4709
        %4836 = vmatprep.subr.mxu0 0.0
        %4837 = vmatpush1.msra.mxu0 %v4708
        %4838 = vmatprep.subr.mxu0 0.0
        %4839 = vmatpush1.msra.mxu0 %v4707
        %4840 = vmatprep.subr.mxu0 0.0
        %4841 = vmatpush1.msra.mxu0 %v4706
        %4842 = vmatprep.subr.mxu0 0.0
        %4843 = vmatpush1.msra.mxu0 %v4705
        %4844 = vmatprep.subr.mxu0 0.0
        %4845 = vmatpush1.msra.mxu0 %v4704
        %4846 = vmatprep.subr.mxu0 0.0
        %4847 = vmatpush1.msra.mxu0 %v4703
        %4848 = vmatprep.subr.mxu0 0.0
        %4849 = vmatpush2.msra.mxu0 0.0
        %4850 = vmatprep.subr.mxu0 0.0
        %4851 = vmatpush2.msra.mxu0 0.0
        %4852 = vmatprep.subr.mxu0 0.0
        %4853 = vmatpush2.msra.mxu0 0.0
        %4854 = vmatprep.subr.mxu0 0.0
        %4855 = vmatpush2.msra.mxu0 0.0
        %4856 = vmatprep.subr.mxu0 0.0
        %4857 = vmatpush2.msra.mxu0 0.0
        %4858 = vmatprep.subr.mxu0 0.0
        %4859 = vmatpush2.msra.mxu0 0.0
        %4860 = vmatprep.subr.mxu0 0.0
        %4861 = vmatpush2.msra.mxu0 0.0
        %4862 = vmatprep.subr.mxu0 0.0
        %4863 = vmatpush2.msra.mxu0 0.0
        %4864 = vmatprep.subr.mxu0 0.0
        %4865 = vmatpush2.msra.mxu0 0.0
        %4866 = vmatprep.subr.mxu0 0.0
        %4867 = vmatpush2.msra.mxu0 0.0
        %4868 = vmatprep.subr.mxu0 0.0
        %4869 = vmatpush2.msra.mxu0 0.0
        %4870 = vmatprep.subr.mxu0 0.0
        %4871 = vmatpush2.msra.mxu0 0.0
        %4872 = vmatprep.subr.mxu0 0.0
        %4873 = vmatpush2.msra.mxu0 0.0
        %4874 = vmatprep.subr.mxu0 0.0
        %4875 = vmatpush2.msra.mxu0 0.0
        %4876 = vmatprep.subr.mxu0 0.0
        %4877 = vmatpush2.msra.mxu0 0.0
        %4878 = vmatprep.subr.mxu0 0.0
        %4879 = vmatpush2.msra.mxu0 0.0
        %4880 = vmatprep.mubr.f32.mxu0 0.0
        %4881 = vmatmul.mubr.f32.gmra.mxu0 %v4815
        %v4882 = vpop.f32.mrf.mxu0
        %v4883 = vadd.f32 0.0, %v4882
        %v4884 = vpop.f32.mrf.mxu0
        %4885 = vdwg.mxu0
        %v4886 = vmul.f32 %v4883, 0.03125
        %v4887 = vmul.f32 %v4808, %v4808
        %v4888 = vsub.f32 %v4886, %v4887
        %v4889 = vld [vmem:[%s12] sm:$0x1]
        %v4890 = vld [vmem:[%s12 + $0x1] sm:$0x1]
        %v4891 = vadd.f32 %v4888, 1e-05
        %v4892 = vrsqrt.pop %v4891
        %v4893 = vmul.f32 %v4889, %v4892
        %v4894 = vmul.f32 %v4808, %v4893
        %v4895 = vsub.f32 %v4890, %v4894
        %vm4896 = vcmask 261120
        %v4898 = vsel %vm4896, %v4893, 0
        %4900 = vmatprep.subr.mxu0 0.0
        %4901 = vmatpush1.msra.mxu0 0.0
        %4902 = vmatprep.subr.mxu0 0.0
        %4903 = vmatpush1.msra.mxu0 0.0
        %4904 = vmatprep.subr.mxu0 0.0
        %4905 = vmatpush1.msra.mxu0 0.0
        %4906 = vmatprep.subr.mxu0 0.0
        %4907 = vmatpush1.msra.mxu0 0.0
        %4908 = vmatprep.subr.mxu0 0.0
        %4909 = vmatpush1.msra.mxu0 0.0
        %4910 = vmatprep.subr.mxu0 0.0
        %4911 = vmatpush1.msra.mxu0 0.0
        %4912 = vmatprep.subr.mxu0 0.0
        %4913 = vmatpush1.msra.mxu0 0.0
        %4914 = vmatprep.subr.mxu0 0.0
        %4915 = vmatpush1.msra.mxu0 0.0
        %4916 = vmatprep.subr.mxu0 0.0
        %4917 = vmatpush1.msra.mxu0 0.0
        %4918 = vmatprep.subr.mxu0 0.0
        %4919 = vmatpush1.msra.mxu0 0.0
        %4920 = vmatprep.subr.mxu0 0.0
        %4921 = vmatpush1.msra.mxu0 0.0
        %4922 = vmatprep.subr.mxu0 0.0
        %4923 = vmatpush1.msra.mxu0 0.0
        %4924 = vmatprep.subr.mxu0 0.0
        %4925 = vmatpush1.msra.mxu0 %v4731
        %4926 = vmatprep.subr.mxu0 0.0
        %4927 = vmatpush1.msra.mxu0 %v4730
        %4928 = vmatprep.subr.mxu0 0.0
        %4929 = vmatpush1.msra.mxu0 %v4729
        %4930 = vmatprep.subr.mxu0 0.0
        %4931 = vmatpush1.msra.mxu0 %v4728
        %4932 = vmatprep.subr.mxu0 0.0
        %4933 = vmatpush2.msra.mxu0 0.0
        %4934 = vmatprep.subr.mxu0 0.0
        %4935 = vmatpush2.msra.mxu0 0.0
        %4936 = vmatprep.subr.mxu0 0.0
        %4937 = vmatpush2.msra.mxu0 0.0
        %4938 = vmatprep.subr.mxu0 0.0
        %4939 = vmatpush2.msra.mxu0 0.0
        %4940 = vmatprep.subr.mxu0 0.0
        %4941 = vmatpush2.msra.mxu0 0.0
        %4942 = vmatprep.subr.mxu0 0.0
        %4943 = vmatpush2.msra.mxu0 0.0
        %4944 = vmatprep.subr.mxu0 0.0
        %4945 = vmatpush2.msra.mxu0 0.0
        %4946 = vmatprep.subr.mxu0 0.0
        %4947 = vmatpush2.msra.mxu0 0.0
        %4948 = vmatprep.subr.mxu0 0.0
        %4949 = vmatpush2.msra.mxu0 0.0
        %4950 = vmatprep.subr.mxu0 0.0
        %4951 = vmatpush2.msra.mxu0 0.0
        %4952 = vmatprep.subr.mxu0 0.0
        %4953 = vmatpush2.msra.mxu0 0.0
        %4954 = vmatprep.subr.mxu0 0.0
        %4955 = vmatpush2.msra.mxu0 0.0
        %4956 = vmatprep.subr.mxu0 0.0
        %4957 = vmatpush2.msra.mxu0 0.0
        %4958 = vmatprep.subr.mxu0 0.0
        %4959 = vmatpush2.msra.mxu0 0.0
        %4960 = vmatprep.subr.mxu0 0.0
        %4961 = vmatpush2.msra.mxu0 0.0
        %4962 = vmatprep.subr.mxu0 0.0
        %4963 = vmatpush2.msra.mxu0 0.0
        %4964 = vmatprep.mubr.f32.mxu0 0.0
        %4965 = vmatmul.mubr.f32.gmra.mxu0 %v4898
        %v4966 = vpop.f32.mrf.mxu0
        %v4967 = vadd.f32 0.0, %v4966
        %v4968 = vpop.f32.mrf.mxu0
        %4969 = vdwg.mxu0
        %v4971 = vsel %vm4896, %v4895, 0
        %4973 = vmatprep.subr.mxu0 0.0
        %4974 = vmatpush1.msra.mxu0 0.0
        %4975 = vmatprep.subr.mxu0 0.0
        %4976 = vmatpush1.msra.mxu0 0.0
        %4977 = vmatprep.subr.mxu0 0.0
        %4978 = vmatpush1.msra.mxu0 0.0
        %4979 = vmatprep.subr.mxu0 0.0
        %4980 = vmatpush1.msra.mxu0 0.0
        %4981 = vmatprep.subr.mxu0 0.0
        %4982 = vmatpush1.msra.mxu0 0.0
        %4983 = vmatprep.subr.mxu0 0.0
        %4984 = vmatpush1.msra.mxu0 0.0
        %4985 = vmatprep.subr.mxu0 0.0
        %4986 = vmatpush1.msra.mxu0 0.0
        %4987 = vmatprep.subr.mxu0 0.0
        %4988 = vmatpush1.msra.mxu0 0.0
        %4989 = vmatprep.subr.mxu0 0.0
        %4990 = vmatpush1.msra.mxu0 0.0
        %4991 = vmatprep.subr.mxu0 0.0
        %4992 = vmatpush1.msra.mxu0 0.0
        %4993 = vmatprep.subr.mxu0 0.0
        %4994 = vmatpush1.msra.mxu0 0.0
        %4995 = vmatprep.subr.mxu0 0.0
        %4996 = vmatpush1.msra.mxu0 0.0
        %4997 = vmatprep.subr.mxu0 0.0
        %4998 = vmatpush1.msra.mxu0 %v4731
        %4999 = vmatprep.subr.mxu0 0.0
        %5000 = vmatpush1.msra.mxu0 %v4730
        %5001 = vmatprep.subr.mxu0 0.0
        %5002 = vmatpush1.msra.mxu0 %v4729
        %5003 = vmatprep.subr.mxu0 0.0
        %5004 = vmatpush1.msra.mxu0 %v4728
        %5005 = vmatprep.subr.mxu0 0.0
        %5006 = vmatpush2.msra.mxu0 0.0
        %5007 = vmatprep.subr.mxu0 0.0
        %5008 = vmatpush2.msra.mxu0 0.0
        %5009 = vmatprep.subr.mxu0 0.0
        %5010 = vmatpush2.msra.mxu0 0.0
        %5011 = vmatprep.subr.mxu0 0.0
        %5012 = vmatpush2.msra.mxu0 0.0
        %5013 = vmatprep.subr.mxu0 0.0
        %5014 = vmatpush2.msra.mxu0 0.0
        %5015 = vmatprep.subr.mxu0 0.0
        %5016 = vmatpush2.msra.mxu0 0.0
        %5017 = vmatprep.subr.mxu0 0.0
        %5018 = vmatpush2.msra.mxu0 0.0
        %5019 = vmatprep.subr.mxu0 0.0
        %5020 = vmatpush2.msra.mxu0 0.0
        %5021 = vmatprep.subr.mxu0 0.0
        %5022 = vmatpush2.msra.mxu0 0.0
        %5023 = vmatprep.subr.mxu0 0.0
        %5024 = vmatpush2.msra.mxu0 0.0
        %5025 = vmatprep.subr.mxu0 0.0
        %5026 = vmatpush2.msra.mxu0 0.0
        %5027 = vmatprep.subr.mxu0 0.0
        %5028 = vmatpush2.msra.mxu0 0.0
        %5029 = vmatprep.subr.mxu0 0.0
        %5030 = vmatpush2.msra.mxu0 0.0
        %5031 = vmatprep.subr.mxu0 0.0
        %5032 = vmatpush2.msra.mxu0 0.0
        %5033 = vmatprep.subr.mxu0 0.0
        %5034 = vmatpush2.msra.mxu0 0.0
        %5035 = vmatprep.subr.mxu0 0.0
        %5036 = vmatpush2.msra.mxu0 0.0
        %5037 = vmatprep.mubr.f32.mxu0 0.0
        %5038 = vmatmul.mubr.f32.gmra.mxu0 %v4971
        %v5039 = vpop.f32.mrf.mxu0
        %v5040 = vadd.f32 0.0, %v5039
        %v5041 = vpop.f32.mrf.mxu0
        %5042 = vdwg.mxu0
        %v5043 = vlaneseq
        %v5044 = vshrl.u32 %v5043, 7
        %v5045 = vsub.s32 0, %v5044
        %v5046 = vrot.slane %v4967, %v5045
        %v5047 = vmul.f32 %v4648, %v5046
        %v5048 = vlaneseq
        %v5049 = vshrl.u32 %v5048, 7
        %v5050 = vsub.s32 0, %v5049
        %v5051 = vrot.slane %v5040, %v5050
        %v5052 = vadd.f32 %v5047, %v5051
        %v5053 = vld [vmem:[%s4] sm:$0x7]
        %v5055 = vsel %vm2218, %v5053, 0
        %5057 = vmatprep.subr.mxu0 0.0
        %5058 = vmatpush1.msra.mxu0 0.0
        %5059 = vmatprep.subr.mxu0 0.0
        %5060 = vmatpush1.msra.mxu0 0.0
        %5061 = vmatprep.subr.mxu0 0.0
        %5062 = vmatpush1.msra.mxu0 0.0
        %5063 = vmatprep.subr.mxu0 0.0
        %5064 = vmatpush1.msra.mxu0 0.0
        %5065 = vmatprep.subr.mxu0 0.0
        %5066 = vmatpush1.msra.mxu0 0.0
        %5067 = vmatprep.subr.mxu0 0.0
        %5068 = vmatpush1.msra.mxu0 0.0
        %5069 = vmatprep.subr.mxu0 0.0
        %5070 = vmatpush1.msra.mxu0 0.0
        %5071 = vmatprep.subr.mxu0 0.0
        %5072 = vmatpush1.msra.mxu0 0.0
        %5073 = vmatprep.subr.mxu0 0.0
        %5074 = vmatpush1.msra.mxu0 0.0
        %5075 = vmatprep.subr.mxu0 0.0
        %5076 = vmatpush1.msra.mxu0 0.0
        %5077 = vmatprep.subr.mxu0 0.0
        %5078 = vmatpush1.msra.mxu0 0.0
        %5079 = vmatprep.subr.mxu0 0.0
        %5080 = vmatpush1.msra.mxu0 0.0
        %5081 = vmatprep.subr.mxu0 0.0
        %5082 = vmatpush1.msra.mxu0 0.0
        %5083 = vmatprep.subr.mxu0 0.0
        %5084 = vmatpush1.msra.mxu0 0.0
        %5085 = vmatprep.subr.mxu0 0.0
        %5086 = vmatpush1.msra.mxu0 0.0
        %5087 = vmatprep.subr.mxu0 0.0
        %5088 = vmatpush1.msra.mxu0 %v5052
        %5089 = vmatprep.subr.mxu0 0.0
        %5090 = vmatpush2.msra.mxu0 0.0
        %5091 = vmatprep.subr.mxu0 0.0
        %5092 = vmatpush2.msra.mxu0 0.0
        %5093 = vmatprep.subr.mxu0 0.0
        %5094 = vmatpush2.msra.mxu0 0.0
        %5095 = vmatprep.subr.mxu0 0.0
        %5096 = vmatpush2.msra.mxu0 0.0
        %5097 = vmatprep.subr.mxu0 0.0
        %5098 = vmatpush2.msra.mxu0 0.0
        %5099 = vmatprep.subr.mxu0 0.0
        %5100 = vmatpush2.msra.mxu0 0.0
        %5101 = vmatprep.subr.mxu0 0.0
        %5102 = vmatpush2.msra.mxu0 0.0
        %5103 = vmatprep.subr.mxu0 0.0
        %5104 = vmatpush2.msra.mxu0 0.0
        %5105 = vmatprep.subr.mxu0 0.0
        %5106 = vmatpush2.msra.mxu0 0.0
        %5107 = vmatprep.subr.mxu0 0.0
        %5108 = vmatpush2.msra.mxu0 0.0
        %5109 = vmatprep.subr.mxu0 0.0
        %5110 = vmatpush2.msra.mxu0 0.0
        %5111 = vmatprep.subr.mxu0 0.0
        %5112 = vmatpush2.msra.mxu0 0.0
        %5113 = vmatprep.subr.mxu0 0.0
        %5114 = vmatpush2.msra.mxu0 0.0
        %5115 = vmatprep.subr.mxu0 0.0
        %5116 = vmatpush2.msra.mxu0 0.0
        %5117 = vmatprep.subr.mxu0 0.0
        %5118 = vmatpush2.msra.mxu0 0.0
        %5119 = vmatprep.subr.mxu0 0.0
        %5120 = vmatpush2.msra.mxu0 0.0
        %5121 = vmatprep.mubr.f32.mxu0 0.0
        %5122 = vmatmul.mubr.f32.gmra.mxu0 %v5055
        %v5123 = vpop.f32.mrf.mxu0
        %v5124 = vadd.f32 0.0, %v5123
        %v5125 = vpop.f32.mrf.mxu0
        %5126 = vdwg.mxu0
        %v5127 = vld [vmem:[%s8] sm:$0xff]
        %v5128 = vld [vmem:[%s8 + $0x8] sm:$0xff]
        %v5129 = vld [vmem:[%s8 + $0x10] sm:$0xff]
        %v5130 = vld [vmem:[%s8 + $0x18] sm:$0xff]
        %v5131 = vld [vmem:[%s8 + $0x20] sm:$0xff]
        %v5132 = vld [vmem:[%s8 + $0x28] sm:$0xff]
        %v5133 = vld [vmem:[%s8 + $0x30] sm:$0xff]
        %v5134 = vld [vmem:[%s8 + $0x38] sm:$0xff]
        %v5135 = vld [vmem:[%s8 + $0x40] sm:$0xff]
        %v5136 = vld [vmem:[%s8 + $0x48] sm:$0xff]
        %v5137 = vld [vmem:[%s8 + $0x50] sm:$0xff]
        %v5138 = vld [vmem:[%s8 + $0x58] sm:$0xff]
        %v5139 = vld [vmem:[%s8 + $0x60] sm:$0xff]
        %v5140 = vld [vmem:[%s8 + $0x68] sm:$0xff]
        %v5141 = vld [vmem:[%s8 + $0x70] sm:$0xff]
        %v5142 = vld [vmem:[%s8 + $0x78] sm:$0xff]
        %v5143 = vld [vmem:[%s8 + $0x80] sm:$0xff]
        %v5144 = vld [vmem:[%s8 + $0x88] sm:$0xff]
        %v5145 = vld [vmem:[%s8 + $0x90] sm:$0xff]
        %v5146 = vld [vmem:[%s8 + $0x98] sm:$0xff]
        %v5147 = vld [vmem:[%s8 + $0xa0] sm:$0xff]
        %v5148 = vld [vmem:[%s8 + $0xa8] sm:$0xff]
        %v5149 = vld [vmem:[%s8 + $0xb0] sm:$0xff]
        %v5150 = vld [vmem:[%s8 + $0xb8] sm:$0xff]
        %v5151 = vld [vmem:[%s8 + $0xc0] sm:$0xff]
        %v5152 = vld [vmem:[%s8 + $0xc8] sm:$0xff]
        %v5153 = vld [vmem:[%s8 + $0xd0] sm:$0xff]
        %v5154 = vld [vmem:[%s8 + $0xd8] sm:$0xff]
        %v5155 = vld [vmem:[%s8 + $0xe0] sm:$0xff]
        %v5156 = vld [vmem:[%s8 + $0xe8] sm:$0xff]
        %v5157 = vld [vmem:[%s8 + $0xf0] sm:$0xff]
        %v5158 = vld [vmem:[%s8 + $0xf8] sm:$0xff]
        %s5159 = scalar_lea.vmem %s4, 4
        %v5160 = vld [vmem:[%s5159] sm:$0x7]
        %v5162 = vsel %vm2218, %v5160, 0
        %5164 = vmatprep.subr.mxu0 0.0
        %5165 = vmatpush1.msra.mxu0 0.0
        %5166 = vmatprep.subr.mxu0 0.0
        %5167 = vmatpush1.msra.mxu0 0.0
        %5168 = vmatprep.subr.mxu0 0.0
        %5169 = vmatpush1.msra.mxu0 0.0
        %5170 = vmatprep.subr.mxu0 0.0
        %5171 = vmatpush1.msra.mxu0 0.0
        %5172 = vmatprep.subr.mxu0 0.0
        %5173 = vmatpush1.msra.mxu0 0.0
        %5174 = vmatprep.subr.mxu0 0.0
        %5175 = vmatpush1.msra.mxu0 0.0
        %5176 = vmatprep.subr.mxu0 0.0
        %5177 = vmatpush1.msra.mxu0 0.0
        %5178 = vmatprep.subr.mxu0 0.0
        %5179 = vmatpush1.msra.mxu0 0.0
        %5180 = vmatprep.subr.mxu0 0.0
        %5181 = vmatpush1.msra.mxu0 0.0
        %5182 = vmatprep.subr.mxu0 0.0
        %5183 = vmatpush1.msra.mxu0 0.0
        %5184 = vmatprep.subr.mxu0 0.0
        %5185 = vmatpush1.msra.mxu0 0.0
        %5186 = vmatprep.subr.mxu0 0.0
        %5187 = vmatpush1.msra.mxu0 0.0
        %5188 = vmatprep.subr.mxu0 0.0
        %5189 = vmatpush1.msra.mxu0 0.0
        %5190 = vmatprep.subr.mxu0 0.0
        %5191 = vmatpush1.msra.mxu0 0.0
        %5192 = vmatprep.subr.mxu0 0.0
        %5193 = vmatpush1.msra.mxu0 0.0
        %5194 = vmatprep.subr.mxu0 0.0
        %5195 = vmatpush1.msra.mxu0 %v5052
        %5196 = vmatprep.subr.mxu0 0.0
        %5197 = vmatpush2.msra.mxu0 0.0
        %5198 = vmatprep.subr.mxu0 0.0
        %5199 = vmatpush2.msra.mxu0 0.0
        %5200 = vmatprep.subr.mxu0 0.0
        %5201 = vmatpush2.msra.mxu0 0.0
        %5202 = vmatprep.subr.mxu0 0.0
        %5203 = vmatpush2.msra.mxu0 0.0
        %5204 = vmatprep.subr.mxu0 0.0
        %5205 = vmatpush2.msra.mxu0 0.0
        %5206 = vmatprep.subr.mxu0 0.0
        %5207 = vmatpush2.msra.mxu0 0.0
        %5208 = vmatprep.subr.mxu0 0.0
        %5209 = vmatpush2.msra.mxu0 0.0
        %5210 = vmatprep.subr.mxu0 0.0
        %5211 = vmatpush2.msra.mxu0 0.0
        %5212 = vmatprep.subr.mxu0 0.0
        %5213 = vmatpush2.msra.mxu0 0.0
        %5214 = vmatprep.subr.mxu0 0.0
        %5215 = vmatpush2.msra.mxu0 0.0
        %5216 = vmatprep.subr.mxu0 0.0
        %5217 = vmatpush2.msra.mxu0 0.0
        %5218 = vmatprep.subr.mxu0 0.0
        %5219 = vmatpush2.msra.mxu0 0.0
        %5220 = vmatprep.subr.mxu0 0.0
        %5221 = vmatpush2.msra.mxu0 0.0
        %5222 = vmatprep.subr.mxu0 0.0
        %5223 = vmatpush2.msra.mxu0 0.0
        %5224 = vmatprep.subr.mxu0 0.0
        %5225 = vmatpush2.msra.mxu0 0.0
        %5226 = vmatprep.subr.mxu0 0.0
        %5227 = vmatpush2.msra.mxu0 0.0
        %5228 = vmatprep.mubr.f32.mxu0 0.0
        %5229 = vmatmul.mubr.f32.gmra.mxu0 %v5162
        %v5230 = vpop.f32.mrf.mxu0
        %v5231 = vadd.f32 0.0, %v5230
        %v5232 = vpop.f32.mrf.mxu0
        %5233 = vdwg.mxu0
        %s5234 = scalar_lea.vmem %s8, 256
        %v5235 = vld [vmem:[%s5234] sm:$0xff]
        %v5236 = vld [vmem:[%s5234 + $0x8] sm:$0xff]
        %v5237 = vld [vmem:[%s5234 + $0x10] sm:$0xff]
        %v5238 = vld [vmem:[%s5234 + $0x18] sm:$0xff]
        %v5239 = vld [vmem:[%s5234 + $0x20] sm:$0xff]
        %v5240 = vld [vmem:[%s5234 + $0x28] sm:$0xff]
        %v5241 = vld [vmem:[%s5234 + $0x30] sm:$0xff]
        %v5242 = vld [vmem:[%s5234 + $0x38] sm:$0xff]
        %v5243 = vld [vmem:[%s5234 + $0x40] sm:$0xff]
        %v5244 = vld [vmem:[%s5234 + $0x48] sm:$0xff]
        %v5245 = vld [vmem:[%s5234 + $0x50] sm:$0xff]
        %v5246 = vld [vmem:[%s5234 + $0x58] sm:$0xff]
        %v5247 = vld [vmem:[%s5234 + $0x60] sm:$0xff]
        %v5248 = vld [vmem:[%s5234 + $0x68] sm:$0xff]
        %v5249 = vld [vmem:[%s5234 + $0x70] sm:$0xff]
        %v5250 = vld [vmem:[%s5234 + $0x78] sm:$0xff]
        %v5251 = vld [vmem:[%s5234 + $0x80] sm:$0xff]
        %v5252 = vld [vmem:[%s5234 + $0x88] sm:$0xff]
        %v5253 = vld [vmem:[%s5234 + $0x90] sm:$0xff]
        %v5254 = vld [vmem:[%s5234 + $0x98] sm:$0xff]
        %v5255 = vld [vmem:[%s5234 + $0xa0] sm:$0xff]
        %v5256 = vld [vmem:[%s5234 + $0xa8] sm:$0xff]
        %v5257 = vld [vmem:[%s5234 + $0xb0] sm:$0xff]
        %v5258 = vld [vmem:[%s5234 + $0xb8] sm:$0xff]
        %v5259 = vld [vmem:[%s5234 + $0xc0] sm:$0xff]
        %v5260 = vld [vmem:[%s5234 + $0xc8] sm:$0xff]
        %v5261 = vld [vmem:[%s5234 + $0xd0] sm:$0xff]
        %v5262 = vld [vmem:[%s5234 + $0xd8] sm:$0xff]
        %v5263 = vld [vmem:[%s5234 + $0xe0] sm:$0xff]
        %v5264 = vld [vmem:[%s5234 + $0xe8] sm:$0xff]
        %v5265 = vld [vmem:[%s5234 + $0xf0] sm:$0xff]
        %v5266 = vld [vmem:[%s5234 + $0xf8] sm:$0xff]
        %5267 = vmatprep.subr.mxu0 %v5266
        %5268 = vmatpush1.msra.mxu0 %v5265
        %5269 = vmatprep.subr.mxu0 %v5264
        %5270 = vmatpush1.msra.mxu0 %v5263
        %5271 = vmatprep.subr.mxu0 %v5262
        %5272 = vmatpush1.msra.mxu0 %v5261
        %5273 = vmatprep.subr.mxu0 %v5260
        %5274 = vmatpush1.msra.mxu0 %v5259
        %5275 = vmatprep.subr.mxu0 %v5258
        %5276 = vmatpush1.msra.mxu0 %v5257
        %5277 = vmatprep.subr.mxu0 %v5256
        %5278 = vmatpush1.msra.mxu0 %v5255
        %5279 = vmatprep.subr.mxu0 %v5254
        %5280 = vmatpush1.msra.mxu0 %v5253
        %5281 = vmatprep.subr.mxu0 %v5252
        %5282 = vmatpush1.msra.mxu0 %v5251
        %5283 = vmatprep.subr.mxu0 %v5250
        %5284 = vmatpush1.msra.mxu0 %v5249
        %5285 = vmatprep.subr.mxu0 %v5248
        %5286 = vmatpush1.msra.mxu0 %v5247
        %5287 = vmatprep.subr.mxu0 %v5246
        %5288 = vmatpush1.msra.mxu0 %v5245
        %5289 = vmatprep.subr.mxu0 %v5244
        %5290 = vmatpush1.msra.mxu0 %v5243
        %5291 = vmatprep.subr.mxu0 %v5242
        %5292 = vmatpush1.msra.mxu0 %v5241
        %5293 = vmatprep.subr.mxu0 %v5240
        %5294 = vmatpush1.msra.mxu0 %v5239
        %5295 = vmatprep.subr.mxu0 %v5238
        %5296 = vmatpush1.msra.mxu0 %v5237
        %5297 = vmatprep.subr.mxu0 %v5236
        %5298 = vmatpush1.msra.mxu0 %v5235
        %5299 = vmatprep.subr.mxu0 0.0
        %5300 = vmatpush2.msra.mxu0 0.0
        %5301 = vmatprep.subr.mxu0 0.0
        %5302 = vmatpush2.msra.mxu0 0.0
        %5303 = vmatprep.subr.mxu0 0.0
        %5304 = vmatpush2.msra.mxu0 0.0
        %5305 = vmatprep.subr.mxu0 0.0
        %5306 = vmatpush2.msra.mxu0 0.0
        %5307 = vmatprep.subr.mxu0 0.0
        %5308 = vmatpush2.msra.mxu0 0.0
        %5309 = vmatprep.subr.mxu0 0.0
        %5310 = vmatpush2.msra.mxu0 0.0
        %5311 = vmatprep.subr.mxu0 0.0
        %5312 = vmatpush2.msra.mxu0 0.0
        %5313 = vmatprep.subr.mxu0 0.0
        %5314 = vmatpush2.msra.mxu0 0.0
        %5315 = vmatprep.subr.mxu0 0.0
        %5316 = vmatpush2.msra.mxu0 0.0
        %5317 = vmatprep.subr.mxu0 0.0
        %5318 = vmatpush2.msra.mxu0 0.0
        %5319 = vmatprep.subr.mxu0 0.0
        %5320 = vmatpush2.msra.mxu0 0.0
        %5321 = vmatprep.subr.mxu0 0.0
        %5322 = vmatpush2.msra.mxu0 0.0
        %5323 = vmatprep.subr.mxu0 0.0
        %5324 = vmatpush2.msra.mxu0 0.0
        %5325 = vmatprep.subr.mxu0 0.0
        %5326 = vmatpush2.msra.mxu0 0.0
        %5327 = vmatprep.subr.mxu0 0.0
        %5328 = vmatpush2.msra.mxu0 0.0
        %5329 = vmatprep.subr.mxu0 0.0
        %5330 = vmatpush2.msra.mxu0 0.0
        %5331 = vmatprep.mubr.f32.mxu0 0.0
        %5332 = vmatmul.mubr.f32.gmra.mxu0 %v5231
        %v5333 = vpop.f32.mrf.mxu0
        %v5334 = vadd.f32 0.0, %v5333
        %v5335 = vpop.f32.mrf.mxu0
        %v5336 = vadd.f32 0.0, %v5335
        %5337 = vdwg.mxu0
        %5338 = vmatprep.subr.mxu0 %v5158
        %5339 = vmatpush1.msra.mxu0 %v5157
        %5340 = vmatprep.subr.mxu0 %v5156
        %5341 = vmatpush1.msra.mxu0 %v5155
        %5342 = vmatprep.subr.mxu0 %v5154
        %5343 = vmatpush1.msra.mxu0 %v5153
        %5344 = vmatprep.subr.mxu0 %v5152
        %5345 = vmatpush1.msra.mxu0 %v5151
        %5346 = vmatprep.subr.mxu0 %v5150
        %5347 = vmatpush1.msra.mxu0 %v5149
        %5348 = vmatprep.subr.mxu0 %v5148
        %5349 = vmatpush1.msra.mxu0 %v5147
        %5350 = vmatprep.subr.mxu0 %v5146
        %5351 = vmatpush1.msra.mxu0 %v5145
        %5352 = vmatprep.subr.mxu0 %v5144
        %5353 = vmatpush1.msra.mxu0 %v5143
        %5354 = vmatprep.subr.mxu0 %v5142
        %5355 = vmatpush1.msra.mxu0 %v5141
        %5356 = vmatprep.subr.mxu0 %v5140
        %5357 = vmatpush1.msra.mxu0 %v5139
        %5358 = vmatprep.subr.mxu0 %v5138
        %5359 = vmatpush1.msra.mxu0 %v5137
        %5360 = vmatprep.subr.mxu0 %v5136
        %5361 = vmatpush1.msra.mxu0 %v5135
        %5362 = vmatprep.subr.mxu0 %v5134
        %5363 = vmatpush1.msra.mxu0 %v5133
        %5364 = vmatprep.subr.mxu0 %v5132
        %5365 = vmatpush1.msra.mxu0 %v5131
        %5366 = vmatprep.subr.mxu0 %v5130
        %5367 = vmatpush1.msra.mxu0 %v5129
        %5368 = vmatprep.subr.mxu0 %v5128
        %5369 = vmatpush1.msra.mxu0 %v5127
        %5370 = vmatprep.subr.mxu0 0.0
        %5371 = vmatpush2.msra.mxu0 0.0
        %5372 = vmatprep.subr.mxu0 0.0
        %5373 = vmatpush2.msra.mxu0 0.0
        %5374 = vmatprep.subr.mxu0 0.0
        %5375 = vmatpush2.msra.mxu0 0.0
        %5376 = vmatprep.subr.mxu0 0.0
        %5377 = vmatpush2.msra.mxu0 0.0
        %5378 = vmatprep.subr.mxu0 0.0
        %5379 = vmatpush2.msra.mxu0 0.0
        %5380 = vmatprep.subr.mxu0 0.0
        %5381 = vmatpush2.msra.mxu0 0.0
        %5382 = vmatprep.subr.mxu0 0.0
        %5383 = vmatpush2.msra.mxu0 0.0
        %5384 = vmatprep.subr.mxu0 0.0
        %5385 = vmatpush2.msra.mxu0 0.0
        %5386 = vmatprep.subr.mxu0 0.0
        %5387 = vmatpush2.msra.mxu0 0.0
        %5388 = vmatprep.subr.mxu0 0.0
        %5389 = vmatpush2.msra.mxu0 0.0
        %5390 = vmatprep.subr.mxu0 0.0
        %5391 = vmatpush2.msra.mxu0 0.0
        %5392 = vmatprep.subr.mxu0 0.0
        %5393 = vmatpush2.msra.mxu0 0.0
        %5394 = vmatprep.subr.mxu0 0.0
        %5395 = vmatpush2.msra.mxu0 0.0
        %5396 = vmatprep.subr.mxu0 0.0
        %5397 = vmatpush2.msra.mxu0 0.0
        %5398 = vmatprep.subr.mxu0 0.0
        %5399 = vmatpush2.msra.mxu0 0.0
        %5400 = vmatprep.subr.mxu0 0.0
        %5401 = vmatpush2.msra.mxu0 0.0
        %5402 = vmatprep.mubr.f32.mxu0 0.0
        %5403 = vmatmul.mubr.f32.gmra.mxu0 %v5124
        %v5404 = vpop.f32.mrf.mxu0
        %v5405 = vadd.f32 %v5334, %v5404
        %v5406 = vpop.f32.mrf.mxu0
        %v5407 = vadd.f32 %v5336, %v5406
        %5408 = vdwg.mxu0
        %s5409 = scalar_lea.vmem %s4, 8
        %v5410 = vld [vmem:[%s5409] sm:$0x7]
        %v5412 = vsel %vm2218, %v5410, 0
        %5414 = vmatprep.subr.mxu0 0.0
        %5415 = vmatpush1.msra.mxu0 0.0
        %5416 = vmatprep.subr.mxu0 0.0
        %5417 = vmatpush1.msra.mxu0 0.0
        %5418 = vmatprep.subr.mxu0 0.0
        %5419 = vmatpush1.msra.mxu0 0.0
        %5420 = vmatprep.subr.mxu0 0.0
        %5421 = vmatpush1.msra.mxu0 0.0
        %5422 = vmatprep.subr.mxu0 0.0
        %5423 = vmatpush1.msra.mxu0 0.0
        %5424 = vmatprep.subr.mxu0 0.0
        %5425 = vmatpush1.msra.mxu0 0.0
        %5426 = vmatprep.subr.mxu0 0.0
        %5427 = vmatpush1.msra.mxu0 0.0
        %5428 = vmatprep.subr.mxu0 0.0
        %5429 = vmatpush1.msra.mxu0 0.0
        %5430 = vmatprep.subr.mxu0 0.0
        %5431 = vmatpush1.msra.mxu0 0.0
        %5432 = vmatprep.subr.mxu0 0.0
        %5433 = vmatpush1.msra.mxu0 0.0
        %5434 = vmatprep.subr.mxu0 0.0
        %5435 = vmatpush1.msra.mxu0 0.0
        %5436 = vmatprep.subr.mxu0 0.0
        %5437 = vmatpush1.msra.mxu0 0.0
        %5438 = vmatprep.subr.mxu0 0.0
        %5439 = vmatpush1.msra.mxu0 0.0
        %5440 = vmatprep.subr.mxu0 0.0
        %5441 = vmatpush1.msra.mxu0 0.0
        %5442 = vmatprep.subr.mxu0 0.0
        %5443 = vmatpush1.msra.mxu0 0.0
        %5444 = vmatprep.subr.mxu0 0.0
        %5445 = vmatpush1.msra.mxu0 %v5052
        %5446 = vmatprep.subr.mxu0 0.0
        %5447 = vmatpush2.msra.mxu0 0.0
        %5448 = vmatprep.subr.mxu0 0.0
        %5449 = vmatpush2.msra.mxu0 0.0
        %5450 = vmatprep.subr.mxu0 0.0
        %5451 = vmatpush2.msra.mxu0 0.0
        %5452 = vmatprep.subr.mxu0 0.0
        %5453 = vmatpush2.msra.mxu0 0.0
        %5454 = vmatprep.subr.mxu0 0.0
        %5455 = vmatpush2.msra.mxu0 0.0
        %5456 = vmatprep.subr.mxu0 0.0
        %5457 = vmatpush2.msra.mxu0 0.0
        %5458 = vmatprep.subr.mxu0 0.0
        %5459 = vmatpush2.msra.mxu0 0.0
        %5460 = vmatprep.subr.mxu0 0.0
        %5461 = vmatpush2.msra.mxu0 0.0
        %5462 = vmatprep.subr.mxu0 0.0
        %5463 = vmatpush2.msra.mxu0 0.0
        %5464 = vmatprep.subr.mxu0 0.0
        %5465 = vmatpush2.msra.mxu0 0.0
        %5466 = vmatprep.subr.mxu0 0.0
        %5467 = vmatpush2.msra.mxu0 0.0
        %5468 = vmatprep.subr.mxu0 0.0
        %5469 = vmatpush2.msra.mxu0 0.0
        %5470 = vmatprep.subr.mxu0 0.0
        %5471 = vmatpush2.msra.mxu0 0.0
        %5472 = vmatprep.subr.mxu0 0.0
        %5473 = vmatpush2.msra.mxu0 0.0
        %5474 = vmatprep.subr.mxu0 0.0
        %5475 = vmatpush2.msra.mxu0 0.0
        %5476 = vmatprep.subr.mxu0 0.0
        %5477 = vmatpush2.msra.mxu0 0.0
        %5478 = vmatprep.mubr.f32.mxu0 0.0
        %5479 = vmatmul.mubr.f32.gmra.mxu0 %v5412
        %v5480 = vpop.f32.mrf.mxu0
        %v5481 = vadd.f32 0.0, %v5480
        %v5482 = vpop.f32.mrf.mxu0
        %5483 = vdwg.mxu0
        %s5484 = scalar_lea.vmem %s8, 512
        %v5485 = vld [vmem:[%s5484] sm:$0xff]
        %v5486 = vld [vmem:[%s5484 + $0x8] sm:$0xff]
        %v5487 = vld [vmem:[%s5484 + $0x10] sm:$0xff]
        %v5488 = vld [vmem:[%s5484 + $0x18] sm:$0xff]
        %v5489 = vld [vmem:[%s5484 + $0x20] sm:$0xff]
        %v5490 = vld [vmem:[%s5484 + $0x28] sm:$0xff]
        %v5491 = vld [vmem:[%s5484 + $0x30] sm:$0xff]
        %v5492 = vld [vmem:[%s5484 + $0x38] sm:$0xff]
        %v5493 = vld [vmem:[%s5484 + $0x40] sm:$0xff]
        %v5494 = vld [vmem:[%s5484 + $0x48] sm:$0xff]
        %v5495 = vld [vmem:[%s5484 + $0x50] sm:$0xff]
        %v5496 = vld [vmem:[%s5484 + $0x58] sm:$0xff]
        %v5497 = vld [vmem:[%s5484 + $0x60] sm:$0xff]
        %v5498 = vld [vmem:[%s5484 + $0x68] sm:$0xff]
        %v5499 = vld [vmem:[%s5484 + $0x70] sm:$0xff]
        %v5500 = vld [vmem:[%s5484 + $0x78] sm:$0xff]
        %v5501 = vld [vmem:[%s5484 + $0x80] sm:$0xff]
        %v5502 = vld [vmem:[%s5484 + $0x88] sm:$0xff]
        %v5503 = vld [vmem:[%s5484 + $0x90] sm:$0xff]
        %v5504 = vld [vmem:[%s5484 + $0x98] sm:$0xff]
        %v5505 = vld [vmem:[%s5484 + $0xa0] sm:$0xff]
        %v5506 = vld [vmem:[%s5484 + $0xa8] sm:$0xff]
        %v5507 = vld [vmem:[%s5484 + $0xb0] sm:$0xff]
        %v5508 = vld [vmem:[%s5484 + $0xb8] sm:$0xff]
        %v5509 = vld [vmem:[%s5484 + $0xc0] sm:$0xff]
        %v5510 = vld [vmem:[%s5484 + $0xc8] sm:$0xff]
        %v5511 = vld [vmem:[%s5484 + $0xd0] sm:$0xff]
        %v5512 = vld [vmem:[%s5484 + $0xd8] sm:$0xff]
        %v5513 = vld [vmem:[%s5484 + $0xe0] sm:$0xff]
        %v5514 = vld [vmem:[%s5484 + $0xe8] sm:$0xff]
        %v5515 = vld [vmem:[%s5484 + $0xf0] sm:$0xff]
        %v5516 = vld [vmem:[%s5484 + $0xf8] sm:$0xff]
        %5517 = vmatprep.subr.mxu0 %v5516
        %5518 = vmatpush1.msra.mxu0 %v5515
        %5519 = vmatprep.subr.mxu0 %v5514
        %5520 = vmatpush1.msra.mxu0 %v5513
        %5521 = vmatprep.subr.mxu0 %v5512
        %5522 = vmatpush1.msra.mxu0 %v5511
        %5523 = vmatprep.subr.mxu0 %v5510
        %5524 = vmatpush1.msra.mxu0 %v5509
        %5525 = vmatprep.subr.mxu0 %v5508
        %5526 = vmatpush1.msra.mxu0 %v5507
        %5527 = vmatprep.subr.mxu0 %v5506
        %5528 = vmatpush1.msra.mxu0 %v5505
        %5529 = vmatprep.subr.mxu0 %v5504
        %5530 = vmatpush1.msra.mxu0 %v5503
        %5531 = vmatprep.subr.mxu0 %v5502
        %5532 = vmatpush1.msra.mxu0 %v5501
        %5533 = vmatprep.subr.mxu0 %v5500
        %5534 = vmatpush1.msra.mxu0 %v5499
        %5535 = vmatprep.subr.mxu0 %v5498
        %5536 = vmatpush1.msra.mxu0 %v5497
        %5537 = vmatprep.subr.mxu0 %v5496
        %5538 = vmatpush1.msra.mxu0 %v5495
        %5539 = vmatprep.subr.mxu0 %v5494
        %5540 = vmatpush1.msra.mxu0 %v5493
        %5541 = vmatprep.subr.mxu0 %v5492
        %5542 = vmatpush1.msra.mxu0 %v5491
        %5543 = vmatprep.subr.mxu0 %v5490
        %5544 = vmatpush1.msra.mxu0 %v5489
        %5545 = vmatprep.subr.mxu0 %v5488
        %5546 = vmatpush1.msra.mxu0 %v5487
        %5547 = vmatprep.subr.mxu0 %v5486
        %5548 = vmatpush1.msra.mxu0 %v5485
        %5549 = vmatprep.subr.mxu0 0.0
        %5550 = vmatpush2.msra.mxu0 0.0
        %5551 = vmatprep.subr.mxu0 0.0
        %5552 = vmatpush2.msra.mxu0 0.0
        %5553 = vmatprep.subr.mxu0 0.0
        %5554 = vmatpush2.msra.mxu0 0.0
        %5555 = vmatprep.subr.mxu0 0.0
        %5556 = vmatpush2.msra.mxu0 0.0
        %5557 = vmatprep.subr.mxu0 0.0
        %5558 = vmatpush2.msra.mxu0 0.0
        %5559 = vmatprep.subr.mxu0 0.0
        %5560 = vmatpush2.msra.mxu0 0.0
        %5561 = vmatprep.subr.mxu0 0.0
        %5562 = vmatpush2.msra.mxu0 0.0
        %5563 = vmatprep.subr.mxu0 0.0
        %5564 = vmatpush2.msra.mxu0 0.0
        %5565 = vmatprep.subr.mxu0 0.0
        %5566 = vmatpush2.msra.mxu0 0.0
        %5567 = vmatprep.subr.mxu0 0.0
        %5568 = vmatpush2.msra.mxu0 0.0
        %5569 = vmatprep.subr.mxu0 0.0
        %5570 = vmatpush2.msra.mxu0 0.0
        %5571 = vmatprep.subr.mxu0 0.0
        %5572 = vmatpush2.msra.mxu0 0.0
        %5573 = vmatprep.subr.mxu0 0.0
        %5574 = vmatpush2.msra.mxu0 0.0
        %5575 = vmatprep.subr.mxu0 0.0
        %5576 = vmatpush2.msra.mxu0 0.0
        %5577 = vmatprep.subr.mxu0 0.0
        %5578 = vmatpush2.msra.mxu0 0.0
        %5579 = vmatprep.subr.mxu0 0.0
        %5580 = vmatpush2.msra.mxu0 0.0
        %5581 = vmatprep.mubr.f32.mxu0 0.0
        %5582 = vmatmul.mubr.f32.gmra.mxu0 %v5481
        %v5583 = vpop.f32.mrf.mxu0
        %v5584 = vadd.f32 0.0, %v5583
        %v5585 = vpop.f32.mrf.mxu0
        %v5586 = vadd.f32 0.0, %v5585
        %5587 = vdwg.mxu0
        %v5588 = vadd.f32 %v5405, %v5584
        %v5589 = vadd.f32 %v5407, %v5586
        %s5590 = scalar_lea.vmem %s4, 12
        %v5591 = vld [vmem:[%s5590] sm:$0x7]
        %v5593 = vsel %vm2218, %v5591, 0
        %5595 = vmatprep.subr.mxu0 0.0
        %5596 = vmatpush1.msra.mxu0 0.0
        %5597 = vmatprep.subr.mxu0 0.0
        %5598 = vmatpush1.msra.mxu0 0.0
        %5599 = vmatprep.subr.mxu0 0.0
        %5600 = vmatpush1.msra.mxu0 0.0
        %5601 = vmatprep.subr.mxu0 0.0
        %5602 = vmatpush1.msra.mxu0 0.0
        %5603 = vmatprep.subr.mxu0 0.0
        %5604 = vmatpush1.msra.mxu0 0.0
        %5605 = vmatprep.subr.mxu0 0.0
        %5606 = vmatpush1.msra.mxu0 0.0
        %5607 = vmatprep.subr.mxu0 0.0
        %5608 = vmatpush1.msra.mxu0 0.0
        %5609 = vmatprep.subr.mxu0 0.0
        %5610 = vmatpush1.msra.mxu0 0.0
        %5611 = vmatprep.subr.mxu0 0.0
        %5612 = vmatpush1.msra.mxu0 0.0
        %5613 = vmatprep.subr.mxu0 0.0
        %5614 = vmatpush1.msra.mxu0 0.0
        %5615 = vmatprep.subr.mxu0 0.0
        %5616 = vmatpush1.msra.mxu0 0.0
        %5617 = vmatprep.subr.mxu0 0.0
        %5618 = vmatpush1.msra.mxu0 0.0
        %5619 = vmatprep.subr.mxu0 0.0
        %5620 = vmatpush1.msra.mxu0 0.0
        %5621 = vmatprep.subr.mxu0 0.0
        %5622 = vmatpush1.msra.mxu0 0.0
        %5623 = vmatprep.subr.mxu0 0.0
        %5624 = vmatpush1.msra.mxu0 0.0
        %5625 = vmatprep.subr.mxu0 0.0
        %5626 = vmatpush1.msra.mxu0 %v5052
        %5627 = vmatprep.subr.mxu0 0.0
        %5628 = vmatpush2.msra.mxu0 0.0
        %5629 = vmatprep.subr.mxu0 0.0
        %5630 = vmatpush2.msra.mxu0 0.0
        %5631 = vmatprep.subr.mxu0 0.0
        %5632 = vmatpush2.msra.mxu0 0.0
        %5633 = vmatprep.subr.mxu0 0.0
        %5634 = vmatpush2.msra.mxu0 0.0
        %5635 = vmatprep.subr.mxu0 0.0
        %5636 = vmatpush2.msra.mxu0 0.0
        %5637 = vmatprep.subr.mxu0 0.0
        %5638 = vmatpush2.msra.mxu0 0.0
        %5639 = vmatprep.subr.mxu0 0.0
        %5640 = vmatpush2.msra.mxu0 0.0
        %5641 = vmatprep.subr.mxu0 0.0
        %5642 = vmatpush2.msra.mxu0 0.0
        %5643 = vmatprep.subr.mxu0 0.0
        %5644 = vmatpush2.msra.mxu0 0.0
        %5645 = vmatprep.subr.mxu0 0.0
        %5646 = vmatpush2.msra.mxu0 0.0
        %5647 = vmatprep.subr.mxu0 0.0
        %5648 = vmatpush2.msra.mxu0 0.0
        %5649 = vmatprep.subr.mxu0 0.0
        %5650 = vmatpush2.msra.mxu0 0.0
        %5651 = vmatprep.subr.mxu0 0.0
        %5652 = vmatpush2.msra.mxu0 0.0
        %5653 = vmatprep.subr.mxu0 0.0
        %5654 = vmatpush2.msra.mxu0 0.0
        %5655 = vmatprep.subr.mxu0 0.0
        %5656 = vmatpush2.msra.mxu0 0.0
        %5657 = vmatprep.subr.mxu0 0.0
        %5658 = vmatpush2.msra.mxu0 0.0
        %5659 = vmatprep.mubr.f32.mxu0 0.0
        %5660 = vmatmul.mubr.f32.gmra.mxu0 %v5593
        %v5661 = vpop.f32.mrf.mxu0
        %v5662 = vadd.f32 0.0, %v5661
        %v5663 = vpop.f32.mrf.mxu0
        %5664 = vdwg.mxu0
        %s5665 = scalar_lea.vmem %s8, 768
        %v5666 = vld [vmem:[%s5665] sm:$0xff]
        %v5667 = vld [vmem:[%s5665 + $0x8] sm:$0xff]
        %v5668 = vld [vmem:[%s5665 + $0x10] sm:$0xff]
        %v5669 = vld [vmem:[%s5665 + $0x18] sm:$0xff]
        %v5670 = vld [vmem:[%s5665 + $0x20] sm:$0xff]
        %v5671 = vld [vmem:[%s5665 + $0x28] sm:$0xff]
        %v5672 = vld [vmem:[%s5665 + $0x30] sm:$0xff]
        %v5673 = vld [vmem:[%s5665 + $0x38] sm:$0xff]
        %v5674 = vld [vmem:[%s5665 + $0x40] sm:$0xff]
        %v5675 = vld [vmem:[%s5665 + $0x48] sm:$0xff]
        %v5676 = vld [vmem:[%s5665 + $0x50] sm:$0xff]
        %v5677 = vld [vmem:[%s5665 + $0x58] sm:$0xff]
        %v5678 = vld [vmem:[%s5665 + $0x60] sm:$0xff]
        %v5679 = vld [vmem:[%s5665 + $0x68] sm:$0xff]
        %v5680 = vld [vmem:[%s5665 + $0x70] sm:$0xff]
        %v5681 = vld [vmem:[%s5665 + $0x78] sm:$0xff]
        %v5682 = vld [vmem:[%s5665 + $0x80] sm:$0xff]
        %v5683 = vld [vmem:[%s5665 + $0x88] sm:$0xff]
        %v5684 = vld [vmem:[%s5665 + $0x90] sm:$0xff]
        %v5685 = vld [vmem:[%s5665 + $0x98] sm:$0xff]
        %v5686 = vld [vmem:[%s5665 + $0xa0] sm:$0xff]
        %v5687 = vld [vmem:[%s5665 + $0xa8] sm:$0xff]
        %v5688 = vld [vmem:[%s5665 + $0xb0] sm:$0xff]
        %v5689 = vld [vmem:[%s5665 + $0xb8] sm:$0xff]
        %v5690 = vld [vmem:[%s5665 + $0xc0] sm:$0xff]
        %v5691 = vld [vmem:[%s5665 + $0xc8] sm:$0xff]
        %v5692 = vld [vmem:[%s5665 + $0xd0] sm:$0xff]
        %v5693 = vld [vmem:[%s5665 + $0xd8] sm:$0xff]
        %v5694 = vld [vmem:[%s5665 + $0xe0] sm:$0xff]
        %v5695 = vld [vmem:[%s5665 + $0xe8] sm:$0xff]
        %v5696 = vld [vmem:[%s5665 + $0xf0] sm:$0xff]
        %v5697 = vld [vmem:[%s5665 + $0xf8] sm:$0xff]
        %5698 = vmatprep.subr.mxu0 %v5697
        %5699 = vmatpush1.msra.mxu0 %v5696
        %5700 = vmatprep.subr.mxu0 %v5695
        %5701 = vmatpush1.msra.mxu0 %v5694
        %5702 = vmatprep.subr.mxu0 %v5693
        %5703 = vmatpush1.msra.mxu0 %v5692
        %5704 = vmatprep.subr.mxu0 %v5691
        %5705 = vmatpush1.msra.mxu0 %v5690
        %5706 = vmatprep.subr.mxu0 %v5689
        %5707 = vmatpush1.msra.mxu0 %v5688
        %5708 = vmatprep.subr.mxu0 %v5687
        %5709 = vmatpush1.msra.mxu0 %v5686
        %5710 = vmatprep.subr.mxu0 %v5685
        %5711 = vmatpush1.msra.mxu0 %v5684
        %5712 = vmatprep.subr.mxu0 %v5683
        %5713 = vmatpush1.msra.mxu0 %v5682
        %5714 = vmatprep.subr.mxu0 %v5681
        %5715 = vmatpush1.msra.mxu0 %v5680
        %5716 = vmatprep.subr.mxu0 %v5679
        %5717 = vmatpush1.msra.mxu0 %v5678
        %5718 = vmatprep.subr.mxu0 %v5677
        %5719 = vmatpush1.msra.mxu0 %v5676
        %5720 = vmatprep.subr.mxu0 %v5675
        %5721 = vmatpush1.msra.mxu0 %v5674
        %5722 = vmatprep.subr.mxu0 %v5673
        %5723 = vmatpush1.msra.mxu0 %v5672
        %5724 = vmatprep.subr.mxu0 %v5671
        %5725 = vmatpush1.msra.mxu0 %v5670
        %5726 = vmatprep.subr.mxu0 %v5669
        %5727 = vmatpush1.msra.mxu0 %v5668
        %5728 = vmatprep.subr.mxu0 %v5667
        %5729 = vmatpush1.msra.mxu0 %v5666
        %5730 = vmatprep.subr.mxu0 0.0
        %5731 = vmatpush2.msra.mxu0 0.0
        %5732 = vmatprep.subr.mxu0 0.0
        %5733 = vmatpush2.msra.mxu0 0.0
        %5734 = vmatprep.subr.mxu0 0.0
        %5735 = vmatpush2.msra.mxu0 0.0
        %5736 = vmatprep.subr.mxu0 0.0
        %5737 = vmatpush2.msra.mxu0 0.0
        %5738 = vmatprep.subr.mxu0 0.0
        %5739 = vmatpush2.msra.mxu0 0.0
        %5740 = vmatprep.subr.mxu0 0.0
        %5741 = vmatpush2.msra.mxu0 0.0
        %5742 = vmatprep.subr.mxu0 0.0
        %5743 = vmatpush2.msra.mxu0 0.0
        %5744 = vmatprep.subr.mxu0 0.0
        %5745 = vmatpush2.msra.mxu0 0.0
        %5746 = vmatprep.subr.mxu0 0.0
        %5747 = vmatpush2.msra.mxu0 0.0
        %5748 = vmatprep.subr.mxu0 0.0
        %5749 = vmatpush2.msra.mxu0 0.0
        %5750 = vmatprep.subr.mxu0 0.0
        %5751 = vmatpush2.msra.mxu0 0.0
        %5752 = vmatprep.subr.mxu0 0.0
        %5753 = vmatpush2.msra.mxu0 0.0
        %5754 = vmatprep.subr.mxu0 0.0
        %5755 = vmatpush2.msra.mxu0 0.0
        %5756 = vmatprep.subr.mxu0 0.0
        %5757 = vmatpush2.msra.mxu0 0.0
        %5758 = vmatprep.subr.mxu0 0.0
        %5759 = vmatpush2.msra.mxu0 0.0
        %5760 = vmatprep.subr.mxu0 0.0
        %5761 = vmatpush2.msra.mxu0 0.0
        %5762 = vmatprep.mubr.f32.mxu0 0.0
        %5763 = vmatmul.mubr.f32.gmra.mxu0 %v5662
        %v5764 = vpop.f32.mrf.mxu0
        %v5765 = vadd.f32 0.0, %v5764
        %v5766 = vpop.f32.mrf.mxu0
        %v5767 = vadd.f32 0.0, %v5766
        %5768 = vdwg.mxu0
        %v5769 = vadd.f32 %v5588, %v5765
        %v5770 = vadd.f32 %v5589, %v5767
        %v5771 = vmax.f32 %v5769, 0.0
        %v5772 = vmax.f32 %v5770, 0.0
        %v5773 = vadd.s32 %v1963, 128
        %v5774 = vadd.s32 %v1963, 136
        %v5775 = vadd.s32 %v1963, 144
        %v5776 = vadd.s32 %v1963, 152
        %v5777 = vadd.s32 %v1963, 160
        %v5778 = vadd.s32 %v1963, 168
        %v5779 = vadd.s32 %v1963, 176
        %v5780 = vadd.s32 %v1963, 184
        %v5781 = vand.u32 %v1963, 63
        %v5782 = vand.u32 %v1964, 63
        %v5783 = vand.u32 %v1965, 63
        %v5784 = vand.u32 %v1966, 63
        %v5785 = vand.u32 %v1967, 63
        %v5786 = vand.u32 %v1968, 63
        %v5787 = vand.u32 %v1969, 63
        %v5788 = vand.u32 %v1970, 63
        %v5789 = vand.u32 %v3448, 63
        %v5790 = vand.u32 %v3449, 63
        %v5791 = vand.u32 %v4649, 63
        %v5792 = vand.u32 %v4650, 63
        %v5793 = vand.u32 %v4651, 63
        %v5794 = vand.u32 %v4652, 63
        %v5795 = vand.u32 %v4653, 63
        %v5796 = vand.u32 %v4654, 63
        %v5797 = vand.u32 %v5773, 63
        %v5798 = vand.u32 %v5774, 63
        %v5799 = vand.u32 %v5775, 63
        %v5800 = vand.u32 %v5776, 63
        %v5801 = vand.u32 %v5777, 63
        %v5802 = vand.u32 %v5778, 63
        %v5803 = vand.u32 %v5779, 63
        %v5804 = vand.u32 %v5780, 63
        %vm5805 = vcmp.eq.s32.totalorder %v5781, %v1980
        %vm5806 = vcmp.eq.s32.totalorder %v5782, %v1980
        %vm5807 = vcmp.eq.s32.totalorder %v5783, %v1980
        %vm5808 = vcmp.eq.s32.totalorder %v5784, %v1980
        %vm5809 = vcmp.eq.s32.totalorder %v5785, %v1980
        %vm5810 = vcmp.eq.s32.totalorder %v5786, %v1980
        %vm5811 = vcmp.eq.s32.totalorder %v5787, %v1980
        %vm5812 = vcmp.eq.s32.totalorder %v5788, %v1980
        %vm5813 = vcmp.eq.s32.totalorder %v5789, %v1980
        %vm5814 = vcmp.eq.s32.totalorder %v5790, %v1980
        %vm5815 = vcmp.eq.s32.totalorder %v5791, %v1980
        %vm5816 = vcmp.eq.s32.totalorder %v5792, %v1980
        %vm5817 = vcmp.eq.s32.totalorder %v5793, %v1980
        %vm5818 = vcmp.eq.s32.totalorder %v5794, %v1980
        %vm5819 = vcmp.eq.s32.totalorder %v5795, %v1980
        %vm5820 = vcmp.eq.s32.totalorder %v5796, %v1980
        %vm5821 = vcmp.eq.s32.totalorder %v5797, %v1980
        %vm5822 = vcmp.eq.s32.totalorder %v5798, %v1980
        %vm5823 = vcmp.eq.s32.totalorder %v5799, %v1980
        %vm5824 = vcmp.eq.s32.totalorder %v5800, %v1980
        %vm5825 = vcmp.eq.s32.totalorder %v5801, %v1980
        %vm5826 = vcmp.eq.s32.totalorder %v5802, %v1980
        %vm5827 = vcmp.eq.s32.totalorder %v5803, %v1980
        %vm5828 = vcmp.eq.s32.totalorder %v5804, %v1980
        %v5829 = vsel %vm5805, 1, 0
        %v5830 = vsel %vm5806, 1, 0
        %v5831 = vsel %vm5807, 1, 0
        %v5832 = vsel %vm5808, 1, 0
        %v5833 = vsel %vm5809, 1, 0
        %v5834 = vsel %vm5810, 1, 0
        %v5835 = vsel %vm5811, 1, 0
        %v5836 = vsel %vm5812, 1, 0
        %v5837 = vsel %vm5813, 1, 0
        %v5838 = vsel %vm5814, 1, 0
        %v5839 = vsel %vm5815, 1, 0
        %v5840 = vsel %vm5816, 1, 0
        %v5841 = vsel %vm5817, 1, 0
        %v5842 = vsel %vm5818, 1, 0
        %v5843 = vsel %vm5819, 1, 0
        %v5844 = vsel %vm5820, 1, 0
        %v5845 = vsel %vm5821, 1, 0
        %v5846 = vsel %vm5822, 1, 0
        %v5847 = vsel %vm5823, 1, 0
        %v5848 = vsel %vm5824, 1, 0
        %v5849 = vsel %vm5825, 1, 0
        %v5850 = vsel %vm5826, 1, 0
        %v5851 = vsel %vm5827, 1, 0
        %v5852 = vsel %vm5828, 1, 0
        %v5853 = vcvt.s32.f32 %v5829
        %v5854 = vcvt.s32.f32 %v5830
        %v5855 = vcvt.s32.f32 %v5831
        %v5856 = vcvt.s32.f32 %v5832
        %v5857 = vcvt.s32.f32 %v5833
        %v5858 = vcvt.s32.f32 %v5834
        %v5859 = vcvt.s32.f32 %v5835
        %v5860 = vcvt.s32.f32 %v5836
        %v5861 = vcvt.s32.f32 %v5837
        %v5862 = vcvt.s32.f32 %v5838
        %v5863 = vcvt.s32.f32 %v5839
        %v5864 = vcvt.s32.f32 %v5840
        %v5865 = vcvt.s32.f32 %v5841
        %v5866 = vcvt.s32.f32 %v5842
        %v5867 = vcvt.s32.f32 %v5843
        %v5868 = vcvt.s32.f32 %v5844
        %v5869 = vcvt.s32.f32 %v5845
        %v5870 = vcvt.s32.f32 %v5846
        %v5871 = vcvt.s32.f32 %v5847
        %v5872 = vcvt.s32.f32 %v5848
        %v5873 = vcvt.s32.f32 %v5849
        %v5874 = vcvt.s32.f32 %v5850
        %v5875 = vcvt.s32.f32 %v5851
        %v5876 = vcvt.s32.f32 %v5852
        %v5877 = vadd.s32 %v1980, 128
        %v5878 = vand.u32 %v1980, 63
        %v5879 = vand.u32 %v5877, 63
        %vm5880 = vcmp.eq.s32.totalorder %v1963, %v5878
        %vm5881 = vcmp.eq.s32.totalorder %v1963, %v5879
        %vm5882 = vcmp.eq.s32.totalorder %v1964, %v5878
        %vm5883 = vcmp.eq.s32.totalorder %v1964, %v5879
        %vm5884 = vcmp.eq.s32.totalorder %v1965, %v5878
        %vm5885 = vcmp.eq.s32.totalorder %v1965, %v5879
        %vm5886 = vcmp.eq.s32.totalorder %v1966, %v5878
        %vm5887 = vcmp.eq.s32.totalorder %v1966, %v5879
        %vm5888 = vcmp.eq.s32.totalorder %v1967, %v5878
        %vm5889 = vcmp.eq.s32.totalorder %v1967, %v5879
        %vm5890 = vcmp.eq.s32.totalorder %v1968, %v5878
        %vm5891 = vcmp.eq.s32.totalorder %v1968, %v5879
        %vm5892 = vcmp.eq.s32.totalorder %v1969, %v5878
        %vm5893 = vcmp.eq.s32.totalorder %v1969, %v5879
        %vm5894 = vcmp.eq.s32.totalorder %v1970, %v5878
        %vm5895 = vcmp.eq.s32.totalorder %v1970, %v5879
        %v5896 = vsel %vm5880, 1, 0
        %v5897 = vsel %vm5881, 1, 0
        %v5898 = vsel %vm5882, 1, 0
        %v5899 = vsel %vm5883, 1, 0
        %v5900 = vsel %vm5884, 1, 0
        %v5901 = vsel %vm5885, 1, 0
        %v5902 = vsel %vm5886, 1, 0
        %v5903 = vsel %vm5887, 1, 0
        %v5904 = vsel %vm5888, 1, 0
        %v5905 = vsel %vm5889, 1, 0
        %v5906 = vsel %vm5890, 1, 0
        %v5907 = vsel %vm5891, 1, 0
        %v5908 = vsel %vm5892, 1, 0
        %v5909 = vsel %vm5893, 1, 0
        %v5910 = vsel %vm5894, 1, 0
        %v5911 = vsel %vm5895, 1, 0
        %v5912 = vcvt.s32.f32 %v5896
        %v5913 = vcvt.s32.f32 %v5897
        %v5914 = vcvt.s32.f32 %v5898
        %v5915 = vcvt.s32.f32 %v5899
        %v5916 = vcvt.s32.f32 %v5900
        %v5917 = vcvt.s32.f32 %v5901
        %v5918 = vcvt.s32.f32 %v5902
        %v5919 = vcvt.s32.f32 %v5903
        %v5920 = vcvt.s32.f32 %v5904
        %v5921 = vcvt.s32.f32 %v5905
        %v5922 = vcvt.s32.f32 %v5906
        %v5923 = vcvt.s32.f32 %v5907
        %v5924 = vcvt.s32.f32 %v5908
        %v5925 = vcvt.s32.f32 %v5909
        %v5926 = vcvt.s32.f32 %v5910
        %v5927 = vcvt.s32.f32 %v5911
        %vm5928 = vcmask 1042432
        %v5929 = vsel %vm5928, %v5771, 0.0
        %v5930 = vrot.slane %v5929, 4
        %v5931 = vadd.f32 %v5929, %v5930
        %v5932 = vrot.slane %v5931, 2
        %v5933 = vadd.f32 %v5931, %v5932
        %v5934 = vrot.slane %v5933, 1
        %v5935 = vadd.f32 %v5933, %v5934
        %vm5936 = vcmask 518144
        %v5937 = vsel %vm5936, %v5772, 0.0
        %v5938 = vrot.slane %v5937, 4
        %v5939 = vadd.f32 %v5937, %v5938
        %v5940 = vrot.slane %v5939, 2
        %v5941 = vadd.f32 %v5939, %v5940
        %v5942 = vrot.slane %v5941, 1
        %v5943 = vadd.f32 %v5941, %v5942
        %v5945 = vsel %vm2009, %v5943, 0
        %5947 = vmatprep.subr.mxu0 0.0
        %5948 = vmatpush1.msra.mxu0 %v5868
        %5949 = vmatprep.subr.mxu0 0.0
        %5950 = vmatpush1.msra.mxu0 %v5867
        %5951 = vmatprep.subr.mxu0 0.0
        %5952 = vmatpush1.msra.mxu0 %v5866
        %5953 = vmatprep.subr.mxu0 0.0
        %5954 = vmatpush1.msra.mxu0 %v5865
        %5955 = vmatprep.subr.mxu0 0.0
        %5956 = vmatpush1.msra.mxu0 %v5864
        %5957 = vmatprep.subr.mxu0 0.0
        %5958 = vmatpush1.msra.mxu0 %v5863
        %5959 = vmatprep.subr.mxu0 0.0
        %5960 = vmatpush1.msra.mxu0 %v5862
        %5961 = vmatprep.subr.mxu0 0.0
        %5962 = vmatpush1.msra.mxu0 %v5861
        %5963 = vmatprep.subr.mxu0 0.0
        %5964 = vmatpush1.msra.mxu0 %v5860
        %5965 = vmatprep.subr.mxu0 0.0
        %5966 = vmatpush1.msra.mxu0 %v5859
        %5967 = vmatprep.subr.mxu0 0.0
        %5968 = vmatpush1.msra.mxu0 %v5858
        %5969 = vmatprep.subr.mxu0 0.0
        %5970 = vmatpush1.msra.mxu0 %v5857
        %5971 = vmatprep.subr.mxu0 0.0
        %5972 = vmatpush1.msra.mxu0 %v5856
        %5973 = vmatprep.subr.mxu0 0.0
        %5974 = vmatpush1.msra.mxu0 %v5855
        %5975 = vmatprep.subr.mxu0 0.0
        %5976 = vmatpush1.msra.mxu0 %v5854
        %5977 = vmatprep.subr.mxu0 0.0
        %5978 = vmatpush1.msra.mxu0 %v5853
        %5979 = vmatprep.subr.mxu0 0.0
        %5980 = vmatpush2.msra.mxu0 0.0
        %5981 = vmatprep.subr.mxu0 0.0
        %5982 = vmatpush2.msra.mxu0 0.0
        %5983 = vmatprep.subr.mxu0 0.0
        %5984 = vmatpush2.msra.mxu0 0.0
        %5985 = vmatprep.subr.mxu0 0.0
        %5986 = vmatpush2.msra.mxu0 0.0
        %5987 = vmatprep.subr.mxu0 0.0
        %5988 = vmatpush2.msra.mxu0 0.0
        %5989 = vmatprep.subr.mxu0 0.0
        %5990 = vmatpush2.msra.mxu0 0.0
        %5991 = vmatprep.subr.mxu0 0.0
        %5992 = vmatpush2.msra.mxu0 0.0
        %5993 = vmatprep.subr.mxu0 0.0
        %5994 = vmatpush2.msra.mxu0 0.0
        %5995 = vmatprep.subr.mxu0 0.0
        %5996 = vmatpush2.msra.mxu0 %v5876
        %5997 = vmatprep.subr.mxu0 0.0
        %5998 = vmatpush2.msra.mxu0 %v5875
        %5999 = vmatprep.subr.mxu0 0.0
        %6000 = vmatpush2.msra.mxu0 %v5874
        %6001 = vmatprep.subr.mxu0 0.0
        %6002 = vmatpush2.msra.mxu0 %v5873
        %6003 = vmatprep.subr.mxu0 0.0
        %6004 = vmatpush2.msra.mxu0 %v5872
        %6005 = vmatprep.subr.mxu0 0.0
        %6006 = vmatpush2.msra.mxu0 %v5871
        %6007 = vmatprep.subr.mxu0 0.0
        %6008 = vmatpush2.msra.mxu0 %v5870
        %6009 = vmatprep.subr.mxu0 0.0
        %6010 = vmatpush2.msra.mxu0 %v5869
        %6011 = vmatprep.mubr.f32.mxu0 %v5945
        %6012 = vmatmul.mubr.f32.gmra.mxu0 %v5935
        %v6013 = vpop.f32.mrf.mxu0
        %v6014 = vadd.f32 0.0, %v6013
        %v6015 = vpop.f32.mrf.mxu0
        %6016 = vdwg.mxu0
        %v6017 = vmul.f32 %v6014, 0.11111111
        %v6018 = vmul.f32 %v5771, %v5771
        %v6019 = vmul.f32 %v5772, %v5772
        %v6020 = vsel %vm5928, %v6018, 0.0
        %v6021 = vrot.slane %v6020, 4
        %v6022 = vadd.f32 %v6020, %v6021
        %v6023 = vrot.slane %v6022, 2
        %v6024 = vadd.f32 %v6022, %v6023
        %v6025 = vrot.slane %v6024, 1
        %v6026 = vadd.f32 %v6024, %v6025
        %v6027 = vsel %vm5936, %v6019, 0.0
        %v6028 = vrot.slane %v6027, 4
        %v6029 = vadd.f32 %v6027, %v6028
        %v6030 = vrot.slane %v6029, 2
        %v6031 = vadd.f32 %v6029, %v6030
        %v6032 = vrot.slane %v6031, 1
        %v6033 = vadd.f32 %v6031, %v6032
        %v6035 = vsel %vm2009, %v6033, 0
        %6037 = vmatprep.subr.mxu0 0.0
        %6038 = vmatpush1.msra.mxu0 %v5868
        %6039 = vmatprep.subr.mxu0 0.0
        %6040 = vmatpush1.msra.mxu0 %v5867
        %6041 = vmatprep.subr.mxu0 0.0
        %6042 = vmatpush1.msra.mxu0 %v5866
        %6043 = vmatprep.subr.mxu0 0.0
        %6044 = vmatpush1.msra.mxu0 %v5865
        %6045 = vmatprep.subr.mxu0 0.0
        %6046 = vmatpush1.msra.mxu0 %v5864
        %6047 = vmatprep.subr.mxu0 0.0
        %6048 = vmatpush1.msra.mxu0 %v5863
        %6049 = vmatprep.subr.mxu0 0.0
        %6050 = vmatpush1.msra.mxu0 %v5862
        %6051 = vmatprep.subr.mxu0 0.0
        %6052 = vmatpush1.msra.mxu0 %v5861
        %6053 = vmatprep.subr.mxu0 0.0
        %6054 = vmatpush1.msra.mxu0 %v5860
        %6055 = vmatprep.subr.mxu0 0.0
        %6056 = vmatpush1.msra.mxu0 %v5859
        %6057 = vmatprep.subr.mxu0 0.0
        %6058 = vmatpush1.msra.mxu0 %v5858
        %6059 = vmatprep.subr.mxu0 0.0
        %6060 = vmatpush1.msra.mxu0 %v5857
        %6061 = vmatprep.subr.mxu0 0.0
        %6062 = vmatpush1.msra.mxu0 %v5856
        %6063 = vmatprep.subr.mxu0 0.0
        %6064 = vmatpush1.msra.mxu0 %v5855
        %6065 = vmatprep.subr.mxu0 0.0
        %6066 = vmatpush1.msra.mxu0 %v5854
        %6067 = vmatprep.subr.mxu0 0.0
        %6068 = vmatpush1.msra.mxu0 %v5853
        %6069 = vmatprep.subr.mxu0 0.0
        %6070 = vmatpush2.msra.mxu0 0.0
        %6071 = vmatprep.subr.mxu0 0.0
        %6072 = vmatpush2.msra.mxu0 0.0
        %6073 = vmatprep.subr.mxu0 0.0
        %6074 = vmatpush2.msra.mxu0 0.0
        %6075 = vmatprep.subr.mxu0 0.0
        %6076 = vmatpush2.msra.mxu0 0.0
        %6077 = vmatprep.subr.mxu0 0.0
        %6078 = vmatpush2.msra.mxu0 0.0
        %6079 = vmatprep.subr.mxu0 0.0
        %6080 = vmatpush2.msra.mxu0 0.0
        %6081 = vmatprep.subr.mxu0 0.0
        %6082 = vmatpush2.msra.mxu0 0.0
        %6083 = vmatprep.subr.mxu0 0.0
        %6084 = vmatpush2.msra.mxu0 0.0
        %6085 = vmatprep.subr.mxu0 0.0
        %6086 = vmatpush2.msra.mxu0 %v5876
        %6087 = vmatprep.subr.mxu0 0.0
        %6088 = vmatpush2.msra.mxu0 %v5875
        %6089 = vmatprep.subr.mxu0 0.0
        %6090 = vmatpush2.msra.mxu0 %v5874
        %6091 = vmatprep.subr.mxu0 0.0
        %6092 = vmatpush2.msra.mxu0 %v5873
        %6093 = vmatprep.subr.mxu0 0.0
        %6094 = vmatpush2.msra.mxu0 %v5872
        %6095 = vmatprep.subr.mxu0 0.0
        %6096 = vmatpush2.msra.mxu0 %v5871
        %6097 = vmatprep.subr.mxu0 0.0
        %6098 = vmatpush2.msra.mxu0 %v5870
        %6099 = vmatprep.subr.mxu0 0.0
        %6100 = vmatpush2.msra.mxu0 %v5869
        %6101 = vmatprep.mubr.f32.mxu0 %v6035
        %6102 = vmatmul.mubr.f32.gmra.mxu0 %v6026
        %v6103 = vpop.f32.mrf.mxu0
        %v6104 = vadd.f32 0.0, %v6103
        %v6105 = vpop.f32.mrf.mxu0
        %6106 = vdwg.mxu0
        %v6107 = vmul.f32 %v6104, 0.11111111
        %v6108 = vmul.f32 %v6017, %v6017
        %v6109 = vsub.f32 %v6107, %v6108
        %v6110 = vld [vmem:[%s13] sm:$0x1]
        %v6111 = vld [vmem:[%s13 + $0x1] sm:$0x1]
        %v6112 = vadd.f32 %v6109, 1e-05
        %v6113 = vrsqrt.pop %v6112
        %v6114 = vmul.f32 %v6110, %v6113
        %v6115 = vmul.f32 %v6017, %v6114
        %v6116 = vsub.f32 %v6111, %v6115
        %v6118 = vsel %vm2009, %v6114, 0
        %6120 = vmatprep.subr.mxu0 0.0
        %6121 = vmatpush1.msra.mxu0 0.0
        %6122 = vmatprep.subr.mxu0 0.0
        %6123 = vmatpush1.msra.mxu0 0.0
        %6124 = vmatprep.subr.mxu0 0.0
        %6125 = vmatpush1.msra.mxu0 0.0
        %6126 = vmatprep.subr.mxu0 0.0
        %6127 = vmatpush1.msra.mxu0 0.0
        %6128 = vmatprep.subr.mxu0 0.0
        %6129 = vmatpush1.msra.mxu0 0.0
        %6130 = vmatprep.subr.mxu0 0.0
        %6131 = vmatpush1.msra.mxu0 0.0
        %6132 = vmatprep.subr.mxu0 0.0
        %6133 = vmatpush1.msra.mxu0 0.0
        %6134 = vmatprep.subr.mxu0 0.0
        %6135 = vmatpush1.msra.mxu0 0.0
        %6136 = vmatprep.subr.mxu0 %v5927
        %6137 = vmatpush1.msra.mxu0 %v5926
        %6138 = vmatprep.subr.mxu0 %v5925
        %6139 = vmatpush1.msra.mxu0 %v5924
        %6140 = vmatprep.subr.mxu0 %v5923
        %6141 = vmatpush1.msra.mxu0 %v5922
        %6142 = vmatprep.subr.mxu0 %v5921
        %6143 = vmatpush1.msra.mxu0 %v5920
        %6144 = vmatprep.subr.mxu0 %v5919
        %6145 = vmatpush1.msra.mxu0 %v5918
        %6146 = vmatprep.subr.mxu0 %v5917
        %6147 = vmatpush1.msra.mxu0 %v5916
        %6148 = vmatprep.subr.mxu0 %v5915
        %6149 = vmatpush1.msra.mxu0 %v5914
        %6150 = vmatprep.subr.mxu0 %v5913
        %6151 = vmatpush1.msra.mxu0 %v5912
        %6152 = vmatprep.subr.mxu0 0.0
        %6153 = vmatpush2.msra.mxu0 0.0
        %6154 = vmatprep.subr.mxu0 0.0
        %6155 = vmatpush2.msra.mxu0 0.0
        %6156 = vmatprep.subr.mxu0 0.0
        %6157 = vmatpush2.msra.mxu0 0.0
        %6158 = vmatprep.subr.mxu0 0.0
        %6159 = vmatpush2.msra.mxu0 0.0
        %6160 = vmatprep.subr.mxu0 0.0
        %6161 = vmatpush2.msra.mxu0 0.0
        %6162 = vmatprep.subr.mxu0 0.0
        %6163 = vmatpush2.msra.mxu0 0.0
        %6164 = vmatprep.subr.mxu0 0.0
        %6165 = vmatpush2.msra.mxu0 0.0
        %6166 = vmatprep.subr.mxu0 0.0
        %6167 = vmatpush2.msra.mxu0 0.0
        %6168 = vmatprep.subr.mxu0 0.0
        %6169 = vmatpush2.msra.mxu0 0.0
        %6170 = vmatprep.subr.mxu0 0.0
        %6171 = vmatpush2.msra.mxu0 0.0
        %6172 = vmatprep.subr.mxu0 0.0
        %6173 = vmatpush2.msra.mxu0 0.0
        %6174 = vmatprep.subr.mxu0 0.0
        %6175 = vmatpush2.msra.mxu0 0.0
        %6176 = vmatprep.subr.mxu0 0.0
        %6177 = vmatpush2.msra.mxu0 0.0
        %6178 = vmatprep.subr.mxu0 0.0
        %6179 = vmatpush2.msra.mxu0 0.0
        %6180 = vmatprep.subr.mxu0 0.0
        %6181 = vmatpush2.msra.mxu0 0.0
        %6182 = vmatprep.subr.mxu0 0.0
        %6183 = vmatpush2.msra.mxu0 0.0
        %6184 = vmatprep.mubr.f32.mxu0 0.0
        %6185 = vmatmul.mubr.f32.gmra.mxu0 %v6118
        %v6186 = vpop.f32.mrf.mxu0
        %v6187 = vadd.f32 0.0, %v6186
        %v6188 = vpop.f32.mrf.mxu0
        %v6189 = vadd.f32 0.0, %v6188
        %6190 = vdwg.mxu0
        %v6192 = vsel %vm2009, %v6116, 0
        %6194 = vmatprep.subr.mxu0 0.0
        %6195 = vmatpush1.msra.mxu0 0.0
        %6196 = vmatprep.subr.mxu0 0.0
        %6197 = vmatpush1.msra.mxu0 0.0
        %6198 = vmatprep.subr.mxu0 0.0
        %6199 = vmatpush1.msra.mxu0 0.0
        %6200 = vmatprep.subr.mxu0 0.0
        %6201 = vmatpush1.msra.mxu0 0.0
        %6202 = vmatprep.subr.mxu0 0.0
        %6203 = vmatpush1.msra.mxu0 0.0
        %6204 = vmatprep.subr.mxu0 0.0
        %6205 = vmatpush1.msra.mxu0 0.0
        %6206 = vmatprep.subr.mxu0 0.0
        %6207 = vmatpush1.msra.mxu0 0.0
        %6208 = vmatprep.subr.mxu0 0.0
        %6209 = vmatpush1.msra.mxu0 0.0
        %6210 = vmatprep.subr.mxu0 %v5927
        %6211 = vmatpush1.msra.mxu0 %v5926
        %6212 = vmatprep.subr.mxu0 %v5925
        %6213 = vmatpush1.msra.mxu0 %v5924
        %6214 = vmatprep.subr.mxu0 %v5923
        %6215 = vmatpush1.msra.mxu0 %v5922
        %6216 = vmatprep.subr.mxu0 %v5921
        %6217 = vmatpush1.msra.mxu0 %v5920
        %6218 = vmatprep.subr.mxu0 %v5919
        %6219 = vmatpush1.msra.mxu0 %v5918
        %6220 = vmatprep.subr.mxu0 %v5917
        %6221 = vmatpush1.msra.mxu0 %v5916
        %6222 = vmatprep.subr.mxu0 %v5915
        %6223 = vmatpush1.msra.mxu0 %v5914
        %6224 = vmatprep.subr.mxu0 %v5913
        %6225 = vmatpush1.msra.mxu0 %v5912
        %6226 = vmatprep.subr.mxu0 0.0
        %6227 = vmatpush2.msra.mxu0 0.0
        %6228 = vmatprep.subr.mxu0 0.0
        %6229 = vmatpush2.msra.mxu0 0.0
        %6230 = vmatprep.subr.mxu0 0.0
        %6231 = vmatpush2.msra.mxu0 0.0
        %6232 = vmatprep.subr.mxu0 0.0
        %6233 = vmatpush2.msra.mxu0 0.0
        %6234 = vmatprep.subr.mxu0 0.0
        %6235 = vmatpush2.msra.mxu0 0.0
        %6236 = vmatprep.subr.mxu0 0.0
        %6237 = vmatpush2.msra.mxu0 0.0
        %6238 = vmatprep.subr.mxu0 0.0
        %6239 = vmatpush2.msra.mxu0 0.0
        %6240 = vmatprep.subr.mxu0 0.0
        %6241 = vmatpush2.msra.mxu0 0.0
        %6242 = vmatprep.subr.mxu0 0.0
        %6243 = vmatpush2.msra.mxu0 0.0
        %6244 = vmatprep.subr.mxu0 0.0
        %6245 = vmatpush2.msra.mxu0 0.0
        %6246 = vmatprep.subr.mxu0 0.0
        %6247 = vmatpush2.msra.mxu0 0.0
        %6248 = vmatprep.subr.mxu0 0.0
        %6249 = vmatpush2.msra.mxu0 0.0
        %6250 = vmatprep.subr.mxu0 0.0
        %6251 = vmatpush2.msra.mxu0 0.0
        %6252 = vmatprep.subr.mxu0 0.0
        %6253 = vmatpush2.msra.mxu0 0.0
        %6254 = vmatprep.subr.mxu0 0.0
        %6255 = vmatpush2.msra.mxu0 0.0
        %6256 = vmatprep.subr.mxu0 0.0
        %6257 = vmatpush2.msra.mxu0 0.0
        %6258 = vmatprep.mubr.f32.mxu0 0.0
        %6259 = vmatmul.mubr.f32.gmra.mxu0 %v6192
        %v6260 = vpop.f32.mrf.mxu0
        %v6261 = vadd.f32 0.0, %v6260
        %v6262 = vpop.f32.mrf.mxu0
        %v6263 = vadd.f32 0.0, %v6262
        %6264 = vdwg.mxu0
        %v6265 = vlaneseq
        %v6266 = vshrl.u32 %v6265, 7
        %v6267 = vsub.s32 0, %v6266
        %v6268 = vrot.slane %v6187, %v6267
        %v6269 = vlaneseq
        %v6270 = vshrl.u32 %v6269, 7
        %v6271 = vsub.s32 0, %v6270
        %v6272 = vrot.slane %v6189, %v6271
        %v6273 = vmul.f32 %v5771, %v6268
        %v6274 = vmul.f32 %v5772, %v6272
        %v6275 = vlaneseq
        %v6276 = vshrl.u32 %v6275, 7
        %v6277 = vsub.s32 0, %v6276
        %v6278 = vrot.slane %v6261, %v6277
        %v6279 = vlaneseq
        %v6280 = vshrl.u32 %v6279, 7
        %v6281 = vsub.s32 0, %v6280
        %v6282 = vrot.slane %v6263, %v6281
        %v6283 = vadd.f32 %v6273, %v6278
        %v6284 = vadd.f32 %v6274, %v6282
        %v6285 = vld [vmem:[%s9] sm:$0xff]
        %v6286 = vld [vmem:[%s9 + $0x8] sm:$0xff]
        %v6287 = vld [vmem:[%s9 + $0x10] sm:$0xff]
        %v6288 = vld [vmem:[%s9 + $0x18] sm:$0xff]
        %v6289 = vld [vmem:[%s9 + $0x20] sm:$0xff]
        %v6290 = vld [vmem:[%s9 + $0x28] sm:$0xff]
        %v6291 = vld [vmem:[%s9 + $0x30] sm:$0xff]
        %v6292 = vld [vmem:[%s9 + $0x38] sm:$0xff]
        %v6293 = vld [vmem:[%s9 + $0x40] sm:$0xff]
        %v6294 = vld [vmem:[%s9 + $0x48] sm:$0xff]
        %v6295 = vld [vmem:[%s9 + $0x50] sm:$0xff]
        %v6296 = vld [vmem:[%s9 + $0x58] sm:$0xff]
        %v6297 = vld [vmem:[%s9 + $0x60] sm:$0xff]
        %v6298 = vld [vmem:[%s9 + $0x68] sm:$0xff]
        %v6299 = vld [vmem:[%s9 + $0x70] sm:$0xff]
        %v6300 = vld [vmem:[%s9 + $0x78] sm:$0xff]
        %v6301 = vld [vmem:[%s9 + $0x80] sm:$0xff]
        %v6302 = vld [vmem:[%s9 + $0x88] sm:$0xff]
        %v6303 = vld [vmem:[%s9 + $0x90] sm:$0xff]
        %v6304 = vld [vmem:[%s9 + $0x98] sm:$0xff]
        %v6305 = vld [vmem:[%s9 + $0xa0] sm:$0xff]
        %v6306 = vld [vmem:[%s9 + $0xa8] sm:$0xff]
        %v6307 = vld [vmem:[%s9 + $0xb0] sm:$0xff]
        %v6308 = vld [vmem:[%s9 + $0xb8] sm:$0xff]
        %s6309 = scalar_lea.vmem %s9, 192
        %v6310 = vld [vmem:[%s6309] sm:$0xff]
        %v6311 = vld [vmem:[%s6309 + $0x8] sm:$0xff]
        %v6312 = vld [vmem:[%s6309 + $0x10] sm:$0xff]
        %v6313 = vld [vmem:[%s6309 + $0x18] sm:$0xff]
        %v6314 = vld [vmem:[%s6309 + $0x20] sm:$0xff]
        %v6315 = vld [vmem:[%s6309 + $0x28] sm:$0xff]
        %v6316 = vld [vmem:[%s6309 + $0x30] sm:$0xff]
        %v6317 = vld [vmem:[%s6309 + $0x38] sm:$0xff]
        %v6318 = vld [vmem:[%s6309 + $0x40] sm:$0xff]
        %v6319 = vld [vmem:[%s6309 + $0x48] sm:$0xff]
        %v6320 = vld [vmem:[%s6309 + $0x50] sm:$0xff]
        %v6321 = vld [vmem:[%s6309 + $0x58] sm:$0xff]
        %v6322 = vld [vmem:[%s6309 + $0x60] sm:$0xff]
        %v6323 = vld [vmem:[%s6309 + $0x68] sm:$0xff]
        %v6324 = vld [vmem:[%s6309 + $0x70] sm:$0xff]
        %v6325 = vld [vmem:[%s6309 + $0x78] sm:$0xff]
        %v6326 = vld [vmem:[%s6309 + $0x80] sm:$0xff]
        %v6327 = vld [vmem:[%s6309 + $0x88] sm:$0xff]
        %v6328 = vld [vmem:[%s6309 + $0x90] sm:$0xff]
        %v6329 = vld [vmem:[%s6309 + $0x98] sm:$0xff]
        %v6330 = vld [vmem:[%s6309 + $0xa0] sm:$0xff]
        %v6331 = vld [vmem:[%s6309 + $0xa8] sm:$0xff]
        %v6332 = vld [vmem:[%s6309 + $0xb0] sm:$0xff]
        %v6333 = vld [vmem:[%s6309 + $0xb8] sm:$0xff]
        %v6336 = vrot.slane %v6283, 1
        %v6337 = vrot.slane %v6284, 1
        %v6339 = vsel %vm2009, %v6337, 0
        %6341 = vmatprep.subr.mxu0 0.0
        %6342 = vmatpush1.msra.mxu0 %v6325
        %6343 = vmatprep.subr.mxu0 0.0
        %6344 = vmatpush1.msra.mxu0 %v6324
        %6345 = vmatprep.subr.mxu0 0.0
        %6346 = vmatpush1.msra.mxu0 %v6323
        %6347 = vmatprep.subr.mxu0 0.0
        %6348 = vmatpush1.msra.mxu0 %v6322
        %6349 = vmatprep.subr.mxu0 0.0
        %6350 = vmatpush1.msra.mxu0 %v6321
        %6351 = vmatprep.subr.mxu0 0.0
        %6352 = vmatpush1.msra.mxu0 %v6320
        %6353 = vmatprep.subr.mxu0 0.0
        %6354 = vmatpush1.msra.mxu0 %v6319
        %6355 = vmatprep.subr.mxu0 0.0
        %6356 = vmatpush1.msra.mxu0 %v6318
        %6357 = vmatprep.subr.mxu0 0.0
        %6358 = vmatpush1.msra.mxu0 %v6317
        %6359 = vmatprep.subr.mxu0 0.0
        %6360 = vmatpush1.msra.mxu0 %v6316
        %6361 = vmatprep.subr.mxu0 0.0
        %6362 = vmatpush1.msra.mxu0 %v6315
        %6363 = vmatprep.subr.mxu0 0.0
        %6364 = vmatpush1.msra.mxu0 %v6314
        %6365 = vmatprep.subr.mxu0 0.0
        %6366 = vmatpush1.msra.mxu0 %v6313
        %6367 = vmatprep.subr.mxu0 0.0
        %6368 = vmatpush1.msra.mxu0 %v6312
        %6369 = vmatprep.subr.mxu0 0.0
        %6370 = vmatpush1.msra.mxu0 %v6311
        %6371 = vmatprep.subr.mxu0 0.0
        %6372 = vmatpush1.msra.mxu0 %v6310
        %6373 = vmatprep.subr.mxu0 0.0
        %6374 = vmatpush2.msra.mxu0 0.0
        %6375 = vmatprep.subr.mxu0 0.0
        %6376 = vmatpush2.msra.mxu0 0.0
        %6377 = vmatprep.subr.mxu0 0.0
        %6378 = vmatpush2.msra.mxu0 0.0
        %6379 = vmatprep.subr.mxu0 0.0
        %6380 = vmatpush2.msra.mxu0 0.0
        %6381 = vmatprep.subr.mxu0 0.0
        %6382 = vmatpush2.msra.mxu0 0.0
        %6383 = vmatprep.subr.mxu0 0.0
        %6384 = vmatpush2.msra.mxu0 0.0
        %6385 = vmatprep.subr.mxu0 0.0
        %6386 = vmatpush2.msra.mxu0 0.0
        %6387 = vmatprep.subr.mxu0 0.0
        %6388 = vmatpush2.msra.mxu0 0.0
        %6389 = vmatprep.subr.mxu0 0.0
        %6390 = vmatpush2.msra.mxu0 %v6333
        %6391 = vmatprep.subr.mxu0 0.0
        %6392 = vmatpush2.msra.mxu0 %v6332
        %6393 = vmatprep.subr.mxu0 0.0
        %6394 = vmatpush2.msra.mxu0 %v6331
        %6395 = vmatprep.subr.mxu0 0.0
        %6396 = vmatpush2.msra.mxu0 %v6330
        %6397 = vmatprep.subr.mxu0 0.0
        %6398 = vmatpush2.msra.mxu0 %v6329
        %6399 = vmatprep.subr.mxu0 0.0
        %6400 = vmatpush2.msra.mxu0 %v6328
        %6401 = vmatprep.subr.mxu0 0.0
        %6402 = vmatpush2.msra.mxu0 %v6327
        %6403 = vmatprep.subr.mxu0 0.0
        %6404 = vmatpush2.msra.mxu0 %v6326
        %6405 = vmatprep.mubr.f32.mxu0 %v6339
        %6406 = vmatmul.mubr.f32.gmra.mxu0 %v6336
        %v6407 = vpop.f32.mrf.mxu0
        %v6408 = vadd.f32 0.0, %v6407
        %v6409 = vpop.f32.mrf.mxu0
        %6410 = vdwg.mxu0
        %v6411 = vsel %vm2009, %v6284, 0
        %6413 = vmatprep.subr.mxu0 0.0
        %6414 = vmatpush1.msra.mxu0 %v6300
        %6415 = vmatprep.subr.mxu0 0.0
        %6416 = vmatpush1.msra.mxu0 %v6299
        %6417 = vmatprep.subr.mxu0 0.0
        %6418 = vmatpush1.msra.mxu0 %v6298
        %6419 = vmatprep.subr.mxu0 0.0
        %6420 = vmatpush1.msra.mxu0 %v6297
        %6421 = vmatprep.subr.mxu0 0.0
        %6422 = vmatpush1.msra.mxu0 %v6296
        %6423 = vmatprep.subr.mxu0 0.0
        %6424 = vmatpush1.msra.mxu0 %v6295
        %6425 = vmatprep.subr.mxu0 0.0
        %6426 = vmatpush1.msra.mxu0 %v6294
        %6427 = vmatprep.subr.mxu0 0.0
        %6428 = vmatpush1.msra.mxu0 %v6293
        %6429 = vmatprep.subr.mxu0 0.0
        %6430 = vmatpush1.msra.mxu0 %v6292
        %6431 = vmatprep.subr.mxu0 0.0
        %6432 = vmatpush1.msra.mxu0 %v6291
        %6433 = vmatprep.subr.mxu0 0.0
        %6434 = vmatpush1.msra.mxu0 %v6290
        %6435 = vmatprep.subr.mxu0 0.0
        %6436 = vmatpush1.msra.mxu0 %v6289
        %6437 = vmatprep.subr.mxu0 0.0
        %6438 = vmatpush1.msra.mxu0 %v6288
        %6439 = vmatprep.subr.mxu0 0.0
        %6440 = vmatpush1.msra.mxu0 %v6287
        %6441 = vmatprep.subr.mxu0 0.0
        %6442 = vmatpush1.msra.mxu0 %v6286
        %6443 = vmatprep.subr.mxu0 0.0
        %6444 = vmatpush1.msra.mxu0 %v6285
        %6445 = vmatprep.subr.mxu0 0.0
        %6446 = vmatpush2.msra.mxu0 0.0
        %6447 = vmatprep.subr.mxu0 0.0
        %6448 = vmatpush2.msra.mxu0 0.0
        %6449 = vmatprep.subr.mxu0 0.0
        %6450 = vmatpush2.msra.mxu0 0.0
        %6451 = vmatprep.subr.mxu0 0.0
        %6452 = vmatpush2.msra.mxu0 0.0
        %6453 = vmatprep.subr.mxu0 0.0
        %6454 = vmatpush2.msra.mxu0 0.0
        %6455 = vmatprep.subr.mxu0 0.0
        %6456 = vmatpush2.msra.mxu0 0.0
        %6457 = vmatprep.subr.mxu0 0.0
        %6458 = vmatpush2.msra.mxu0 0.0
        %6459 = vmatprep.subr.mxu0 0.0
        %6460 = vmatpush2.msra.mxu0 0.0
        %6461 = vmatprep.subr.mxu0 0.0
        %6462 = vmatpush2.msra.mxu0 %v6308
        %6463 = vmatprep.subr.mxu0 0.0
        %6464 = vmatpush2.msra.mxu0 %v6307
        %6465 = vmatprep.subr.mxu0 0.0
        %6466 = vmatpush2.msra.mxu0 %v6306
        %6467 = vmatprep.subr.mxu0 0.0
        %6468 = vmatpush2.msra.mxu0 %v6305
        %6469 = vmatprep.subr.mxu0 0.0
        %6470 = vmatpush2.msra.mxu0 %v6304
        %6471 = vmatprep.subr.mxu0 0.0
        %6472 = vmatpush2.msra.mxu0 %v6303
        %6473 = vmatprep.subr.mxu0 0.0
        %6474 = vmatpush2.msra.mxu0 %v6302
        %6475 = vmatprep.subr.mxu0 0.0
        %6476 = vmatpush2.msra.mxu0 %v6301
        %6477 = vmatprep.mubr.f32.mxu0 %v6411
        %6478 = vmatmul.mubr.f32.gmra.mxu0 %v6283
        %v6479 = vpop.f32.mrf.mxu0
        %v6480 = vadd.f32 %v6408, %v6479
        %v6481 = vpop.f32.mrf.mxu0
        %6482 = vdwg.mxu0
        %s6483 = scalar_lea.vmem %s9, 384
        %v6484 = vld [vmem:[%s6483] sm:$0xff]
        %v6485 = vld [vmem:[%s6483 + $0x8] sm:$0xff]
        %v6486 = vld [vmem:[%s6483 + $0x10] sm:$0xff]
        %v6487 = vld [vmem:[%s6483 + $0x18] sm:$0xff]
        %v6488 = vld [vmem:[%s6483 + $0x20] sm:$0xff]
        %v6489 = vld [vmem:[%s6483 + $0x28] sm:$0xff]
        %v6490 = vld [vmem:[%s6483 + $0x30] sm:$0xff]
        %v6491 = vld [vmem:[%s6483 + $0x38] sm:$0xff]
        %v6492 = vld [vmem:[%s6483 + $0x40] sm:$0xff]
        %v6493 = vld [vmem:[%s6483 + $0x48] sm:$0xff]
        %v6494 = vld [vmem:[%s6483 + $0x50] sm:$0xff]
        %v6495 = vld [vmem:[%s6483 + $0x58] sm:$0xff]
        %v6496 = vld [vmem:[%s6483 + $0x60] sm:$0xff]
        %v6497 = vld [vmem:[%s6483 + $0x68] sm:$0xff]
        %v6498 = vld [vmem:[%s6483 + $0x70] sm:$0xff]
        %v6499 = vld [vmem:[%s6483 + $0x78] sm:$0xff]
        %v6500 = vld [vmem:[%s6483 + $0x80] sm:$0xff]
        %v6501 = vld [vmem:[%s6483 + $0x88] sm:$0xff]
        %v6502 = vld [vmem:[%s6483 + $0x90] sm:$0xff]
        %v6503 = vld [vmem:[%s6483 + $0x98] sm:$0xff]
        %v6504 = vld [vmem:[%s6483 + $0xa0] sm:$0xff]
        %v6505 = vld [vmem:[%s6483 + $0xa8] sm:$0xff]
        %v6506 = vld [vmem:[%s6483 + $0xb0] sm:$0xff]
        %v6507 = vld [vmem:[%s6483 + $0xb8] sm:$0xff]
        %v6508 = vrot.slane %v6283, 2
        %v6509 = vrot.slane %v6284, 2
        %v6511 = vsel %vm2009, %v6509, 0
        %6513 = vmatprep.subr.mxu0 0.0
        %6514 = vmatpush1.msra.mxu0 %v6499
        %6515 = vmatprep.subr.mxu0 0.0
        %6516 = vmatpush1.msra.mxu0 %v6498
        %6517 = vmatprep.subr.mxu0 0.0
        %6518 = vmatpush1.msra.mxu0 %v6497
        %6519 = vmatprep.subr.mxu0 0.0
        %6520 = vmatpush1.msra.mxu0 %v6496
        %6521 = vmatprep.subr.mxu0 0.0
        %6522 = vmatpush1.msra.mxu0 %v6495
        %6523 = vmatprep.subr.mxu0 0.0
        %6524 = vmatpush1.msra.mxu0 %v6494
        %6525 = vmatprep.subr.mxu0 0.0
        %6526 = vmatpush1.msra.mxu0 %v6493
        %6527 = vmatprep.subr.mxu0 0.0
        %6528 = vmatpush1.msra.mxu0 %v6492
        %6529 = vmatprep.subr.mxu0 0.0
        %6530 = vmatpush1.msra.mxu0 %v6491
        %6531 = vmatprep.subr.mxu0 0.0
        %6532 = vmatpush1.msra.mxu0 %v6490
        %6533 = vmatprep.subr.mxu0 0.0
        %6534 = vmatpush1.msra.mxu0 %v6489
        %6535 = vmatprep.subr.mxu0 0.0
        %6536 = vmatpush1.msra.mxu0 %v6488
        %6537 = vmatprep.subr.mxu0 0.0
        %6538 = vmatpush1.msra.mxu0 %v6487
        %6539 = vmatprep.subr.mxu0 0.0
        %6540 = vmatpush1.msra.mxu0 %v6486
        %6541 = vmatprep.subr.mxu0 0.0
        %6542 = vmatpush1.msra.mxu0 %v6485
        %6543 = vmatprep.subr.mxu0 0.0
        %6544 = vmatpush1.msra.mxu0 %v6484
        %6545 = vmatprep.subr.mxu0 0.0
        %6546 = vmatpush2.msra.mxu0 0.0
        %6547 = vmatprep.subr.mxu0 0.0
        %6548 = vmatpush2.msra.mxu0 0.0
        %6549 = vmatprep.subr.mxu0 0.0
        %6550 = vmatpush2.msra.mxu0 0.0
        %6551 = vmatprep.subr.mxu0 0.0
        %6552 = vmatpush2.msra.mxu0 0.0
        %6553 = vmatprep.subr.mxu0 0.0
        %6554 = vmatpush2.msra.mxu0 0.0
        %6555 = vmatprep.subr.mxu0 0.0
        %6556 = vmatpush2.msra.mxu0 0.0
        %6557 = vmatprep.subr.mxu0 0.0
        %6558 = vmatpush2.msra.mxu0 0.0
        %6559 = vmatprep.subr.mxu0 0.0
        %6560 = vmatpush2.msra.mxu0 0.0
        %6561 = vmatprep.subr.mxu0 0.0
        %6562 = vmatpush2.msra.mxu0 %v6507
        %6563 = vmatprep.subr.mxu0 0.0
        %6564 = vmatpush2.msra.mxu0 %v6506
        %6565 = vmatprep.subr.mxu0 0.0
        %6566 = vmatpush2.msra.mxu0 %v6505
        %6567 = vmatprep.subr.mxu0 0.0
        %6568 = vmatpush2.msra.mxu0 %v6504
        %6569 = vmatprep.subr.mxu0 0.0
        %6570 = vmatpush2.msra.mxu0 %v6503
        %6571 = vmatprep.subr.mxu0 0.0
        %6572 = vmatpush2.msra.mxu0 %v6502
        %6573 = vmatprep.subr.mxu0 0.0
        %6574 = vmatpush2.msra.mxu0 %v6501
        %6575 = vmatprep.subr.mxu0 0.0
        %6576 = vmatpush2.msra.mxu0 %v6500
        %6577 = vmatprep.mubr.f32.mxu0 %v6511
        %6578 = vmatmul.mubr.f32.gmra.mxu0 %v6508
        %v6579 = vpop.f32.mrf.mxu0
        %v6580 = vadd.f32 0.0, %v6579
        %v6581 = vpop.f32.mrf.mxu0
        %6582 = vdwg.mxu0
        %v6583 = vadd.f32 %v6480, %v6580
        %v6584 = vld [vmem:[%s14] sm:$0xff]
        %v6585 = vld [vmem:[%s14 + $0x8] sm:$0xff]
        %v6586 = vld [vmem:[%s14 + $0x10] sm:$0xff]
        %v6587 = vld [vmem:[%s14 + $0x18] sm:$0xff]
        %v6588 = vld [vmem:[%s15] sm:$0x1]
        %v6590 = vsel %vm4896, %v6583, 0
        %6592 = vmatprep.subr.mxu0 0.0
        %6593 = vmatpush1.msra.mxu0 0.0
        %6594 = vmatprep.subr.mxu0 0.0
        %6595 = vmatpush1.msra.mxu0 0.0
        %6596 = vmatprep.subr.mxu0 0.0
        %6597 = vmatpush1.msra.mxu0 0.0
        %6598 = vmatprep.subr.mxu0 0.0
        %6599 = vmatpush1.msra.mxu0 0.0
        %6600 = vmatprep.subr.mxu0 0.0
        %6601 = vmatpush1.msra.mxu0 0.0
        %6602 = vmatprep.subr.mxu0 0.0
        %6603 = vmatpush1.msra.mxu0 0.0
        %6604 = vmatprep.subr.mxu0 0.0
        %6605 = vmatpush1.msra.mxu0 0.0
        %6606 = vmatprep.subr.mxu0 0.0
        %6607 = vmatpush1.msra.mxu0 0.0
        %6608 = vmatprep.subr.mxu0 0.0
        %6609 = vmatpush1.msra.mxu0 0.0
        %6610 = vmatprep.subr.mxu0 0.0
        %6611 = vmatpush1.msra.mxu0 0.0
        %6612 = vmatprep.subr.mxu0 0.0
        %6613 = vmatpush1.msra.mxu0 0.0
        %6614 = vmatprep.subr.mxu0 0.0
        %6615 = vmatpush1.msra.mxu0 0.0
        %6616 = vmatprep.subr.mxu0 0.0
        %6617 = vmatpush1.msra.mxu0 %v6587
        %6618 = vmatprep.subr.mxu0 0.0
        %6619 = vmatpush1.msra.mxu0 %v6586
        %6620 = vmatprep.subr.mxu0 0.0
        %6621 = vmatpush1.msra.mxu0 %v6585
        %6622 = vmatprep.subr.mxu0 0.0
        %6623 = vmatpush1.msra.mxu0 %v6584
        %6624 = vmatprep.subr.mxu0 0.0
        %6625 = vmatpush2.msra.mxu0 0.0
        %6626 = vmatprep.subr.mxu0 0.0
        %6627 = vmatpush2.msra.mxu0 0.0
        %6628 = vmatprep.subr.mxu0 0.0
        %6629 = vmatpush2.msra.mxu0 0.0
        %6630 = vmatprep.subr.mxu0 0.0
        %6631 = vmatpush2.msra.mxu0 0.0
        %6632 = vmatprep.subr.mxu0 0.0
        %6633 = vmatpush2.msra.mxu0 0.0
        %6634 = vmatprep.subr.mxu0 0.0
        %6635 = vmatpush2.msra.mxu0 0.0
        %6636 = vmatprep.subr.mxu0 0.0
        %6637 = vmatpush2.msra.mxu0 0.0
        %6638 = vmatprep.subr.mxu0 0.0
        %6639 = vmatpush2.msra.mxu0 0.0
        %6640 = vmatprep.subr.mxu0 0.0
        %6641 = vmatpush2.msra.mxu0 0.0
        %6642 = vmatprep.subr.mxu0 0.0
        %6643 = vmatpush2.msra.mxu0 0.0
        %6644 = vmatprep.subr.mxu0 0.0
        %6645 = vmatpush2.msra.mxu0 0.0
        %6646 = vmatprep.subr.mxu0 0.0
        %6647 = vmatpush2.msra.mxu0 0.0
        %6648 = vmatprep.subr.mxu0 0.0
        %6649 = vmatpush2.msra.mxu0 0.0
        %6650 = vmatprep.subr.mxu0 0.0
        %6651 = vmatpush2.msra.mxu0 0.0
        %6652 = vmatprep.subr.mxu0 0.0
        %6653 = vmatpush2.msra.mxu0 0.0
        %6654 = vmatprep.subr.mxu0 0.0
        %6655 = vmatpush2.msra.mxu0 0.0
        %6656 = vmatprep.mubr.f32.mxu0 0.0
        %6657 = vmatmul.mubr.f32.gmra.mxu0 %v6590
        %v6658 = vpop.f32.mrf.mxu0
        %v6659 = vadd.f32 %v6588, %v6658
        %v6660 = vpop.f32.mrf.mxu0
        %6661 = vdwg.mxu0
        %vm6662 = vcmask 253952
        %6663 = vst.msk [vmem:[%s513] sm:$0x1] %vm6662, %v6659
        %s6664 = sand.u32 %s379, 1
        %s6665 = scalar_lea.sflag [#allocation3], %s6664
        %s6666 = sand.u32 %s379, 1
        %s6667 = scalar_lea.vmem [#allocation2], %s6666
        // Predicated region
        $region85: #{netE_forward.1} parent=83 // pred_check
          %p6668 = pneg %p389
        $region86: #{netE_forward.1} parent=83 // pred_check_branch
          %6670 = sbr.rel (%p6668) target = $region88
        $region87: #{netE_forward.1} parent=83 // pred_region
          %s6672 = ssub.s32 16, 16
          %6673 = vsyncadd %s6665, %s6672
          %s6674 = smul.addr %s30, 16
          %s6675 = scalar_lea.hbm %s16, %s6674
          %s6677 = sshll.u32 %s6667, 4
          %s6678 = int_to_ptr.vmem [resolvable:$true] %s6677
          %6680 = dma.vmem_to_hbm [thread:$0]  %s6678, 16, %s6675, %s6665
        $region88: #{netE_forward.1} parent=83 // pred_fallthru
          _
      $region84: #{netE_forward.1} parent=5 // pred_fallthru
        _
      %p6681 = scmp.le.s32.totalorder 2, %s25
      // Predicated region
      $region89: #{netE_forward.1} parent=5 // pred_check
        %p6682 = pneg %p6681
      $region90: #{netE_forward.1} parent=5 // pred_check_branch
        %6684 = sbr.rel (%p6682) target = $region92
      $region91: #{netE_forward.1} parent=5 // pred_region
        %s6685 = ssub.s32 %s25, 2
        // Predicated region
        $region93: #{netE_forward.1} parent=91 // pred_check
          %p6686 = pneg %p395
        $region94: #{netE_forward.1} parent=91 // pred_check_branch
          %6688 = sbr.rel (%p6686) target = $region96
        $region95: #{netE_forward.1} parent=91 // pred_region
          %s6689 = sand.u32 %s380, 1
          %s6690 = scalar_lea.sflag [#allocation3], %s6689
          %s6691 = sand.u32 %s380, 1
          %s6692 = scalar_lea.vmem [#allocation2], %s6691
          %6693 = dma.done %s6690, 16
        $region96: #{netE_forward.1} parent=91 // pred_fallthru
          _
      $region92: #{netE_forward.1} parent=5 // pred_fallthru
        _
    $region6: #{netE_forward.1} parent=1 // loop_footer
      %s29 = sadd.s32 1, %s25
    $region7: #{netE_forward.1} parent=1 // loop_footer_branch
      %24 = sbr.rel target = $region3
    $region8: #{netE_forward.1} parent=1 // loop_exit
      _
    %6694 = vsyncpa [#allocation3], 1
    %s6695 = scalar_lea.sflag [#allocation3], 1
    %6696 = vsyncpa %s6695, 1

</llo_original>
